<compile_context>
chip_gen: v6e
topology: v6e:2x2x1
jax: 0.10.0
libtpu: 0.0.40
codegen_flags: <defaults>
</compile_context>

<pallas_src>
import math

import numpy as np

import jax
import jax.numpy as jnp
from jax.experimental import pallas as pl
from jax.experimental.pallas import tpu as pltpu

# ----------------------------- "args" ---------------------------------------
BATCH = 2            # bs
SEQ = 8              # decoder sequence length
EMBED = 32           # args.decoder_embed_dim
FFN = 32             # args.decoder_ffn_embed_dim (== EMBED so Decoder.layer_norm is valid)
HEADS = 4            # args.decoder_attention_heads
HEAD_DIM = EMBED // HEADS
ENC_SEQ = 8          # encoder output length
ENC_EMBED = 48       # args.encoder_embed_dim
PLM_SEQ = 10         # plm output length
PLM_EMBED = 40       # args.plm_encoder_embed_dim
NUM_LAYERS = 6       # args.decoder_layers
LN_EPS = 1e-5

VO_DIM = HEADS * EMBED        # concatenated per-head (V @ Wo[head rows]) blocks = 128 lanes

_VMEM = pl.BlockSpec(memory_space=pltpu.MemorySpace.VMEM)


# ------------------------ constant masks (numpy) -----------------------------
def _keep_mask(tq: int, tk: int) -> np.ndarray:
    """Multiplicative 0/1 mask on the fused (B*tq, H*B*tk) probability slab:
    1 on same-batch (query, key) pairs inside each head block, 0 otherwise."""
    rb = np.arange(BATCH * tq)[:, None] // tq
    cb = (np.arange(HEADS * BATCH * tk)[None, :] % (BATCH * tk)) // tk
    return (rb == cb).astype(np.float32)


def _head_rowmask(tk: int) -> np.ndarray:
    """0/1 mask (E, H*B*tk) selecting rows hD:(h+1)D inside column block h.
    Multiplying a column-tiled K^T by this yields the block-diagonal K^T
    operand used for the single fused score matmul."""
    nk = BATCH * tk
    r = np.arange(EMBED)[:, None] // HEAD_DIM
    c = np.arange(HEADS * nk)[None, :] // nk
    return (r == c).astype(np.float32)


_KEEP_SELF = _keep_mask(SEQ, SEQ)
_KEEP_ENC = _keep_mask(SEQ, ENC_SEQ)
_KEEP_PLM = _keep_mask(SEQ, PLM_SEQ)
_ROWM_SELF = _head_rowmask(SEQ)
_ROWM_ENC = _head_rowmask(ENC_SEQ)
_ROWM_PLM = _head_rowmask(PLM_SEQ)


# ------------------------------- kernel --------------------------------------
def fused_decoder_kernel(
    x_ref, enc_ref, plm_ref,
    keep_self_ref, keep_enc_ref, keep_plm_ref,
    rm_self_ref, rm_enc_ref, rm_plm_ref,
    sa_proj_w_ref, sa_proj_b_ref, sa_out_b_ref,
    cq_w_ref, cq_b_ref,
    ea_kv_w_ref, ea_kv_b_ref, ea_out_b_ref,
    pa_kv_w_ref, pa_kv_b_ref, pa_out_b_ref,
    fc1_w_ref, fc1_b_ref, fc2_w_ref, fc2_b_ref,
    ln_g_ref, ln_b_ref,
    x_out_ref, attn_out_ref, inner_ref,
):
    f32 = jnp.float32

    def bd_keys(k, rowmask):
        """k: (Nk, E) keys -> block-diagonal K^T operand (E, HEADS*Nk).

        Column block h holds k[:, hD:(h+1)D]^T in rows hD:(h+1)D, zeros
        elsewhere, so `q @ result` yields all-head, all-pairs scores with a
        single full-depth (K=E) MXU push.  One small transpose per call."""
        kT = k.T                                           # (E, Nk)
        return jnp.concatenate([kT] * HEADS, axis=1) * rowmask

    def stack_heads(vo):
        """vo: (Nk, HEADS*E) per-head V@Wo blocks -> (HEADS*Nk, E) row-stacked
        operand so a single P@V matmul also performs the sum over heads."""
        return jnp.concatenate(
            [vo[:, h * EMBED:(h + 1) * EMBED] for h in range(HEADS)], axis=0)

    def attend(q, kT_bd, vo_st, keep, out_bias, need_probs):
        """All heads & both batch elements of one attention in 2 MXU pushes.

        q:     (B*Tq, E)        queries (1/sqrt(head_dim) folded into Wq/bq)
        kT_bd: (E, H*B*Tk)      block-diagonal K^T operand
        vo_st: (H*B*Tk, E)      row-stacked per-head (V @ Wo[head]) blocks
        keep:  (B*Tq, H*B*Tk)   multiplicative 0/1 same-batch mask
        Returns (out (B*Tq, E), sum-over-heads softmax probs or None)."""
        nk = keep.shape[1] // HEADS
        s = jnp.dot(q, kT_bd, preferred_element_type=f32)       # push 1 (all heads)
        s = s - jnp.max(s, axis=-1, keepdims=True)              # row stabilizer only
        p = jnp.exp(s) * keep                                   # one wide exp, masked
        parts = []
        for h in range(HEADS):                                  # VPU-only segmented softmax
            ph = p[:, h * nk:(h + 1) * nk]
            # exact reciprocal: returned probs must sum to 1 (V-bias fold relies on it)
            parts.append(ph * pl.reciprocal(
                jnp.sum(ph, axis=-1, keepdims=True), approx=False))
        pn = jnp.concatenate(parts, axis=-1)
        out = jnp.dot(pn, vo_st, preferred_element_type=f32) + out_bias   # push 2
        probs = None
        if need_probs:
            probs = parts[0]
            for h in range(1, HEADS):
                probs = probs + parts[h]
        return out, probs

    x = x_ref[...]                                              # (B*T, E)

    # enc / plm operands are x-independent and the six layer slots share one
    # weight set -> build once, above the layer loop (weights read at point of
    # use; they are not kept live afterwards).
    enc_kv = (jnp.dot(enc_ref[...], ea_kv_w_ref[...], preferred_element_type=f32)
              + ea_kv_b_ref[...])
    vo_enc = stack_heads(enc_kv[:, :VO_DIM])
    kT_enc = bd_keys(enc_kv[:, VO_DIM:], rm_enc_ref[...])
    plm_kv = (jnp.dot(plm_ref[...], pa_kv_w_ref[...], preferred_element_type=f32)
              + pa_kv_b_ref[...])
    vo_plm = stack_heads(plm_kv[:, :VO_DIM])
    kT_plm = bd_keys(plm_kv[:, VO_DIM:], rm_plm_ref[...])

    inner_ref[0] = x
    attn_probs = None

    for layer in range(NUM_LAYERS):            # fully unrolled; weights shared
        need_attn = layer == NUM_LAYERS - 1    # alignment_layer == num_layers - 1

        # ---- self attention + residual (fused [VO | Q | K] projection) ----
        proj = (jnp.dot(x, sa_proj_w_ref[...], preferred_element_type=f32)
                + sa_proj_b_ref[...])
        vo_s = stack_heads(proj[:, :VO_DIM])
        q_s = proj[:, VO_DIM:VO_DIM + EMBED]
        kT_s = bd_keys(proj[:, VO_DIM + EMBED:], rm_self_ref[...])
        sa_out, _ = attend(q_s, kT_s, vo_s, keep_self_ref[...],
                           sa_out_b_ref[...], False)
        x = x + sa_out

        # ---- encoder attn + plm attn (dropnet [0.5, 0.5] folded into weights) ----
        cq = (jnp.dot(x, cq_w_ref[...], preferred_element_type=f32)
              + cq_b_ref[...])                               # [Q_enc | Q_plm], one push
        enc_att, probs = attend(cq[:, :EMBED], kT_enc, vo_enc, keep_enc_ref[...],
                                ea_out_b_ref[...], need_attn)
        plm_att, _ = attend(cq[:, EMBED:], kT_plm, vo_plm, keep_plm_ref[...],
                            pa_out_b_ref[...], False)
        x = x + enc_att + plm_att

        # ---- feed-forward + residual ----
        h1 = jnp.maximum(
            jnp.dot(x, fc1_w_ref[...], preferred_element_type=f32) + fc1_b_ref[...],
            0.0)
        x = x + jnp.dot(h1, fc2_w_ref[...], preferred_element_type=f32) + fc2_b_ref[...]

        # Inner-state store: 2 narrow vsts per layer, off the dependence chain.
        # (Deferring all 7 stores to the epilogue would keep ~14 extra vregs
        # live across the whole unrolled loop — worse than the stores.)
        inner_ref[layer + 1] = x
        if need_attn:
            attn_probs = probs

    # ---- Decoder.layer_norm over the last (ffn == embed) dim ----
    mu = jnp.mean(x, axis=-1, keepdims=True)
    var = jnp.mean(jnp.square(x - mu), axis=-1, keepdims=True)
    x_out_ref[...] = ((x - mu) * jax.lax.rsqrt(var + LN_EPS)
                      * ln_g_ref[...] + ln_b_ref[...])

    # ---- alignment-layer encoder-attention weights: mean over heads & batch ----
    acc = attn_probs[0:SEQ, 0:ENC_SEQ]
    for b in range(1, BATCH):
        acc = acc + attn_probs[b * SEQ:(b + 1) * SEQ,
                               b * ENC_SEQ:(b + 1) * ENC_SEQ]
    attn_out_ref[...] = acc * (1.0 / (HEADS * BATCH))


# ------------------------------- wrapper --------------------------------------
@jax.jit
def decoder_forward(prev_output_tokens, encoder_out, plm_out, packed_params):
    # prev_output_tokens: (B, T, E); encoder_out: (S_enc, B, E_enc); plm_out: (S_plm, B, E_plm)
    x_flat = prev_output_tokens.reshape(BATCH * SEQ, EMBED)
    enc_flat = jnp.transpose(encoder_out, (1, 0, 2)).reshape(BATCH * ENC_SEQ, ENC_EMBED)
    plm_flat = jnp.transpose(plm_out, (1, 0, 2)).reshape(BATCH * PLM_SEQ, PLM_EMBED)

    n_in = 9 + len(packed_params)
    x_out_flat, attn_mean, inner_flat = pl.pallas_call(
        fused_decoder_kernel,
        out_shape=(
            jax.ShapeDtypeStruct((BATCH * SEQ, FFN), jnp.float32),
            jax.ShapeDtypeStruct((SEQ, ENC_SEQ), jnp.float32),
            jax.ShapeDtypeStruct((NUM_LAYERS + 1, BATCH * SEQ, EMBED), jnp.float32),
        ),
        in_specs=[_VMEM] * n_in,
        out_specs=(_VMEM, _VMEM, _VMEM),
    )(x_flat, enc_flat, plm_flat,
      _KEEP_SELF, _KEEP_ENC, _KEEP_PLM,
      _ROWM_SELF, _ROWM_ENC, _ROWM_PLM,
      *packed_params)

    x_out = x_out_flat.reshape(BATCH, SEQ, FFN)
    # inner_states in the reference's seq-first (T, B, E) layout, stacked
    inner_states = jnp.transpose(
        inner_flat.reshape(NUM_LAYERS + 1, BATCH, SEQ, EMBED), (0, 2, 1, 3))
    return x_out, attn_mean, inner_states


# ------------------------- parameter construction ----------------------------
def _init_mha(key, kv_dim):
    # Well-conditioned synthetic weights: small output-side projections keep
    # activations / attention logits O(1) through the 6 (LayerNorm-free,
    # residual-only) layers, so default MXU precision stays well within tolerance.
    ks = jax.random.split(key, 8)
    wq = jax.random.normal(ks[0], (EMBED, EMBED), jnp.float32) * (0.5 / math.sqrt(EMBED))
    wk = jax.random.normal(ks[1], (kv_dim, EMBED), jnp.float32) * (0.5 / math.sqrt(kv_dim))
    wv = jax.random.normal(ks[2], (kv_dim, EMBED), jnp.float32) * (1.0 / math.sqrt(kv_dim))
    bq = jax.random.normal(ks[3], (1, EMBED), jnp.float32) * 0.02
    bk = jax.random.normal(ks[4], (1, EMBED), jnp.float32) * 0.02
    bv = jax.random.normal(ks[5], (1, EMBED), jnp.float32) * 0.02
    wo = jax.random.normal(ks[6], (EMBED, EMBED), jnp.float32) * 0.05
    bo = jax.random.normal(ks[7], (1, EMBED), jnp.float32) * 0.02
    return (wq, bq, wk, bk, wv, bv, wo, bo)


def make_params(key):
    k_sa, k_ea, k_pa, k_f1, k_f1b, k_f2, k_f2b, k_g, k_b = jax.random.split(key, 9)
    sa = _init_mha(k_sa, EMBED)
    ea = _init_mha(k_ea, ENC_EMBED)
    pa = _init_mha(k_pa, PLM_EMBED)
    fc1_w = jax.random.normal(k_f1, (EMBED, FFN), jnp.float32) / math.sqrt(EMBED)
    fc1_b = jax.random.normal(k_f1b, (1, FFN), jnp.float32) * 0.02
    fc2_w = jax.random.normal(k_f2, (FFN, EMBED), jnp.float32) * 0.05
    fc2_b = jax.random.normal(k_f2b, (1, EMBED), jnp.float32) * 0.02
    layer_params = sa + ea + pa + (fc1_w, fc1_b, fc2_w, fc2_b)
    ln_gamma = (1.0 + 0.05 * jax.random.normal(k_g, (1, 1, FFN), jnp.float32))
    ln_beta = 0.05 * jax.random.normal(k_b, (1, 1, FFN), jnp.float32)
    return layer_params, ln_gamma, ln_beta


def pack_params(layer_params, ln_gamma, ln_beta):
    """Fold / fuse the raw MHA weights into the kernel's wide-matmul layout."""
    sa = layer_params[0:8]
    ea = layer_params[8:16]
    pa = layer_params[16:24]
    fc1_w, fc1_b, fc2_w, fc2_b = layer_params[24:28]
    scale = 1.0 / math.sqrt(HEAD_DIM)

    def fold_vo(wv, wo):
        # block h = Wv[:, hD:(h+1)D] @ Wo[hD:(h+1)D, :] -> (kv_dim, H*EMBED)
        blocks = [wv[:, h * HEAD_DIM:(h + 1) * HEAD_DIM]
                  @ wo[h * HEAD_DIM:(h + 1) * HEAD_DIM, :] for h in range(HEADS)]
        return jnp.concatenate(blocks, axis=1)

    sa_wq, sa_bq, sa_wk, sa_bk, sa_wv, sa_bv, sa_wo, sa_bo = sa
    ea_wq, ea_bq, ea_wk, ea_bk, ea_wv, ea_bv, ea_wo, ea_bo = ea
    pa_wq, pa_bq, pa_wk, pa_bk, pa_wv, pa_bv, pa_wo, pa_bo = pa

    zeros_vo = jnp.zeros((1, VO_DIM), jnp.float32)

    # self-attn fused projection: [V@Wo per head | Q*scale | K]   (E, H*E + 2E)
    sa_proj_w = jnp.concatenate([fold_vo(sa_wv, sa_wo), sa_wq * scale, sa_wk], axis=1)
    sa_proj_b = jnp.concatenate([zeros_vo, sa_bq * scale, sa_bk], axis=1)
    sa_out_b = sa_bv @ sa_wo + sa_bo                      # (1, E)

    # cross-attn query projections fused: [Q_enc*scale | Q_plm*scale]
    cq_w = jnp.concatenate([ea_wq * scale, pa_wq * scale], axis=1)
    cq_b = jnp.concatenate([ea_bq * scale, pa_bq * scale], axis=1)

    # enc / plm fused [V@Wo | K] projections; 0.5 dropnet weight folded in
    ea_kv_w = jnp.concatenate([0.5 * fold_vo(ea_wv, ea_wo), ea_wk], axis=1)
    ea_kv_b = jnp.concatenate([zeros_vo, ea_bk], axis=1)
    ea_out_b = 0.5 * (ea_bv @ ea_wo + ea_bo)
    pa_kv_w = jnp.concatenate([0.5 * fold_vo(pa_wv, pa_wo), pa_wk], axis=1)
    pa_kv_b = jnp.concatenate([zeros_vo, pa_bk], axis=1)
    pa_out_b = 0.5 * (pa_bv @ pa_wo + pa_bo)

    return (sa_proj_w, sa_proj_b, sa_out_b,
            cq_w, cq_b,
            ea_kv_w, ea_kv_b, ea_out_b,
            pa_kv_w, pa_kv_b, pa_out_b,
            fc1_w, fc1_b, fc2_w, fc2_b,
            ln_gamma.reshape(1, FFN), ln_beta.reshape(1, FFN))


# ------------------------- pure-JAX reference (sanity) -----------------------
def _ref_mha(q_in, kv_in, p):
    wq, bq, wk, bk, wv, bv, wo, bo = p
    q = q_in @ wq + bq
    k = kv_in @ wk + bk
    v = kv_in @ wv + bv
    tq, tk = q_in.shape[0], kv_in.shape[0]
    qh = q.reshape(tq, HEADS, HEAD_DIM)
    kh = k.reshape(tk, HEADS, HEAD_DIM)
    vh = v.reshape(tk, HEADS, HEAD_DIM)
    s = jnp.einsum("qhd,khd->hqk", qh, kh) / math.sqrt(HEAD_DIM)
    a = jax.nn.softmax(s, axis=-1)
    o = jnp.einsum("hqk,khd->qhd", a, vh).reshape(tq, EMBED)
    return o @ wo + bo, a.mean(axis=0)


def _ref_forward(x_bte, enc, plm, layer_params, ln_gamma, ln_beta):
    sa, ea, pa = layer_params[0:8], layer_params[8:16], layer_params[16:24]
    fc1_w, fc1_b, fc2_w, fc2_b = layer_params[24:28]
    x = jnp.transpose(x_bte, (1, 0, 2))     # (T, B, E)
    inner = [x]
    attn = None
    for idx in range(NUM_LAYERS):
        cols_x, cols_a = [], []
        for b in range(BATCH):
            xb = x[:, b, :]
            xb = xb + _ref_mha(xb, xb, sa)[0]
            x1, a = _ref_mha(xb, enc[:, b, :], ea)
            x2, _ = _ref_mha(xb, plm[:, b, :], pa)
            xb = xb + 0.5 * x1 + 0.5 * x2
            h = jnp.maximum(xb @ fc1_w + fc1_b, 0.0)
            xb = xb + (h @ fc2_w + fc2_b)
            cols_x.append(xb)
            cols_a.append(a)
        x = jnp.stack(cols_x, axis=1)
        inner.append(x)
        if idx == NUM_LAYERS - 1:
            attn = jnp.stack(cols_a, axis=0)
    xo = jnp.transpose(x, (1, 0, 2))
    mu = xo.mean(-1, keepdims=True)
    var = ((xo - mu) ** 2).mean(-1, keepdims=True)
    xo = (xo - mu) / jnp.sqrt(var + LN_EPS) * ln_gamma + ln_beta
    return xo, attn.mean(axis=0), jnp.stack(inner, axis=0)


# ------------------------------------ main ------------------------------------
if __name__ == "__main__":
    key = jax.random.PRNGKey(0)
    k_x, k_e, k_p, k_w = jax.random.split(key, 4)
    prev_output_tokens = jax.random.normal(k_x, (BATCH, SEQ, EMBED), jnp.float32)
    encoder_out = jax.random.normal(k_e, (ENC_SEQ, BATCH, ENC_EMBED), jnp.float32)
    plm_out = jax.random.normal(k_p, (PLM_SEQ, BATCH, PLM_EMBED), jnp.float32)

    layer_params, ln_gamma, ln_beta = make_params(k_w)
    packed = pack_params(layer_params, ln_gamma, ln_beta)

    x_out, attn_mean, inner_states = decoder_forward(
        prev_output_tokens, encoder_out, plm_out, packed)
    jax.block_until_ready(x_out)
    jax.block_until_ready(attn_mean)
    jax.block_until_ready(inner_states)

    # sanity check against a pure-JAX reference of the same math
    x_ref_val, attn_ref_val, inner_ref_val = _ref_forward(
        prev_output_tokens, encoder_out, plm_out, layer_params, ln_gamma, ln_beta)

    assert x_out.shape == (BATCH, SEQ, FFN)
    assert attn_mean.shape == (SEQ, ENC_SEQ)
    assert inner_states.shape == (NUM_LAYERS + 1, SEQ, BATCH, EMBED)
    # Default MXU matmul precision (bf16 inputs, f32 accumulation).  With the
    # well-conditioned weights the end-to-end error is ~1e-3; 5e-2 keeps a
    # comfortable margin while still catching any structural bug (which would
    # produce O(0.1-1) discrepancies).
    assert jnp.allclose(x_out, x_ref_val, rtol=5e-2, atol=5e-2)
    assert jnp.allclose(attn_mean, attn_ref_val, rtol=5e-2, atol=5e-2)
    assert jnp.allclose(inner_states, inner_ref_val, rtol=5e-2, atol=5e-2)

    print("KERNEL_OK")
</pallas_src>

<mosaic_0001>
module attributes {stable_mosaic.version = 11 : i64} {
  func.func @fused_decoder_kernel(%arg0: memref<16x32xf32, #tpu.memory_space<vmem>>, %arg1: memref<16x48xf32, #tpu.memory_space<vmem>>, %arg2: memref<20x40xf32, #tpu.memory_space<vmem>>, %arg3: memref<16x64xf32, #tpu.memory_space<vmem>>, %arg4: memref<16x64xf32, #tpu.memory_space<vmem>>, %arg5: memref<16x80xf32, #tpu.memory_space<vmem>>, %arg6: memref<32x64xf32, #tpu.memory_space<vmem>>, %arg7: memref<32x64xf32, #tpu.memory_space<vmem>>, %arg8: memref<32x80xf32, #tpu.memory_space<vmem>>, %arg9: memref<32x192xf32, #tpu.memory_space<vmem>>, %arg10: memref<1x192xf32, #tpu.memory_space<vmem>>, %arg11: memref<1x32xf32, #tpu.memory_space<vmem>>, %arg12: memref<32x64xf32, #tpu.memory_space<vmem>>, %arg13: memref<1x64xf32, #tpu.memory_space<vmem>>, %arg14: memref<48x160xf32, #tpu.memory_space<vmem>>, %arg15: memref<1x160xf32, #tpu.memory_space<vmem>>, %arg16: memref<1x32xf32, #tpu.memory_space<vmem>>, %arg17: memref<40x160xf32, #tpu.memory_space<vmem>>, %arg18: memref<1x160xf32, #tpu.memory_space<vmem>>, %arg19: memref<1x32xf32, #tpu.memory_space<vmem>>, %arg20: memref<32x32xf32, #tpu.memory_space<vmem>>, %arg21: memref<1x32xf32, #tpu.memory_space<vmem>>, %arg22: memref<32x32xf32, #tpu.memory_space<vmem>>, %arg23: memref<1x32xf32, #tpu.memory_space<vmem>>, %arg24: memref<1x32xf32, #tpu.memory_space<vmem>>, %arg25: memref<1x32xf32, #tpu.memory_space<vmem>>, %arg26: memref<16x32xf32, #tpu.memory_space<vmem>>, %arg27: memref<8x8xf32, #tpu.memory_space<vmem>>, %arg28: memref<7x16x32xf32, #tpu.memory_space<vmem>>) attributes {dimension_semantics = [], scalar_prefetch = 0 : i64, scratch_operands = 0 : i64, tpu.core_type = #tpu.core_type<tc>} {
    %c0 = arith.constant 0 : index
    %c0_0 = arith.constant 0 : index
    %0 = vector.load %arg0[%c0, %c0_0] : memref<16x32xf32, #tpu.memory_space<vmem>>, vector<16x32xf32>
    %c0_1 = arith.constant 0 : index
    %c0_2 = arith.constant 0 : index
    %1 = vector.load %arg1[%c0_1, %c0_2] : memref<16x48xf32, #tpu.memory_space<vmem>>, vector<16x48xf32>
    %c0_3 = arith.constant 0 : index
    %c0_4 = arith.constant 0 : index
    %2 = vector.load %arg14[%c0_3, %c0_4] : memref<48x160xf32, #tpu.memory_space<vmem>>, vector<48x160xf32>
    %cst = arith.constant dense<0.000000e+00> : vector<16x160xf32>
    %3 = tpu.matmul %1, %2, %cst {dimension_numbers = #tpu.dot_dimension_numbers<[1], [0], [0], [1], [0, 0, 1, 1], [], []>} : vector<16x48xf32>, vector<48x160xf32>, vector<16x160xf32> -> vector<16x160xf32>
    %c0_5 = arith.constant 0 : index
    %c0_6 = arith.constant 0 : index
    %4 = vector.load %arg15[%c0_5, %c0_6] : memref<1x160xf32, #tpu.memory_space<vmem>>, vector<1x160xf32>
    %5 = vector.broadcast %4 : vector<1x160xf32> to vector<16x160xf32>
    %6 = arith.addf %3, %5 : vector<16x160xf32>
    %7 = vector.extract_strided_slice %6 {offsets = [0, 0], sizes = [16, 128], strides = [1, 1]} : vector<16x160xf32> to vector<16x128xf32>
    %8 = vector.extract_strided_slice %7 {offsets = [0, 0], sizes = [16, 32], strides = [1, 1]} : vector<16x128xf32> to vector<16x32xf32>
    %9 = vector.extract_strided_slice %7 {offsets = [0, 32], sizes = [16, 32], strides = [1, 1]} : vector<16x128xf32> to vector<16x32xf32>
    %10 = vector.extract_strided_slice %7 {offsets = [0, 64], sizes = [16, 32], strides = [1, 1]} : vector<16x128xf32> to vector<16x32xf32>
    %11 = vector.extract_strided_slice %7 {offsets = [0, 96], sizes = [16, 32], strides = [1, 1]} : vector<16x128xf32> to vector<16x32xf32>
    %12 = tpu.concatenate %8, %9, %10, %11 in 0 : vector<16x32xf32>, vector<16x32xf32>, vector<16x32xf32>, vector<16x32xf32> -> vector<64x32xf32>
    %13 = vector.extract_strided_slice %6 {offsets = [0, 128], sizes = [16, 32], strides = [1, 1]} : vector<16x160xf32> to vector<16x32xf32>
    %c0_7 = arith.constant 0 : index
    %c0_8 = arith.constant 0 : index
    %14 = vector.load %arg7[%c0_7, %c0_8] : memref<32x64xf32, #tpu.memory_space<vmem>>, vector<32x64xf32>
    %15 = tpu.transpose %13, [1, 0] : vector<16x32xf32> -> vector<32x16xf32>
    %16 = tpu.concatenate %15, %15, %15, %15 in 1 : vector<32x16xf32>, vector<32x16xf32>, vector<32x16xf32>, vector<32x16xf32> -> vector<32x64xf32>
    %17 = arith.mulf %16, %14 : vector<32x64xf32>
    %c0_9 = arith.constant 0 : index
    %c0_10 = arith.constant 0 : index
    %18 = vector.load %arg2[%c0_9, %c0_10] : memref<20x40xf32, #tpu.memory_space<vmem>>, vector<20x40xf32>
    %c0_11 = arith.constant 0 : index
    %c0_12 = arith.constant 0 : index
    %19 = vector.load %arg17[%c0_11, %c0_12] : memref<40x160xf32, #tpu.memory_space<vmem>>, vector<40x160xf32>
    %cst_13 = arith.constant dense<0.000000e+00> : vector<20x160xf32>
    %20 = tpu.matmul %18, %19, %cst_13 {dimension_numbers = #tpu.dot_dimension_numbers<[1], [0], [0], [1], [0, 0, 1, 1], [], []>} : vector<20x40xf32>, vector<40x160xf32>, vector<20x160xf32> -> vector<20x160xf32>
    %c0_14 = arith.constant 0 : index
    %c0_15 = arith.constant 0 : index
    %21 = vector.load %arg18[%c0_14, %c0_15] : memref<1x160xf32, #tpu.memory_space<vmem>>, vector<1x160xf32>
    %22 = vector.broadcast %21 : vector<1x160xf32> to vector<20x160xf32>
    %23 = arith.addf %20, %22 : vector<20x160xf32>
    %24 = vector.extract_strided_slice %23 {offsets = [0, 0], sizes = [20, 128], strides = [1, 1]} : vector<20x160xf32> to vector<20x128xf32>
    %25 = vector.extract_strided_slice %24 {offsets = [0, 0], sizes = [20, 32], strides = [1, 1]} : vector<20x128xf32> to vector<20x32xf32>
    %26 = vector.extract_strided_slice %24 {offsets = [0, 32], sizes = [20, 32], strides = [1, 1]} : vector<20x128xf32> to vector<20x32xf32>
    %27 = vector.extract_strided_slice %24 {offsets = [0, 64], sizes = [20, 32], strides = [1, 1]} : vector<20x128xf32> to vector<20x32xf32>
    %28 = vector.extract_strided_slice %24 {offsets = [0, 96], sizes = [20, 32], strides = [1, 1]} : vector<20x128xf32> to vector<20x32xf32>
    %29 = tpu.concatenate %25, %26, %27, %28 in 0 : vector<20x32xf32>, vector<20x32xf32>, vector<20x32xf32>, vector<20x32xf32> -> vector<80x32xf32>
    %30 = vector.extract_strided_slice %23 {offsets = [0, 128], sizes = [20, 32], strides = [1, 1]} : vector<20x160xf32> to vector<20x32xf32>
    %c0_16 = arith.constant 0 : index
    %c0_17 = arith.constant 0 : index
    %31 = vector.load %arg8[%c0_16, %c0_17] : memref<32x80xf32, #tpu.memory_space<vmem>>, vector<32x80xf32>
    %32 = tpu.transpose %30, [1, 0] : vector<20x32xf32> -> vector<32x20xf32>
    %33 = tpu.concatenate %32, %32, %32, %32 in 1 : vector<32x20xf32>, vector<32x20xf32>, vector<32x20xf32>, vector<32x20xf32> -> vector<32x80xf32>
    %34 = arith.mulf %33, %31 : vector<32x80xf32>
    %c0_18 = arith.constant 0 : index
    %c0_19 = arith.constant 0 : index
    %c0_20 = arith.constant 0 : index
    %35 = vector.load %arg28[%c0_18, %c0_19, %c0_20] : memref<7x16x32xf32, #tpu.memory_space<vmem>>, vector<1x16x32xf32>
    %36 = vector.shape_cast %35 : vector<1x16x32xf32> to vector<16x32xf32>
    %37 = vector.shape_cast %0 : vector<16x32xf32> to vector<1x16x32xf32>
    tpu.vector_store %arg28[%c0_18, %c0_19, %c0_20], %37 {strides = array<i32>} : memref<7x16x32xf32, #tpu.memory_space<vmem>>, vector<1x16x32xf32>,
    %c0_21 = arith.constant 0 : index
    %c0_22 = arith.constant 0 : index
    %38 = vector.load %arg9[%c0_21, %c0_22] : memref<32x192xf32, #tpu.memory_space<vmem>>, vector<32x192xf32>
    %cst_23 = arith.constant dense<0.000000e+00> : vector<16x192xf32>
    %39 = tpu.matmul %0, %38, %cst_23 {dimension_numbers = #tpu.dot_dimension_numbers<[1], [0], [0], [1], [0, 0, 1, 1], [], []>} : vector<16x32xf32>, vector<32x192xf32>, vector<16x192xf32> -> vector<16x192xf32>
    %c0_24 = arith.constant 0 : index
    %c0_25 = arith.constant 0 : index
    %40 = vector.load %arg10[%c0_24, %c0_25] : memref<1x192xf32, #tpu.memory_space<vmem>>, vector<1x192xf32>
    %41 = vector.broadcast %40 : vector<1x192xf32> to vector<16x192xf32>
    %42 = arith.addf %39, %41 : vector<16x192xf32>
    %43 = vector.extract_strided_slice %42 {offsets = [0, 0], sizes = [16, 128], strides = [1, 1]} : vector<16x192xf32> to vector<16x128xf32>
    %44 = vector.extract_strided_slice %43 {offsets = [0, 0], sizes = [16, 32], strides = [1, 1]} : vector<16x128xf32> to vector<16x32xf32>
    %45 = vector.extract_strided_slice %43 {offsets = [0, 32], sizes = [16, 32], strides = [1, 1]} : vector<16x128xf32> to vector<16x32xf32>
    %46 = vector.extract_strided_slice %43 {offsets = [0, 64], sizes = [16, 32], strides = [1, 1]} : vector<16x128xf32> to vector<16x32xf32>
    %47 = vector.extract_strided_slice %43 {offsets = [0, 96], sizes = [16, 32], strides = [1, 1]} : vector<16x128xf32> to vector<16x32xf32>
    %48 = tpu.concatenate %44, %45, %46, %47 in 0 : vector<16x32xf32>, vector<16x32xf32>, vector<16x32xf32>, vector<16x32xf32> -> vector<64x32xf32>
    %49 = vector.extract_strided_slice %42 {offsets = [0, 128], sizes = [16, 32], strides = [1, 1]} : vector<16x192xf32> to vector<16x32xf32>
    %50 = vector.extract_strided_slice %42 {offsets = [0, 160], sizes = [16, 32], strides = [1, 1]} : vector<16x192xf32> to vector<16x32xf32>
    %c0_26 = arith.constant 0 : index
    %c0_27 = arith.constant 0 : index
    %51 = vector.load %arg6[%c0_26, %c0_27] : memref<32x64xf32, #tpu.memory_space<vmem>>, vector<32x64xf32>
    %52 = tpu.transpose %50, [1, 0] : vector<16x32xf32> -> vector<32x16xf32>
    %53 = tpu.concatenate %52, %52, %52, %52 in 1 : vector<32x16xf32>, vector<32x16xf32>, vector<32x16xf32>, vector<32x16xf32> -> vector<32x64xf32>
    %54 = arith.mulf %53, %51 : vector<32x64xf32>
    %c0_28 = arith.constant 0 : index
    %c0_29 = arith.constant 0 : index
    %55 = vector.load %arg3[%c0_28, %c0_29] : memref<16x64xf32, #tpu.memory_space<vmem>>, vector<16x64xf32>
    %c0_30 = arith.constant 0 : index
    %c0_31 = arith.constant 0 : index
    %56 = vector.load %arg11[%c0_30, %c0_31] : memref<1x32xf32, #tpu.memory_space<vmem>>, vector<1x32xf32>
    %cst_32 = arith.constant dense<0.000000e+00> : vector<16x64xf32>
    %57 = tpu.matmul %49, %54, %cst_32 {dimension_numbers = #tpu.dot_dimension_numbers<[1], [0], [0], [1], [0, 0, 1, 1], [], []>} : vector<16x32xf32>, vector<32x64xf32>, vector<16x64xf32> -> vector<16x64xf32>
    %cst_33 = arith.constant dense<0xFF800000> : vector<16xf32>
    %58 = vector.multi_reduction <maximumf>, %57, %cst_33 [1] : vector<16x64xf32> to vector<16xf32>
    %59 = vector.shape_cast %58 : vector<16xf32> to vector<16x1xf32>
    %60 = vector.broadcast %59 : vector<16x1xf32> to vector<16x64xf32>
    %61 = arith.subf %57, %60 : vector<16x64xf32>
    %62 = math.exp %61 : vector<16x64xf32>
    %63 = arith.mulf %62, %55 : vector<16x64xf32>
    %64 = vector.extract_strided_slice %63 {offsets = [0, 0], sizes = [16, 16], strides = [1, 1]} : vector<16x64xf32> to vector<16x16xf32>
    %cst_34 = arith.constant dense<0.000000e+00> : vector<16xf32>
    %65 = vector.multi_reduction <add>, %64, %cst_34 [1] : vector<16x16xf32> to vector<16xf32>
    %66 = vector.shape_cast %65 : vector<16xf32> to vector<16x1xf32>
    %67 = tpu.reciprocal %66 : vector<16x1xf32> -> vector<16x1xf32>
    %68 = vector.broadcast %67 : vector<16x1xf32> to vector<16x16xf32>
    %69 = arith.mulf %64, %68 : vector<16x16xf32>
    %70 = vector.extract_strided_slice %63 {offsets = [0, 16], sizes = [16, 16], strides = [1, 1]} : vector<16x64xf32> to vector<16x16xf32>
    %cst_35 = arith.constant dense<0.000000e+00> : vector<16xf32>
    %71 = vector.multi_reduction <add>, %70, %cst_35 [1] : vector<16x16xf32> to vector<16xf32>
    %72 = vector.shape_cast %71 : vector<16xf32> to vector<16x1xf32>
    %73 = tpu.reciprocal %72 : vector<16x1xf32> -> vector<16x1xf32>
    %74 = vector.broadcast %73 : vector<16x1xf32> to vector<16x16xf32>
    %75 = arith.mulf %70, %74 : vector<16x16xf32>
    %76 = vector.extract_strided_slice %63 {offsets = [0, 32], sizes = [16, 16], strides = [1, 1]} : vector<16x64xf32> to vector<16x16xf32>
    %cst_36 = arith.constant dense<0.000000e+00> : vector<16xf32>
    %77 = vector.multi_reduction <add>, %76, %cst_36 [1] : vector<16x16xf32> to vector<16xf32>
    %78 = vector.shape_cast %77 : vector<16xf32> to vector<16x1xf32>
    %79 = tpu.reciprocal %78 : vector<16x1xf32> -> vector<16x1xf32>
    %80 = vector.broadcast %79 : vector<16x1xf32> to vector<16x16xf32>
    %81 = arith.mulf %76, %80 : vector<16x16xf32>
    %82 = vector.extract_strided_slice %63 {offsets = [0, 48], sizes = [16, 16], strides = [1, 1]} : vector<16x64xf32> to vector<16x16xf32>
    %cst_37 = arith.constant dense<0.000000e+00> : vector<16xf32>
    %83 = vector.multi_reduction <add>, %82, %cst_37 [1] : vector<16x16xf32> to vector<16xf32>
    %84 = vector.shape_cast %83 : vector<16xf32> to vector<16x1xf32>
    %85 = tpu.reciprocal %84 : vector<16x1xf32> -> vector<16x1xf32>
    %86 = vector.broadcast %85 : vector<16x1xf32> to vector<16x16xf32>
    %87 = arith.mulf %82, %86 : vector<16x16xf32>
    %88 = tpu.concatenate %69, %75, %81, %87 in 1 : vector<16x16xf32>, vector<16x16xf32>, vector<16x16xf32>, vector<16x16xf32> -> vector<16x64xf32>
    %cst_38 = arith.constant dense<0.000000e+00> : vector<16x32xf32>
    %89 = tpu.matmul %88, %48, %cst_38 {dimension_numbers = #tpu.dot_dimension_numbers<[1], [0], [0], [1], [0, 0, 1, 1], [], []>} : vector<16x64xf32>, vector<64x32xf32>, vector<16x32xf32> -> vector<16x32xf32>
    %90 = vector.broadcast %56 : vector<1x32xf32> to vector<16x32xf32>
    %91 = arith.addf %89, %90 : vector<16x32xf32>
    %92 = arith.addf %0, %91 : vector<16x32xf32>
    %c0_39 = arith.constant 0 : index
    %c0_40 = arith.constant 0 : index
    %93 = vector.load %arg12[%c0_39, %c0_40] : memref<32x64xf32, #tpu.memory_space<vmem>>, vector<32x64xf32>
    %cst_41 = arith.constant dense<0.000000e+00> : vector<16x64xf32>
    %94 = tpu.matmul %92, %93, %cst_41 {dimension_numbers = #tpu.dot_dimension_numbers<[1], [0], [0], [1], [0, 0, 1, 1], [], []>} : vector<16x32xf32>, vector<32x64xf32>, vector<16x64xf32> -> vector<16x64xf32>
    %c0_42 = arith.constant 0 : index
    %c0_43 = arith.constant 0 : index
    %95 = vector.load %arg13[%c0_42, %c0_43] : memref<1x64xf32, #tpu.memory_space<vmem>>, vector<1x64xf32>
    %96 = vector.broadcast %95 : vector<1x64xf32> to vector<16x64xf32>
    %97 = arith.addf %94, %96 : vector<16x64xf32>
    %98 = vector.extract_strided_slice %97 {offsets = [0, 0], sizes = [16, 32], strides = [1, 1]} : vector<16x64xf32> to vector<16x32xf32>
    %c0_44 = arith.constant 0 : index
    %c0_45 = arith.constant 0 : index
    %99 = vector.load %arg4[%c0_44, %c0_45] : memref<16x64xf32, #tpu.memory_space<vmem>>, vector<16x64xf32>
    %c0_46 = arith.constant 0 : index
    %c0_47 = arith.constant 0 : index
    %100 = vector.load %arg16[%c0_46, %c0_47] : memref<1x32xf32, #tpu.memory_space<vmem>>, vector<1x32xf32>
    %cst_48 = arith.constant dense<0.000000e+00> : vector<16x64xf32>
    %101 = tpu.matmul %98, %17, %cst_48 {dimension_numbers = #tpu.dot_dimension_numbers<[1], [0], [0], [1], [0, 0, 1, 1], [], []>} : vector<16x32xf32>, vector<32x64xf32>, vector<16x64xf32> -> vector<16x64xf32>
    %cst_49 = arith.constant dense<0xFF800000> : vector<16xf32>
    %102 = vector.multi_reduction <maximumf>, %101, %cst_49 [1] : vector<16x64xf32> to vector<16xf32>
    %103 = vector.shape_cast %102 : vector<16xf32> to vector<16x1xf32>
    %104 = vector.broadcast %103 : vector<16x1xf32> to vector<16x64xf32>
    %105 = arith.subf %101, %104 : vector<16x64xf32>
    %106 = math.exp %105 : vector<16x64xf32>
    %107 = arith.mulf %106, %99 : vector<16x64xf32>
    %108 = vector.extract_strided_slice %107 {offsets = [0, 0], sizes = [16, 16], strides = [1, 1]} : vector<16x64xf32> to vector<16x16xf32>
    %cst_50 = arith.constant dense<0.000000e+00> : vector<16xf32>
    %109 = vector.multi_reduction <add>, %108, %cst_50 [1] : vector<16x16xf32> to vector<16xf32>
    %110 = vector.shape_cast %109 : vector<16xf32> to vector<16x1xf32>
    %111 = tpu.reciprocal %110 : vector<16x1xf32> -> vector<16x1xf32>
    %112 = vector.broadcast %111 : vector<16x1xf32> to vector<16x16xf32>
    %113 = arith.mulf %108, %112 : vector<16x16xf32>
    %114 = vector.extract_strided_slice %107 {offsets = [0, 16], sizes = [16, 16], strides = [1, 1]} : vector<16x64xf32> to vector<16x16xf32>
    %cst_51 = arith.constant dense<0.000000e+00> : vector<16xf32>
    %115 = vector.multi_reduction <add>, %114, %cst_51 [1] : vector<16x16xf32> to vector<16xf32>
    %116 = vector.shape_cast %115 : vector<16xf32> to vector<16x1xf32>
    %117 = tpu.reciprocal %116 : vector<16x1xf32> -> vector<16x1xf32>
    %118 = vector.broadcast %117 : vector<16x1xf32> to vector<16x16xf32>
    %119 = arith.mulf %114, %118 : vector<16x16xf32>
    %120 = vector.extract_strided_slice %107 {offsets = [0, 32], sizes = [16, 16], strides = [1, 1]} : vector<16x64xf32> to vector<16x16xf32>
    %cst_52 = arith.constant dense<0.000000e+00> : vector<16xf32>
    %121 = vector.multi_reduction <add>, %120, %cst_52 [1] : vector<16x16xf32> to vector<16xf32>
    %122 = vector.shape_cast %121 : vector<16xf32> to vector<16x1xf32>
    %123 = tpu.reciprocal %122 : vector<16x1xf32> -> vector<16x1xf32>
    %124 = vector.broadcast %123 : vector<16x1xf32> to vector<16x16xf32>
    %125 = arith.mulf %120, %124 : vector<16x16xf32>
    %126 = vector.extract_strided_slice %107 {offsets = [0, 48], sizes = [16, 16], strides = [1, 1]} : vector<16x64xf32> to vector<16x16xf32>
    %cst_53 = arith.constant dense<0.000000e+00> : vector<16xf32>
    %127 = vector.multi_reduction <add>, %126, %cst_53 [1] : vector<16x16xf32> to vector<16xf32>
    %128 = vector.shape_cast %127 : vector<16xf32> to vector<16x1xf32>
    %129 = tpu.reciprocal %128 : vector<16x1xf32> -> vector<16x1xf32>
    %130 = vector.broadcast %129 : vector<16x1xf32> to vector<16x16xf32>
    %131 = arith.mulf %126, %130 : vector<16x16xf32>
    %132 = tpu.concatenate %113, %119, %125, %131 in 1 : vector<16x16xf32>, vector<16x16xf32>, vector<16x16xf32>, vector<16x16xf32> -> vector<16x64xf32>
    %cst_54 = arith.constant dense<0.000000e+00> : vector<16x32xf32>
    %133 = tpu.matmul %132, %12, %cst_54 {dimension_numbers = #tpu.dot_dimension_numbers<[1], [0], [0], [1], [0, 0, 1, 1], [], []>} : vector<16x64xf32>, vector<64x32xf32>, vector<16x32xf32> -> vector<16x32xf32>
    %134 = vector.broadcast %100 : vector<1x32xf32> to vector<16x32xf32>
    %135 = arith.addf %133, %134 : vector<16x32xf32>
    %136 = vector.extract_strided_slice %97 {offsets = [0, 32], sizes = [16, 32], strides = [1, 1]} : vector<16x64xf32> to vector<16x32xf32>
    %c0_55 = arith.constant 0 : index
    %c0_56 = arith.constant 0 : index
    %137 = vector.load %arg5[%c0_55, %c0_56] : memref<16x80xf32, #tpu.memory_space<vmem>>, vector<16x80xf32>
    %c0_57 = arith.constant 0 : index
    %c0_58 = arith.constant 0 : index
    %138 = vector.load %arg19[%c0_57, %c0_58] : memref<1x32xf32, #tpu.memory_space<vmem>>, vector<1x32xf32>
    %cst_59 = arith.constant dense<0.000000e+00> : vector<16x80xf32>
    %139 = tpu.matmul %136, %34, %cst_59 {dimension_numbers = #tpu.dot_dimension_numbers<[1], [0], [0], [1], [0, 0, 1, 1], [], []>} : vector<16x32xf32>, vector<32x80xf32>, vector<16x80xf32> -> vector<16x80xf32>
    %cst_60 = arith.constant dense<0xFF800000> : vector<16xf32>
    %140 = vector.multi_reduction <maximumf>, %139, %cst_60 [1] : vector<16x80xf32> to vector<16xf32>
    %141 = vector.shape_cast %140 : vector<16xf32> to vector<16x1xf32>
    %142 = vector.broadcast %141 : vector<16x1xf32> to vector<16x80xf32>
    %143 = arith.subf %139, %142 : vector<16x80xf32>
    %144 = math.exp %143 : vector<16x80xf32>
    %145 = arith.mulf %144, %137 : vector<16x80xf32>
    %146 = vector.extract_strided_slice %145 {offsets = [0, 0], sizes = [16, 20], strides = [1, 1]} : vector<16x80xf32> to vector<16x20xf32>
    %cst_61 = arith.constant dense<0.000000e+00> : vector<16xf32>
    %147 = vector.multi_reduction <add>, %146, %cst_61 [1] : vector<16x20xf32> to vector<16xf32>
    %148 = vector.shape_cast %147 : vector<16xf32> to vector<16x1xf32>
    %149 = tpu.reciprocal %148 : vector<16x1xf32> -> vector<16x1xf32>
    %150 = vector.broadcast %149 : vector<16x1xf32> to vector<16x20xf32>
    %151 = arith.mulf %146, %150 : vector<16x20xf32>
    %152 = vector.extract_strided_slice %145 {offsets = [0, 20], sizes = [16, 20], strides = [1, 1]} : vector<16x80xf32> to vector<16x20xf32>
    %cst_62 = arith.constant dense<0.000000e+00> : vector<16xf32>
    %153 = vector.multi_reduction <add>, %152, %cst_62 [1] : vector<16x20xf32> to vector<16xf32>
    %154 = vector.shape_cast %153 : vector<16xf32> to vector<16x1xf32>
    %155 = tpu.reciprocal %154 : vector<16x1xf32> -> vector<16x1xf32>
    %156 = vector.broadcast %155 : vector<16x1xf32> to vector<16x20xf32>
    %157 = arith.mulf %152, %156 : vector<16x20xf32>
    %158 = vector.extract_strided_slice %145 {offsets = [0, 40], sizes = [16, 20], strides = [1, 1]} : vector<16x80xf32> to vector<16x20xf32>
    %cst_63 = arith.constant dense<0.000000e+00> : vector<16xf32>
    %159 = vector.multi_reduction <add>, %158, %cst_63 [1] : vector<16x20xf32> to vector<16xf32>
    %160 = vector.shape_cast %159 : vector<16xf32> to vector<16x1xf32>
    %161 = tpu.reciprocal %160 : vector<16x1xf32> -> vector<16x1xf32>
    %162 = vector.broadcast %161 : vector<16x1xf32> to vector<16x20xf32>
    %163 = arith.mulf %158, %162 : vector<16x20xf32>
    %164 = vector.extract_strided_slice %145 {offsets = [0, 60], sizes = [16, 20], strides = [1, 1]} : vector<16x80xf32> to vector<16x20xf32>
    %cst_64 = arith.constant dense<0.000000e+00> : vector<16xf32>
    %165 = vector.multi_reduction <add>, %164, %cst_64 [1] : vector<16x20xf32> to vector<16xf32>
    %166 = vector.shape_cast %165 : vector<16xf32> to vector<16x1xf32>
    %167 = tpu.reciprocal %166 : vector<16x1xf32> -> vector<16x1xf32>
    %168 = vector.broadcast %167 : vector<16x1xf32> to vector<16x20xf32>
    %169 = arith.mulf %164, %168 : vector<16x20xf32>
    %170 = tpu.concatenate %151, %157, %163, %169 in 1 : vector<16x20xf32>, vector<16x20xf32>, vector<16x20xf32>, vector<16x20xf32> -> vector<16x80xf32>
    %cst_65 = arith.constant dense<0.000000e+00> : vector<16x32xf32>
    %171 = tpu.matmul %170, %29, %cst_65 {dimension_numbers = #tpu.dot_dimension_numbers<[1], [0], [0], [1], [0, 0, 1, 1], [], []>} : vector<16x80xf32>, vector<80x32xf32>, vector<16x32xf32> -> vector<16x32xf32>
    %172 = vector.broadcast %138 : vector<1x32xf32> to vector<16x32xf32>
    %173 = arith.addf %171, %172 : vector<16x32xf32>
    %174 = arith.addf %92, %135 : vector<16x32xf32>
    %175 = arith.addf %174, %173 : vector<16x32xf32>
    %c0_66 = arith.constant 0 : index
    %c0_67 = arith.constant 0 : index
    %176 = vector.load %arg20[%c0_66, %c0_67] : memref<32x32xf32, #tpu.memory_space<vmem>>, vector<32x32xf32>
    %cst_68 = arith.constant dense<0.000000e+00> : vector<16x32xf32>
    %177 = tpu.matmul %175, %176, %cst_68 {dimension_numbers = #tpu.dot_dimension_numbers<[1], [0], [0], [1], [0, 0, 1, 1], [], []>} : vector<16x32xf32>, vector<32x32xf32>, vector<16x32xf32> -> vector<16x32xf32>
    %c0_69 = arith.constant 0 : index
    %c0_70 = arith.constant 0 : index
    %178 = vector.load %arg21[%c0_69, %c0_70] : memref<1x32xf32, #tpu.memory_space<vmem>>, vector<1x32xf32>
    %179 = vector.broadcast %178 : vector<1x32xf32> to vector<16x32xf32>
    %180 = arith.addf %177, %179 : vector<16x32xf32>
    %cst_71 = arith.constant 0.000000e+00 : f32
    %181 = vector.broadcast %cst_71 : f32 to vector<16x32xf32>
    %182 = arith.maximumf %180, %181 : vector<16x32xf32>
    %c0_72 = arith.constant 0 : index
    %c0_73 = arith.constant 0 : index
    %183 = vector.load %arg22[%c0_72, %c0_73] : memref<32x32xf32, #tpu.memory_space<vmem>>, vector<32x32xf32>
    %cst_74 = arith.constant dense<0.000000e+00> : vector<16x32xf32>
    %184 = tpu.matmul %182, %183, %cst_74 {dimension_numbers = #tpu.dot_dimension_numbers<[1], [0], [0], [1], [0, 0, 1, 1], [], []>} : vector<16x32xf32>, vector<32x32xf32>, vector<16x32xf32> -> vector<16x32xf32>
    %185 = arith.addf %175, %184 : vector<16x32xf32>
    %c0_75 = arith.constant 0 : index
    %c0_76 = arith.constant 0 : index
    %186 = vector.load %arg23[%c0_75, %c0_76] : memref<1x32xf32, #tpu.memory_space<vmem>>, vector<1x32xf32>
    %187 = vector.broadcast %186 : vector<1x32xf32> to vector<16x32xf32>
    %188 = arith.addf %185, %187 : vector<16x32xf32>
    %c1 = arith.constant 1 : index
    %c0_77 = arith.constant 0 : index
    %c0_78 = arith.constant 0 : index
    %189 = vector.load %arg28[%c1, %c0_77, %c0_78] : memref<7x16x32xf32, #tpu.memory_space<vmem>>, vector<1x16x32xf32>
    %190 = vector.shape_cast %189 : vector<1x16x32xf32> to vector<16x32xf32>
    %191 = vector.shape_cast %188 : vector<16x32xf32> to vector<1x16x32xf32>
    tpu.vector_store %arg28[%c1, %c0_77, %c0_78], %191 {strides = array<i32>} : memref<7x16x32xf32, #tpu.memory_space<vmem>>, vector<1x16x32xf32>,
    %c0_79 = arith.constant 0 : index
    %c0_80 = arith.constant 0 : index
    %192 = vector.load %arg9[%c0_79, %c0_80] : memref<32x192xf32, #tpu.memory_space<vmem>>, vector<32x192xf32>
    %cst_81 = arith.constant dense<0.000000e+00> : vector<16x192xf32>
    %193 = tpu.matmul %188, %192, %cst_81 {dimension_numbers = #tpu.dot_dimension_numbers<[1], [0], [0], [1], [0, 0, 1, 1], [], []>} : vector<16x32xf32>, vector<32x192xf32>, vector<16x192xf32> -> vector<16x192xf32>
    %c0_82 = arith.constant 0 : index
    %c0_83 = arith.constant 0 : index
    %194 = vector.load %arg10[%c0_82, %c0_83] : memref<1x192xf32, #tpu.memory_space<vmem>>, vector<1x192xf32>
    %195 = vector.broadcast %194 : vector<1x192xf32> to vector<16x192xf32>
    %196 = arith.addf %193, %195 : vector<16x192xf32>
    %197 = vector.extract_strided_slice %196 {offsets = [0, 0], sizes = [16, 128], strides = [1, 1]} : vector<16x192xf32> to vector<16x128xf32>
    %198 = vector.extract_strided_slice %197 {offsets = [0, 0], sizes = [16, 32], strides = [1, 1]} : vector<16x128xf32> to vector<16x32xf32>
    %199 = vector.extract_strided_slice %197 {offsets = [0, 32], sizes = [16, 32], strides = [1, 1]} : vector<16x128xf32> to vector<16x32xf32>
    %200 = vector.extract_strided_slice %197 {offsets = [0, 64], sizes = [16, 32], strides = [1, 1]} : vector<16x128xf32> to vector<16x32xf32>
    %201 = vector.extract_strided_slice %197 {offsets = [0, 96], sizes = [16, 32], strides = [1, 1]} : vector<16x128xf32> to vector<16x32xf32>
    %202 = tpu.concatenate %198, %199, %200, %201 in 0 : vector<16x32xf32>, vector<16x32xf32>, vector<16x32xf32>, vector<16x32xf32> -> vector<64x32xf32>
    %203 = vector.extract_strided_slice %196 {offsets = [0, 128], sizes = [16, 32], strides = [1, 1]} : vector<16x192xf32> to vector<16x32xf32>
    %204 = vector.extract_strided_slice %196 {offsets = [0, 160], sizes = [16, 32], strides = [1, 1]} : vector<16x192xf32> to vector<16x32xf32>
    %c0_84 = arith.constant 0 : index
    %c0_85 = arith.constant 0 : index
    %205 = vector.load %arg6[%c0_84, %c0_85] : memref<32x64xf32, #tpu.memory_space<vmem>>, vector<32x64xf32>
    %206 = tpu.transpose %204, [1, 0] : vector<16x32xf32> -> vector<32x16xf32>
    %207 = tpu.concatenate %206, %206, %206, %206 in 1 : vector<32x16xf32>, vector<32x16xf32>, vector<32x16xf32>, vector<32x16xf32> -> vector<32x64xf32>
    %208 = arith.mulf %207, %205 : vector<32x64xf32>
    %c0_86 = arith.constant 0 : index
    %c0_87 = arith.constant 0 : index
    %209 = vector.load %arg3[%c0_86, %c0_87] : memref<16x64xf32, #tpu.memory_space<vmem>>, vector<16x64xf32>
    %c0_88 = arith.constant 0 : index
    %c0_89 = arith.constant 0 : index
    %210 = vector.load %arg11[%c0_88, %c0_89] : memref<1x32xf32, #tpu.memory_space<vmem>>, vector<1x32xf32>
    %cst_90 = arith.constant dense<0.000000e+00> : vector<16x64xf32>
    %211 = tpu.matmul %203, %208, %cst_90 {dimension_numbers = #tpu.dot_dimension_numbers<[1], [0], [0], [1], [0, 0, 1, 1], [], []>} : vector<16x32xf32>, vector<32x64xf32>, vector<16x64xf32> -> vector<16x64xf32>
    %cst_91 = arith.constant dense<0xFF800000> : vector<16xf32>
    %212 = vector.multi_reduction <maximumf>, %211, %cst_91 [1] : vector<16x64xf32> to vector<16xf32>
    %213 = vector.shape_cast %212 : vector<16xf32> to vector<16x1xf32>
    %214 = vector.broadcast %213 : vector<16x1xf32> to vector<16x64xf32>
    %215 = arith.subf %211, %214 : vector<16x64xf32>
    %216 = math.exp %215 : vector<16x64xf32>
    %217 = arith.mulf %216, %209 : vector<16x64xf32>
    %218 = vector.extract_strided_slice %217 {offsets = [0, 0], sizes = [16, 16], strides = [1, 1]} : vector<16x64xf32> to vector<16x16xf32>
    %cst_92 = arith.constant dense<0.000000e+00> : vector<16xf32>
    %219 = vector.multi_reduction <add>, %218, %cst_92 [1] : vector<16x16xf32> to vector<16xf32>
    %220 = vector.shape_cast %219 : vector<16xf32> to vector<16x1xf32>
    %221 = tpu.reciprocal %220 : vector<16x1xf32> -> vector<16x1xf32>
    %222 = vector.broadcast %221 : vector<16x1xf32> to vector<16x16xf32>
    %223 = arith.mulf %218, %222 : vector<16x16xf32>
    %224 = vector.extract_strided_slice %217 {offsets = [0, 16], sizes = [16, 16], strides = [1, 1]} : vector<16x64xf32> to vector<16x16xf32>
    %cst_93 = arith.constant dense<0.000000e+00> : vector<16xf32>
    %225 = vector.multi_reduction <add>, %224, %cst_93 [1] : vector<16x16xf32> to vector<16xf32>
    %226 = vector.shape_cast %225 : vector<16xf32> to vector<16x1xf32>
    %227 = tpu.reciprocal %226 : vector<16x1xf32> -> vector<16x1xf32>
    %228 = vector.broadcast %227 : vector<16x1xf32> to vector<16x16xf32>
    %229 = arith.mulf %224, %228 : vector<16x16xf32>
    %230 = vector.extract_strided_slice %217 {offsets = [0, 32], sizes = [16, 16], strides = [1, 1]} : vector<16x64xf32> to vector<16x16xf32>
    %cst_94 = arith.constant dense<0.000000e+00> : vector<16xf32>
    %231 = vector.multi_reduction <add>, %230, %cst_94 [1] : vector<16x16xf32> to vector<16xf32>
    %232 = vector.shape_cast %231 : vector<16xf32> to vector<16x1xf32>
    %233 = tpu.reciprocal %232 : vector<16x1xf32> -> vector<16x1xf32>
    %234 = vector.broadcast %233 : vector<16x1xf32> to vector<16x16xf32>
    %235 = arith.mulf %230, %234 : vector<16x16xf32>
    %236 = vector.extract_strided_slice %217 {offsets = [0, 48], sizes = [16, 16], strides = [1, 1]} : vector<16x64xf32> to vector<16x16xf32>
    %cst_95 = arith.constant dense<0.000000e+00> : vector<16xf32>
    %237 = vector.multi_reduction <add>, %236, %cst_95 [1] : vector<16x16xf32> to vector<16xf32>
    %238 = vector.shape_cast %237 : vector<16xf32> to vector<16x1xf32>
    %239 = tpu.reciprocal %238 : vector<16x1xf32> -> vector<16x1xf32>
    %240 = vector.broadcast %239 : vector<16x1xf32> to vector<16x16xf32>
    %241 = arith.mulf %236, %240 : vector<16x16xf32>
    %242 = tpu.concatenate %223, %229, %235, %241 in 1 : vector<16x16xf32>, vector<16x16xf32>, vector<16x16xf32>, vector<16x16xf32> -> vector<16x64xf32>
    %cst_96 = arith.constant dense<0.000000e+00> : vector<16x32xf32>
    %243 = tpu.matmul %242, %202, %cst_96 {dimension_numbers = #tpu.dot_dimension_numbers<[1], [0], [0], [1], [0, 0, 1, 1], [], []>} : vector<16x64xf32>, vector<64x32xf32>, vector<16x32xf32> -> vector<16x32xf32>
    %244 = vector.broadcast %210 : vector<1x32xf32> to vector<16x32xf32>
    %245 = arith.addf %243, %244 : vector<16x32xf32>
    %246 = arith.addf %188, %245 : vector<16x32xf32>
    %c0_97 = arith.constant 0 : index
    %c0_98 = arith.constant 0 : index
    %247 = vector.load %arg12[%c0_97, %c0_98] : memref<32x64xf32, #tpu.memory_space<vmem>>, vector<32x64xf32>
    %cst_99 = arith.constant dense<0.000000e+00> : vector<16x64xf32>
    %248 = tpu.matmul %246, %247, %cst_99 {dimension_numbers = #tpu.dot_dimension_numbers<[1], [0], [0], [1], [0, 0, 1, 1], [], []>} : vector<16x32xf32>, vector<32x64xf32>, vector<16x64xf32> -> vector<16x64xf32>
    %c0_100 = arith.constant 0 : index
    %c0_101 = arith.constant 0 : index
    %249 = vector.load %arg13[%c0_100, %c0_101] : memref<1x64xf32, #tpu.memory_space<vmem>>, vector<1x64xf32>
    %250 = vector.broadcast %249 : vector<1x64xf32> to vector<16x64xf32>
    %251 = arith.addf %248, %250 : vector<16x64xf32>
    %252 = vector.extract_strided_slice %251 {offsets = [0, 0], sizes = [16, 32], strides = [1, 1]} : vector<16x64xf32> to vector<16x32xf32>
    %c0_102 = arith.constant 0 : index
    %c0_103 = arith.constant 0 : index
    %253 = vector.load %arg4[%c0_102, %c0_103] : memref<16x64xf32, #tpu.memory_space<vmem>>, vector<16x64xf32>
    %c0_104 = arith.constant 0 : index
    %c0_105 = arith.constant 0 : index
    %254 = vector.load %arg16[%c0_104, %c0_105] : memref<1x32xf32, #tpu.memory_space<vmem>>, vector<1x32xf32>
    %cst_106 = arith.constant dense<0.000000e+00> : vector<16x64xf32>
    %255 = tpu.matmul %252, %17, %cst_106 {dimension_numbers = #tpu.dot_dimension_numbers<[1], [0], [0], [1], [0, 0, 1, 1], [], []>} : vector<16x32xf32>, vector<32x64xf32>, vector<16x64xf32> -> vector<16x64xf32>
    %cst_107 = arith.constant dense<0xFF800000> : vector<16xf32>
    %256 = vector.multi_reduction <maximumf>, %255, %cst_107 [1] : vector<16x64xf32> to vector<16xf32>
    %257 = vector.shape_cast %256 : vector<16xf32> to vector<16x1xf32>
    %258 = vector.broadcast %257 : vector<16x1xf32> to vector<16x64xf32>
    %259 = arith.subf %255, %258 : vector<16x64xf32>
    %260 = math.exp %259 : vector<16x64xf32>
    %261 = arith.mulf %260, %253 : vector<16x64xf32>
    %262 = vector.extract_strided_slice %261 {offsets = [0, 0], sizes = [16, 16], strides = [1, 1]} : vector<16x64xf32> to vector<16x16xf32>
    %cst_108 = arith.constant dense<0.000000e+00> : vector<16xf32>
    %263 = vector.multi_reduction <add>, %262, %cst_108 [1] : vector<16x16xf32> to vector<16xf32>
    %264 = vector.shape_cast %263 : vector<16xf32> to vector<16x1xf32>
    %265 = tpu.reciprocal %264 : vector<16x1xf32> -> vector<16x1xf32>
    %266 = vector.broadcast %265 : vector<16x1xf32> to vector<16x16xf32>
    %267 = arith.mulf %262, %266 : vector<16x16xf32>
    %268 = vector.extract_strided_slice %261 {offsets = [0, 16], sizes = [16, 16], strides = [1, 1]} : vector<16x64xf32> to vector<16x16xf32>
    %cst_109 = arith.constant dense<0.000000e+00> : vector<16xf32>
    %269 = vector.multi_reduction <add>, %268, %cst_109 [1] : vector<16x16xf32> to vector<16xf32>
    %270 = vector.shape_cast %269 : vector<16xf32> to vector<16x1xf32>
    %271 = tpu.reciprocal %270 : vector<16x1xf32> -> vector<16x1xf32>
    %272 = vector.broadcast %271 : vector<16x1xf32> to vector<16x16xf32>
    %273 = arith.mulf %268, %272 : vector<16x16xf32>
    %274 = vector.extract_strided_slice %261 {offsets = [0, 32], sizes = [16, 16], strides = [1, 1]} : vector<16x64xf32> to vector<16x16xf32>
    %cst_110 = arith.constant dense<0.000000e+00> : vector<16xf32>
    %275 = vector.multi_reduction <add>, %274, %cst_110 [1] : vector<16x16xf32> to vector<16xf32>
    %276 = vector.shape_cast %275 : vector<16xf32> to vector<16x1xf32>
    %277 = tpu.reciprocal %276 : vector<16x1xf32> -> vector<16x1xf32>
    %278 = vector.broadcast %277 : vector<16x1xf32> to vector<16x16xf32>
    %279 = arith.mulf %274, %278 : vector<16x16xf32>
    %280 = vector.extract_strided_slice %261 {offsets = [0, 48], sizes = [16, 16], strides = [1, 1]} : vector<16x64xf32> to vector<16x16xf32>
    %cst_111 = arith.constant dense<0.000000e+00> : vector<16xf32>
    %281 = vector.multi_reduction <add>, %280, %cst_111 [1] : vector<16x16xf32> to vector<16xf32>
    %282 = vector.shape_cast %281 : vector<16xf32> to vector<16x1xf32>
    %283 = tpu.reciprocal %282 : vector<16x1xf32> -> vector<16x1xf32>
    %284 = vector.broadcast %283 : vector<16x1xf32> to vector<16x16xf32>
    %285 = arith.mulf %280, %284 : vector<16x16xf32>
    %286 = tpu.concatenate %267, %273, %279, %285 in 1 : vector<16x16xf32>, vector<16x16xf32>, vector<16x16xf32>, vector<16x16xf32> -> vector<16x64xf32>
    %cst_112 = arith.constant dense<0.000000e+00> : vector<16x32xf32>
    %287 = tpu.matmul %286, %12, %cst_112 {dimension_numbers = #tpu.dot_dimension_numbers<[1], [0], [0], [1], [0, 0, 1, 1], [], []>} : vector<16x64xf32>, vector<64x32xf32>, vector<16x32xf32> -> vector<16x32xf32>
    %288 = vector.broadcast %254 : vector<1x32xf32> to vector<16x32xf32>
    %289 = arith.addf %287, %288 : vector<16x32xf32>
    %290 = vector.extract_strided_slice %251 {offsets = [0, 32], sizes = [16, 32], strides = [1, 1]} : vector<16x64xf32> to vector<16x32xf32>
    %c0_113 = arith.constant 0 : index
    %c0_114 = arith.constant 0 : index
    %291 = vector.load %arg5[%c0_113, %c0_114] : memref<16x80xf32, #tpu.memory_space<vmem>>, vector<16x80xf32>
    %c0_115 = arith.constant 0 : index
    %c0_116 = arith.constant 0 : index
    %292 = vector.load %arg19[%c0_115, %c0_116] : memref<1x32xf32, #tpu.memory_space<vmem>>, vector<1x32xf32>
    %cst_117 = arith.constant dense<0.000000e+00> : vector<16x80xf32>
    %293 = tpu.matmul %290, %34, %cst_117 {dimension_numbers = #tpu.dot_dimension_numbers<[1], [0], [0], [1], [0, 0, 1, 1], [], []>} : vector<16x32xf32>, vector<32x80xf32>, vector<16x80xf32> -> vector<16x80xf32>
    %cst_118 = arith.constant dense<0xFF800000> : vector<16xf32>
    %294 = vector.multi_reduction <maximumf>, %293, %cst_118 [1] : vector<16x80xf32> to vector<16xf32>
    %295 = vector.shape_cast %294 : vector<16xf32> to vector<16x1xf32>
    %296 = vector.broadcast %295 : vector<16x1xf32> to vector<16x80xf32>
    %297 = arith.subf %293, %296 : vector<16x80xf32>
    %298 = math.exp %297 : vector<16x80xf32>
    %299 = arith.mulf %298, %291 : vector<16x80xf32>
    %300 = vector.extract_strided_slice %299 {offsets = [0, 0], sizes = [16, 20], strides = [1, 1]} : vector<16x80xf32> to vector<16x20xf32>
    %cst_119 = arith.constant dense<0.000000e+00> : vector<16xf32>
    %301 = vector.multi_reduction <add>, %300, %cst_119 [1] : vector<16x20xf32> to vector<16xf32>
    %302 = vector.shape_cast %301 : vector<16xf32> to vector<16x1xf32>
    %303 = tpu.reciprocal %302 : vector<16x1xf32> -> vector<16x1xf32>
    %304 = vector.broadcast %303 : vector<16x1xf32> to vector<16x20xf32>
    %305 = arith.mulf %300, %304 : vector<16x20xf32>
    %306 = vector.extract_strided_slice %299 {offsets = [0, 20], sizes = [16, 20], strides = [1, 1]} : vector<16x80xf32> to vector<16x20xf32>
    %cst_120 = arith.constant dense<0.000000e+00> : vector<16xf32>
    %307 = vector.multi_reduction <add>, %306, %cst_120 [1] : vector<16x20xf32> to vector<16xf32>
    %308 = vector.shape_cast %307 : vector<16xf32> to vector<16x1xf32>
    %309 = tpu.reciprocal %308 : vector<16x1xf32> -> vector<16x1xf32>
    %310 = vector.broadcast %309 : vector<16x1xf32> to vector<16x20xf32>
    %311 = arith.mulf %306, %310 : vector<16x20xf32>
    %312 = vector.extract_strided_slice %299 {offsets = [0, 40], sizes = [16, 20], strides = [1, 1]} : vector<16x80xf32> to vector<16x20xf32>
    %cst_121 = arith.constant dense<0.000000e+00> : vector<16xf32>
    %313 = vector.multi_reduction <add>, %312, %cst_121 [1] : vector<16x20xf32> to vector<16xf32>
    %314 = vector.shape_cast %313 : vector<16xf32> to vector<16x1xf32>
    %315 = tpu.reciprocal %314 : vector<16x1xf32> -> vector<16x1xf32>
    %316 = vector.broadcast %315 : vector<16x1xf32> to vector<16x20xf32>
    %317 = arith.mulf %312, %316 : vector<16x20xf32>
    %318 = vector.extract_strided_slice %299 {offsets = [0, 60], sizes = [16, 20], strides = [1, 1]} : vector<16x80xf32> to vector<16x20xf32>
    %cst_122 = arith.constant dense<0.000000e+00> : vector<16xf32>
    %319 = vector.multi_reduction <add>, %318, %cst_122 [1] : vector<16x20xf32> to vector<16xf32>
    %320 = vector.shape_cast %319 : vector<16xf32> to vector<16x1xf32>
    %321 = tpu.reciprocal %320 : vector<16x1xf32> -> vector<16x1xf32>
    %322 = vector.broadcast %321 : vector<16x1xf32> to vector<16x20xf32>
    %323 = arith.mulf %318, %322 : vector<16x20xf32>
    %324 = tpu.concatenate %305, %311, %317, %323 in 1 : vector<16x20xf32>, vector<16x20xf32>, vector<16x20xf32>, vector<16x20xf32> -> vector<16x80xf32>
    %cst_123 = arith.constant dense<0.000000e+00> : vector<16x32xf32>
    %325 = tpu.matmul %324, %29, %cst_123 {dimension_numbers = #tpu.dot_dimension_numbers<[1], [0], [0], [1], [0, 0, 1, 1], [], []>} : vector<16x80xf32>, vector<80x32xf32>, vector<16x32xf32> -> vector<16x32xf32>
    %326 = vector.broadcast %292 : vector<1x32xf32> to vector<16x32xf32>
    %327 = arith.addf %325, %326 : vector<16x32xf32>
    %328 = arith.addf %246, %289 : vector<16x32xf32>
    %329 = arith.addf %328, %327 : vector<16x32xf32>
    %c0_124 = arith.constant 0 : index
    %c0_125 = arith.constant 0 : index
    %330 = vector.load %arg20[%c0_124, %c0_125] : memref<32x32xf32, #tpu.memory_space<vmem>>, vector<32x32xf32>
    %cst_126 = arith.constant dense<0.000000e+00> : vector<16x32xf32>
    %331 = tpu.matmul %329, %330, %cst_126 {dimension_numbers = #tpu.dot_dimension_numbers<[1], [0], [0], [1], [0, 0, 1, 1], [], []>} : vector<16x32xf32>, vector<32x32xf32>, vector<16x32xf32> -> vector<16x32xf32>
    %c0_127 = arith.constant 0 : index
    %c0_128 = arith.constant 0 : index
    %332 = vector.load %arg21[%c0_127, %c0_128] : memref<1x32xf32, #tpu.memory_space<vmem>>, vector<1x32xf32>
    %333 = vector.broadcast %332 : vector<1x32xf32> to vector<16x32xf32>
    %334 = arith.addf %331, %333 : vector<16x32xf32>
    %cst_129 = arith.constant 0.000000e+00 : f32
    %335 = vector.broadcast %cst_129 : f32 to vector<16x32xf32>
    %336 = arith.maximumf %334, %335 : vector<16x32xf32>
    %c0_130 = arith.constant 0 : index
    %c0_131 = arith.constant 0 : index
    %337 = vector.load %arg22[%c0_130, %c0_131] : memref<32x32xf32, #tpu.memory_space<vmem>>, vector<32x32xf32>
    %cst_132 = arith.constant dense<0.000000e+00> : vector<16x32xf32>
    %338 = tpu.matmul %336, %337, %cst_132 {dimension_numbers = #tpu.dot_dimension_numbers<[1], [0], [0], [1], [0, 0, 1, 1], [], []>} : vector<16x32xf32>, vector<32x32xf32>, vector<16x32xf32> -> vector<16x32xf32>
    %339 = arith.addf %329, %338 : vector<16x32xf32>
    %c0_133 = arith.constant 0 : index
    %c0_134 = arith.constant 0 : index
    %340 = vector.load %arg23[%c0_133, %c0_134] : memref<1x32xf32, #tpu.memory_space<vmem>>, vector<1x32xf32>
    %341 = vector.broadcast %340 : vector<1x32xf32> to vector<16x32xf32>
    %342 = arith.addf %339, %341 : vector<16x32xf32>
    %c2 = arith.constant 2 : index
    %c0_135 = arith.constant 0 : index
    %c0_136 = arith.constant 0 : index
    %343 = vector.load %arg28[%c2, %c0_135, %c0_136] : memref<7x16x32xf32, #tpu.memory_space<vmem>>, vector<1x16x32xf32>
    %344 = vector.shape_cast %343 : vector<1x16x32xf32> to vector<16x32xf32>
    %345 = vector.shape_cast %342 : vector<16x32xf32> to vector<1x16x32xf32>
    tpu.vector_store %arg28[%c2, %c0_135, %c0_136], %345 {strides = array<i32>} : memref<7x16x32xf32, #tpu.memory_space<vmem>>, vector<1x16x32xf32>,
    %c0_137 = arith.constant 0 : index
    %c0_138 = arith.constant 0 : index
    %346 = vector.load %arg9[%c0_137, %c0_138] : memref<32x192xf32, #tpu.memory_space<vmem>>, vector<32x192xf32>
    %cst_139 = arith.constant dense<0.000000e+00> : vector<16x192xf32>
    %347 = tpu.matmul %342, %346, %cst_139 {dimension_numbers = #tpu.dot_dimension_numbers<[1], [0], [0], [1], [0, 0, 1, 1], [], []>} : vector<16x32xf32>, vector<32x192xf32>, vector<16x192xf32> -> vector<16x192xf32>
    %c0_140 = arith.constant 0 : index
    %c0_141 = arith.constant 0 : index
    %348 = vector.load %arg10[%c0_140, %c0_141] : memref<1x192xf32, #tpu.memory_space<vmem>>, vector<1x192xf32>
    %349 = vector.broadcast %348 : vector<1x192xf32> to vector<16x192xf32>
    %350 = arith.addf %347, %349 : vector<16x192xf32>
    %351 = vector.extract_strided_slice %350 {offsets = [0, 0], sizes = [16, 128], strides = [1, 1]} : vector<16x192xf32> to vector<16x128xf32>
    %352 = vector.extract_strided_slice %351 {offsets = [0, 0], sizes = [16, 32], strides = [1, 1]} : vector<16x128xf32> to vector<16x32xf32>
    %353 = vector.extract_strided_slice %351 {offsets = [0, 32], sizes = [16, 32], strides = [1, 1]} : vector<16x128xf32> to vector<16x32xf32>
    %354 = vector.extract_strided_slice %351 {offsets = [0, 64], sizes = [16, 32], strides = [1, 1]} : vector<16x128xf32> to vector<16x32xf32>
    %355 = vector.extract_strided_slice %351 {offsets = [0, 96], sizes = [16, 32], strides = [1, 1]} : vector<16x128xf32> to vector<16x32xf32>
    %356 = tpu.concatenate %352, %353, %354, %355 in 0 : vector<16x32xf32>, vector<16x32xf32>, vector<16x32xf32>, vector<16x32xf32> -> vector<64x32xf32>
    %357 = vector.extract_strided_slice %350 {offsets = [0, 128], sizes = [16, 32], strides = [1, 1]} : vector<16x192xf32> to vector<16x32xf32>
    %358 = vector.extract_strided_slice %350 {offsets = [0, 160], sizes = [16, 32], strides = [1, 1]} : vector<16x192xf32> to vector<16x32xf32>
    %c0_142 = arith.constant 0 : index
    %c0_143 = arith.constant 0 : index
    %359 = vector.load %arg6[%c0_142, %c0_143] : memref<32x64xf32, #tpu.memory_space<vmem>>, vector<32x64xf32>
    %360 = tpu.transpose %358, [1, 0] : vector<16x32xf32> -> vector<32x16xf32>
    %361 = tpu.concatenate %360, %360, %360, %360 in 1 : vector<32x16xf32>, vector<32x16xf32>, vector<32x16xf32>, vector<32x16xf32> -> vector<32x64xf32>
    %362 = arith.mulf %361, %359 : vector<32x64xf32>
    %c0_144 = arith.constant 0 : index
    %c0_145 = arith.constant 0 : index
    %363 = vector.load %arg3[%c0_144, %c0_145] : memref<16x64xf32, #tpu.memory_space<vmem>>, vector<16x64xf32>
    %c0_146 = arith.constant 0 : index
    %c0_147 = arith.constant 0 : index
    %364 = vector.load %arg11[%c0_146, %c0_147] : memref<1x32xf32, #tpu.memory_space<vmem>>, vector<1x32xf32>
    %cst_148 = arith.constant dense<0.000000e+00> : vector<16x64xf32>
    %365 = tpu.matmul %357, %362, %cst_148 {dimension_numbers = #tpu.dot_dimension_numbers<[1], [0], [0], [1], [0, 0, 1, 1], [], []>} : vector<16x32xf32>, vector<32x64xf32>, vector<16x64xf32> -> vector<16x64xf32>
    %cst_149 = arith.constant dense<0xFF800000> : vector<16xf32>
    %366 = vector.multi_reduction <maximumf>, %365, %cst_149 [1] : vector<16x64xf32> to vector<16xf32>
    %367 = vector.shape_cast %366 : vector<16xf32> to vector<16x1xf32>
    %368 = vector.broadcast %367 : vector<16x1xf32> to vector<16x64xf32>
    %369 = arith.subf %365, %368 : vector<16x64xf32>
    %370 = math.exp %369 : vector<16x64xf32>
    %371 = arith.mulf %370, %363 : vector<16x64xf32>
    %372 = vector.extract_strided_slice %371 {offsets = [0, 0], sizes = [16, 16], strides = [1, 1]} : vector<16x64xf32> to vector<16x16xf32>
    %cst_150 = arith.constant dense<0.000000e+00> : vector<16xf32>
    %373 = vector.multi_reduction <add>, %372, %cst_150 [1] : vector<16x16xf32> to vector<16xf32>
    %374 = vector.shape_cast %373 : vector<16xf32> to vector<16x1xf32>
    %375 = tpu.reciprocal %374 : vector<16x1xf32> -> vector<16x1xf32>
    %376 = vector.broadcast %375 : vector<16x1xf32> to vector<16x16xf32>
    %377 = arith.mulf %372, %376 : vector<16x16xf32>
    %378 = vector.extract_strided_slice %371 {offsets = [0, 16], sizes = [16, 16], strides = [1, 1]} : vector<16x64xf32> to vector<16x16xf32>
    %cst_151 = arith.constant dense<0.000000e+00> : vector<16xf32>
    %379 = vector.multi_reduction <add>, %378, %cst_151 [1] : vector<16x16xf32> to vector<16xf32>
    %380 = vector.shape_cast %379 : vector<16xf32> to vector<16x1xf32>
    %381 = tpu.reciprocal %380 : vector<16x1xf32> -> vector<16x1xf32>
    %382 = vector.broadcast %381 : vector<16x1xf32> to vector<16x16xf32>
    %383 = arith.mulf %378, %382 : vector<16x16xf32>
    %384 = vector.extract_strided_slice %371 {offsets = [0, 32], sizes = [16, 16], strides = [1, 1]} : vector<16x64xf32> to vector<16x16xf32>
    %cst_152 = arith.constant dense<0.000000e+00> : vector<16xf32>
    %385 = vector.multi_reduction <add>, %384, %cst_152 [1] : vector<16x16xf32> to vector<16xf32>
    %386 = vector.shape_cast %385 : vector<16xf32> to vector<16x1xf32>
    %387 = tpu.reciprocal %386 : vector<16x1xf32> -> vector<16x1xf32>
    %388 = vector.broadcast %387 : vector<16x1xf32> to vector<16x16xf32>
    %389 = arith.mulf %384, %388 : vector<16x16xf32>
    %390 = vector.extract_strided_slice %371 {offsets = [0, 48], sizes = [16, 16], strides = [1, 1]} : vector<16x64xf32> to vector<16x16xf32>
    %cst_153 = arith.constant dense<0.000000e+00> : vector<16xf32>
    %391 = vector.multi_reduction <add>, %390, %cst_153 [1] : vector<16x16xf32> to vector<16xf32>
    %392 = vector.shape_cast %391 : vector<16xf32> to vector<16x1xf32>
    %393 = tpu.reciprocal %392 : vector<16x1xf32> -> vector<16x1xf32>
    %394 = vector.broadcast %393 : vector<16x1xf32> to vector<16x16xf32>
    %395 = arith.mulf %390, %394 : vector<16x16xf32>
    %396 = tpu.concatenate %377, %383, %389, %395 in 1 : vector<16x16xf32>, vector<16x16xf32>, vector<16x16xf32>, vector<16x16xf32> -> vector<16x64xf32>
    %cst_154 = arith.constant dense<0.000000e+00> : vector<16x32xf32>
    %397 = tpu.matmul %396, %356, %cst_154 {dimension_numbers = #tpu.dot_dimension_numbers<[1], [0], [0], [1], [0, 0, 1, 1], [], []>} : vector<16x64xf32>, vector<64x32xf32>, vector<16x32xf32> -> vector<16x32xf32>
    %398 = vector.broadcast %364 : vector<1x32xf32> to vector<16x32xf32>
    %399 = arith.addf %397, %398 : vector<16x32xf32>
    %400 = arith.addf %342, %399 : vector<16x32xf32>
    %c0_155 = arith.constant 0 : index
    %c0_156 = arith.constant 0 : index
    %401 = vector.load %arg12[%c0_155, %c0_156] : memref<32x64xf32, #tpu.memory_space<vmem>>, vector<32x64xf32>
    %cst_157 = arith.constant dense<0.000000e+00> : vector<16x64xf32>
    %402 = tpu.matmul %400, %401, %cst_157 {dimension_numbers = #tpu.dot_dimension_numbers<[1], [0], [0], [1], [0, 0, 1, 1], [], []>} : vector<16x32xf32>, vector<32x64xf32>, vector<16x64xf32> -> vector<16x64xf32>
    %c0_158 = arith.constant 0 : index
    %c0_159 = arith.constant 0 : index
    %403 = vector.load %arg13[%c0_158, %c0_159] : memref<1x64xf32, #tpu.memory_space<vmem>>, vector<1x64xf32>
    %404 = vector.broadcast %403 : vector<1x64xf32> to vector<16x64xf32>
    %405 = arith.addf %402, %404 : vector<16x64xf32>
    %406 = vector.extract_strided_slice %405 {offsets = [0, 0], sizes = [16, 32], strides = [1, 1]} : vector<16x64xf32> to vector<16x32xf32>
    %c0_160 = arith.constant 0 : index
    %c0_161 = arith.constant 0 : index
    %407 = vector.load %arg4[%c0_160, %c0_161] : memref<16x64xf32, #tpu.memory_space<vmem>>, vector<16x64xf32>
    %c0_162 = arith.constant 0 : index
    %c0_163 = arith.constant 0 : index
    %408 = vector.load %arg16[%c0_162, %c0_163] : memref<1x32xf32, #tpu.memory_space<vmem>>, vector<1x32xf32>
    %cst_164 = arith.constant dense<0.000000e+00> : vector<16x64xf32>
    %409 = tpu.matmul %406, %17, %cst_164 {dimension_numbers = #tpu.dot_dimension_numbers<[1], [0], [0], [1], [0, 0, 1, 1], [], []>} : vector<16x32xf32>, vector<32x64xf32>, vector<16x64xf32> -> vector<16x64xf32>
    %cst_165 = arith.constant dense<0xFF800000> : vector<16xf32>
    %410 = vector.multi_reduction <maximumf>, %409, %cst_165 [1] : vector<16x64xf32> to vector<16xf32>
    %411 = vector.shape_cast %410 : vector<16xf32> to vector<16x1xf32>
    %412 = vector.broadcast %411 : vector<16x1xf32> to vector<16x64xf32>
    %413 = arith.subf %409, %412 : vector<16x64xf32>
    %414 = math.exp %413 : vector<16x64xf32>
    %415 = arith.mulf %414, %407 : vector<16x64xf32>
    %416 = vector.extract_strided_slice %415 {offsets = [0, 0], sizes = [16, 16], strides = [1, 1]} : vector<16x64xf32> to vector<16x16xf32>
    %cst_166 = arith.constant dense<0.000000e+00> : vector<16xf32>
    %417 = vector.multi_reduction <add>, %416, %cst_166 [1] : vector<16x16xf32> to vector<16xf32>
    %418 = vector.shape_cast %417 : vector<16xf32> to vector<16x1xf32>
    %419 = tpu.reciprocal %418 : vector<16x1xf32> -> vector<16x1xf32>
    %420 = vector.broadcast %419 : vector<16x1xf32> to vector<16x16xf32>
    %421 = arith.mulf %416, %420 : vector<16x16xf32>
    %422 = vector.extract_strided_slice %415 {offsets = [0, 16], sizes = [16, 16], strides = [1, 1]} : vector<16x64xf32> to vector<16x16xf32>
    %cst_167 = arith.constant dense<0.000000e+00> : vector<16xf32>
    %423 = vector.multi_reduction <add>, %422, %cst_167 [1] : vector<16x16xf32> to vector<16xf32>
    %424 = vector.shape_cast %423 : vector<16xf32> to vector<16x1xf32>
    %425 = tpu.reciprocal %424 : vector<16x1xf32> -> vector<16x1xf32>
    %426 = vector.broadcast %425 : vector<16x1xf32> to vector<16x16xf32>
    %427 = arith.mulf %422, %426 : vector<16x16xf32>
    %428 = vector.extract_strided_slice %415 {offsets = [0, 32], sizes = [16, 16], strides = [1, 1]} : vector<16x64xf32> to vector<16x16xf32>
    %cst_168 = arith.constant dense<0.000000e+00> : vector<16xf32>
    %429 = vector.multi_reduction <add>, %428, %cst_168 [1] : vector<16x16xf32> to vector<16xf32>
    %430 = vector.shape_cast %429 : vector<16xf32> to vector<16x1xf32>
    %431 = tpu.reciprocal %430 : vector<16x1xf32> -> vector<16x1xf32>
    %432 = vector.broadcast %431 : vector<16x1xf32> to vector<16x16xf32>
    %433 = arith.mulf %428, %432 : vector<16x16xf32>
    %434 = vector.extract_strided_slice %415 {offsets = [0, 48], sizes = [16, 16], strides = [1, 1]} : vector<16x64xf32> to vector<16x16xf32>
    %cst_169 = arith.constant dense<0.000000e+00> : vector<16xf32>
    %435 = vector.multi_reduction <add>, %434, %cst_169 [1] : vector<16x16xf32> to vector<16xf32>
    %436 = vector.shape_cast %435 : vector<16xf32> to vector<16x1xf32>
    %437 = tpu.reciprocal %436 : vector<16x1xf32> -> vector<16x1xf32>
    %438 = vector.broadcast %437 : vector<16x1xf32> to vector<16x16xf32>
    %439 = arith.mulf %434, %438 : vector<16x16xf32>
    %440 = tpu.concatenate %421, %427, %433, %439 in 1 : vector<16x16xf32>, vector<16x16xf32>, vector<16x16xf32>, vector<16x16xf32> -> vector<16x64xf32>
    %cst_170 = arith.constant dense<0.000000e+00> : vector<16x32xf32>
    %441 = tpu.matmul %440, %12, %cst_170 {dimension_numbers = #tpu.dot_dimension_numbers<[1], [0], [0], [1], [0, 0, 1, 1], [], []>} : vector<16x64xf32>, vector<64x32xf32>, vector<16x32xf32> -> vector<16x32xf32>
    %442 = vector.broadcast %408 : vector<1x32xf32> to vector<16x32xf32>
    %443 = arith.addf %441, %442 : vector<16x32xf32>
    %444 = vector.extract_strided_slice %405 {offsets = [0, 32], sizes = [16, 32], strides = [1, 1]} : vector<16x64xf32> to vector<16x32xf32>
    %c0_171 = arith.constant 0 : index
    %c0_172 = arith.constant 0 : index
    %445 = vector.load %arg5[%c0_171, %c0_172] : memref<16x80xf32, #tpu.memory_space<vmem>>, vector<16x80xf32>
    %c0_173 = arith.constant 0 : index
    %c0_174 = arith.constant 0 : index
    %446 = vector.load %arg19[%c0_173, %c0_174] : memref<1x32xf32, #tpu.memory_space<vmem>>, vector<1x32xf32>
    %cst_175 = arith.constant dense<0.000000e+00> : vector<16x80xf32>
    %447 = tpu.matmul %444, %34, %cst_175 {dimension_numbers = #tpu.dot_dimension_numbers<[1], [0], [0], [1], [0, 0, 1, 1], [], []>} : vector<16x32xf32>, vector<32x80xf32>, vector<16x80xf32> -> vector<16x80xf32>
    %cst_176 = arith.constant dense<0xFF800000> : vector<16xf32>
    %448 = vector.multi_reduction <maximumf>, %447, %cst_176 [1] : vector<16x80xf32> to vector<16xf32>
    %449 = vector.shape_cast %448 : vector<16xf32> to vector<16x1xf32>
    %450 = vector.broadcast %449 : vector<16x1xf32> to vector<16x80xf32>
    %451 = arith.subf %447, %450 : vector<16x80xf32>
    %452 = math.exp %451 : vector<16x80xf32>
    %453 = arith.mulf %452, %445 : vector<16x80xf32>
    %454 = vector.extract_strided_slice %453 {offsets = [0, 0], sizes = [16, 20], strides = [1, 1]} : vector<16x80xf32> to vector<16x20xf32>
    %cst_177 = arith.constant dense<0.000000e+00> : vector<16xf32>
    %455 = vector.multi_reduction <add>, %454, %cst_177 [1] : vector<16x20xf32> to vector<16xf32>
    %456 = vector.shape_cast %455 : vector<16xf32> to vector<16x1xf32>
    %457 = tpu.reciprocal %456 : vector<16x1xf32> -> vector<16x1xf32>
    %458 = vector.broadcast %457 : vector<16x1xf32> to vector<16x20xf32>
    %459 = arith.mulf %454, %458 : vector<16x20xf32>
    %460 = vector.extract_strided_slice %453 {offsets = [0, 20], sizes = [16, 20], strides = [1, 1]} : vector<16x80xf32> to vector<16x20xf32>
    %cst_178 = arith.constant dense<0.000000e+00> : vector<16xf32>
    %461 = vector.multi_reduction <add>, %460, %cst_178 [1] : vector<16x20xf32> to vector<16xf32>
    %462 = vector.shape_cast %461 : vector<16xf32> to vector<16x1xf32>
    %463 = tpu.reciprocal %462 : vector<16x1xf32> -> vector<16x1xf32>
    %464 = vector.broadcast %463 : vector<16x1xf32> to vector<16x20xf32>
    %465 = arith.mulf %460, %464 : vector<16x20xf32>
    %466 = vector.extract_strided_slice %453 {offsets = [0, 40], sizes = [16, 20], strides = [1, 1]} : vector<16x80xf32> to vector<16x20xf32>
    %cst_179 = arith.constant dense<0.000000e+00> : vector<16xf32>
    %467 = vector.multi_reduction <add>, %466, %cst_179 [1] : vector<16x20xf32> to vector<16xf32>
    %468 = vector.shape_cast %467 : vector<16xf32> to vector<16x1xf32>
    %469 = tpu.reciprocal %468 : vector<16x1xf32> -> vector<16x1xf32>
    %470 = vector.broadcast %469 : vector<16x1xf32> to vector<16x20xf32>
    %471 = arith.mulf %466, %470 : vector<16x20xf32>
    %472 = vector.extract_strided_slice %453 {offsets = [0, 60], sizes = [16, 20], strides = [1, 1]} : vector<16x80xf32> to vector<16x20xf32>
    %cst_180 = arith.constant dense<0.000000e+00> : vector<16xf32>
    %473 = vector.multi_reduction <add>, %472, %cst_180 [1] : vector<16x20xf32> to vector<16xf32>
    %474 = vector.shape_cast %473 : vector<16xf32> to vector<16x1xf32>
    %475 = tpu.reciprocal %474 : vector<16x1xf32> -> vector<16x1xf32>
    %476 = vector.broadcast %475 : vector<16x1xf32> to vector<16x20xf32>
    %477 = arith.mulf %472, %476 : vector<16x20xf32>
    %478 = tpu.concatenate %459, %465, %471, %477 in 1 : vector<16x20xf32>, vector<16x20xf32>, vector<16x20xf32>, vector<16x20xf32> -> vector<16x80xf32>
    %cst_181 = arith.constant dense<0.000000e+00> : vector<16x32xf32>
    %479 = tpu.matmul %478, %29, %cst_181 {dimension_numbers = #tpu.dot_dimension_numbers<[1], [0], [0], [1], [0, 0, 1, 1], [], []>} : vector<16x80xf32>, vector<80x32xf32>, vector<16x32xf32> -> vector<16x32xf32>
    %480 = vector.broadcast %446 : vector<1x32xf32> to vector<16x32xf32>
    %481 = arith.addf %479, %480 : vector<16x32xf32>
    %482 = arith.addf %400, %443 : vector<16x32xf32>
    %483 = arith.addf %482, %481 : vector<16x32xf32>
    %c0_182 = arith.constant 0 : index
    %c0_183 = arith.constant 0 : index
    %484 = vector.load %arg20[%c0_182, %c0_183] : memref<32x32xf32, #tpu.memory_space<vmem>>, vector<32x32xf32>
    %cst_184 = arith.constant dense<0.000000e+00> : vector<16x32xf32>
    %485 = tpu.matmul %483, %484, %cst_184 {dimension_numbers = #tpu.dot_dimension_numbers<[1], [0], [0], [1], [0, 0, 1, 1], [], []>} : vector<16x32xf32>, vector<32x32xf32>, vector<16x32xf32> -> vector<16x32xf32>
    %c0_185 = arith.constant 0 : index
    %c0_186 = arith.constant 0 : index
    %486 = vector.load %arg21[%c0_185, %c0_186] : memref<1x32xf32, #tpu.memory_space<vmem>>, vector<1x32xf32>
    %487 = vector.broadcast %486 : vector<1x32xf32> to vector<16x32xf32>
    %488 = arith.addf %485, %487 : vector<16x32xf32>
    %cst_187 = arith.constant 0.000000e+00 : f32
    %489 = vector.broadcast %cst_187 : f32 to vector<16x32xf32>
    %490 = arith.maximumf %488, %489 : vector<16x32xf32>
    %c0_188 = arith.constant 0 : index
    %c0_189 = arith.constant 0 : index
    %491 = vector.load %arg22[%c0_188, %c0_189] : memref<32x32xf32, #tpu.memory_space<vmem>>, vector<32x32xf32>
    %cst_190 = arith.constant dense<0.000000e+00> : vector<16x32xf32>
    %492 = tpu.matmul %490, %491, %cst_190 {dimension_numbers = #tpu.dot_dimension_numbers<[1], [0], [0], [1], [0, 0, 1, 1], [], []>} : vector<16x32xf32>, vector<32x32xf32>, vector<16x32xf32> -> vector<16x32xf32>
    %493 = arith.addf %483, %492 : vector<16x32xf32>
    %c0_191 = arith.constant 0 : index
    %c0_192 = arith.constant 0 : index
    %494 = vector.load %arg23[%c0_191, %c0_192] : memref<1x32xf32, #tpu.memory_space<vmem>>, vector<1x32xf32>
    %495 = vector.broadcast %494 : vector<1x32xf32> to vector<16x32xf32>
    %496 = arith.addf %493, %495 : vector<16x32xf32>
    %c3 = arith.constant 3 : index
    %c0_193 = arith.constant 0 : index
    %c0_194 = arith.constant 0 : index
    %497 = vector.load %arg28[%c3, %c0_193, %c0_194] : memref<7x16x32xf32, #tpu.memory_space<vmem>>, vector<1x16x32xf32>
    %498 = vector.shape_cast %497 : vector<1x16x32xf32> to vector<16x32xf32>
    %499 = vector.shape_cast %496 : vector<16x32xf32> to vector<1x16x32xf32>
    tpu.vector_store %arg28[%c3, %c0_193, %c0_194], %499 {strides = array<i32>} : memref<7x16x32xf32, #tpu.memory_space<vmem>>, vector<1x16x32xf32>,
    %c0_195 = arith.constant 0 : index
    %c0_196 = arith.constant 0 : index
    %500 = vector.load %arg9[%c0_195, %c0_196] : memref<32x192xf32, #tpu.memory_space<vmem>>, vector<32x192xf32>
    %cst_197 = arith.constant dense<0.000000e+00> : vector<16x192xf32>
    %501 = tpu.matmul %496, %500, %cst_197 {dimension_numbers = #tpu.dot_dimension_numbers<[1], [0], [0], [1], [0, 0, 1, 1], [], []>} : vector<16x32xf32>, vector<32x192xf32>, vector<16x192xf32> -> vector<16x192xf32>
    %c0_198 = arith.constant 0 : index
    %c0_199 = arith.constant 0 : index
    %502 = vector.load %arg10[%c0_198, %c0_199] : memref<1x192xf32, #tpu.memory_space<vmem>>, vector<1x192xf32>
    %503 = vector.broadcast %502 : vector<1x192xf32> to vector<16x192xf32>
    %504 = arith.addf %501, %503 : vector<16x192xf32>
    %505 = vector.extract_strided_slice %504 {offsets = [0, 0], sizes = [16, 128], strides = [1, 1]} : vector<16x192xf32> to vector<16x128xf32>
    %506 = vector.extract_strided_slice %505 {offsets = [0, 0], sizes = [16, 32], strides = [1, 1]} : vector<16x128xf32> to vector<16x32xf32>
    %507 = vector.extract_strided_slice %505 {offsets = [0, 32], sizes = [16, 32], strides = [1, 1]} : vector<16x128xf32> to vector<16x32xf32>
    %508 = vector.extract_strided_slice %505 {offsets = [0, 64], sizes = [16, 32], strides = [1, 1]} : vector<16x128xf32> to vector<16x32xf32>
    %509 = vector.extract_strided_slice %505 {offsets = [0, 96], sizes = [16, 32], strides = [1, 1]} : vector<16x128xf32> to vector<16x32xf32>
    %510 = tpu.concatenate %506, %507, %508, %509 in 0 : vector<16x32xf32>, vector<16x32xf32>, vector<16x32xf32>, vector<16x32xf32> -> vector<64x32xf32>
    %511 = vector.extract_strided_slice %504 {offsets = [0, 128], sizes = [16, 32], strides = [1, 1]} : vector<16x192xf32> to vector<16x32xf32>
    %512 = vector.extract_strided_slice %504 {offsets = [0, 160], sizes = [16, 32], strides = [1, 1]} : vector<16x192xf32> to vector<16x32xf32>
    %c0_200 = arith.constant 0 : index
    %c0_201 = arith.constant 0 : index
    %513 = vector.load %arg6[%c0_200, %c0_201] : memref<32x64xf32, #tpu.memory_space<vmem>>, vector<32x64xf32>
    %514 = tpu.transpose %512, [1, 0] : vector<16x32xf32> -> vector<32x16xf32>
    %515 = tpu.concatenate %514, %514, %514, %514 in 1 : vector<32x16xf32>, vector<32x16xf32>, vector<32x16xf32>, vector<32x16xf32> -> vector<32x64xf32>
    %516 = arith.mulf %515, %513 : vector<32x64xf32>
    %c0_202 = arith.constant 0 : index
    %c0_203 = arith.constant 0 : index
    %517 = vector.load %arg3[%c0_202, %c0_203] : memref<16x64xf32, #tpu.memory_space<vmem>>, vector<16x64xf32>
    %c0_204 = arith.constant 0 : index
    %c0_205 = arith.constant 0 : index
    %518 = vector.load %arg11[%c0_204, %c0_205] : memref<1x32xf32, #tpu.memory_space<vmem>>, vector<1x32xf32>
    %cst_206 = arith.constant dense<0.000000e+00> : vector<16x64xf32>
    %519 = tpu.matmul %511, %516, %cst_206 {dimension_numbers = #tpu.dot_dimension_numbers<[1], [0], [0], [1], [0, 0, 1, 1], [], []>} : vector<16x32xf32>, vector<32x64xf32>, vector<16x64xf32> -> vector<16x64xf32>
    %cst_207 = arith.constant dense<0xFF800000> : vector<16xf32>
    %520 = vector.multi_reduction <maximumf>, %519, %cst_207 [1] : vector<16x64xf32> to vector<16xf32>
    %521 = vector.shape_cast %520 : vector<16xf32> to vector<16x1xf32>
    %522 = vector.broadcast %521 : vector<16x1xf32> to vector<16x64xf32>
    %523 = arith.subf %519, %522 : vector<16x64xf32>
    %524 = math.exp %523 : vector<16x64xf32>
    %525 = arith.mulf %524, %517 : vector<16x64xf32>
    %526 = vector.extract_strided_slice %525 {offsets = [0, 0], sizes = [16, 16], strides = [1, 1]} : vector<16x64xf32> to vector<16x16xf32>
    %cst_208 = arith.constant dense<0.000000e+00> : vector<16xf32>
    %527 = vector.multi_reduction <add>, %526, %cst_208 [1] : vector<16x16xf32> to vector<16xf32>
    %528 = vector.shape_cast %527 : vector<16xf32> to vector<16x1xf32>
    %529 = tpu.reciprocal %528 : vector<16x1xf32> -> vector<16x1xf32>
    %530 = vector.broadcast %529 : vector<16x1xf32> to vector<16x16xf32>
    %531 = arith.mulf %526, %530 : vector<16x16xf32>
    %532 = vector.extract_strided_slice %525 {offsets = [0, 16], sizes = [16, 16], strides = [1, 1]} : vector<16x64xf32> to vector<16x16xf32>
    %cst_209 = arith.constant dense<0.000000e+00> : vector<16xf32>
    %533 = vector.multi_reduction <add>, %532, %cst_209 [1] : vector<16x16xf32> to vector<16xf32>
    %534 = vector.shape_cast %533 : vector<16xf32> to vector<16x1xf32>
    %535 = tpu.reciprocal %534 : vector<16x1xf32> -> vector<16x1xf32>
    %536 = vector.broadcast %535 : vector<16x1xf32> to vector<16x16xf32>
    %537 = arith.mulf %532, %536 : vector<16x16xf32>
    %538 = vector.extract_strided_slice %525 {offsets = [0, 32], sizes = [16, 16], strides = [1, 1]} : vector<16x64xf32> to vector<16x16xf32>
    %cst_210 = arith.constant dense<0.000000e+00> : vector<16xf32>
    %539 = vector.multi_reduction <add>, %538, %cst_210 [1] : vector<16x16xf32> to vector<16xf32>
    %540 = vector.shape_cast %539 : vector<16xf32> to vector<16x1xf32>
    %541 = tpu.reciprocal %540 : vector<16x1xf32> -> vector<16x1xf32>
    %542 = vector.broadcast %541 : vector<16x1xf32> to vector<16x16xf32>
    %543 = arith.mulf %538, %542 : vector<16x16xf32>
    %544 = vector.extract_strided_slice %525 {offsets = [0, 48], sizes = [16, 16], strides = [1, 1]} : vector<16x64xf32> to vector<16x16xf32>
    %cst_211 = arith.constant dense<0.000000e+00> : vector<16xf32>
    %545 = vector.multi_reduction <add>, %544, %cst_211 [1] : vector<16x16xf32> to vector<16xf32>
    %546 = vector.shape_cast %545 : vector<16xf32> to vector<16x1xf32>
    %547 = tpu.reciprocal %546 : vector<16x1xf32> -> vector<16x1xf32>
    %548 = vector.broadcast %547 : vector<16x1xf32> to vector<16x16xf32>
    %549 = arith.mulf %544, %548 : vector<16x16xf32>
    %550 = tpu.concatenate %531, %537, %543, %549 in 1 : vector<16x16xf32>, vector<16x16xf32>, vector<16x16xf32>, vector<16x16xf32> -> vector<16x64xf32>
    %cst_212 = arith.constant dense<0.000000e+00> : vector<16x32xf32>
    %551 = tpu.matmul %550, %510, %cst_212 {dimension_numbers = #tpu.dot_dimension_numbers<[1], [0], [0], [1], [0, 0, 1, 1], [], []>} : vector<16x64xf32>, vector<64x32xf32>, vector<16x32xf32> -> vector<16x32xf32>
    %552 = vector.broadcast %518 : vector<1x32xf32> to vector<16x32xf32>
    %553 = arith.addf %551, %552 : vector<16x32xf32>
    %554 = arith.addf %496, %553 : vector<16x32xf32>
    %c0_213 = arith.constant 0 : index
    %c0_214 = arith.constant 0 : index
    %555 = vector.load %arg12[%c0_213, %c0_214] : memref<32x64xf32, #tpu.memory_space<vmem>>, vector<32x64xf32>
    %cst_215 = arith.constant dense<0.000000e+00> : vector<16x64xf32>
    %556 = tpu.matmul %554, %555, %cst_215 {dimension_numbers = #tpu.dot_dimension_numbers<[1], [0], [0], [1], [0, 0, 1, 1], [], []>} : vector<16x32xf32>, vector<32x64xf32>, vector<16x64xf32> -> vector<16x64xf32>
    %c0_216 = arith.constant 0 : index
    %c0_217 = arith.constant 0 : index
    %557 = vector.load %arg13[%c0_216, %c0_217] : memref<1x64xf32, #tpu.memory_space<vmem>>, vector<1x64xf32>
    %558 = vector.broadcast %557 : vector<1x64xf32> to vector<16x64xf32>
    %559 = arith.addf %556, %558 : vector<16x64xf32>
    %560 = vector.extract_strided_slice %559 {offsets = [0, 0], sizes = [16, 32], strides = [1, 1]} : vector<16x64xf32> to vector<16x32xf32>
    %c0_218 = arith.constant 0 : index
    %c0_219 = arith.constant 0 : index
    %561 = vector.load %arg4[%c0_218, %c0_219] : memref<16x64xf32, #tpu.memory_space<vmem>>, vector<16x64xf32>
    %c0_220 = arith.constant 0 : index
    %c0_221 = arith.constant 0 : index
    %562 = vector.load %arg16[%c0_220, %c0_221] : memref<1x32xf32, #tpu.memory_space<vmem>>, vector<1x32xf32>
    %cst_222 = arith.constant dense<0.000000e+00> : vector<16x64xf32>
    %563 = tpu.matmul %560, %17, %cst_222 {dimension_numbers = #tpu.dot_dimension_numbers<[1], [0], [0], [1], [0, 0, 1, 1], [], []>} : vector<16x32xf32>, vector<32x64xf32>, vector<16x64xf32> -> vector<16x64xf32>
    %cst_223 = arith.constant dense<0xFF800000> : vector<16xf32>
    %564 = vector.multi_reduction <maximumf>, %563, %cst_223 [1] : vector<16x64xf32> to vector<16xf32>
    %565 = vector.shape_cast %564 : vector<16xf32> to vector<16x1xf32>
    %566 = vector.broadcast %565 : vector<16x1xf32> to vector<16x64xf32>
    %567 = arith.subf %563, %566 : vector<16x64xf32>
    %568 = math.exp %567 : vector<16x64xf32>
    %569 = arith.mulf %568, %561 : vector<16x64xf32>
    %570 = vector.extract_strided_slice %569 {offsets = [0, 0], sizes = [16, 16], strides = [1, 1]} : vector<16x64xf32> to vector<16x16xf32>
    %cst_224 = arith.constant dense<0.000000e+00> : vector<16xf32>
    %571 = vector.multi_reduction <add>, %570, %cst_224 [1] : vector<16x16xf32> to vector<16xf32>
    %572 = vector.shape_cast %571 : vector<16xf32> to vector<16x1xf32>
    %573 = tpu.reciprocal %572 : vector<16x1xf32> -> vector<16x1xf32>
    %574 = vector.broadcast %573 : vector<16x1xf32> to vector<16x16xf32>
    %575 = arith.mulf %570, %574 : vector<16x16xf32>
    %576 = vector.extract_strided_slice %569 {offsets = [0, 16], sizes = [16, 16], strides = [1, 1]} : vector<16x64xf32> to vector<16x16xf32>
    %cst_225 = arith.constant dense<0.000000e+00> : vector<16xf32>
    %577 = vector.multi_reduction <add>, %576, %cst_225 [1] : vector<16x16xf32> to vector<16xf32>
    %578 = vector.shape_cast %577 : vector<16xf32> to vector<16x1xf32>
    %579 = tpu.reciprocal %578 : vector<16x1xf32> -> vector<16x1xf32>
    %580 = vector.broadcast %579 : vector<16x1xf32> to vector<16x16xf32>
    %581 = arith.mulf %576, %580 : vector<16x16xf32>
    %582 = vector.extract_strided_slice %569 {offsets = [0, 32], sizes = [16, 16], strides = [1, 1]} : vector<16x64xf32> to vector<16x16xf32>
    %cst_226 = arith.constant dense<0.000000e+00> : vector<16xf32>
    %583 = vector.multi_reduction <add>, %582, %cst_226 [1] : vector<16x16xf32> to vector<16xf32>
    %584 = vector.shape_cast %583 : vector<16xf32> to vector<16x1xf32>
    %585 = tpu.reciprocal %584 : vector<16x1xf32> -> vector<16x1xf32>
    %586 = vector.broadcast %585 : vector<16x1xf32> to vector<16x16xf32>
    %587 = arith.mulf %582, %586 : vector<16x16xf32>
    %588 = vector.extract_strided_slice %569 {offsets = [0, 48], sizes = [16, 16], strides = [1, 1]} : vector<16x64xf32> to vector<16x16xf32>
    %cst_227 = arith.constant dense<0.000000e+00> : vector<16xf32>
    %589 = vector.multi_reduction <add>, %588, %cst_227 [1] : vector<16x16xf32> to vector<16xf32>
    %590 = vector.shape_cast %589 : vector<16xf32> to vector<16x1xf32>
    %591 = tpu.reciprocal %590 : vector<16x1xf32> -> vector<16x1xf32>
    %592 = vector.broadcast %591 : vector<16x1xf32> to vector<16x16xf32>
    %593 = arith.mulf %588, %592 : vector<16x16xf32>
    %594 = tpu.concatenate %575, %581, %587, %593 in 1 : vector<16x16xf32>, vector<16x16xf32>, vector<16x16xf32>, vector<16x16xf32> -> vector<16x64xf32>
    %cst_228 = arith.constant dense<0.000000e+00> : vector<16x32xf32>
    %595 = tpu.matmul %594, %12, %cst_228 {dimension_numbers = #tpu.dot_dimension_numbers<[1], [0], [0], [1], [0, 0, 1, 1], [], []>} : vector<16x64xf32>, vector<64x32xf32>, vector<16x32xf32> -> vector<16x32xf32>
    %596 = vector.broadcast %562 : vector<1x32xf32> to vector<16x32xf32>
    %597 = arith.addf %595, %596 : vector<16x32xf32>
    %598 = vector.extract_strided_slice %559 {offsets = [0, 32], sizes = [16, 32], strides = [1, 1]} : vector<16x64xf32> to vector<16x32xf32>
    %c0_229 = arith.constant 0 : index
    %c0_230 = arith.constant 0 : index
    %599 = vector.load %arg5[%c0_229, %c0_230] : memref<16x80xf32, #tpu.memory_space<vmem>>, vector<16x80xf32>
    %c0_231 = arith.constant 0 : index
    %c0_232 = arith.constant 0 : index
    %600 = vector.load %arg19[%c0_231, %c0_232] : memref<1x32xf32, #tpu.memory_space<vmem>>, vector<1x32xf32>
    %cst_233 = arith.constant dense<0.000000e+00> : vector<16x80xf32>
    %601 = tpu.matmul %598, %34, %cst_233 {dimension_numbers = #tpu.dot_dimension_numbers<[1], [0], [0], [1], [0, 0, 1, 1], [], []>} : vector<16x32xf32>, vector<32x80xf32>, vector<16x80xf32> -> vector<16x80xf32>
    %cst_234 = arith.constant dense<0xFF800000> : vector<16xf32>
    %602 = vector.multi_reduction <maximumf>, %601, %cst_234 [1] : vector<16x80xf32> to vector<16xf32>
    %603 = vector.shape_cast %602 : vector<16xf32> to vector<16x1xf32>
    %604 = vector.broadcast %603 : vector<16x1xf32> to vector<16x80xf32>
    %605 = arith.subf %601, %604 : vector<16x80xf32>
    %606 = math.exp %605 : vector<16x80xf32>
    %607 = arith.mulf %606, %599 : vector<16x80xf32>
    %608 = vector.extract_strided_slice %607 {offsets = [0, 0], sizes = [16, 20], strides = [1, 1]} : vector<16x80xf32> to vector<16x20xf32>
    %cst_235 = arith.constant dense<0.000000e+00> : vector<16xf32>
    %609 = vector.multi_reduction <add>, %608, %cst_235 [1] : vector<16x20xf32> to vector<16xf32>
    %610 = vector.shape_cast %609 : vector<16xf32> to vector<16x1xf32>
    %611 = tpu.reciprocal %610 : vector<16x1xf32> -> vector<16x1xf32>
    %612 = vector.broadcast %611 : vector<16x1xf32> to vector<16x20xf32>
    %613 = arith.mulf %608, %612 : vector<16x20xf32>
    %614 = vector.extract_strided_slice %607 {offsets = [0, 20], sizes = [16, 20], strides = [1, 1]} : vector<16x80xf32> to vector<16x20xf32>
    %cst_236 = arith.constant dense<0.000000e+00> : vector<16xf32>
    %615 = vector.multi_reduction <add>, %614, %cst_236 [1] : vector<16x20xf32> to vector<16xf32>
    %616 = vector.shape_cast %615 : vector<16xf32> to vector<16x1xf32>
    %617 = tpu.reciprocal %616 : vector<16x1xf32> -> vector<16x1xf32>
    %618 = vector.broadcast %617 : vector<16x1xf32> to vector<16x20xf32>
    %619 = arith.mulf %614, %618 : vector<16x20xf32>
    %620 = vector.extract_strided_slice %607 {offsets = [0, 40], sizes = [16, 20], strides = [1, 1]} : vector<16x80xf32> to vector<16x20xf32>
    %cst_237 = arith.constant dense<0.000000e+00> : vector<16xf32>
    %621 = vector.multi_reduction <add>, %620, %cst_237 [1] : vector<16x20xf32> to vector<16xf32>
    %622 = vector.shape_cast %621 : vector<16xf32> to vector<16x1xf32>
    %623 = tpu.reciprocal %622 : vector<16x1xf32> -> vector<16x1xf32>
    %624 = vector.broadcast %623 : vector<16x1xf32> to vector<16x20xf32>
    %625 = arith.mulf %620, %624 : vector<16x20xf32>
    %626 = vector.extract_strided_slice %607 {offsets = [0, 60], sizes = [16, 20], strides = [1, 1]} : vector<16x80xf32> to vector<16x20xf32>
    %cst_238 = arith.constant dense<0.000000e+00> : vector<16xf32>
    %627 = vector.multi_reduction <add>, %626, %cst_238 [1] : vector<16x20xf32> to vector<16xf32>
    %628 = vector.shape_cast %627 : vector<16xf32> to vector<16x1xf32>
    %629 = tpu.reciprocal %628 : vector<16x1xf32> -> vector<16x1xf32>
    %630 = vector.broadcast %629 : vector<16x1xf32> to vector<16x20xf32>
    %631 = arith.mulf %626, %630 : vector<16x20xf32>
    %632 = tpu.concatenate %613, %619, %625, %631 in 1 : vector<16x20xf32>, vector<16x20xf32>, vector<16x20xf32>, vector<16x20xf32> -> vector<16x80xf32>
    %cst_239 = arith.constant dense<0.000000e+00> : vector<16x32xf32>
    %633 = tpu.matmul %632, %29, %cst_239 {dimension_numbers = #tpu.dot_dimension_numbers<[1], [0], [0], [1], [0, 0, 1, 1], [], []>} : vector<16x80xf32>, vector<80x32xf32>, vector<16x32xf32> -> vector<16x32xf32>
    %634 = vector.broadcast %600 : vector<1x32xf32> to vector<16x32xf32>
    %635 = arith.addf %633, %634 : vector<16x32xf32>
    %636 = arith.addf %554, %597 : vector<16x32xf32>
    %637 = arith.addf %636, %635 : vector<16x32xf32>
    %c0_240 = arith.constant 0 : index
    %c0_241 = arith.constant 0 : index
    %638 = vector.load %arg20[%c0_240, %c0_241] : memref<32x32xf32, #tpu.memory_space<vmem>>, vector<32x32xf32>
    %cst_242 = arith.constant dense<0.000000e+00> : vector<16x32xf32>
    %639 = tpu.matmul %637, %638, %cst_242 {dimension_numbers = #tpu.dot_dimension_numbers<[1], [0], [0], [1], [0, 0, 1, 1], [], []>} : vector<16x32xf32>, vector<32x32xf32>, vector<16x32xf32> -> vector<16x32xf32>
    %c0_243 = arith.constant 0 : index
    %c0_244 = arith.constant 0 : index
    %640 = vector.load %arg21[%c0_243, %c0_244] : memref<1x32xf32, #tpu.memory_space<vmem>>, vector<1x32xf32>
    %641 = vector.broadcast %640 : vector<1x32xf32> to vector<16x32xf32>
    %642 = arith.addf %639, %641 : vector<16x32xf32>
    %cst_245 = arith.constant 0.000000e+00 : f32
    %643 = vector.broadcast %cst_245 : f32 to vector<16x32xf32>
    %644 = arith.maximumf %642, %643 : vector<16x32xf32>
    %c0_246 = arith.constant 0 : index
    %c0_247 = arith.constant 0 : index
    %645 = vector.load %arg22[%c0_246, %c0_247] : memref<32x32xf32, #tpu.memory_space<vmem>>, vector<32x32xf32>
    %cst_248 = arith.constant dense<0.000000e+00> : vector<16x32xf32>
    %646 = tpu.matmul %644, %645, %cst_248 {dimension_numbers = #tpu.dot_dimension_numbers<[1], [0], [0], [1], [0, 0, 1, 1], [], []>} : vector<16x32xf32>, vector<32x32xf32>, vector<16x32xf32> -> vector<16x32xf32>
    %647 = arith.addf %637, %646 : vector<16x32xf32>
    %c0_249 = arith.constant 0 : index
    %c0_250 = arith.constant 0 : index
    %648 = vector.load %arg23[%c0_249, %c0_250] : memref<1x32xf32, #tpu.memory_space<vmem>>, vector<1x32xf32>
    %649 = vector.broadcast %648 : vector<1x32xf32> to vector<16x32xf32>
    %650 = arith.addf %647, %649 : vector<16x32xf32>
    %c4 = arith.constant 4 : index
    %c0_251 = arith.constant 0 : index
    %c0_252 = arith.constant 0 : index
    %651 = vector.load %arg28[%c4, %c0_251, %c0_252] : memref<7x16x32xf32, #tpu.memory_space<vmem>>, vector<1x16x32xf32>
    %652 = vector.shape_cast %651 : vector<1x16x32xf32> to vector<16x32xf32>
    %653 = vector.shape_cast %650 : vector<16x32xf32> to vector<1x16x32xf32>
    tpu.vector_store %arg28[%c4, %c0_251, %c0_252], %653 {strides = array<i32>} : memref<7x16x32xf32, #tpu.memory_space<vmem>>, vector<1x16x32xf32>,
    %c0_253 = arith.constant 0 : index
    %c0_254 = arith.constant 0 : index
    %654 = vector.load %arg9[%c0_253, %c0_254] : memref<32x192xf32, #tpu.memory_space<vmem>>, vector<32x192xf32>
    %cst_255 = arith.constant dense<0.000000e+00> : vector<16x192xf32>
    %655 = tpu.matmul %650, %654, %cst_255 {dimension_numbers = #tpu.dot_dimension_numbers<[1], [0], [0], [1], [0, 0, 1, 1], [], []>} : vector<16x32xf32>, vector<32x192xf32>, vector<16x192xf32> -> vector<16x192xf32>
    %c0_256 = arith.constant 0 : index
    %c0_257 = arith.constant 0 : index
    %656 = vector.load %arg10[%c0_256, %c0_257] : memref<1x192xf32, #tpu.memory_space<vmem>>, vector<1x192xf32>
    %657 = vector.broadcast %656 : vector<1x192xf32> to vector<16x192xf32>
    %658 = arith.addf %655, %657 : vector<16x192xf32>
    %659 = vector.extract_strided_slice %658 {offsets = [0, 0], sizes = [16, 128], strides = [1, 1]} : vector<16x192xf32> to vector<16x128xf32>
    %660 = vector.extract_strided_slice %659 {offsets = [0, 0], sizes = [16, 32], strides = [1, 1]} : vector<16x128xf32> to vector<16x32xf32>
    %661 = vector.extract_strided_slice %659 {offsets = [0, 32], sizes = [16, 32], strides = [1, 1]} : vector<16x128xf32> to vector<16x32xf32>
    %662 = vector.extract_strided_slice %659 {offsets = [0, 64], sizes = [16, 32], strides = [1, 1]} : vector<16x128xf32> to vector<16x32xf32>
    %663 = vector.extract_strided_slice %659 {offsets = [0, 96], sizes = [16, 32], strides = [1, 1]} : vector<16x128xf32> to vector<16x32xf32>
    %664 = tpu.concatenate %660, %661, %662, %663 in 0 : vector<16x32xf32>, vector<16x32xf32>, vector<16x32xf32>, vector<16x32xf32> -> vector<64x32xf32>
    %665 = vector.extract_strided_slice %658 {offsets = [0, 128], sizes = [16, 32], strides = [1, 1]} : vector<16x192xf32> to vector<16x32xf32>
    %666 = vector.extract_strided_slice %658 {offsets = [0, 160], sizes = [16, 32], strides = [1, 1]} : vector<16x192xf32> to vector<16x32xf32>
    %c0_258 = arith.constant 0 : index
    %c0_259 = arith.constant 0 : index
    %667 = vector.load %arg6[%c0_258, %c0_259] : memref<32x64xf32, #tpu.memory_space<vmem>>, vector<32x64xf32>
    %668 = tpu.transpose %666, [1, 0] : vector<16x32xf32> -> vector<32x16xf32>
    %669 = tpu.concatenate %668, %668, %668, %668 in 1 : vector<32x16xf32>, vector<32x16xf32>, vector<32x16xf32>, vector<32x16xf32> -> vector<32x64xf32>
    %670 = arith.mulf %669, %667 : vector<32x64xf32>
    %c0_260 = arith.constant 0 : index
    %c0_261 = arith.constant 0 : index
    %671 = vector.load %arg3[%c0_260, %c0_261] : memref<16x64xf32, #tpu.memory_space<vmem>>, vector<16x64xf32>
    %c0_262 = arith.constant 0 : index
    %c0_263 = arith.constant 0 : index
    %672 = vector.load %arg11[%c0_262, %c0_263] : memref<1x32xf32, #tpu.memory_space<vmem>>, vector<1x32xf32>
    %cst_264 = arith.constant dense<0.000000e+00> : vector<16x64xf32>
    %673 = tpu.matmul %665, %670, %cst_264 {dimension_numbers = #tpu.dot_dimension_numbers<[1], [0], [0], [1], [0, 0, 1, 1], [], []>} : vector<16x32xf32>, vector<32x64xf32>, vector<16x64xf32> -> vector<16x64xf32>
    %cst_265 = arith.constant dense<0xFF800000> : vector<16xf32>
    %674 = vector.multi_reduction <maximumf>, %673, %cst_265 [1] : vector<16x64xf32> to vector<16xf32>
    %675 = vector.shape_cast %674 : vector<16xf32> to vector<16x1xf32>
    %676 = vector.broadcast %675 : vector<16x1xf32> to vector<16x64xf32>
    %677 = arith.subf %673, %676 : vector<16x64xf32>
    %678 = math.exp %677 : vector<16x64xf32>
    %679 = arith.mulf %678, %671 : vector<16x64xf32>
    %680 = vector.extract_strided_slice %679 {offsets = [0, 0], sizes = [16, 16], strides = [1, 1]} : vector<16x64xf32> to vector<16x16xf32>
    %cst_266 = arith.constant dense<0.000000e+00> : vector<16xf32>
    %681 = vector.multi_reduction <add>, %680, %cst_266 [1] : vector<16x16xf32> to vector<16xf32>
    %682 = vector.shape_cast %681 : vector<16xf32> to vector<16x1xf32>
    %683 = tpu.reciprocal %682 : vector<16x1xf32> -> vector<16x1xf32>
    %684 = vector.broadcast %683 : vector<16x1xf32> to vector<16x16xf32>
    %685 = arith.mulf %680, %684 : vector<16x16xf32>
    %686 = vector.extract_strided_slice %679 {offsets = [0, 16], sizes = [16, 16], strides = [1, 1]} : vector<16x64xf32> to vector<16x16xf32>
    %cst_267 = arith.constant dense<0.000000e+00> : vector<16xf32>
    %687 = vector.multi_reduction <add>, %686, %cst_267 [1] : vector<16x16xf32> to vector<16xf32>
    %688 = vector.shape_cast %687 : vector<16xf32> to vector<16x1xf32>
    %689 = tpu.reciprocal %688 : vector<16x1xf32> -> vector<16x1xf32>
    %690 = vector.broadcast %689 : vector<16x1xf32> to vector<16x16xf32>
    %691 = arith.mulf %686, %690 : vector<16x16xf32>
    %692 = vector.extract_strided_slice %679 {offsets = [0, 32], sizes = [16, 16], strides = [1, 1]} : vector<16x64xf32> to vector<16x16xf32>
    %cst_268 = arith.constant dense<0.000000e+00> : vector<16xf32>
    %693 = vector.multi_reduction <add>, %692, %cst_268 [1] : vector<16x16xf32> to vector<16xf32>
    %694 = vector.shape_cast %693 : vector<16xf32> to vector<16x1xf32>
    %695 = tpu.reciprocal %694 : vector<16x1xf32> -> vector<16x1xf32>
    %696 = vector.broadcast %695 : vector<16x1xf32> to vector<16x16xf32>
    %697 = arith.mulf %692, %696 : vector<16x16xf32>
    %698 = vector.extract_strided_slice %679 {offsets = [0, 48], sizes = [16, 16], strides = [1, 1]} : vector<16x64xf32> to vector<16x16xf32>
    %cst_269 = arith.constant dense<0.000000e+00> : vector<16xf32>
    %699 = vector.multi_reduction <add>, %698, %cst_269 [1] : vector<16x16xf32> to vector<16xf32>
    %700 = vector.shape_cast %699 : vector<16xf32> to vector<16x1xf32>
    %701 = tpu.reciprocal %700 : vector<16x1xf32> -> vector<16x1xf32>
    %702 = vector.broadcast %701 : vector<16x1xf32> to vector<16x16xf32>
    %703 = arith.mulf %698, %702 : vector<16x16xf32>
    %704 = tpu.concatenate %685, %691, %697, %703 in 1 : vector<16x16xf32>, vector<16x16xf32>, vector<16x16xf32>, vector<16x16xf32> -> vector<16x64xf32>
    %cst_270 = arith.constant dense<0.000000e+00> : vector<16x32xf32>
    %705 = tpu.matmul %704, %664, %cst_270 {dimension_numbers = #tpu.dot_dimension_numbers<[1], [0], [0], [1], [0, 0, 1, 1], [], []>} : vector<16x64xf32>, vector<64x32xf32>, vector<16x32xf32> -> vector<16x32xf32>
    %706 = vector.broadcast %672 : vector<1x32xf32> to vector<16x32xf32>
    %707 = arith.addf %705, %706 : vector<16x32xf32>
    %708 = arith.addf %650, %707 : vector<16x32xf32>
    %c0_271 = arith.constant 0 : index
    %c0_272 = arith.constant 0 : index
    %709 = vector.load %arg12[%c0_271, %c0_272] : memref<32x64xf32, #tpu.memory_space<vmem>>, vector<32x64xf32>
    %cst_273 = arith.constant dense<0.000000e+00> : vector<16x64xf32>
    %710 = tpu.matmul %708, %709, %cst_273 {dimension_numbers = #tpu.dot_dimension_numbers<[1], [0], [0], [1], [0, 0, 1, 1], [], []>} : vector<16x32xf32>, vector<32x64xf32>, vector<16x64xf32> -> vector<16x64xf32>
    %c0_274 = arith.constant 0 : index
    %c0_275 = arith.constant 0 : index
    %711 = vector.load %arg13[%c0_274, %c0_275] : memref<1x64xf32, #tpu.memory_space<vmem>>, vector<1x64xf32>
    %712 = vector.broadcast %711 : vector<1x64xf32> to vector<16x64xf32>
    %713 = arith.addf %710, %712 : vector<16x64xf32>
    %714 = vector.extract_strided_slice %713 {offsets = [0, 0], sizes = [16, 32], strides = [1, 1]} : vector<16x64xf32> to vector<16x32xf32>
    %c0_276 = arith.constant 0 : index
    %c0_277 = arith.constant 0 : index
    %715 = vector.load %arg4[%c0_276, %c0_277] : memref<16x64xf32, #tpu.memory_space<vmem>>, vector<16x64xf32>
    %c0_278 = arith.constant 0 : index
    %c0_279 = arith.constant 0 : index
    %716 = vector.load %arg16[%c0_278, %c0_279] : memref<1x32xf32, #tpu.memory_space<vmem>>, vector<1x32xf32>
    %cst_280 = arith.constant dense<0.000000e+00> : vector<16x64xf32>
    %717 = tpu.matmul %714, %17, %cst_280 {dimension_numbers = #tpu.dot_dimension_numbers<[1], [0], [0], [1], [0, 0, 1, 1], [], []>} : vector<16x32xf32>, vector<32x64xf32>, vector<16x64xf32> -> vector<16x64xf32>
    %cst_281 = arith.constant dense<0xFF800000> : vector<16xf32>
    %718 = vector.multi_reduction <maximumf>, %717, %cst_281 [1] : vector<16x64xf32> to vector<16xf32>
    %719 = vector.shape_cast %718 : vector<16xf32> to vector<16x1xf32>
    %720 = vector.broadcast %719 : vector<16x1xf32> to vector<16x64xf32>
    %721 = arith.subf %717, %720 : vector<16x64xf32>
    %722 = math.exp %721 : vector<16x64xf32>
    %723 = arith.mulf %722, %715 : vector<16x64xf32>
    %724 = vector.extract_strided_slice %723 {offsets = [0, 0], sizes = [16, 16], strides = [1, 1]} : vector<16x64xf32> to vector<16x16xf32>
    %cst_282 = arith.constant dense<0.000000e+00> : vector<16xf32>
    %725 = vector.multi_reduction <add>, %724, %cst_282 [1] : vector<16x16xf32> to vector<16xf32>
    %726 = vector.shape_cast %725 : vector<16xf32> to vector<16x1xf32>
    %727 = tpu.reciprocal %726 : vector<16x1xf32> -> vector<16x1xf32>
    %728 = vector.broadcast %727 : vector<16x1xf32> to vector<16x16xf32>
    %729 = arith.mulf %724, %728 : vector<16x16xf32>
    %730 = vector.extract_strided_slice %723 {offsets = [0, 16], sizes = [16, 16], strides = [1, 1]} : vector<16x64xf32> to vector<16x16xf32>
    %cst_283 = arith.constant dense<0.000000e+00> : vector<16xf32>
    %731 = vector.multi_reduction <add>, %730, %cst_283 [1] : vector<16x16xf32> to vector<16xf32>
    %732 = vector.shape_cast %731 : vector<16xf32> to vector<16x1xf32>
    %733 = tpu.reciprocal %732 : vector<16x1xf32> -> vector<16x1xf32>
    %734 = vector.broadcast %733 : vector<16x1xf32> to vector<16x16xf32>
    %735 = arith.mulf %730, %734 : vector<16x16xf32>
    %736 = vector.extract_strided_slice %723 {offsets = [0, 32], sizes = [16, 16], strides = [1, 1]} : vector<16x64xf32> to vector<16x16xf32>
    %cst_284 = arith.constant dense<0.000000e+00> : vector<16xf32>
    %737 = vector.multi_reduction <add>, %736, %cst_284 [1] : vector<16x16xf32> to vector<16xf32>
    %738 = vector.shape_cast %737 : vector<16xf32> to vector<16x1xf32>
    %739 = tpu.reciprocal %738 : vector<16x1xf32> -> vector<16x1xf32>
    %740 = vector.broadcast %739 : vector<16x1xf32> to vector<16x16xf32>
    %741 = arith.mulf %736, %740 : vector<16x16xf32>
    %742 = vector.extract_strided_slice %723 {offsets = [0, 48], sizes = [16, 16], strides = [1, 1]} : vector<16x64xf32> to vector<16x16xf32>
    %cst_285 = arith.constant dense<0.000000e+00> : vector<16xf32>
    %743 = vector.multi_reduction <add>, %742, %cst_285 [1] : vector<16x16xf32> to vector<16xf32>
    %744 = vector.shape_cast %743 : vector<16xf32> to vector<16x1xf32>
    %745 = tpu.reciprocal %744 : vector<16x1xf32> -> vector<16x1xf32>
    %746 = vector.broadcast %745 : vector<16x1xf32> to vector<16x16xf32>
    %747 = arith.mulf %742, %746 : vector<16x16xf32>
    %748 = tpu.concatenate %729, %735, %741, %747 in 1 : vector<16x16xf32>, vector<16x16xf32>, vector<16x16xf32>, vector<16x16xf32> -> vector<16x64xf32>
    %cst_286 = arith.constant dense<0.000000e+00> : vector<16x32xf32>
    %749 = tpu.matmul %748, %12, %cst_286 {dimension_numbers = #tpu.dot_dimension_numbers<[1], [0], [0], [1], [0, 0, 1, 1], [], []>} : vector<16x64xf32>, vector<64x32xf32>, vector<16x32xf32> -> vector<16x32xf32>
    %750 = vector.broadcast %716 : vector<1x32xf32> to vector<16x32xf32>
    %751 = arith.addf %749, %750 : vector<16x32xf32>
    %752 = vector.extract_strided_slice %713 {offsets = [0, 32], sizes = [16, 32], strides = [1, 1]} : vector<16x64xf32> to vector<16x32xf32>
    %c0_287 = arith.constant 0 : index
    %c0_288 = arith.constant 0 : index
    %753 = vector.load %arg5[%c0_287, %c0_288] : memref<16x80xf32, #tpu.memory_space<vmem>>, vector<16x80xf32>
    %c0_289 = arith.constant 0 : index
    %c0_290 = arith.constant 0 : index
    %754 = vector.load %arg19[%c0_289, %c0_290] : memref<1x32xf32, #tpu.memory_space<vmem>>, vector<1x32xf32>
    %cst_291 = arith.constant dense<0.000000e+00> : vector<16x80xf32>
    %755 = tpu.matmul %752, %34, %cst_291 {dimension_numbers = #tpu.dot_dimension_numbers<[1], [0], [0], [1], [0, 0, 1, 1], [], []>} : vector<16x32xf32>, vector<32x80xf32>, vector<16x80xf32> -> vector<16x80xf32>
    %cst_292 = arith.constant dense<0xFF800000> : vector<16xf32>
    %756 = vector.multi_reduction <maximumf>, %755, %cst_292 [1] : vector<16x80xf32> to vector<16xf32>
    %757 = vector.shape_cast %756 : vector<16xf32> to vector<16x1xf32>
    %758 = vector.broadcast %757 : vector<16x1xf32> to vector<16x80xf32>
    %759 = arith.subf %755, %758 : vector<16x80xf32>
    %760 = math.exp %759 : vector<16x80xf32>
    %761 = arith.mulf %760, %753 : vector<16x80xf32>
    %762 = vector.extract_strided_slice %761 {offsets = [0, 0], sizes = [16, 20], strides = [1, 1]} : vector<16x80xf32> to vector<16x20xf32>
    %cst_293 = arith.constant dense<0.000000e+00> : vector<16xf32>
    %763 = vector.multi_reduction <add>, %762, %cst_293 [1] : vector<16x20xf32> to vector<16xf32>
    %764 = vector.shape_cast %763 : vector<16xf32> to vector<16x1xf32>
    %765 = tpu.reciprocal %764 : vector<16x1xf32> -> vector<16x1xf32>
    %766 = vector.broadcast %765 : vector<16x1xf32> to vector<16x20xf32>
    %767 = arith.mulf %762, %766 : vector<16x20xf32>
    %768 = vector.extract_strided_slice %761 {offsets = [0, 20], sizes = [16, 20], strides = [1, 1]} : vector<16x80xf32> to vector<16x20xf32>
    %cst_294 = arith.constant dense<0.000000e+00> : vector<16xf32>
    %769 = vector.multi_reduction <add>, %768, %cst_294 [1] : vector<16x20xf32> to vector<16xf32>
    %770 = vector.shape_cast %769 : vector<16xf32> to vector<16x1xf32>
    %771 = tpu.reciprocal %770 : vector<16x1xf32> -> vector<16x1xf32>
    %772 = vector.broadcast %771 : vector<16x1xf32> to vector<16x20xf32>
    %773 = arith.mulf %768, %772 : vector<16x20xf32>
    %774 = vector.extract_strided_slice %761 {offsets = [0, 40], sizes = [16, 20], strides = [1, 1]} : vector<16x80xf32> to vector<16x20xf32>
    %cst_295 = arith.constant dense<0.000000e+00> : vector<16xf32>
    %775 = vector.multi_reduction <add>, %774, %cst_295 [1] : vector<16x20xf32> to vector<16xf32>
    %776 = vector.shape_cast %775 : vector<16xf32> to vector<16x1xf32>
    %777 = tpu.reciprocal %776 : vector<16x1xf32> -> vector<16x1xf32>
    %778 = vector.broadcast %777 : vector<16x1xf32> to vector<16x20xf32>
    %779 = arith.mulf %774, %778 : vector<16x20xf32>
    %780 = vector.extract_strided_slice %761 {offsets = [0, 60], sizes = [16, 20], strides = [1, 1]} : vector<16x80xf32> to vector<16x20xf32>
    %cst_296 = arith.constant dense<0.000000e+00> : vector<16xf32>
    %781 = vector.multi_reduction <add>, %780, %cst_296 [1] : vector<16x20xf32> to vector<16xf32>
    %782 = vector.shape_cast %781 : vector<16xf32> to vector<16x1xf32>
    %783 = tpu.reciprocal %782 : vector<16x1xf32> -> vector<16x1xf32>
    %784 = vector.broadcast %783 : vector<16x1xf32> to vector<16x20xf32>
    %785 = arith.mulf %780, %784 : vector<16x20xf32>
    %786 = tpu.concatenate %767, %773, %779, %785 in 1 : vector<16x20xf32>, vector<16x20xf32>, vector<16x20xf32>, vector<16x20xf32> -> vector<16x80xf32>
    %cst_297 = arith.constant dense<0.000000e+00> : vector<16x32xf32>
    %787 = tpu.matmul %786, %29, %cst_297 {dimension_numbers = #tpu.dot_dimension_numbers<[1], [0], [0], [1], [0, 0, 1, 1], [], []>} : vector<16x80xf32>, vector<80x32xf32>, vector<16x32xf32> -> vector<16x32xf32>
    %788 = vector.broadcast %754 : vector<1x32xf32> to vector<16x32xf32>
    %789 = arith.addf %787, %788 : vector<16x32xf32>
    %790 = arith.addf %708, %751 : vector<16x32xf32>
    %791 = arith.addf %790, %789 : vector<16x32xf32>
    %c0_298 = arith.constant 0 : index
    %c0_299 = arith.constant 0 : index
    %792 = vector.load %arg20[%c0_298, %c0_299] : memref<32x32xf32, #tpu.memory_space<vmem>>, vector<32x32xf32>
    %cst_300 = arith.constant dense<0.000000e+00> : vector<16x32xf32>
    %793 = tpu.matmul %791, %792, %cst_300 {dimension_numbers = #tpu.dot_dimension_numbers<[1], [0], [0], [1], [0, 0, 1, 1], [], []>} : vector<16x32xf32>, vector<32x32xf32>, vector<16x32xf32> -> vector<16x32xf32>
    %c0_301 = arith.constant 0 : index
    %c0_302 = arith.constant 0 : index
    %794 = vector.load %arg21[%c0_301, %c0_302] : memref<1x32xf32, #tpu.memory_space<vmem>>, vector<1x32xf32>
    %795 = vector.broadcast %794 : vector<1x32xf32> to vector<16x32xf32>
    %796 = arith.addf %793, %795 : vector<16x32xf32>
    %cst_303 = arith.constant 0.000000e+00 : f32
    %797 = vector.broadcast %cst_303 : f32 to vector<16x32xf32>
    %798 = arith.maximumf %796, %797 : vector<16x32xf32>
    %c0_304 = arith.constant 0 : index
    %c0_305 = arith.constant 0 : index
    %799 = vector.load %arg22[%c0_304, %c0_305] : memref<32x32xf32, #tpu.memory_space<vmem>>, vector<32x32xf32>
    %cst_306 = arith.constant dense<0.000000e+00> : vector<16x32xf32>
    %800 = tpu.matmul %798, %799, %cst_306 {dimension_numbers = #tpu.dot_dimension_numbers<[1], [0], [0], [1], [0, 0, 1, 1], [], []>} : vector<16x32xf32>, vector<32x32xf32>, vector<16x32xf32> -> vector<16x32xf32>
    %801 = arith.addf %791, %800 : vector<16x32xf32>
    %c0_307 = arith.constant 0 : index
    %c0_308 = arith.constant 0 : index
    %802 = vector.load %arg23[%c0_307, %c0_308] : memref<1x32xf32, #tpu.memory_space<vmem>>, vector<1x32xf32>
    %803 = vector.broadcast %802 : vector<1x32xf32> to vector<16x32xf32>
    %804 = arith.addf %801, %803 : vector<16x32xf32>
    %c5 = arith.constant 5 : index
    %c0_309 = arith.constant 0 : index
    %c0_310 = arith.constant 0 : index
    %805 = vector.load %arg28[%c5, %c0_309, %c0_310] : memref<7x16x32xf32, #tpu.memory_space<vmem>>, vector<1x16x32xf32>
    %806 = vector.shape_cast %805 : vector<1x16x32xf32> to vector<16x32xf32>
    %807 = vector.shape_cast %804 : vector<16x32xf32> to vector<1x16x32xf32>
    tpu.vector_store %arg28[%c5, %c0_309, %c0_310], %807 {strides = array<i32>} : memref<7x16x32xf32, #tpu.memory_space<vmem>>, vector<1x16x32xf32>,
    %c0_311 = arith.constant 0 : index
    %c0_312 = arith.constant 0 : index
    %808 = vector.load %arg9[%c0_311, %c0_312] : memref<32x192xf32, #tpu.memory_space<vmem>>, vector<32x192xf32>
    %cst_313 = arith.constant dense<0.000000e+00> : vector<16x192xf32>
    %809 = tpu.matmul %804, %808, %cst_313 {dimension_numbers = #tpu.dot_dimension_numbers<[1], [0], [0], [1], [0, 0, 1, 1], [], []>} : vector<16x32xf32>, vector<32x192xf32>, vector<16x192xf32> -> vector<16x192xf32>
    %c0_314 = arith.constant 0 : index
    %c0_315 = arith.constant 0 : index
    %810 = vector.load %arg10[%c0_314, %c0_315] : memref<1x192xf32, #tpu.memory_space<vmem>>, vector<1x192xf32>
    %811 = vector.broadcast %810 : vector<1x192xf32> to vector<16x192xf32>
    %812 = arith.addf %809, %811 : vector<16x192xf32>
    %813 = vector.extract_strided_slice %812 {offsets = [0, 0], sizes = [16, 128], strides = [1, 1]} : vector<16x192xf32> to vector<16x128xf32>
    %814 = vector.extract_strided_slice %813 {offsets = [0, 0], sizes = [16, 32], strides = [1, 1]} : vector<16x128xf32> to vector<16x32xf32>
    %815 = vector.extract_strided_slice %813 {offsets = [0, 32], sizes = [16, 32], strides = [1, 1]} : vector<16x128xf32> to vector<16x32xf32>
    %816 = vector.extract_strided_slice %813 {offsets = [0, 64], sizes = [16, 32], strides = [1, 1]} : vector<16x128xf32> to vector<16x32xf32>
    %817 = vector.extract_strided_slice %813 {offsets = [0, 96], sizes = [16, 32], strides = [1, 1]} : vector<16x128xf32> to vector<16x32xf32>
    %818 = tpu.concatenate %814, %815, %816, %817 in 0 : vector<16x32xf32>, vector<16x32xf32>, vector<16x32xf32>, vector<16x32xf32> -> vector<64x32xf32>
    %819 = vector.extract_strided_slice %812 {offsets = [0, 128], sizes = [16, 32], strides = [1, 1]} : vector<16x192xf32> to vector<16x32xf32>
    %820 = vector.extract_strided_slice %812 {offsets = [0, 160], sizes = [16, 32], strides = [1, 1]} : vector<16x192xf32> to vector<16x32xf32>
    %c0_316 = arith.constant 0 : index
    %c0_317 = arith.constant 0 : index
    %821 = vector.load %arg6[%c0_316, %c0_317] : memref<32x64xf32, #tpu.memory_space<vmem>>, vector<32x64xf32>
    %822 = tpu.transpose %820, [1, 0] : vector<16x32xf32> -> vector<32x16xf32>
    %823 = tpu.concatenate %822, %822, %822, %822 in 1 : vector<32x16xf32>, vector<32x16xf32>, vector<32x16xf32>, vector<32x16xf32> -> vector<32x64xf32>
    %824 = arith.mulf %823, %821 : vector<32x64xf32>
    %c0_318 = arith.constant 0 : index
    %c0_319 = arith.constant 0 : index
    %825 = vector.load %arg3[%c0_318, %c0_319] : memref<16x64xf32, #tpu.memory_space<vmem>>, vector<16x64xf32>
    %c0_320 = arith.constant 0 : index
    %c0_321 = arith.constant 0 : index
    %826 = vector.load %arg11[%c0_320, %c0_321] : memref<1x32xf32, #tpu.memory_space<vmem>>, vector<1x32xf32>
    %cst_322 = arith.constant dense<0.000000e+00> : vector<16x64xf32>
    %827 = tpu.matmul %819, %824, %cst_322 {dimension_numbers = #tpu.dot_dimension_numbers<[1], [0], [0], [1], [0, 0, 1, 1], [], []>} : vector<16x32xf32>, vector<32x64xf32>, vector<16x64xf32> -> vector<16x64xf32>
    %cst_323 = arith.constant dense<0xFF800000> : vector<16xf32>
    %828 = vector.multi_reduction <maximumf>, %827, %cst_323 [1] : vector<16x64xf32> to vector<16xf32>
    %829 = vector.shape_cast %828 : vector<16xf32> to vector<16x1xf32>
    %830 = vector.broadcast %829 : vector<16x1xf32> to vector<16x64xf32>
    %831 = arith.subf %827, %830 : vector<16x64xf32>
    %832 = math.exp %831 : vector<16x64xf32>
    %833 = arith.mulf %832, %825 : vector<16x64xf32>
    %834 = vector.extract_strided_slice %833 {offsets = [0, 0], sizes = [16, 16], strides = [1, 1]} : vector<16x64xf32> to vector<16x16xf32>
    %cst_324 = arith.constant dense<0.000000e+00> : vector<16xf32>
    %835 = vector.multi_reduction <add>, %834, %cst_324 [1] : vector<16x16xf32> to vector<16xf32>
    %836 = vector.shape_cast %835 : vector<16xf32> to vector<16x1xf32>
    %837 = tpu.reciprocal %836 : vector<16x1xf32> -> vector<16x1xf32>
    %838 = vector.broadcast %837 : vector<16x1xf32> to vector<16x16xf32>
    %839 = arith.mulf %834, %838 : vector<16x16xf32>
    %840 = vector.extract_strided_slice %833 {offsets = [0, 16], sizes = [16, 16], strides = [1, 1]} : vector<16x64xf32> to vector<16x16xf32>
    %cst_325 = arith.constant dense<0.000000e+00> : vector<16xf32>
    %841 = vector.multi_reduction <add>, %840, %cst_325 [1] : vector<16x16xf32> to vector<16xf32>
    %842 = vector.shape_cast %841 : vector<16xf32> to vector<16x1xf32>
    %843 = tpu.reciprocal %842 : vector<16x1xf32> -> vector<16x1xf32>
    %844 = vector.broadcast %843 : vector<16x1xf32> to vector<16x16xf32>
    %845 = arith.mulf %840, %844 : vector<16x16xf32>
    %846 = vector.extract_strided_slice %833 {offsets = [0, 32], sizes = [16, 16], strides = [1, 1]} : vector<16x64xf32> to vector<16x16xf32>
    %cst_326 = arith.constant dense<0.000000e+00> : vector<16xf32>
    %847 = vector.multi_reduction <add>, %846, %cst_326 [1] : vector<16x16xf32> to vector<16xf32>
    %848 = vector.shape_cast %847 : vector<16xf32> to vector<16x1xf32>
    %849 = tpu.reciprocal %848 : vector<16x1xf32> -> vector<16x1xf32>
    %850 = vector.broadcast %849 : vector<16x1xf32> to vector<16x16xf32>
    %851 = arith.mulf %846, %850 : vector<16x16xf32>
    %852 = vector.extract_strided_slice %833 {offsets = [0, 48], sizes = [16, 16], strides = [1, 1]} : vector<16x64xf32> to vector<16x16xf32>
    %cst_327 = arith.constant dense<0.000000e+00> : vector<16xf32>
    %853 = vector.multi_reduction <add>, %852, %cst_327 [1] : vector<16x16xf32> to vector<16xf32>
    %854 = vector.shape_cast %853 : vector<16xf32> to vector<16x1xf32>
    %855 = tpu.reciprocal %854 : vector<16x1xf32> -> vector<16x1xf32>
    %856 = vector.broadcast %855 : vector<16x1xf32> to vector<16x16xf32>
    %857 = arith.mulf %852, %856 : vector<16x16xf32>
    %858 = tpu.concatenate %839, %845, %851, %857 in 1 : vector<16x16xf32>, vector<16x16xf32>, vector<16x16xf32>, vector<16x16xf32> -> vector<16x64xf32>
    %cst_328 = arith.constant dense<0.000000e+00> : vector<16x32xf32>
    %859 = tpu.matmul %858, %818, %cst_328 {dimension_numbers = #tpu.dot_dimension_numbers<[1], [0], [0], [1], [0, 0, 1, 1], [], []>} : vector<16x64xf32>, vector<64x32xf32>, vector<16x32xf32> -> vector<16x32xf32>
    %860 = vector.broadcast %826 : vector<1x32xf32> to vector<16x32xf32>
    %861 = arith.addf %859, %860 : vector<16x32xf32>
    %862 = arith.addf %804, %861 : vector<16x32xf32>
    %c0_329 = arith.constant 0 : index
    %c0_330 = arith.constant 0 : index
    %863 = vector.load %arg12[%c0_329, %c0_330] : memref<32x64xf32, #tpu.memory_space<vmem>>, vector<32x64xf32>
    %cst_331 = arith.constant dense<0.000000e+00> : vector<16x64xf32>
    %864 = tpu.matmul %862, %863, %cst_331 {dimension_numbers = #tpu.dot_dimension_numbers<[1], [0], [0], [1], [0, 0, 1, 1], [], []>} : vector<16x32xf32>, vector<32x64xf32>, vector<16x64xf32> -> vector<16x64xf32>
    %c0_332 = arith.constant 0 : index
    %c0_333 = arith.constant 0 : index
    %865 = vector.load %arg13[%c0_332, %c0_333] : memref<1x64xf32, #tpu.memory_space<vmem>>, vector<1x64xf32>
    %866 = vector.broadcast %865 : vector<1x64xf32> to vector<16x64xf32>
    %867 = arith.addf %864, %866 : vector<16x64xf32>
    %868 = vector.extract_strided_slice %867 {offsets = [0, 0], sizes = [16, 32], strides = [1, 1]} : vector<16x64xf32> to vector<16x32xf32>
    %c0_334 = arith.constant 0 : index
    %c0_335 = arith.constant 0 : index
    %869 = vector.load %arg4[%c0_334, %c0_335] : memref<16x64xf32, #tpu.memory_space<vmem>>, vector<16x64xf32>
    %c0_336 = arith.constant 0 : index
    %c0_337 = arith.constant 0 : index
    %870 = vector.load %arg16[%c0_336, %c0_337] : memref<1x32xf32, #tpu.memory_space<vmem>>, vector<1x32xf32>
    %cst_338 = arith.constant dense<0.000000e+00> : vector<16x64xf32>
    %871 = tpu.matmul %868, %17, %cst_338 {dimension_numbers = #tpu.dot_dimension_numbers<[1], [0], [0], [1], [0, 0, 1, 1], [], []>} : vector<16x32xf32>, vector<32x64xf32>, vector<16x64xf32> -> vector<16x64xf32>
    %cst_339 = arith.constant dense<0xFF800000> : vector<16xf32>
    %872 = vector.multi_reduction <maximumf>, %871, %cst_339 [1] : vector<16x64xf32> to vector<16xf32>
    %873 = vector.shape_cast %872 : vector<16xf32> to vector<16x1xf32>
    %874 = vector.broadcast %873 : vector<16x1xf32> to vector<16x64xf32>
    %875 = arith.subf %871, %874 : vector<16x64xf32>
    %876 = math.exp %875 : vector<16x64xf32>
    %877 = arith.mulf %876, %869 : vector<16x64xf32>
    %878 = vector.extract_strided_slice %877 {offsets = [0, 0], sizes = [16, 16], strides = [1, 1]} : vector<16x64xf32> to vector<16x16xf32>
    %cst_340 = arith.constant dense<0.000000e+00> : vector<16xf32>
    %879 = vector.multi_reduction <add>, %878, %cst_340 [1] : vector<16x16xf32> to vector<16xf32>
    %880 = vector.shape_cast %879 : vector<16xf32> to vector<16x1xf32>
    %881 = tpu.reciprocal %880 : vector<16x1xf32> -> vector<16x1xf32>
    %882 = vector.broadcast %881 : vector<16x1xf32> to vector<16x16xf32>
    %883 = arith.mulf %878, %882 : vector<16x16xf32>
    %884 = vector.extract_strided_slice %877 {offsets = [0, 16], sizes = [16, 16], strides = [1, 1]} : vector<16x64xf32> to vector<16x16xf32>
    %cst_341 = arith.constant dense<0.000000e+00> : vector<16xf32>
    %885 = vector.multi_reduction <add>, %884, %cst_341 [1] : vector<16x16xf32> to vector<16xf32>
    %886 = vector.shape_cast %885 : vector<16xf32> to vector<16x1xf32>
    %887 = tpu.reciprocal %886 : vector<16x1xf32> -> vector<16x1xf32>
    %888 = vector.broadcast %887 : vector<16x1xf32> to vector<16x16xf32>
    %889 = arith.mulf %884, %888 : vector<16x16xf32>
    %890 = vector.extract_strided_slice %877 {offsets = [0, 32], sizes = [16, 16], strides = [1, 1]} : vector<16x64xf32> to vector<16x16xf32>
    %cst_342 = arith.constant dense<0.000000e+00> : vector<16xf32>
    %891 = vector.multi_reduction <add>, %890, %cst_342 [1] : vector<16x16xf32> to vector<16xf32>
    %892 = vector.shape_cast %891 : vector<16xf32> to vector<16x1xf32>
    %893 = tpu.reciprocal %892 : vector<16x1xf32> -> vector<16x1xf32>
    %894 = vector.broadcast %893 : vector<16x1xf32> to vector<16x16xf32>
    %895 = arith.mulf %890, %894 : vector<16x16xf32>
    %896 = vector.extract_strided_slice %877 {offsets = [0, 48], sizes = [16, 16], strides = [1, 1]} : vector<16x64xf32> to vector<16x16xf32>
    %cst_343 = arith.constant dense<0.000000e+00> : vector<16xf32>
    %897 = vector.multi_reduction <add>, %896, %cst_343 [1] : vector<16x16xf32> to vector<16xf32>
    %898 = vector.shape_cast %897 : vector<16xf32> to vector<16x1xf32>
    %899 = tpu.reciprocal %898 : vector<16x1xf32> -> vector<16x1xf32>
    %900 = vector.broadcast %899 : vector<16x1xf32> to vector<16x16xf32>
    %901 = arith.mulf %896, %900 : vector<16x16xf32>
    %902 = tpu.concatenate %883, %889, %895, %901 in 1 : vector<16x16xf32>, vector<16x16xf32>, vector<16x16xf32>, vector<16x16xf32> -> vector<16x64xf32>
    %cst_344 = arith.constant dense<0.000000e+00> : vector<16x32xf32>
    %903 = tpu.matmul %902, %12, %cst_344 {dimension_numbers = #tpu.dot_dimension_numbers<[1], [0], [0], [1], [0, 0, 1, 1], [], []>} : vector<16x64xf32>, vector<64x32xf32>, vector<16x32xf32> -> vector<16x32xf32>
    %904 = vector.broadcast %870 : vector<1x32xf32> to vector<16x32xf32>
    %905 = arith.addf %903, %904 : vector<16x32xf32>
    %906 = arith.addf %883, %889 : vector<16x16xf32>
    %907 = arith.addf %906, %895 : vector<16x16xf32>
    %908 = arith.addf %907, %901 : vector<16x16xf32>
    %909 = vector.extract_strided_slice %867 {offsets = [0, 32], sizes = [16, 32], strides = [1, 1]} : vector<16x64xf32> to vector<16x32xf32>
    %c0_345 = arith.constant 0 : index
    %c0_346 = arith.constant 0 : index
    %910 = vector.load %arg5[%c0_345, %c0_346] : memref<16x80xf32, #tpu.memory_space<vmem>>, vector<16x80xf32>
    %c0_347 = arith.constant 0 : index
    %c0_348 = arith.constant 0 : index
    %911 = vector.load %arg19[%c0_347, %c0_348] : memref<1x32xf32, #tpu.memory_space<vmem>>, vector<1x32xf32>
    %cst_349 = arith.constant dense<0.000000e+00> : vector<16x80xf32>
    %912 = tpu.matmul %909, %34, %cst_349 {dimension_numbers = #tpu.dot_dimension_numbers<[1], [0], [0], [1], [0, 0, 1, 1], [], []>} : vector<16x32xf32>, vector<32x80xf32>, vector<16x80xf32> -> vector<16x80xf32>
    %cst_350 = arith.constant dense<0xFF800000> : vector<16xf32>
    %913 = vector.multi_reduction <maximumf>, %912, %cst_350 [1] : vector<16x80xf32> to vector<16xf32>
    %914 = vector.shape_cast %913 : vector<16xf32> to vector<16x1xf32>
    %915 = vector.broadcast %914 : vector<16x1xf32> to vector<16x80xf32>
    %916 = arith.subf %912, %915 : vector<16x80xf32>
    %917 = math.exp %916 : vector<16x80xf32>
    %918 = arith.mulf %917, %910 : vector<16x80xf32>
    %919 = vector.extract_strided_slice %918 {offsets = [0, 0], sizes = [16, 20], strides = [1, 1]} : vector<16x80xf32> to vector<16x20xf32>
    %cst_351 = arith.constant dense<0.000000e+00> : vector<16xf32>
    %920 = vector.multi_reduction <add>, %919, %cst_351 [1] : vector<16x20xf32> to vector<16xf32>
    %921 = vector.shape_cast %920 : vector<16xf32> to vector<16x1xf32>
    %922 = tpu.reciprocal %921 : vector<16x1xf32> -> vector<16x1xf32>
    %923 = vector.broadcast %922 : vector<16x1xf32> to vector<16x20xf32>
    %924 = arith.mulf %919, %923 : vector<16x20xf32>
    %925 = vector.extract_strided_slice %918 {offsets = [0, 20], sizes = [16, 20], strides = [1, 1]} : vector<16x80xf32> to vector<16x20xf32>
    %cst_352 = arith.constant dense<0.000000e+00> : vector<16xf32>
    %926 = vector.multi_reduction <add>, %925, %cst_352 [1] : vector<16x20xf32> to vector<16xf32>
    %927 = vector.shape_cast %926 : vector<16xf32> to vector<16x1xf32>
    %928 = tpu.reciprocal %927 : vector<16x1xf32> -> vector<16x1xf32>
    %929 = vector.broadcast %928 : vector<16x1xf32> to vector<16x20xf32>
    %930 = arith.mulf %925, %929 : vector<16x20xf32>
    %931 = vector.extract_strided_slice %918 {offsets = [0, 40], sizes = [16, 20], strides = [1, 1]} : vector<16x80xf32> to vector<16x20xf32>
    %cst_353 = arith.constant dense<0.000000e+00> : vector<16xf32>
    %932 = vector.multi_reduction <add>, %931, %cst_353 [1] : vector<16x20xf32> to vector<16xf32>
    %933 = vector.shape_cast %932 : vector<16xf32> to vector<16x1xf32>
    %934 = tpu.reciprocal %933 : vector<16x1xf32> -> vector<16x1xf32>
    %935 = vector.broadcast %934 : vector<16x1xf32> to vector<16x20xf32>
    %936 = arith.mulf %931, %935 : vector<16x20xf32>
    %937 = vector.extract_strided_slice %918 {offsets = [0, 60], sizes = [16, 20], strides = [1, 1]} : vector<16x80xf32> to vector<16x20xf32>
    %cst_354 = arith.constant dense<0.000000e+00> : vector<16xf32>
    %938 = vector.multi_reduction <add>, %937, %cst_354 [1] : vector<16x20xf32> to vector<16xf32>
    %939 = vector.shape_cast %938 : vector<16xf32> to vector<16x1xf32>
    %940 = tpu.reciprocal %939 : vector<16x1xf32> -> vector<16x1xf32>
    %941 = vector.broadcast %940 : vector<16x1xf32> to vector<16x20xf32>
    %942 = arith.mulf %937, %941 : vector<16x20xf32>
    %943 = tpu.concatenate %924, %930, %936, %942 in 1 : vector<16x20xf32>, vector<16x20xf32>, vector<16x20xf32>, vector<16x20xf32> -> vector<16x80xf32>
    %cst_355 = arith.constant dense<0.000000e+00> : vector<16x32xf32>
    %944 = tpu.matmul %943, %29, %cst_355 {dimension_numbers = #tpu.dot_dimension_numbers<[1], [0], [0], [1], [0, 0, 1, 1], [], []>} : vector<16x80xf32>, vector<80x32xf32>, vector<16x32xf32> -> vector<16x32xf32>
    %945 = vector.broadcast %911 : vector<1x32xf32> to vector<16x32xf32>
    %946 = arith.addf %944, %945 : vector<16x32xf32>
    %947 = arith.addf %862, %905 : vector<16x32xf32>
    %948 = arith.addf %947, %946 : vector<16x32xf32>
    %c0_356 = arith.constant 0 : index
    %c0_357 = arith.constant 0 : index
    %949 = vector.load %arg20[%c0_356, %c0_357] : memref<32x32xf32, #tpu.memory_space<vmem>>, vector<32x32xf32>
    %cst_358 = arith.constant dense<0.000000e+00> : vector<16x32xf32>
    %950 = tpu.matmul %948, %949, %cst_358 {dimension_numbers = #tpu.dot_dimension_numbers<[1], [0], [0], [1], [0, 0, 1, 1], [], []>} : vector<16x32xf32>, vector<32x32xf32>, vector<16x32xf32> -> vector<16x32xf32>
    %c0_359 = arith.constant 0 : index
    %c0_360 = arith.constant 0 : index
    %951 = vector.load %arg21[%c0_359, %c0_360] : memref<1x32xf32, #tpu.memory_space<vmem>>, vector<1x32xf32>
    %952 = vector.broadcast %951 : vector<1x32xf32> to vector<16x32xf32>
    %953 = arith.addf %950, %952 : vector<16x32xf32>
    %cst_361 = arith.constant 0.000000e+00 : f32
    %954 = vector.broadcast %cst_361 : f32 to vector<16x32xf32>
    %955 = arith.maximumf %953, %954 : vector<16x32xf32>
    %c0_362 = arith.constant 0 : index
    %c0_363 = arith.constant 0 : index
    %956 = vector.load %arg22[%c0_362, %c0_363] : memref<32x32xf32, #tpu.memory_space<vmem>>, vector<32x32xf32>
    %cst_364 = arith.constant dense<0.000000e+00> : vector<16x32xf32>
    %957 = tpu.matmul %955, %956, %cst_364 {dimension_numbers = #tpu.dot_dimension_numbers<[1], [0], [0], [1], [0, 0, 1, 1], [], []>} : vector<16x32xf32>, vector<32x32xf32>, vector<16x32xf32> -> vector<16x32xf32>
    %958 = arith.addf %948, %957 : vector<16x32xf32>
    %c0_365 = arith.constant 0 : index
    %c0_366 = arith.constant 0 : index
    %959 = vector.load %arg23[%c0_365, %c0_366] : memref<1x32xf32, #tpu.memory_space<vmem>>, vector<1x32xf32>
    %960 = vector.broadcast %959 : vector<1x32xf32> to vector<16x32xf32>
    %961 = arith.addf %958, %960 : vector<16x32xf32>
    %c6 = arith.constant 6 : index
    %c0_367 = arith.constant 0 : index
    %c0_368 = arith.constant 0 : index
    %962 = vector.load %arg28[%c6, %c0_367, %c0_368] : memref<7x16x32xf32, #tpu.memory_space<vmem>>, vector<1x16x32xf32>
    %963 = vector.shape_cast %962 : vector<1x16x32xf32> to vector<16x32xf32>
    %964 = vector.shape_cast %961 : vector<16x32xf32> to vector<1x16x32xf32>
    tpu.vector_store %arg28[%c6, %c0_367, %c0_368], %964 {strides = array<i32>} : memref<7x16x32xf32, #tpu.memory_space<vmem>>, vector<1x16x32xf32>,
    %cst_369 = arith.constant dense<0.000000e+00> : vector<16xf32>
    %965 = vector.multi_reduction <add>, %961, %cst_369 [1] : vector<16x32xf32> to vector<16xf32>
    %966 = vector.shape_cast %965 : vector<16xf32> to vector<16x1xf32>
    %cst_370 = arith.constant 3.200000e+01 : f32
    %967 = vector.broadcast %cst_370 : f32 to vector<16x1xf32>
    %968 = arith.divf %966, %967 : vector<16x1xf32>
    %969 = vector.broadcast %968 : vector<16x1xf32> to vector<16x32xf32>
    %970 = arith.subf %961, %969 : vector<16x32xf32>
    %971 = arith.mulf %970, %970 : vector<16x32xf32>
    %cst_371 = arith.constant dense<0.000000e+00> : vector<16xf32>
    %972 = vector.multi_reduction <add>, %971, %cst_371 [1] : vector<16x32xf32> to vector<16xf32>
    %973 = vector.shape_cast %972 : vector<16xf32> to vector<16x1xf32>
    %cst_372 = arith.constant 3.200000e+01 : f32
    %974 = vector.broadcast %cst_372 : f32 to vector<16x1xf32>
    %975 = arith.divf %973, %974 : vector<16x1xf32>
    %976 = vector.broadcast %968 : vector<16x1xf32> to vector<16x32xf32>
    %977 = arith.subf %961, %976 : vector<16x32xf32>
    %cst_373 = arith.constant 9.99999974E-6 : f32
    %978 = vector.broadcast %cst_373 : f32 to vector<16x1xf32>
    %979 = arith.addf %975, %978 : vector<16x1xf32>
    %980 = math.rsqrt %979 : vector<16x1xf32>
    %981 = vector.broadcast %980 : vector<16x1xf32> to vector<16x32xf32>
    %982 = arith.mulf %977, %981 : vector<16x32xf32>
    %c0_374 = arith.constant 0 : index
    %c0_375 = arith.constant 0 : index
    %983 = vector.load %arg24[%c0_374, %c0_375] : memref<1x32xf32, #tpu.memory_space<vmem>>, vector<1x32xf32>
    %984 = vector.broadcast %983 : vector<1x32xf32> to vector<16x32xf32>
    %985 = arith.mulf %982, %984 : vector<16x32xf32>
    %c0_376 = arith.constant 0 : index
    %c0_377 = arith.constant 0 : index
    %986 = vector.load %arg25[%c0_376, %c0_377] : memref<1x32xf32, #tpu.memory_space<vmem>>, vector<1x32xf32>
    %987 = vector.broadcast %986 : vector<1x32xf32> to vector<16x32xf32>
    %988 = arith.addf %985, %987 : vector<16x32xf32>
    %c0_378 = arith.constant 0 : index
    %c0_379 = arith.constant 0 : index
    %989 = vector.load %arg26[%c0_378, %c0_379] : memref<16x32xf32, #tpu.memory_space<vmem>>, vector<16x32xf32>
    tpu.vector_store %arg26[%c0_378, %c0_379], %988 {strides = array<i32>} : memref<16x32xf32, #tpu.memory_space<vmem>>, vector<16x32xf32>,
    %990 = vector.extract_strided_slice %908 {offsets = [0, 0], sizes = [8, 8], strides = [1, 1]} : vector<16x16xf32> to vector<8x8xf32>
    %991 = vector.extract_strided_slice %908 {offsets = [8, 8], sizes = [8, 8], strides = [1, 1]} : vector<16x16xf32> to vector<8x8xf32>
    %992 = arith.addf %990, %991 : vector<8x8xf32>
    %cst_380 = arith.constant 1.250000e-01 : f32
    %993 = vector.broadcast %cst_380 : f32 to vector<8x8xf32>
    %994 = arith.mulf %992, %993 : vector<8x8xf32>
    %c0_381 = arith.constant 0 : index
    %c0_382 = arith.constant 0 : index
    %995 = vector.load %arg27[%c0_381, %c0_382] : memref<8x8xf32, #tpu.memory_space<vmem>>, vector<8x8xf32>
    tpu.vector_store %arg27[%c0_381, %c0_382], %994 {strides = array<i32>} : memref<8x8xf32, #tpu.memory_space<vmem>>, vector<8x8xf32>,
    return
  }
}

</mosaic_0001>

<llo_original>
// kernel: decoder_forward.1
$region0: #{decoder_forward.1}
  #allocation0 [shape = 'u32[]', space=smem, size = 0x4, offset = 0x4, fixed_abs, tag = 'smem constant byte address 0x4 - core index']
  #allocation1 [shape = 'u32[144,128]{1,0:T(1,128)}', space=vmem, size = 0x12000, scoped, tag = 'internal scratch']
  %s0 = inlined_call_operand.hbm [shape: f32[16,32], index: 0, kind: input, shape index: {}]
  %s1 = inlined_call_operand.vmem [shape: f32[16,48], index: 1, kind: input, shape index: {}]
  %s2 = inlined_call_operand.vmem [shape: f32[20,40], index: 2, kind: input, shape index: {}]
  %s3 = inlined_call_operand.vmem [shape: f32[16,64], index: 3, kind: input, shape index: {}, may-alias: {3,4}]
  %s4 = inlined_call_operand.vmem [shape: f32[16,64], index: 4, kind: input, shape index: {}, may-alias: {3,4}]
  %s5 = inlined_call_operand.hbm [shape: f32[16,80], index: 5, kind: input, shape index: {}]
  %s6 = inlined_call_operand.vmem [shape: f32[32,64], index: 6, kind: input, shape index: {}, may-alias: {6,7}]
  %s7 = inlined_call_operand.vmem [shape: f32[32,64], index: 7, kind: input, shape index: {}, may-alias: {6,7}]
  %s8 = inlined_call_operand.vmem [shape: f32[32,80], index: 8, kind: input, shape index: {}]
  %s9 = inlined_call_operand.hbm [shape: f32[32,192], index: 9, kind: input, shape index: {}]
  %s10 = inlined_call_operand.hbm [shape: f32[1,192], index: 10, kind: input, shape index: {}]
  %s11 = inlined_call_operand.hbm [shape: f32[1,32], index: 11, kind: input, shape index: {}]
  %s12 = inlined_call_operand.hbm [shape: f32[32,64], index: 12, kind: input, shape index: {}]
  %s13 = inlined_call_operand.hbm [shape: f32[1,64], index: 13, kind: input, shape index: {}]
  %s14 = inlined_call_operand.vmem [shape: f32[48,160], index: 14, kind: input, shape index: {}]
  %s15 = inlined_call_operand.hbm [shape: f32[1,160], index: 15, kind: input, shape index: {}]
  %s16 = inlined_call_operand.hbm [shape: f32[1,32], index: 16, kind: input, shape index: {}]
  %s17 = inlined_call_operand.hbm [shape: f32[40,160], index: 17, kind: input, shape index: {}]
  %s18 = inlined_call_operand.hbm [shape: f32[1,160], index: 18, kind: input, shape index: {}]
  %s19 = inlined_call_operand.hbm [shape: f32[1,32], index: 19, kind: input, shape index: {}]
  %s20 = inlined_call_operand.hbm [shape: f32[32,32], index: 20, kind: input, shape index: {}]
  %s21 = inlined_call_operand.hbm [shape: f32[1,32], index: 21, kind: input, shape index: {}]
  %s22 = inlined_call_operand.hbm [shape: f32[32,32], index: 22, kind: input, shape index: {}]
  %s23 = inlined_call_operand.hbm [shape: f32[1,32], index: 23, kind: input, shape index: {}]
  %s24 = inlined_call_operand.vmem [shape: f32[1,32], index: 24, kind: input, shape index: {}]
  %s25 = inlined_call_operand.vmem [shape: f32[1,32], index: 25, kind: input, shape index: {}]
  %s26 = inlined_call_operand.hbm [shape: f32[16,32], index: 26, kind: output, shape index: {0}]
  %s27 = inlined_call_operand.hbm [shape: f32[8,8], index: 27, kind: output, shape index: {1}]
  %s28 = inlined_call_operand.vmem [shape: f32[7,16,32], index: 28, kind: output, shape index: {2}]
  %29 = xla_tuple %s26, %s27, %s28
  %s30 = sld [smem:[#allocation0]]
  $region194: #{decoder_forward.1} parent=0
    _
  %s32 = ssub.s32 1, %s30
  %s33 = scalar_select 0, %s32, %s30
  $region1: #{decoder_forward.1} parent=0
    #allocation2 [shape = 'u8[8192]{0}', space=vmem, size = 0x2000, scoped, tag = 'input window, operand 0, single buffered']
    #allocation3 [shape = 's32[1]{0}', space=sflag, size = 0x4, scoped, tag = 'scoped memory for decoder_forward.1']
    #allocation4 [shape = 's32[1]{0}', space=sflag, size = 0x4, scoped, tag = 'scoped memory for decoder_forward.1']
    #allocation5 [shape = 'u8[8192]{0}', space=vmem, size = 0x2000, scoped, tag = 'input window, operand 5, single buffered']
    #allocation6 [shape = 's32[1]{0}', space=sflag, size = 0x4, scoped, tag = 'scoped memory for decoder_forward.1']
    #allocation7 [shape = 'u8[32768]{0}', space=vmem, size = 0x8000, scoped, tag = 'input window, operand 9, single buffered']
    #allocation8 [shape = 'u8[1024]{0}', space=vmem, size = 0x400, scoped, tag = 'input window, operand 10, single buffered']
    #allocation9 [shape = 's32[1]{0}', space=sflag, size = 0x4, scoped, tag = 'scoped memory for decoder_forward.1']
    #allocation10 [shape = 'u8[512]{0}', space=vmem, size = 0x400, scoped, tag = 'input window, operand 11, single buffered']
    #allocation11 [shape = 'u8[16384]{0}', space=vmem, size = 0x4000, scoped, tag = 'input window, operand 12, single buffered']
    #allocation12 [shape = 's32[1]{0}', space=sflag, size = 0x4, scoped, tag = 'scoped memory for decoder_forward.1']
    #allocation13 [shape = 'u8[512]{0}', space=vmem, size = 0x400, scoped, tag = 'input window, operand 13, single buffered']
    #allocation14 [shape = 'u8[1024]{0}', space=vmem, size = 0x400, scoped, tag = 'input window, operand 15, single buffered']
    #allocation15 [shape = 's32[1]{0}', space=sflag, size = 0x4, scoped, tag = 'scoped memory for decoder_forward.1']
    #allocation16 [shape = 'u8[512]{0}', space=vmem, size = 0x400, scoped, tag = 'input window, operand 16, single buffered']
    #allocation17 [shape = 'u8[40960]{0}', space=vmem, size = 0xa000, scoped, tag = 'input window, operand 17, single buffered']
    #allocation18 [shape = 's32[1]{0}', space=sflag, size = 0x4, scoped, tag = 'scoped memory for decoder_forward.1']
    #allocation19 [shape = 'u8[1024]{0}', space=vmem, size = 0x400, scoped, tag = 'input window, operand 18, single buffered']
    #allocation20 [shape = 'u8[512]{0}', space=vmem, size = 0x400, scoped, tag = 'input window, operand 19, single buffered']
    #allocation21 [shape = 's32[1]{0}', space=sflag, size = 0x4, scoped, tag = 'scoped memory for decoder_forward.1']
    #allocation22 [shape = 'u8[16384]{0}', space=vmem, size = 0x4000, scoped, tag = 'input window, operand 20, single buffered']
    #allocation23 [shape = 'u8[512]{0}', space=vmem, size = 0x400, scoped, tag = 'input window, operand 21, single buffered']
    #allocation24 [shape = 's32[1]{0}', space=sflag, size = 0x4, scoped, tag = 'scoped memory for decoder_forward.1']
    #allocation25 [shape = 'u8[16384]{0}', space=vmem, size = 0x4000, scoped, tag = 'input window, operand 22, single buffered']
    #allocation26 [shape = 'u8[512]{0}', space=vmem, size = 0x400, scoped, tag = 'input window, operand 23, single buffered']
    #allocation27 [shape = 's32[1]{0}', space=sflag, size = 0x4, scoped, tag = 'scoped memory for decoder_forward.1']
    #allocation28 [shape = 'u8[8192]{0}', space=vmem, size = 0x2000, scoped, tag = 'output window, operand 0, single buffered']
    #allocation29 [shape = 'u8[4096]{0}', space=vmem, size = 0x1000, scoped, tag = 'output window, operand 1, single buffered']
    #allocation30 [shape = 's32[1]{0}', space=sflag, size = 0x4, scoped, tag = 'scoped memory for decoder_forward.1']
    %34 = vsyncpa [#allocation3], 0
    %35 = vsyncpa [#allocation6], 0
    %36 = vsyncpa [#allocation9], 0
    %37 = vsyncpa [#allocation12], 0
    %38 = vsyncpa [#allocation15], 0
    %39 = vsyncpa [#allocation18], 0
    %40 = vsyncpa [#allocation21], 0
    %41 = vsyncpa [#allocation24], 0
    %42 = vsyncpa [#allocation27], 0
    %43 = vsyncpa [#allocation4], 0
    %44 = vsyncpa [#allocation30], 0
    // Predicated region
    $region2: #{decoder_forward.1} parent=1 // pred_check
      _
    $region3: #{decoder_forward.1} parent=1 // pred_check_branch
      %46 = sbr.rel (0) target = $region5
    $region4: #{decoder_forward.1} parent=1 // pred_region
      %s48 = ssub.s32 256, 256
      %49 = vsyncadd [#allocation3], %s48
      %s50 = sshll.u32 [#allocation2], 4
      %s51 = int_to_ptr.vmem [resolvable:$true] %s50
      %56 = dma.hbm_to_vmem [thread:$0]  %s0, 256, %s51, [#allocation3], 128, 128, 8
    $region5: #{decoder_forward.1} parent=1 // pred_fallthru
      _
    // Predicated region
    $region6: #{decoder_forward.1} parent=1 // pred_check
      _
    $region7: #{decoder_forward.1} parent=1 // pred_check_branch
      %58 = sbr.rel (0) target = $region9
    $region8: #{decoder_forward.1} parent=1 // pred_region
      _
    $region9: #{decoder_forward.1} parent=1 // pred_fallthru
      _
    // Predicated region
    $region10: #{decoder_forward.1} parent=1 // pred_check
      _
    $region11: #{decoder_forward.1} parent=1 // pred_check_branch
      %60 = sbr.rel (0) target = $region13
    $region12: #{decoder_forward.1} parent=1 // pred_region
      _
    $region13: #{decoder_forward.1} parent=1 // pred_fallthru
      _
    // Predicated region
    $region14: #{decoder_forward.1} parent=1 // pred_check
      _
    $region15: #{decoder_forward.1} parent=1 // pred_check_branch
      %62 = sbr.rel (0) target = $region17
    $region16: #{decoder_forward.1} parent=1 // pred_region
      _
    $region17: #{decoder_forward.1} parent=1 // pred_fallthru
      _
    // Predicated region
    $region18: #{decoder_forward.1} parent=1 // pred_check
      _
    $region19: #{decoder_forward.1} parent=1 // pred_check_branch
      %64 = sbr.rel (0) target = $region21
    $region20: #{decoder_forward.1} parent=1 // pred_region
      _
    $region21: #{decoder_forward.1} parent=1 // pred_fallthru
      _
    // Predicated region
    $region22: #{decoder_forward.1} parent=1 // pred_check
      _
    $region23: #{decoder_forward.1} parent=1 // pred_check_branch
      %66 = sbr.rel (0) target = $region25
    $region24: #{decoder_forward.1} parent=1 // pred_region
      %s68 = ssub.s32 256, 256
      %69 = vsyncadd [#allocation6], %s68
      %s70 = sshll.u32 [#allocation5], 4
      %s71 = int_to_ptr.vmem [resolvable:$true] %s70
      %76 = dma.hbm_to_vmem [thread:$0]  %s5, 256, %s71, [#allocation6], 128, 128, 8
    $region25: #{decoder_forward.1} parent=1 // pred_fallthru
      _
    // Predicated region
    $region26: #{decoder_forward.1} parent=1 // pred_check
      _
    $region27: #{decoder_forward.1} parent=1 // pred_check_branch
      %78 = sbr.rel (0) target = $region29
    $region28: #{decoder_forward.1} parent=1 // pred_region
      _
    $region29: #{decoder_forward.1} parent=1 // pred_fallthru
      _
    // Predicated region
    $region30: #{decoder_forward.1} parent=1 // pred_check
      _
    $region31: #{decoder_forward.1} parent=1 // pred_check_branch
      %80 = sbr.rel (0) target = $region33
    $region32: #{decoder_forward.1} parent=1 // pred_region
      _
    $region33: #{decoder_forward.1} parent=1 // pred_fallthru
      _
    // Predicated region
    $region34: #{decoder_forward.1} parent=1 // pred_check
      _
    $region35: #{decoder_forward.1} parent=1 // pred_check_branch
      %82 = sbr.rel (0) target = $region37
    $region36: #{decoder_forward.1} parent=1 // pred_region
      _
    $region37: #{decoder_forward.1} parent=1 // pred_fallthru
      _
    // Predicated region
    $region38: #{decoder_forward.1} parent=1 // pred_check
      _
    $region39: #{decoder_forward.1} parent=1 // pred_check_branch
      %84 = sbr.rel (0) target = $region41
    $region40: #{decoder_forward.1} parent=1 // pred_region
      %s86 = ssub.s32 1024, 1024
      %87 = vsyncadd [#allocation6], %s86
      %s88 = sshll.u32 [#allocation7], 4
      %s89 = int_to_ptr.vmem [resolvable:$true] %s88
      %94 = dma.hbm_to_vmem [thread:$0]  %s9, 1024, %s89, [#allocation6], 256, 256, 16
    $region41: #{decoder_forward.1} parent=1 // pred_fallthru
      _
    // Predicated region
    $region42: #{decoder_forward.1} parent=1 // pred_check
      _
    $region43: #{decoder_forward.1} parent=1 // pred_check_branch
      %96 = sbr.rel (0) target = $region45
    $region44: #{decoder_forward.1} parent=1 // pred_region
      %s98 = ssub.s32 32, 32
      %99 = vsyncadd [#allocation9], %s98
      %s101 = sshll.u32 [#allocation8], 4
      %s102 = int_to_ptr.vmem [resolvable:$true] %s101
      %104 = dma.hbm_to_vmem [thread:$0]  %s10, 32, %s102, [#allocation9]
    $region45: #{decoder_forward.1} parent=1 // pred_fallthru
      _
    // Predicated region
    $region46: #{decoder_forward.1} parent=1 // pred_check
      _
    $region47: #{decoder_forward.1} parent=1 // pred_check_branch
      %106 = sbr.rel (0) target = $region49
    $region48: #{decoder_forward.1} parent=1 // pred_region
      %s108 = ssub.s32 16, 16
      %109 = vsyncadd [#allocation9], %s108
      %s111 = sshll.u32 [#allocation10], 4
      %s112 = int_to_ptr.vmem [resolvable:$true] %s111
      %114 = dma.hbm_to_vmem [thread:$0]  %s11, 16, %s112, [#allocation9]
    $region49: #{decoder_forward.1} parent=1 // pred_fallthru
      _
    // Predicated region
    $region50: #{decoder_forward.1} parent=1 // pred_check
      _
    $region51: #{decoder_forward.1} parent=1 // pred_check_branch
      %116 = sbr.rel (0) target = $region53
    $region52: #{decoder_forward.1} parent=1 // pred_region
      %s118 = ssub.s32 512, 512
      %119 = vsyncadd [#allocation12], %s118
      %s120 = sshll.u32 [#allocation11], 4
      %s121 = int_to_ptr.vmem [resolvable:$true] %s120
      %126 = dma.hbm_to_vmem [thread:$0]  %s12, 512, %s121, [#allocation12], 128, 128, 8
    $region53: #{decoder_forward.1} parent=1 // pred_fallthru
      _
    // Predicated region
    $region54: #{decoder_forward.1} parent=1 // pred_check
      _
    $region55: #{decoder_forward.1} parent=1 // pred_check_branch
      %128 = sbr.rel (0) target = $region57
    $region56: #{decoder_forward.1} parent=1 // pred_region
      %s130 = ssub.s32 16, 16
      %131 = vsyncadd [#allocation12], %s130
      %s133 = sshll.u32 [#allocation13], 4
      %s134 = int_to_ptr.vmem [resolvable:$true] %s133
      %136 = dma.hbm_to_vmem [thread:$0]  %s13, 16, %s134, [#allocation12]
    $region57: #{decoder_forward.1} parent=1 // pred_fallthru
      _
    // Predicated region
    $region58: #{decoder_forward.1} parent=1 // pred_check
      _
    $region59: #{decoder_forward.1} parent=1 // pred_check_branch
      %138 = sbr.rel (0) target = $region61
    $region60: #{decoder_forward.1} parent=1 // pred_region
      _
    $region61: #{decoder_forward.1} parent=1 // pred_fallthru
      _
    // Predicated region
    $region62: #{decoder_forward.1} parent=1 // pred_check
      _
    $region63: #{decoder_forward.1} parent=1 // pred_check_branch
      %140 = sbr.rel (0) target = $region65
    $region64: #{decoder_forward.1} parent=1 // pred_region
      %s142 = ssub.s32 32, 32
      %143 = vsyncadd [#allocation15], %s142
      %s145 = sshll.u32 [#allocation14], 4
      %s146 = int_to_ptr.vmem [resolvable:$true] %s145
      %148 = dma.hbm_to_vmem [thread:$0]  %s15, 32, %s146, [#allocation15]
    $region65: #{decoder_forward.1} parent=1 // pred_fallthru
      _
    // Predicated region
    $region66: #{decoder_forward.1} parent=1 // pred_check
      _
    $region67: #{decoder_forward.1} parent=1 // pred_check_branch
      %150 = sbr.rel (0) target = $region69
    $region68: #{decoder_forward.1} parent=1 // pred_region
      %s152 = ssub.s32 16, 16
      %153 = vsyncadd [#allocation15], %s152
      %s155 = sshll.u32 [#allocation16], 4
      %s156 = int_to_ptr.vmem [resolvable:$true] %s155
      %158 = dma.hbm_to_vmem [thread:$0]  %s16, 16, %s156, [#allocation15]
    $region69: #{decoder_forward.1} parent=1 // pred_fallthru
      _
    // Predicated region
    $region70: #{decoder_forward.1} parent=1 // pred_check
      _
    $region71: #{decoder_forward.1} parent=1 // pred_check_branch
      %160 = sbr.rel (0) target = $region73
    $region72: #{decoder_forward.1} parent=1 // pred_region
      %s162 = ssub.s32 1280, 1280
      %163 = vsyncadd [#allocation18], %s162
      %s164 = sshll.u32 [#allocation17], 4
      %s165 = int_to_ptr.vmem [resolvable:$true] %s164
      %170 = dma.hbm_to_vmem [thread:$0]  %s17, 1280, %s165, [#allocation18], 256, 256, 16
    $region73: #{decoder_forward.1} parent=1 // pred_fallthru
      _
    // Predicated region
    $region74: #{decoder_forward.1} parent=1 // pred_check
      _
    $region75: #{decoder_forward.1} parent=1 // pred_check_branch
      %172 = sbr.rel (0) target = $region77
    $region76: #{decoder_forward.1} parent=1 // pred_region
      %s174 = ssub.s32 32, 32
      %175 = vsyncadd [#allocation18], %s174
      %s177 = sshll.u32 [#allocation19], 4
      %s178 = int_to_ptr.vmem [resolvable:$true] %s177
      %180 = dma.hbm_to_vmem [thread:$0]  %s18, 32, %s178, [#allocation18]
    $region77: #{decoder_forward.1} parent=1 // pred_fallthru
      _
    // Predicated region
    $region78: #{decoder_forward.1} parent=1 // pred_check
      _
    $region79: #{decoder_forward.1} parent=1 // pred_check_branch
      %182 = sbr.rel (0) target = $region81
    $region80: #{decoder_forward.1} parent=1 // pred_region
      %s184 = ssub.s32 16, 16
      %185 = vsyncadd [#allocation21], %s184
      %s187 = sshll.u32 [#allocation20], 4
      %s188 = int_to_ptr.vmem [resolvable:$true] %s187
      %190 = dma.hbm_to_vmem [thread:$0]  %s19, 16, %s188, [#allocation21]
    $region81: #{decoder_forward.1} parent=1 // pred_fallthru
      _
    // Predicated region
    $region82: #{decoder_forward.1} parent=1 // pred_check
      _
    $region83: #{decoder_forward.1} parent=1 // pred_check_branch
      %192 = sbr.rel (0) target = $region85
    $region84: #{decoder_forward.1} parent=1 // pred_region
      %s194 = ssub.s32 512, 512
      %195 = vsyncadd [#allocation21], %s194
      %s196 = sshll.u32 [#allocation22], 4
      %s197 = int_to_ptr.vmem [resolvable:$true] %s196
      %202 = dma.hbm_to_vmem [thread:$0]  %s20, 512, %s197, [#allocation21], 128, 128, 8
    $region85: #{decoder_forward.1} parent=1 // pred_fallthru
      _
    // Predicated region
    $region86: #{decoder_forward.1} parent=1 // pred_check
      _
    $region87: #{decoder_forward.1} parent=1 // pred_check_branch
      %204 = sbr.rel (0) target = $region89
    $region88: #{decoder_forward.1} parent=1 // pred_region
      %s206 = ssub.s32 16, 16
      %207 = vsyncadd [#allocation24], %s206
      %s209 = sshll.u32 [#allocation23], 4
      %s210 = int_to_ptr.vmem [resolvable:$true] %s209
      %212 = dma.hbm_to_vmem [thread:$0]  %s21, 16, %s210, [#allocation24]
    $region89: #{decoder_forward.1} parent=1 // pred_fallthru
      _
    // Predicated region
    $region90: #{decoder_forward.1} parent=1 // pred_check
      _
    $region91: #{decoder_forward.1} parent=1 // pred_check_branch
      %214 = sbr.rel (0) target = $region93
    $region92: #{decoder_forward.1} parent=1 // pred_region
      %s216 = ssub.s32 512, 512
      %217 = vsyncadd [#allocation24], %s216
      %s218 = sshll.u32 [#allocation25], 4
      %s219 = int_to_ptr.vmem [resolvable:$true] %s218
      %224 = dma.hbm_to_vmem [thread:$0]  %s22, 512, %s219, [#allocation24], 128, 128, 8
    $region93: #{decoder_forward.1} parent=1 // pred_fallthru
      _
    // Predicated region
    $region94: #{decoder_forward.1} parent=1 // pred_check
      _
    $region95: #{decoder_forward.1} parent=1 // pred_check_branch
      %226 = sbr.rel (0) target = $region97
    $region96: #{decoder_forward.1} parent=1 // pred_region
      %s228 = ssub.s32 16, 16
      %229 = vsyncadd [#allocation27], %s228
      %s231 = sshll.u32 [#allocation26], 4
      %s232 = int_to_ptr.vmem [resolvable:$true] %s231
      %234 = dma.hbm_to_vmem [thread:$0]  %s23, 16, %s232, [#allocation27]
    $region97: #{decoder_forward.1} parent=1 // pred_fallthru
      _
    // Predicated region
    $region98: #{decoder_forward.1} parent=1 // pred_check
      _
    $region99: #{decoder_forward.1} parent=1 // pred_check_branch
      %236 = sbr.rel (0) target = $region101
    $region100: #{decoder_forward.1} parent=1 // pred_region
      _
    $region101: #{decoder_forward.1} parent=1 // pred_fallthru
      _
    // Predicated region
    $region102: #{decoder_forward.1} parent=1 // pred_check
      _
    $region103: #{decoder_forward.1} parent=1 // pred_check_branch
      %238 = sbr.rel (0) target = $region105
    $region104: #{decoder_forward.1} parent=1 // pred_region
      _
    $region105: #{decoder_forward.1} parent=1 // pred_fallthru
      _
    // Predicated region
    $region106: #{decoder_forward.1} parent=1 // pred_check
      _
    $region107: #{decoder_forward.1} parent=1 // pred_check_branch
      %240 = sbr.rel (0) target = $region109
    $region108: #{decoder_forward.1} parent=1 // pred_region
      %241 = dma.done [#allocation3], 256
    $region109: #{decoder_forward.1} parent=1 // pred_fallthru
      _
    // Predicated region
    $region110: #{decoder_forward.1} parent=1 // pred_check
      _
    $region111: #{decoder_forward.1} parent=1 // pred_check_branch
      %243 = sbr.rel (0) target = $region113
    $region112: #{decoder_forward.1} parent=1 // pred_region
      %244 = dma.done [#allocation6], 256
    $region113: #{decoder_forward.1} parent=1 // pred_fallthru
      _
    // Predicated region
    $region114: #{decoder_forward.1} parent=1 // pred_check
      _
    $region115: #{decoder_forward.1} parent=1 // pred_check_branch
      %246 = sbr.rel (0) target = $region117
    $region116: #{decoder_forward.1} parent=1 // pred_region
      %247 = dma.done [#allocation6], 1024
    $region117: #{decoder_forward.1} parent=1 // pred_fallthru
      _
    // Predicated region
    $region118: #{decoder_forward.1} parent=1 // pred_check
      _
    $region119: #{decoder_forward.1} parent=1 // pred_check_branch
      %249 = sbr.rel (0) target = $region121
    $region120: #{decoder_forward.1} parent=1 // pred_region
      %250 = dma.done [#allocation9], 32
    $region121: #{decoder_forward.1} parent=1 // pred_fallthru
      _
    // Predicated region
    $region122: #{decoder_forward.1} parent=1 // pred_check
      _
    $region123: #{decoder_forward.1} parent=1 // pred_check_branch
      %252 = sbr.rel (0) target = $region125
    $region124: #{decoder_forward.1} parent=1 // pred_region
      %253 = dma.done [#allocation9], 16
    $region125: #{decoder_forward.1} parent=1 // pred_fallthru
      _
    // Predicated region
    $region126: #{decoder_forward.1} parent=1 // pred_check
      _
    $region127: #{decoder_forward.1} parent=1 // pred_check_branch
      %255 = sbr.rel (0) target = $region129
    $region128: #{decoder_forward.1} parent=1 // pred_region
      %256 = dma.done [#allocation12], 512
    $region129: #{decoder_forward.1} parent=1 // pred_fallthru
      _
    // Predicated region
    $region130: #{decoder_forward.1} parent=1 // pred_check
      _
    $region131: #{decoder_forward.1} parent=1 // pred_check_branch
      %258 = sbr.rel (0) target = $region133
    $region132: #{decoder_forward.1} parent=1 // pred_region
      %259 = dma.done [#allocation12], 16
    $region133: #{decoder_forward.1} parent=1 // pred_fallthru
      _
    // Predicated region
    $region134: #{decoder_forward.1} parent=1 // pred_check
      _
    $region135: #{decoder_forward.1} parent=1 // pred_check_branch
      %261 = sbr.rel (0) target = $region137
    $region136: #{decoder_forward.1} parent=1 // pred_region
      %262 = dma.done [#allocation15], 32
    $region137: #{decoder_forward.1} parent=1 // pred_fallthru
      _
    // Predicated region
    $region138: #{decoder_forward.1} parent=1 // pred_check
      _
    $region139: #{decoder_forward.1} parent=1 // pred_check_branch
      %264 = sbr.rel (0) target = $region141
    $region140: #{decoder_forward.1} parent=1 // pred_region
      %265 = dma.done [#allocation15], 16
    $region141: #{decoder_forward.1} parent=1 // pred_fallthru
      _
    // Predicated region
    $region142: #{decoder_forward.1} parent=1 // pred_check
      _
    $region143: #{decoder_forward.1} parent=1 // pred_check_branch
      %267 = sbr.rel (0) target = $region145
    $region144: #{decoder_forward.1} parent=1 // pred_region
      %268 = dma.done [#allocation18], 1280
    $region145: #{decoder_forward.1} parent=1 // pred_fallthru
      _
    // Predicated region
    $region146: #{decoder_forward.1} parent=1 // pred_check
      _
    $region147: #{decoder_forward.1} parent=1 // pred_check_branch
      %270 = sbr.rel (0) target = $region149
    $region148: #{decoder_forward.1} parent=1 // pred_region
      %271 = dma.done [#allocation18], 32
    $region149: #{decoder_forward.1} parent=1 // pred_fallthru
      _
    // Predicated region
    $region150: #{decoder_forward.1} parent=1 // pred_check
      _
    $region151: #{decoder_forward.1} parent=1 // pred_check_branch
      %273 = sbr.rel (0) target = $region153
    $region152: #{decoder_forward.1} parent=1 // pred_region
      %274 = dma.done [#allocation21], 16
    $region153: #{decoder_forward.1} parent=1 // pred_fallthru
      _
    // Predicated region
    $region154: #{decoder_forward.1} parent=1 // pred_check
      _
    $region155: #{decoder_forward.1} parent=1 // pred_check_branch
      %276 = sbr.rel (0) target = $region157
    $region156: #{decoder_forward.1} parent=1 // pred_region
      %277 = dma.done [#allocation21], 512
    $region157: #{decoder_forward.1} parent=1 // pred_fallthru
      _
    // Predicated region
    $region158: #{decoder_forward.1} parent=1 // pred_check
      _
    $region159: #{decoder_forward.1} parent=1 // pred_check_branch
      %279 = sbr.rel (0) target = $region161
    $region160: #{decoder_forward.1} parent=1 // pred_region
      %280 = dma.done [#allocation24], 16
    $region161: #{decoder_forward.1} parent=1 // pred_fallthru
      _
    // Predicated region
    $region162: #{decoder_forward.1} parent=1 // pred_check
      _
    $region163: #{decoder_forward.1} parent=1 // pred_check_branch
      %282 = sbr.rel (0) target = $region165
    $region164: #{decoder_forward.1} parent=1 // pred_region
      %283 = dma.done [#allocation24], 512
    $region165: #{decoder_forward.1} parent=1 // pred_fallthru
      _
    // Predicated region
    $region166: #{decoder_forward.1} parent=1 // pred_check
      _
    $region167: #{decoder_forward.1} parent=1 // pred_check_branch
      %285 = sbr.rel (0) target = $region169
    $region168: #{decoder_forward.1} parent=1 // pred_region
      %286 = dma.done [#allocation27], 16
    $region169: #{decoder_forward.1} parent=1 // pred_fallthru
      _
    %v287 = vld [vmem:[#allocation2] sm:$0xff]
    %v288 = vld [vmem:[#allocation2 + $0x8] sm:$0xff]
    %v289 = vld [vmem:[%s1] sm:$0xff]
    %v290 = vld [vmem:[%s1 + $0x8] sm:$0xff]
    %v291 = vld [vmem:[%s14] sm:$0xff]
    %v292 = vld [vmem:[%s14 + $0x8] sm:$0xff]
    %v293 = vld [vmem:[%s14 + $0x10] sm:$0xff]
    %v294 = vld [vmem:[%s14 + $0x18] sm:$0xff]
    %v295 = vld [vmem:[%s14 + $0x20] sm:$0xff]
    %v296 = vld [vmem:[%s14 + $0x28] sm:$0xff]
    %v297 = vld [vmem:[%s14 + $0x30] sm:$0xff]
    %v298 = vld [vmem:[%s14 + $0x38] sm:$0xff]
    %v299 = vld [vmem:[%s14 + $0x40] sm:$0xff]
    %v300 = vld [vmem:[%s14 + $0x48] sm:$0xff]
    %v301 = vld [vmem:[%s14 + $0x50] sm:$0xff]
    %v302 = vld [vmem:[%s14 + $0x58] sm:$0xff]
    %v303 = vld [vmem:[#allocation14] sm:$0x3]
    %v305 = vlaneseq
    %v306 = vshrl.u32 %v305, 7
    %v307 = vsub.s32 0, %v306
    %v308 = vrot.slane %v303, %v307
    %v309 = vlaneseq
    %v310 = vshrl.u32 %v309, 7
    %v311 = vsub.s32 1, %v310
    %v312 = vrot.slane %v303, %v311
    %vm315 = vcmask 392192
    %v317 = vsel %vm315, %v289, 0
    %v320 = vsel %vm315, %v290, 0
    %322 = vmatprep.subr.mxu0 0.0
    %323 = vmatpush1.msra.mxu0 0.0
    %324 = vmatprep.subr.mxu0 0.0
    %325 = vmatpush1.msra.mxu0 0.0
    %326 = vmatprep.subr.mxu0 0.0
    %327 = vmatpush1.msra.mxu0 0.0
    %328 = vmatprep.subr.mxu0 0.0
    %329 = vmatpush1.msra.mxu0 0.0
    %330 = vmatprep.subr.mxu0 0.0
    %331 = vmatpush1.msra.mxu0 0.0
    %332 = vmatprep.subr.mxu0 0.0
    %333 = vmatpush1.msra.mxu0 0.0
    %334 = vmatprep.subr.mxu0 0.0
    %335 = vmatpush1.msra.mxu0 0.0
    %336 = vmatprep.subr.mxu0 0.0
    %337 = vmatpush1.msra.mxu0 0.0
    %338 = vmatprep.subr.mxu0 0.0
    %339 = vmatpush1.msra.mxu0 0.0
    %340 = vmatprep.subr.mxu0 0.0
    %341 = vmatpush1.msra.mxu0 0.0
    %342 = vmatprep.subr.mxu0 %v302
    %343 = vmatpush1.msra.mxu0 %v301
    %344 = vmatprep.subr.mxu0 %v300
    %345 = vmatpush1.msra.mxu0 %v299
    %346 = vmatprep.subr.mxu0 %v298
    %347 = vmatpush1.msra.mxu0 %v297
    %348 = vmatprep.subr.mxu0 %v296
    %349 = vmatpush1.msra.mxu0 %v295
    %350 = vmatprep.subr.mxu0 %v294
    %351 = vmatpush1.msra.mxu0 %v293
    %352 = vmatprep.subr.mxu0 %v292
    %353 = vmatpush1.msra.mxu0 %v291
    %354 = vmatprep.subr.mxu0 0.0
    %355 = vmatpush2.msra.mxu0 0.0
    %356 = vmatprep.subr.mxu0 0.0
    %357 = vmatpush2.msra.mxu0 0.0
    %358 = vmatprep.subr.mxu0 0.0
    %359 = vmatpush2.msra.mxu0 0.0
    %360 = vmatprep.subr.mxu0 0.0
    %361 = vmatpush2.msra.mxu0 0.0
    %362 = vmatprep.subr.mxu0 0.0
    %363 = vmatpush2.msra.mxu0 0.0
    %364 = vmatprep.subr.mxu0 0.0
    %365 = vmatpush2.msra.mxu0 0.0
    %366 = vmatprep.subr.mxu0 0.0
    %367 = vmatpush2.msra.mxu0 0.0
    %368 = vmatprep.subr.mxu0 0.0
    %369 = vmatpush2.msra.mxu0 0.0
    %370 = vmatprep.subr.mxu0 0.0
    %371 = vmatpush2.msra.mxu0 0.0
    %372 = vmatprep.subr.mxu0 0.0
    %373 = vmatpush2.msra.mxu0 0.0
    %374 = vmatprep.subr.mxu0 0.0
    %375 = vmatpush2.msra.mxu0 0.0
    %376 = vmatprep.subr.mxu0 0.0
    %377 = vmatpush2.msra.mxu0 0.0
    %378 = vmatprep.subr.mxu0 0.0
    %379 = vmatpush2.msra.mxu0 0.0
    %380 = vmatprep.subr.mxu0 0.0
    %381 = vmatpush2.msra.mxu0 0.0
    %382 = vmatprep.subr.mxu0 0.0
    %383 = vmatpush2.msra.mxu0 0.0
    %384 = vmatprep.subr.mxu0 0.0
    %385 = vmatpush2.msra.mxu0 0.0
    %386 = vmatprep.mubr.f32.mxu0 0.0
    %387 = vmatmul.mubr.f32.gmra.mxu0 %v317
    %v388 = vpop.f32.mrf.mxu0
    %v389 = vadd.f32 %v308, %v388
    %v390 = vpop.f32.mrf.mxu0
    %v391 = vadd.f32 %v312, %v390
    %392 = vmatprep.mubr.f32.mxu0 0.0
    %393 = vmatmul.mubr.f32.gmra.mxu0 %v320
    %v394 = vpop.f32.mrf.mxu0
    %v395 = vadd.f32 %v308, %v394
    %v396 = vpop.f32.mrf.mxu0
    %v397 = vadd.f32 %v312, %v396
    %398 = vdwg.mxu0
    %401 = vrot.lane.b32.xlu0 %v389, 96
    %v402 = vpop.permute.xlu0 %401
    %403 = vrot.lane.b32.xlu0 %v395, 96
    %v404 = vpop.permute.xlu0 %403
    %407 = vrot.lane.b32.xlu0 %v389, 64
    %v408 = vpop.permute.xlu0 %407
    %409 = vrot.lane.b32.xlu0 %v395, 64
    %v410 = vpop.permute.xlu0 %409
    %413 = vrot.lane.b32.xlu0 %v389, 32
    %v414 = vpop.permute.xlu0 %413
    %415 = vrot.lane.b32.xlu0 %v395, 32
    %v416 = vpop.permute.xlu0 %415
    %v419 = vld [vmem:[%s7] sm:$0xff]
    %v420 = vld [vmem:[%s7 + $0x8] sm:$0xff]
    %v421 = vld [vmem:[%s7 + $0x10] sm:$0xff]
    %v422 = vld [vmem:[%s7 + $0x18] sm:$0xff]
    %423 = vxpose.xlu0.b32.start [1/16] %v391, 128
    %424 = vxpose.xlu0.b32.cont [2/16] %v397, 128
    %425 = vxpose.xlu0.b32.cont [3/16] 0.0, 128
    %426 = vxpose.xlu0.b32.cont [4/16] 0.0, 128
    %427 = vxpose.xlu0.b32.cont [5/16] 0.0, 128
    %428 = vxpose.xlu0.b32.cont [6/16] 0.0, 128
    %429 = vxpose.xlu0.b32.cont [7/16] 0.0, 128
    %430 = vxpose.xlu0.b32.cont [8/16] 0.0, 128
    %431 = vxpose.xlu0.b32.cont [9/16] 0.0, 128
    %432 = vxpose.xlu0.b32.cont [10/16] 0.0, 128
    %433 = vxpose.xlu0.b32.cont [11/16] 0.0, 128
    %434 = vxpose.xlu0.b32.cont [12/16] 0.0, 128
    %435 = vxpose.xlu0.b32.cont [13/16] 0.0, 128
    %436 = vxpose.xlu0.b32.cont [14/16] 0.0, 128
    %437 = vxpose.xlu0.b32.cont [15/16] 0.0, 128
    %438 = vxpose.xlu0.b32.end [16/16] 0.0, 128
    %v439 = vpop.trf.xlu0
    %v440 = vpop.trf.xlu0
    %v441 = vpop.trf.xlu0
    %v442 = vpop.trf.xlu0
    %v443 = vpop.trf.xlu0
    %v444 = vpop.trf.xlu0
    %v445 = vpop.trf.xlu0
    %v446 = vpop.trf.xlu0
    %v447 = vpop.trf.xlu0
    %v448 = vpop.trf.xlu0
    %v449 = vpop.trf.xlu0
    %v450 = vpop.trf.xlu0
    %v451 = vpop.trf.xlu0
    %v452 = vpop.trf.xlu0
    %v453 = vpop.trf.xlu0
    %v454 = vpop.trf.xlu0
    %459 = vrot.lane.b32.xlu0 %v439, 16
    %v460 = vpop.permute.xlu0 %459
    %461 = vrot.lane.b32.xlu0 %v440, 16
    %v462 = vpop.permute.xlu0 %461
    %463 = vrot.lane.b32.xlu0 %v441, 16
    %v464 = vpop.permute.xlu0 %463
    %465 = vrot.lane.b32.xlu0 %v442, 16
    %v466 = vpop.permute.xlu0 %465
    %471 = vrot.lane.b32.xlu0 %v439, 32
    %v472 = vpop.permute.xlu0 %471
    %473 = vrot.lane.b32.xlu0 %v440, 32
    %v474 = vpop.permute.xlu0 %473
    %475 = vrot.lane.b32.xlu0 %v441, 32
    %v476 = vpop.permute.xlu0 %475
    %477 = vrot.lane.b32.xlu0 %v442, 32
    %v478 = vpop.permute.xlu0 %477
    %483 = vrot.lane.b32.xlu0 %v439, 48
    %v484 = vpop.permute.xlu0 %483
    %485 = vrot.lane.b32.xlu0 %v440, 48
    %v486 = vpop.permute.xlu0 %485
    %487 = vrot.lane.b32.xlu0 %v441, 48
    %v488 = vpop.permute.xlu0 %487
    %489 = vrot.lane.b32.xlu0 %v442, 48
    %v490 = vpop.permute.xlu0 %489
    %vm495 = vcmask 130048
    %v496 = vsel %vm495, %v439, %v460
    %v497 = vsel %vm495, %v440, %v462
    %v498 = vsel %vm495, %v441, %v464
    %v499 = vsel %vm495, %v442, %v466
    %vm500 = vcmask 261120
    %v501 = vsel %vm500, %v496, %v472
    %v502 = vsel %vm500, %v497, %v474
    %v503 = vsel %vm500, %v498, %v476
    %v504 = vsel %vm500, %v499, %v478
    %v505 = vsel %vm315, %v501, %v484
    %v506 = vsel %vm315, %v502, %v486
    %v507 = vsel %vm315, %v503, %v488
    %v508 = vsel %vm315, %v504, %v490
    %v509 = vmul.f32 %v505, %v419
    %v510 = vmul.f32 %v506, %v420
    %v511 = vmul.f32 %v507, %v421
    %v512 = vmul.f32 %v508, %v422
    %v513 = vld [vmem:[%s2] sm:$0xff]
    %v514 = vld [vmem:[%s2 + $0x8] sm:$0xff]
    %v515 = vld [vmem:[%s2 + $0x10] sm:$0xf]
    %v516 = vld [vmem:[#allocation17] sm:$0xff]
    %v517 = vld [vmem:[#allocation17 + $0x8] sm:$0xff]
    %v518 = vld [vmem:[#allocation17 + $0x10] sm:$0xff]
    %v519 = vld [vmem:[#allocation17 + $0x18] sm:$0xff]
    %v520 = vld [vmem:[#allocation17 + $0x20] sm:$0xff]
    %v521 = vld [vmem:[#allocation17 + $0x28] sm:$0xff]
    %v522 = vld [vmem:[#allocation17 + $0x30] sm:$0xff]
    %v523 = vld [vmem:[#allocation17 + $0x38] sm:$0xff]
    %v524 = vld [vmem:[#allocation17 + $0x40] sm:$0xff]
    %v525 = vld [vmem:[#allocation17 + $0x48] sm:$0xff]
    %v526 = vld [vmem:[#allocation19] sm:$0x3]
    %v528 = vlaneseq
    %v529 = vshrl.u32 %v528, 7
    %v530 = vsub.s32 0, %v529
    %v531 = vrot.slane %v526, %v530
    %v532 = vlaneseq
    %v533 = vshrl.u32 %v532, 7
    %v534 = vsub.s32 1, %v533
    %v535 = vrot.slane %v526, %v534
    %vm538 = vcmask 326656
    %v540 = vsel %vm538, %v513, 0
    %v543 = vsel %vm538, %v514, 0
    %v546 = vsel %vm538, %v515, 0
    %548 = vmatprep.subr.mxu0 0.0
    %549 = vmatpush1.msra.mxu0 0.0
    %550 = vmatprep.subr.mxu0 0.0
    %551 = vmatpush1.msra.mxu0 0.0
    %552 = vmatprep.subr.mxu0 0.0
    %553 = vmatpush1.msra.mxu0 0.0
    %554 = vmatprep.subr.mxu0 0.0
    %555 = vmatpush1.msra.mxu0 0.0
    %556 = vmatprep.subr.mxu0 0.0
    %557 = vmatpush1.msra.mxu0 0.0
    %558 = vmatprep.subr.mxu0 0.0
    %559 = vmatpush1.msra.mxu0 0.0
    %560 = vmatprep.subr.mxu0 0.0
    %561 = vmatpush1.msra.mxu0 0.0
    %562 = vmatprep.subr.mxu0 0.0
    %563 = vmatpush1.msra.mxu0 0.0
    %564 = vmatprep.subr.mxu0 0.0
    %565 = vmatpush1.msra.mxu0 0.0
    %566 = vmatprep.subr.mxu0 0.0
    %567 = vmatpush1.msra.mxu0 0.0
    %568 = vmatprep.subr.mxu0 0.0
    %569 = vmatpush1.msra.mxu0 0.0
    %570 = vmatprep.subr.mxu0 %v525
    %571 = vmatpush1.msra.mxu0 %v524
    %572 = vmatprep.subr.mxu0 %v523
    %573 = vmatpush1.msra.mxu0 %v522
    %574 = vmatprep.subr.mxu0 %v521
    %575 = vmatpush1.msra.mxu0 %v520
    %576 = vmatprep.subr.mxu0 %v519
    %577 = vmatpush1.msra.mxu0 %v518
    %578 = vmatprep.subr.mxu0 %v517
    %579 = vmatpush1.msra.mxu0 %v516
    %580 = vmatprep.subr.mxu0 0.0
    %581 = vmatpush2.msra.mxu0 0.0
    %582 = vmatprep.subr.mxu0 0.0
    %583 = vmatpush2.msra.mxu0 0.0
    %584 = vmatprep.subr.mxu0 0.0
    %585 = vmatpush2.msra.mxu0 0.0
    %586 = vmatprep.subr.mxu0 0.0
    %587 = vmatpush2.msra.mxu0 0.0
    %588 = vmatprep.subr.mxu0 0.0
    %589 = vmatpush2.msra.mxu0 0.0
    %590 = vmatprep.subr.mxu0 0.0
    %591 = vmatpush2.msra.mxu0 0.0
    %592 = vmatprep.subr.mxu0 0.0
    %593 = vmatpush2.msra.mxu0 0.0
    %594 = vmatprep.subr.mxu0 0.0
    %595 = vmatpush2.msra.mxu0 0.0
    %596 = vmatprep.subr.mxu0 0.0
    %597 = vmatpush2.msra.mxu0 0.0
    %598 = vmatprep.subr.mxu0 0.0
    %599 = vmatpush2.msra.mxu0 0.0
    %600 = vmatprep.subr.mxu0 0.0
    %601 = vmatpush2.msra.mxu0 0.0
    %602 = vmatprep.subr.mxu0 0.0
    %603 = vmatpush2.msra.mxu0 0.0
    %604 = vmatprep.subr.mxu0 0.0
    %605 = vmatpush2.msra.mxu0 0.0
    %606 = vmatprep.subr.mxu0 0.0
    %607 = vmatpush2.msra.mxu0 0.0
    %608 = vmatprep.subr.mxu0 0.0
    %609 = vmatpush2.msra.mxu0 0.0
    %610 = vmatprep.subr.mxu0 0.0
    %611 = vmatpush2.msra.mxu0 0.0
    %612 = vmatprep.mubr.f32.mxu0 0.0
    %613 = vmatmul.mubr.f32.gmra.mxu0 %v540
    %v614 = vpop.f32.mrf.mxu0
    %v615 = vadd.f32 %v531, %v614
    %v616 = vpop.f32.mrf.mxu0
    %v617 = vadd.f32 %v535, %v616
    %618 = vmatprep.mubr.f32.mxu0 0.0
    %619 = vmatmul.mubr.f32.gmra.mxu0 %v543
    %v620 = vpop.f32.mrf.mxu0
    %v621 = vadd.f32 %v531, %v620
    %v622 = vpop.f32.mrf.mxu0
    %v623 = vadd.f32 %v535, %v622
    %624 = vmatprep.mubr.f32.mxu0 0.0
    %625 = vmatmul.mubr.f32.gmra.mxu0 %v546
    %v626 = vpop.f32.mrf.mxu0
    %v627 = vadd.f32 %v531, %v626
    %v628 = vpop.f32.mrf.mxu0
    %v629 = vadd.f32 %v535, %v628
    %630 = vdwg.mxu0
    %vm634 = vcmask 1043456
    %v635 = vrot.slane %v615, 4
    %v636 = vrot.slane %v621, 4
    %v637 = vsel %vm634, %v635, %v636
    %v638 = vrot.slane %v627, 4
    %v639 = vsel %vm634, %v636, %v638
    %640 = vrot.lane.b32.xlu0 %v635, 96
    %v641 = vpop.permute.xlu0 %640
    %642 = vrot.lane.b32.xlu0 %v637, 96
    %v643 = vpop.permute.xlu0 %642
    %644 = vrot.lane.b32.xlu0 %v639, 96
    %v645 = vpop.permute.xlu0 %644
    %649 = vrot.lane.b32.xlu0 %v615, 64
    %v650 = vpop.permute.xlu0 %649
    %651 = vrot.lane.b32.xlu0 %v621, 64
    %v652 = vpop.permute.xlu0 %651
    %653 = vrot.lane.b32.xlu0 %v627, 64
    %v654 = vpop.permute.xlu0 %653
    %658 = vrot.lane.b32.xlu0 %v635, 32
    %v659 = vpop.permute.xlu0 %658
    %660 = vrot.lane.b32.xlu0 %v637, 32
    %v661 = vpop.permute.xlu0 %660
    %662 = vrot.lane.b32.xlu0 %v639, 32
    %v663 = vpop.permute.xlu0 %662
    %v667 = vsel %vm634, %v627, %v641
    %v668 = vsel %vm634, %v654, %v659
    %v669 = vld [vmem:[%s8] sm:$0xff]
    %v670 = vld [vmem:[%s8 + $0x8] sm:$0xff]
    %v671 = vld [vmem:[%s8 + $0x10] sm:$0xff]
    %v672 = vld [vmem:[%s8 + $0x18] sm:$0xff]
    %673 = vxpose.xlu0.b32.start [1/16] %v617, 128
    %674 = vxpose.xlu0.b32.cont [2/16] %v623, 128
    %675 = vxpose.xlu0.b32.cont [3/16] %v629, 128
    %676 = vxpose.xlu0.b32.cont [4/16] 0.0, 128
    %677 = vxpose.xlu0.b32.cont [5/16] 0.0, 128
    %678 = vxpose.xlu0.b32.cont [6/16] 0.0, 128
    %679 = vxpose.xlu0.b32.cont [7/16] 0.0, 128
    %680 = vxpose.xlu0.b32.cont [8/16] 0.0, 128
    %681 = vxpose.xlu0.b32.cont [9/16] 0.0, 128
    %682 = vxpose.xlu0.b32.cont [10/16] 0.0, 128
    %683 = vxpose.xlu0.b32.cont [11/16] 0.0, 128
    %684 = vxpose.xlu0.b32.cont [12/16] 0.0, 128
    %685 = vxpose.xlu0.b32.cont [13/16] 0.0, 128
    %686 = vxpose.xlu0.b32.cont [14/16] 0.0, 128
    %687 = vxpose.xlu0.b32.cont [15/16] 0.0, 128
    %688 = vxpose.xlu0.b32.end [16/16] 0.0, 128
    %v689 = vpop.trf.xlu0
    %v690 = vpop.trf.xlu0
    %v691 = vpop.trf.xlu0
    %v692 = vpop.trf.xlu0
    %v693 = vpop.trf.xlu0
    %v694 = vpop.trf.xlu0
    %v695 = vpop.trf.xlu0
    %v696 = vpop.trf.xlu0
    %v697 = vpop.trf.xlu0
    %v698 = vpop.trf.xlu0
    %v699 = vpop.trf.xlu0
    %v700 = vpop.trf.xlu0
    %v701 = vpop.trf.xlu0
    %v702 = vpop.trf.xlu0
    %v703 = vpop.trf.xlu0
    %v704 = vpop.trf.xlu0
    %709 = vrot.lane.b32.xlu0 %v689, 20
    %v710 = vpop.permute.xlu0 %709
    %711 = vrot.lane.b32.xlu0 %v690, 20
    %v712 = vpop.permute.xlu0 %711
    %713 = vrot.lane.b32.xlu0 %v691, 20
    %v714 = vpop.permute.xlu0 %713
    %715 = vrot.lane.b32.xlu0 %v692, 20
    %v716 = vpop.permute.xlu0 %715
    %721 = vrot.lane.b32.xlu0 %v689, 40
    %v722 = vpop.permute.xlu0 %721
    %723 = vrot.lane.b32.xlu0 %v690, 40
    %v724 = vpop.permute.xlu0 %723
    %725 = vrot.lane.b32.xlu0 %v691, 40
    %v726 = vpop.permute.xlu0 %725
    %727 = vrot.lane.b32.xlu0 %v692, 40
    %v728 = vpop.permute.xlu0 %727
    %733 = vrot.lane.b32.xlu0 %v689, 60
    %v734 = vpop.permute.xlu0 %733
    %735 = vrot.lane.b32.xlu0 %v690, 60
    %v736 = vpop.permute.xlu0 %735
    %737 = vrot.lane.b32.xlu0 %v691, 60
    %v738 = vpop.permute.xlu0 %737
    %739 = vrot.lane.b32.xlu0 %v692, 60
    %v740 = vpop.permute.xlu0 %739
    %vm745 = vcmask 162816
    %v746 = vsel %vm745, %v689, %v710
    %v747 = vsel %vm745, %v690, %v712
    %v748 = vsel %vm745, %v691, %v714
    %v749 = vsel %vm745, %v692, %v716
    %v750 = vsel %vm538, %v746, %v722
    %v751 = vsel %vm538, %v747, %v724
    %v752 = vsel %vm538, %v748, %v726
    %v753 = vsel %vm538, %v749, %v728
    %vm754 = vcmask 490496
    %v755 = vsel %vm754, %v750, %v734
    %v756 = vsel %vm754, %v751, %v736
    %v757 = vsel %vm754, %v752, %v738
    %v758 = vsel %vm754, %v753, %v740
    %v759 = vmul.f32 %v755, %v669
    %v760 = vmul.f32 %v756, %v670
    %v761 = vmul.f32 %v757, %v671
    %v762 = vmul.f32 %v758, %v672
    %763 = vst.msk [vmem:[%s28] sm:$0xff] %vm500, %v287
    %764 = vst.msk [vmem:[%s28 + $0x8] sm:$0xff] %vm500, %v288
    %v765 = vld [vmem:[#allocation7] sm:$0xff]
    %v766 = vld [vmem:[#allocation7 + $0x8] sm:$0xff]
    %v767 = vld [vmem:[#allocation7 + $0x10] sm:$0xff]
    %v768 = vld [vmem:[#allocation7 + $0x18] sm:$0xff]
    %v769 = vld [vmem:[#allocation7 + $0x20] sm:$0xff]
    %v770 = vld [vmem:[#allocation7 + $0x28] sm:$0xff]
    %v771 = vld [vmem:[#allocation7 + $0x30] sm:$0xff]
    %v772 = vld [vmem:[#allocation7 + $0x38] sm:$0xff]
    %v773 = vld [vmem:[#allocation8] sm:$0x3]
    %v775 = vlaneseq
    %v776 = vshrl.u32 %v775, 7
    %v777 = vsub.s32 0, %v776
    %v778 = vrot.slane %v773, %v777
    %v779 = vlaneseq
    %v780 = vshrl.u32 %v779, 7
    %v781 = vsub.s32 1, %v780
    %v782 = vrot.slane %v773, %v781
    %v786 = vsel %vm500, %v287, 0
    %v789 = vsel %vm500, %v288, 0
    %791 = vmatprep.subr.mxu0 0.0
    %792 = vmatpush1.msra.mxu0 0.0
    %793 = vmatprep.subr.mxu0 0.0
    %794 = vmatpush1.msra.mxu0 0.0
    %795 = vmatprep.subr.mxu0 0.0
    %796 = vmatpush1.msra.mxu0 0.0
    %797 = vmatprep.subr.mxu0 0.0
    %798 = vmatpush1.msra.mxu0 0.0
    %799 = vmatprep.subr.mxu0 0.0
    %800 = vmatpush1.msra.mxu0 0.0
    %801 = vmatprep.subr.mxu0 0.0
    %802 = vmatpush1.msra.mxu0 0.0
    %803 = vmatprep.subr.mxu0 0.0
    %804 = vmatpush1.msra.mxu0 0.0
    %805 = vmatprep.subr.mxu0 0.0
    %806 = vmatpush1.msra.mxu0 0.0
    %807 = vmatprep.subr.mxu0 0.0
    %808 = vmatpush1.msra.mxu0 0.0
    %809 = vmatprep.subr.mxu0 0.0
    %810 = vmatpush1.msra.mxu0 0.0
    %811 = vmatprep.subr.mxu0 0.0
    %812 = vmatpush1.msra.mxu0 0.0
    %813 = vmatprep.subr.mxu0 0.0
    %814 = vmatpush1.msra.mxu0 0.0
    %815 = vmatprep.subr.mxu0 %v772
    %816 = vmatpush1.msra.mxu0 %v771
    %817 = vmatprep.subr.mxu0 %v770
    %818 = vmatpush1.msra.mxu0 %v769
    %819 = vmatprep.subr.mxu0 %v768
    %820 = vmatpush1.msra.mxu0 %v767
    %821 = vmatprep.subr.mxu0 %v766
    %822 = vmatpush1.msra.mxu0 %v765
    %823 = vmatprep.subr.mxu0 0.0
    %824 = vmatpush2.msra.mxu0 0.0
    %825 = vmatprep.subr.mxu0 0.0
    %826 = vmatpush2.msra.mxu0 0.0
    %827 = vmatprep.subr.mxu0 0.0
    %828 = vmatpush2.msra.mxu0 0.0
    %829 = vmatprep.subr.mxu0 0.0
    %830 = vmatpush2.msra.mxu0 0.0
    %831 = vmatprep.subr.mxu0 0.0
    %832 = vmatpush2.msra.mxu0 0.0
    %833 = vmatprep.subr.mxu0 0.0
    %834 = vmatpush2.msra.mxu0 0.0
    %835 = vmatprep.subr.mxu0 0.0
    %836 = vmatpush2.msra.mxu0 0.0
    %837 = vmatprep.subr.mxu0 0.0
    %838 = vmatpush2.msra.mxu0 0.0
    %839 = vmatprep.subr.mxu0 0.0
    %840 = vmatpush2.msra.mxu0 0.0
    %841 = vmatprep.subr.mxu0 0.0
    %842 = vmatpush2.msra.mxu0 0.0
    %843 = vmatprep.subr.mxu0 0.0
    %844 = vmatpush2.msra.mxu0 0.0
    %845 = vmatprep.subr.mxu0 0.0
    %846 = vmatpush2.msra.mxu0 0.0
    %847 = vmatprep.subr.mxu0 0.0
    %848 = vmatpush2.msra.mxu0 0.0
    %849 = vmatprep.subr.mxu0 0.0
    %850 = vmatpush2.msra.mxu0 0.0
    %851 = vmatprep.subr.mxu0 0.0
    %852 = vmatpush2.msra.mxu0 0.0
    %853 = vmatprep.subr.mxu0 0.0
    %854 = vmatpush2.msra.mxu0 0.0
    %855 = vmatprep.mubr.f32.mxu0 0.0
    %856 = vmatmul.mubr.f32.gmra.mxu0 %v786
    %v857 = vpop.f32.mrf.mxu0
    %v858 = vadd.f32 %v778, %v857
    %v859 = vpop.f32.mrf.mxu0
    %v860 = vadd.f32 %v782, %v859
    %861 = vmatprep.mubr.f32.mxu0 0.0
    %862 = vmatmul.mubr.f32.gmra.mxu0 %v789
    %v863 = vpop.f32.mrf.mxu0
    %v864 = vadd.f32 %v778, %v863
    %v865 = vpop.f32.mrf.mxu0
    %v866 = vadd.f32 %v782, %v865
    %867 = vdwg.mxu0
    %870 = vrot.lane.b32.xlu0 %v858, 96
    %v871 = vpop.permute.xlu0 %870
    %872 = vrot.lane.b32.xlu0 %v864, 96
    %v873 = vpop.permute.xlu0 %872
    %876 = vrot.lane.b32.xlu0 %v858, 64
    %v877 = vpop.permute.xlu0 %876
    %878 = vrot.lane.b32.xlu0 %v864, 64
    %v879 = vpop.permute.xlu0 %878
    %882 = vrot.lane.b32.xlu0 %v858, 32
    %v883 = vpop.permute.xlu0 %882
    %884 = vrot.lane.b32.xlu0 %v864, 32
    %v885 = vpop.permute.xlu0 %884
    %v888 = vld [vmem:[%s6] sm:$0xff]
    %v889 = vld [vmem:[%s6 + $0x8] sm:$0xff]
    %v890 = vld [vmem:[%s6 + $0x10] sm:$0xff]
    %v891 = vld [vmem:[%s6 + $0x18] sm:$0xff]
    %894 = vrot.lane.b32.xlu0 %v860, 96
    %v895 = vpop.permute.xlu0 %894
    %896 = vrot.lane.b32.xlu0 %v866, 96
    %v897 = vpop.permute.xlu0 %896
    %900 = vxpose.xlu0.b32.start [1/16] %v895, 128
    %901 = vxpose.xlu0.b32.cont [2/16] %v897, 128
    %902 = vxpose.xlu0.b32.cont [3/16] 0.0, 128
    %903 = vxpose.xlu0.b32.cont [4/16] 0.0, 128
    %904 = vxpose.xlu0.b32.cont [5/16] 0.0, 128
    %905 = vxpose.xlu0.b32.cont [6/16] 0.0, 128
    %906 = vxpose.xlu0.b32.cont [7/16] 0.0, 128
    %907 = vxpose.xlu0.b32.cont [8/16] 0.0, 128
    %908 = vxpose.xlu0.b32.cont [9/16] 0.0, 128
    %909 = vxpose.xlu0.b32.cont [10/16] 0.0, 128
    %910 = vxpose.xlu0.b32.cont [11/16] 0.0, 128
    %911 = vxpose.xlu0.b32.cont [12/16] 0.0, 128
    %912 = vxpose.xlu0.b32.cont [13/16] 0.0, 128
    %913 = vxpose.xlu0.b32.cont [14/16] 0.0, 128
    %914 = vxpose.xlu0.b32.cont [15/16] 0.0, 128
    %915 = vxpose.xlu0.b32.end [16/16] 0.0, 128
    %v916 = vpop.trf.xlu0
    %v917 = vpop.trf.xlu0
    %v918 = vpop.trf.xlu0
    %v919 = vpop.trf.xlu0
    %v920 = vpop.trf.xlu0
    %v921 = vpop.trf.xlu0
    %v922 = vpop.trf.xlu0
    %v923 = vpop.trf.xlu0
    %v924 = vpop.trf.xlu0
    %v925 = vpop.trf.xlu0
    %v926 = vpop.trf.xlu0
    %v927 = vpop.trf.xlu0
    %v928 = vpop.trf.xlu0
    %v929 = vpop.trf.xlu0
    %v930 = vpop.trf.xlu0
    %v931 = vpop.trf.xlu0
    %936 = vrot.lane.b32.xlu0 %v916, 16
    %v937 = vpop.permute.xlu0 %936
    %938 = vrot.lane.b32.xlu0 %v917, 16
    %v939 = vpop.permute.xlu0 %938
    %940 = vrot.lane.b32.xlu0 %v918, 16
    %v941 = vpop.permute.xlu0 %940
    %942 = vrot.lane.b32.xlu0 %v919, 16
    %v943 = vpop.permute.xlu0 %942
    %948 = vrot.lane.b32.xlu0 %v916, 32
    %v949 = vpop.permute.xlu0 %948
    %950 = vrot.lane.b32.xlu0 %v917, 32
    %v951 = vpop.permute.xlu0 %950
    %952 = vrot.lane.b32.xlu0 %v918, 32
    %v953 = vpop.permute.xlu0 %952
    %954 = vrot.lane.b32.xlu0 %v919, 32
    %v955 = vpop.permute.xlu0 %954
    %960 = vrot.lane.b32.xlu0 %v916, 48
    %v961 = vpop.permute.xlu0 %960
    %962 = vrot.lane.b32.xlu0 %v917, 48
    %v963 = vpop.permute.xlu0 %962
    %964 = vrot.lane.b32.xlu0 %v918, 48
    %v965 = vpop.permute.xlu0 %964
    %966 = vrot.lane.b32.xlu0 %v919, 48
    %v967 = vpop.permute.xlu0 %966
    %v972 = vsel %vm495, %v916, %v937
    %v973 = vsel %vm495, %v917, %v939
    %v974 = vsel %vm495, %v918, %v941
    %v975 = vsel %vm495, %v919, %v943
    %v976 = vsel %vm500, %v972, %v949
    %v977 = vsel %vm500, %v973, %v951
    %v978 = vsel %vm500, %v974, %v953
    %v979 = vsel %vm500, %v975, %v955
    %v980 = vsel %vm315, %v976, %v961
    %v981 = vsel %vm315, %v977, %v963
    %v982 = vsel %vm315, %v978, %v965
    %v983 = vsel %vm315, %v979, %v967
    %v984 = vmul.f32 %v980, %v888
    %v985 = vmul.f32 %v981, %v889
    %v986 = vmul.f32 %v982, %v890
    %v987 = vmul.f32 %v983, %v891
    %v988 = vld [vmem:[%s3] sm:$0xff]
    %v989 = vld [vmem:[%s3 + $0x8] sm:$0xff]
    %v990 = vld [vmem:[#allocation10] sm:$0x1]
    %v991 = vsel %vm500, %v860, 0
    %v993 = vsel %vm500, %v866, 0
    %995 = vmatprep.subr.mxu0 0.0
    %996 = vmatpush1.msra.mxu0 0.0
    %997 = vmatprep.subr.mxu0 0.0
    %998 = vmatpush1.msra.mxu0 0.0
    %999 = vmatprep.subr.mxu0 0.0
    %1000 = vmatpush1.msra.mxu0 0.0
    %1001 = vmatprep.subr.mxu0 0.0
    %1002 = vmatpush1.msra.mxu0 0.0
    %1003 = vmatprep.subr.mxu0 0.0
    %1004 = vmatpush1.msra.mxu0 0.0
    %1005 = vmatprep.subr.mxu0 0.0
    %1006 = vmatpush1.msra.mxu0 0.0
    %1007 = vmatprep.subr.mxu0 0.0
    %1008 = vmatpush1.msra.mxu0 0.0
    %1009 = vmatprep.subr.mxu0 0.0
    %1010 = vmatpush1.msra.mxu0 0.0
    %1011 = vmatprep.subr.mxu0 0.0
    %1012 = vmatpush1.msra.mxu0 0.0
    %1013 = vmatprep.subr.mxu0 0.0
    %1014 = vmatpush1.msra.mxu0 0.0
    %1015 = vmatprep.subr.mxu0 0.0
    %1016 = vmatpush1.msra.mxu0 0.0
    %1017 = vmatprep.subr.mxu0 0.0
    %1018 = vmatpush1.msra.mxu0 0.0
    %1019 = vmatprep.subr.mxu0 0.0
    %1020 = vmatpush1.msra.mxu0 %v987
    %1021 = vmatprep.subr.mxu0 0.0
    %1022 = vmatpush1.msra.mxu0 %v986
    %1023 = vmatprep.subr.mxu0 0.0
    %1024 = vmatpush1.msra.mxu0 %v985
    %1025 = vmatprep.subr.mxu0 0.0
    %1026 = vmatpush1.msra.mxu0 %v984
    %1027 = vmatprep.subr.mxu0 0.0
    %1028 = vmatpush2.msra.mxu0 0.0
    %1029 = vmatprep.subr.mxu0 0.0
    %1030 = vmatpush2.msra.mxu0 0.0
    %1031 = vmatprep.subr.mxu0 0.0
    %1032 = vmatpush2.msra.mxu0 0.0
    %1033 = vmatprep.subr.mxu0 0.0
    %1034 = vmatpush2.msra.mxu0 0.0
    %1035 = vmatprep.subr.mxu0 0.0
    %1036 = vmatpush2.msra.mxu0 0.0
    %1037 = vmatprep.subr.mxu0 0.0
    %1038 = vmatpush2.msra.mxu0 0.0
    %1039 = vmatprep.subr.mxu0 0.0
    %1040 = vmatpush2.msra.mxu0 0.0
    %1041 = vmatprep.subr.mxu0 0.0
    %1042 = vmatpush2.msra.mxu0 0.0
    %1043 = vmatprep.subr.mxu0 0.0
    %1044 = vmatpush2.msra.mxu0 0.0
    %1045 = vmatprep.subr.mxu0 0.0
    %1046 = vmatpush2.msra.mxu0 0.0
    %1047 = vmatprep.subr.mxu0 0.0
    %1048 = vmatpush2.msra.mxu0 0.0
    %1049 = vmatprep.subr.mxu0 0.0
    %1050 = vmatpush2.msra.mxu0 0.0
    %1051 = vmatprep.subr.mxu0 0.0
    %1052 = vmatpush2.msra.mxu0 0.0
    %1053 = vmatprep.subr.mxu0 0.0
    %1054 = vmatpush2.msra.mxu0 0.0
    %1055 = vmatprep.subr.mxu0 0.0
    %1056 = vmatpush2.msra.mxu0 0.0
    %1057 = vmatprep.subr.mxu0 0.0
    %1058 = vmatpush2.msra.mxu0 0.0
    %1059 = vmatprep.mubr.f32.mxu0 0.0
    %1060 = vmatmul.mubr.f32.gmra.mxu0 %v991
    %v1061 = vpop.f32.mrf.mxu0
    %v1062 = vadd.f32 0.0, %v1061
    %v1063 = vpop.f32.mrf.mxu0
    %1064 = vmatprep.mubr.f32.mxu0 0.0
    %1065 = vmatmul.mubr.f32.gmra.mxu0 %v993
    %v1066 = vpop.f32.mrf.mxu0
    %v1067 = vadd.f32 0.0, %v1066
    %v1068 = vpop.f32.mrf.mxu0
    %1069 = vdwg.mxu0
    %vm1070 = vcmask 523264
    %v1071 = vsel %vm1070, %v1062, -inf
    %1072 = vmax.xlane.f32.xlu0 %v1071
    %v1073 = vpop.xlane.xlu0 %1072
    %v1074 = vsel %vm1070, %v1067, -inf
    %1075 = vmax.xlane.f32.xlu0 %v1074
    %v1076 = vpop.xlane.xlu0 %1075
    %v1077 = vsub.f32 %v1062, %v1073
    %v1078 = vsub.f32 %v1067, %v1076
    %v1079 = vmul.f32 %v1077, 1.442695
    %v1080 = vpow.pop %v1079
    %v1081 = vmul.f32 %v1078, 1.442695
    %v1082 = vpow.pop %v1081
    %v1083 = vmul.f32 %v1080, %v988
    %v1084 = vmul.f32 %v1082, %v989
    %v1085 = vsel %vm495, %v1083, 0.0
    %1086 = vadd.xlane.f32.xlu0 %v1085
    %v1087 = vpop.xlane.xlu0 %1086
    %v1088 = vsel %vm495, %v1084, 0.0
    %1089 = vadd.xlane.f32.xlu0 %v1088
    %v1090 = vpop.xlane.xlu0 %1089
    %v1091 = vrcp.pop %v1087
    %v1092 = vrcp.pop %v1090
    %v1093 = vmul.f32 %v1083, %v1091
    %v1094 = vmul.f32 %v1084, %v1092
    %1097 = vrot.lane.b32.xlu0 %v1083, 112
    %v1098 = vpop.permute.xlu0 %1097
    %1099 = vrot.lane.b32.xlu0 %v1084, 112
    %v1100 = vpop.permute.xlu0 %1099
    %v1103 = vsel %vm495, %v1098, 0.0
    %1104 = vadd.xlane.f32.xlu0 %v1103
    %v1105 = vpop.xlane.xlu0 %1104
    %v1106 = vsel %vm495, %v1100, 0.0
    %1107 = vadd.xlane.f32.xlu0 %v1106
    %v1108 = vpop.xlane.xlu0 %1107
    %v1109 = vrcp.pop %v1105
    %v1110 = vrcp.pop %v1108
    %v1111 = vmul.f32 %v1083, %v1109
    %v1112 = vmul.f32 %v1084, %v1110
    %1113 = vrot.lane.b32.xlu0 %v1083, 96
    %v1114 = vpop.permute.xlu0 %1113
    %1115 = vrot.lane.b32.xlu0 %v1084, 96
    %v1116 = vpop.permute.xlu0 %1115
    %v1119 = vsel %vm495, %v1114, 0.0
    %1120 = vadd.xlane.f32.xlu0 %v1119
    %v1121 = vpop.xlane.xlu0 %1120
    %v1122 = vsel %vm495, %v1116, 0.0
    %1123 = vadd.xlane.f32.xlu0 %v1122
    %v1124 = vpop.xlane.xlu0 %1123
    %v1125 = vrcp.pop %v1121
    %v1126 = vrcp.pop %v1124
    %v1127 = vmul.f32 %v1083, %v1125
    %v1128 = vmul.f32 %v1084, %v1126
    %1129 = vrot.lane.b32.xlu0 %v1083, 80
    %v1130 = vpop.permute.xlu0 %1129
    %1131 = vrot.lane.b32.xlu0 %v1084, 80
    %v1132 = vpop.permute.xlu0 %1131
    %v1135 = vsel %vm495, %v1130, 0.0
    %1136 = vadd.xlane.f32.xlu0 %v1135
    %v1137 = vpop.xlane.xlu0 %1136
    %v1138 = vsel %vm495, %v1132, 0.0
    %1139 = vadd.xlane.f32.xlu0 %v1138
    %v1140 = vpop.xlane.xlu0 %1139
    %v1141 = vrcp.pop %v1137
    %v1142 = vrcp.pop %v1140
    %v1143 = vmul.f32 %v1083, %v1141
    %v1144 = vmul.f32 %v1084, %v1142
    %v1145 = vsel %vm495, %v1093, %v1111
    %v1146 = vsel %vm495, %v1094, %v1112
    %v1147 = vsel %vm500, %v1145, %v1127
    %v1148 = vsel %vm500, %v1146, %v1128
    %v1149 = vsel %vm315, %v1147, %v1143
    %v1150 = vsel %vm315, %v1148, %v1144
    %v1152 = vlaneseq
    %v1153 = vshrl.u32 %v1152, 7
    %v1154 = vsub.s32 0, %v1153
    %v1155 = vrot.slane %v990, %v1154
    %v1158 = vsel %vm1070, %v1149, 0
    %v1161 = vsel %vm1070, %v1150, 0
    %1163 = vmatprep.subr.mxu0 0.0
    %1164 = vmatpush1.msra.mxu0 0.0
    %1165 = vmatprep.subr.mxu0 0.0
    %1166 = vmatpush1.msra.mxu0 0.0
    %1167 = vmatprep.subr.mxu0 0.0
    %1168 = vmatpush1.msra.mxu0 0.0
    %1169 = vmatprep.subr.mxu0 0.0
    %1170 = vmatpush1.msra.mxu0 0.0
    %1171 = vmatprep.subr.mxu0 0.0
    %1172 = vmatpush1.msra.mxu0 0.0
    %1173 = vmatprep.subr.mxu0 0.0
    %1174 = vmatpush1.msra.mxu0 0.0
    %1175 = vmatprep.subr.mxu0 0.0
    %1176 = vmatpush1.msra.mxu0 0.0
    %1177 = vmatprep.subr.mxu0 0.0
    %1178 = vmatpush1.msra.mxu0 0.0
    %1179 = vmatprep.subr.mxu0 0.0
    %1180 = vmatpush1.msra.mxu0 %v885
    %1181 = vmatprep.subr.mxu0 0.0
    %1182 = vmatpush1.msra.mxu0 %v883
    %1183 = vmatprep.subr.mxu0 0.0
    %1184 = vmatpush1.msra.mxu0 %v879
    %1185 = vmatprep.subr.mxu0 0.0
    %1186 = vmatpush1.msra.mxu0 %v877
    %1187 = vmatprep.subr.mxu0 0.0
    %1188 = vmatpush1.msra.mxu0 %v873
    %1189 = vmatprep.subr.mxu0 0.0
    %1190 = vmatpush1.msra.mxu0 %v871
    %1191 = vmatprep.subr.mxu0 0.0
    %1192 = vmatpush1.msra.mxu0 %v864
    %1193 = vmatprep.subr.mxu0 0.0
    %1194 = vmatpush1.msra.mxu0 %v858
    %1195 = vmatprep.subr.mxu0 0.0
    %1196 = vmatpush2.msra.mxu0 0.0
    %1197 = vmatprep.subr.mxu0 0.0
    %1198 = vmatpush2.msra.mxu0 0.0
    %1199 = vmatprep.subr.mxu0 0.0
    %1200 = vmatpush2.msra.mxu0 0.0
    %1201 = vmatprep.subr.mxu0 0.0
    %1202 = vmatpush2.msra.mxu0 0.0
    %1203 = vmatprep.subr.mxu0 0.0
    %1204 = vmatpush2.msra.mxu0 0.0
    %1205 = vmatprep.subr.mxu0 0.0
    %1206 = vmatpush2.msra.mxu0 0.0
    %1207 = vmatprep.subr.mxu0 0.0
    %1208 = vmatpush2.msra.mxu0 0.0
    %1209 = vmatprep.subr.mxu0 0.0
    %1210 = vmatpush2.msra.mxu0 0.0
    %1211 = vmatprep.subr.mxu0 0.0
    %1212 = vmatpush2.msra.mxu0 0.0
    %1213 = vmatprep.subr.mxu0 0.0
    %1214 = vmatpush2.msra.mxu0 0.0
    %1215 = vmatprep.subr.mxu0 0.0
    %1216 = vmatpush2.msra.mxu0 0.0
    %1217 = vmatprep.subr.mxu0 0.0
    %1218 = vmatpush2.msra.mxu0 0.0
    %1219 = vmatprep.subr.mxu0 0.0
    %1220 = vmatpush2.msra.mxu0 0.0
    %1221 = vmatprep.subr.mxu0 0.0
    %1222 = vmatpush2.msra.mxu0 0.0
    %1223 = vmatprep.subr.mxu0 0.0
    %1224 = vmatpush2.msra.mxu0 0.0
    %1225 = vmatprep.subr.mxu0 0.0
    %1226 = vmatpush2.msra.mxu0 0.0
    %1227 = vmatprep.mubr.f32.mxu0 0.0
    %1228 = vmatmul.mubr.f32.gmra.mxu0 %v1158
    %v1229 = vpop.f32.mrf.mxu0
    %v1230 = vadd.f32 %v1155, %v1229
    %v1231 = vpop.f32.mrf.mxu0
    %1232 = vmatprep.mubr.f32.mxu0 0.0
    %1233 = vmatmul.mubr.f32.gmra.mxu0 %v1161
    %v1234 = vpop.f32.mrf.mxu0
    %v1235 = vadd.f32 %v1155, %v1234
    %v1236 = vpop.f32.mrf.mxu0
    %1237 = vdwg.mxu0
    %v1238 = vadd.f32 %v287, %v1230
    %v1239 = vadd.f32 %v288, %v1235
    %v1240 = vld [vmem:[#allocation11] sm:$0xff]
    %v1241 = vld [vmem:[#allocation11 + $0x8] sm:$0xff]
    %v1242 = vld [vmem:[#allocation11 + $0x10] sm:$0xff]
    %v1243 = vld [vmem:[#allocation11 + $0x18] sm:$0xff]
    %v1244 = vld [vmem:[#allocation13] sm:$0x1]
    %v1246 = vlaneseq
    %v1247 = vshrl.u32 %v1246, 7
    %v1248 = vsub.s32 0, %v1247
    %v1249 = vrot.slane %v1244, %v1248
    %v1252 = vsel %vm500, %v1238, 0
    %v1255 = vsel %vm500, %v1239, 0
    %1257 = vmatprep.subr.mxu0 0.0
    %1258 = vmatpush1.msra.mxu0 0.0
    %1259 = vmatprep.subr.mxu0 0.0
    %1260 = vmatpush1.msra.mxu0 0.0
    %1261 = vmatprep.subr.mxu0 0.0
    %1262 = vmatpush1.msra.mxu0 0.0
    %1263 = vmatprep.subr.mxu0 0.0
    %1264 = vmatpush1.msra.mxu0 0.0
    %1265 = vmatprep.subr.mxu0 0.0
    %1266 = vmatpush1.msra.mxu0 0.0
    %1267 = vmatprep.subr.mxu0 0.0
    %1268 = vmatpush1.msra.mxu0 0.0
    %1269 = vmatprep.subr.mxu0 0.0
    %1270 = vmatpush1.msra.mxu0 0.0
    %1271 = vmatprep.subr.mxu0 0.0
    %1272 = vmatpush1.msra.mxu0 0.0
    %1273 = vmatprep.subr.mxu0 0.0
    %1274 = vmatpush1.msra.mxu0 0.0
    %1275 = vmatprep.subr.mxu0 0.0
    %1276 = vmatpush1.msra.mxu0 0.0
    %1277 = vmatprep.subr.mxu0 0.0
    %1278 = vmatpush1.msra.mxu0 0.0
    %1279 = vmatprep.subr.mxu0 0.0
    %1280 = vmatpush1.msra.mxu0 0.0
    %1281 = vmatprep.subr.mxu0 0.0
    %1282 = vmatpush1.msra.mxu0 %v1243
    %1283 = vmatprep.subr.mxu0 0.0
    %1284 = vmatpush1.msra.mxu0 %v1242
    %1285 = vmatprep.subr.mxu0 0.0
    %1286 = vmatpush1.msra.mxu0 %v1241
    %1287 = vmatprep.subr.mxu0 0.0
    %1288 = vmatpush1.msra.mxu0 %v1240
    %1289 = vmatprep.subr.mxu0 0.0
    %1290 = vmatpush2.msra.mxu0 0.0
    %1291 = vmatprep.subr.mxu0 0.0
    %1292 = vmatpush2.msra.mxu0 0.0
    %1293 = vmatprep.subr.mxu0 0.0
    %1294 = vmatpush2.msra.mxu0 0.0
    %1295 = vmatprep.subr.mxu0 0.0
    %1296 = vmatpush2.msra.mxu0 0.0
    %1297 = vmatprep.subr.mxu0 0.0
    %1298 = vmatpush2.msra.mxu0 0.0
    %1299 = vmatprep.subr.mxu0 0.0
    %1300 = vmatpush2.msra.mxu0 0.0
    %1301 = vmatprep.subr.mxu0 0.0
    %1302 = vmatpush2.msra.mxu0 0.0
    %1303 = vmatprep.subr.mxu0 0.0
    %1304 = vmatpush2.msra.mxu0 0.0
    %1305 = vmatprep.subr.mxu0 0.0
    %1306 = vmatpush2.msra.mxu0 0.0
    %1307 = vmatprep.subr.mxu0 0.0
    %1308 = vmatpush2.msra.mxu0 0.0
    %1309 = vmatprep.subr.mxu0 0.0
    %1310 = vmatpush2.msra.mxu0 0.0
    %1311 = vmatprep.subr.mxu0 0.0
    %1312 = vmatpush2.msra.mxu0 0.0
    %1313 = vmatprep.subr.mxu0 0.0
    %1314 = vmatpush2.msra.mxu0 0.0
    %1315 = vmatprep.subr.mxu0 0.0
    %1316 = vmatpush2.msra.mxu0 0.0
    %1317 = vmatprep.subr.mxu0 0.0
    %1318 = vmatpush2.msra.mxu0 0.0
    %1319 = vmatprep.subr.mxu0 0.0
    %1320 = vmatpush2.msra.mxu0 0.0
    %1321 = vmatprep.mubr.f32.mxu0 0.0
    %1322 = vmatmul.mubr.f32.gmra.mxu0 %v1252
    %v1323 = vpop.f32.mrf.mxu0
    %v1324 = vadd.f32 %v1249, %v1323
    %v1325 = vpop.f32.mrf.mxu0
    %1326 = vmatprep.mubr.f32.mxu0 0.0
    %1327 = vmatmul.mubr.f32.gmra.mxu0 %v1255
    %v1328 = vpop.f32.mrf.mxu0
    %v1329 = vadd.f32 %v1249, %v1328
    %v1330 = vpop.f32.mrf.mxu0
    %1331 = vdwg.mxu0
    %v1332 = vld [vmem:[%s4] sm:$0xff]
    %v1333 = vld [vmem:[%s4 + $0x8] sm:$0xff]
    %v1334 = vld [vmem:[#allocation16] sm:$0x1]
    %v1336 = vsel %vm500, %v1324, 0
    %v1339 = vsel %vm500, %v1329, 0
    %1341 = vmatprep.subr.mxu0 0.0
    %1342 = vmatpush1.msra.mxu0 0.0
    %1343 = vmatprep.subr.mxu0 0.0
    %1344 = vmatpush1.msra.mxu0 0.0
    %1345 = vmatprep.subr.mxu0 0.0
    %1346 = vmatpush1.msra.mxu0 0.0
    %1347 = vmatprep.subr.mxu0 0.0
    %1348 = vmatpush1.msra.mxu0 0.0
    %1349 = vmatprep.subr.mxu0 0.0
    %1350 = vmatpush1.msra.mxu0 0.0
    %1351 = vmatprep.subr.mxu0 0.0
    %1352 = vmatpush1.msra.mxu0 0.0
    %1353 = vmatprep.subr.mxu0 0.0
    %1354 = vmatpush1.msra.mxu0 0.0
    %1355 = vmatprep.subr.mxu0 0.0
    %1356 = vmatpush1.msra.mxu0 0.0
    %1357 = vmatprep.subr.mxu0 0.0
    %1358 = vmatpush1.msra.mxu0 0.0
    %1359 = vmatprep.subr.mxu0 0.0
    %1360 = vmatpush1.msra.mxu0 0.0
    %1361 = vmatprep.subr.mxu0 0.0
    %1362 = vmatpush1.msra.mxu0 0.0
    %1363 = vmatprep.subr.mxu0 0.0
    %1364 = vmatpush1.msra.mxu0 0.0
    %1365 = vmatprep.subr.mxu0 0.0
    %1366 = vmatpush1.msra.mxu0 %v512
    %1367 = vmatprep.subr.mxu0 0.0
    %1368 = vmatpush1.msra.mxu0 %v511
    %1369 = vmatprep.subr.mxu0 0.0
    %1370 = vmatpush1.msra.mxu0 %v510
    %1371 = vmatprep.subr.mxu0 0.0
    %1372 = vmatpush1.msra.mxu0 %v509
    %1373 = vmatprep.subr.mxu0 0.0
    %1374 = vmatpush2.msra.mxu0 0.0
    %1375 = vmatprep.subr.mxu0 0.0
    %1376 = vmatpush2.msra.mxu0 0.0
    %1377 = vmatprep.subr.mxu0 0.0
    %1378 = vmatpush2.msra.mxu0 0.0
    %1379 = vmatprep.subr.mxu0 0.0
    %1380 = vmatpush2.msra.mxu0 0.0
    %1381 = vmatprep.subr.mxu0 0.0
    %1382 = vmatpush2.msra.mxu0 0.0
    %1383 = vmatprep.subr.mxu0 0.0
    %1384 = vmatpush2.msra.mxu0 0.0
    %1385 = vmatprep.subr.mxu0 0.0
    %1386 = vmatpush2.msra.mxu0 0.0
    %1387 = vmatprep.subr.mxu0 0.0
    %1388 = vmatpush2.msra.mxu0 0.0
    %1389 = vmatprep.subr.mxu0 0.0
    %1390 = vmatpush2.msra.mxu0 0.0
    %1391 = vmatprep.subr.mxu0 0.0
    %1392 = vmatpush2.msra.mxu0 0.0
    %1393 = vmatprep.subr.mxu0 0.0
    %1394 = vmatpush2.msra.mxu0 0.0
    %1395 = vmatprep.subr.mxu0 0.0
    %1396 = vmatpush2.msra.mxu0 0.0
    %1397 = vmatprep.subr.mxu0 0.0
    %1398 = vmatpush2.msra.mxu0 0.0
    %1399 = vmatprep.subr.mxu0 0.0
    %1400 = vmatpush2.msra.mxu0 0.0
    %1401 = vmatprep.subr.mxu0 0.0
    %1402 = vmatpush2.msra.mxu0 0.0
    %1403 = vmatprep.subr.mxu0 0.0
    %1404 = vmatpush2.msra.mxu0 0.0
    %1405 = vmatprep.mubr.f32.mxu0 0.0
    %1406 = vmatmul.mubr.f32.gmra.mxu0 %v1336
    %v1407 = vpop.f32.mrf.mxu0
    %v1408 = vadd.f32 0.0, %v1407
    %v1409 = vpop.f32.mrf.mxu0
    %1410 = vmatprep.mubr.f32.mxu0 0.0
    %1411 = vmatmul.mubr.f32.gmra.mxu0 %v1339
    %v1412 = vpop.f32.mrf.mxu0
    %v1413 = vadd.f32 0.0, %v1412
    %v1414 = vpop.f32.mrf.mxu0
    %1415 = vdwg.mxu0
    %v1416 = vsel %vm1070, %v1408, -inf
    %1417 = vmax.xlane.f32.xlu0 %v1416
    %v1418 = vpop.xlane.xlu0 %1417
    %v1419 = vsel %vm1070, %v1413, -inf
    %1420 = vmax.xlane.f32.xlu0 %v1419
    %v1421 = vpop.xlane.xlu0 %1420
    %v1422 = vsub.f32 %v1408, %v1418
    %v1423 = vsub.f32 %v1413, %v1421
    %v1424 = vmul.f32 %v1422, 1.442695
    %v1425 = vpow.pop %v1424
    %v1426 = vmul.f32 %v1423, 1.442695
    %v1427 = vpow.pop %v1426
    %v1428 = vmul.f32 %v1425, %v1332
    %v1429 = vmul.f32 %v1427, %v1333
    %v1430 = vsel %vm495, %v1428, 0.0
    %1431 = vadd.xlane.f32.xlu0 %v1430
    %v1432 = vpop.xlane.xlu0 %1431
    %v1433 = vsel %vm495, %v1429, 0.0
    %1434 = vadd.xlane.f32.xlu0 %v1433
    %v1435 = vpop.xlane.xlu0 %1434
    %v1436 = vrcp.pop %v1432
    %v1437 = vrcp.pop %v1435
    %v1438 = vmul.f32 %v1428, %v1436
    %v1439 = vmul.f32 %v1429, %v1437
    %1442 = vrot.lane.b32.xlu0 %v1428, 112
    %v1443 = vpop.permute.xlu0 %1442
    %1444 = vrot.lane.b32.xlu0 %v1429, 112
    %v1445 = vpop.permute.xlu0 %1444
    %v1448 = vsel %vm495, %v1443, 0.0
    %1449 = vadd.xlane.f32.xlu0 %v1448
    %v1450 = vpop.xlane.xlu0 %1449
    %v1451 = vsel %vm495, %v1445, 0.0
    %1452 = vadd.xlane.f32.xlu0 %v1451
    %v1453 = vpop.xlane.xlu0 %1452
    %v1454 = vrcp.pop %v1450
    %v1455 = vrcp.pop %v1453
    %v1456 = vmul.f32 %v1428, %v1454
    %v1457 = vmul.f32 %v1429, %v1455
    %1458 = vrot.lane.b32.xlu0 %v1428, 96
    %v1459 = vpop.permute.xlu0 %1458
    %1460 = vrot.lane.b32.xlu0 %v1429, 96
    %v1461 = vpop.permute.xlu0 %1460
    %v1464 = vsel %vm495, %v1459, 0.0
    %1465 = vadd.xlane.f32.xlu0 %v1464
    %v1466 = vpop.xlane.xlu0 %1465
    %v1467 = vsel %vm495, %v1461, 0.0
    %1468 = vadd.xlane.f32.xlu0 %v1467
    %v1469 = vpop.xlane.xlu0 %1468
    %v1470 = vrcp.pop %v1466
    %v1471 = vrcp.pop %v1469
    %v1472 = vmul.f32 %v1428, %v1470
    %v1473 = vmul.f32 %v1429, %v1471
    %1474 = vrot.lane.b32.xlu0 %v1428, 80
    %v1475 = vpop.permute.xlu0 %1474
    %1476 = vrot.lane.b32.xlu0 %v1429, 80
    %v1477 = vpop.permute.xlu0 %1476
    %v1480 = vsel %vm495, %v1475, 0.0
    %1481 = vadd.xlane.f32.xlu0 %v1480
    %v1482 = vpop.xlane.xlu0 %1481
    %v1483 = vsel %vm495, %v1477, 0.0
    %1484 = vadd.xlane.f32.xlu0 %v1483
    %v1485 = vpop.xlane.xlu0 %1484
    %v1486 = vrcp.pop %v1482
    %v1487 = vrcp.pop %v1485
    %v1488 = vmul.f32 %v1428, %v1486
    %v1489 = vmul.f32 %v1429, %v1487
    %v1490 = vsel %vm495, %v1438, %v1456
    %v1491 = vsel %vm495, %v1439, %v1457
    %v1492 = vsel %vm500, %v1490, %v1472
    %v1493 = vsel %vm500, %v1491, %v1473
    %v1494 = vsel %vm315, %v1492, %v1488
    %v1495 = vsel %vm315, %v1493, %v1489
    %v1497 = vlaneseq
    %v1498 = vshrl.u32 %v1497, 7
    %v1499 = vsub.s32 0, %v1498
    %v1500 = vrot.slane %v1334, %v1499
    %v1503 = vsel %vm1070, %v1494, 0
    %v1506 = vsel %vm1070, %v1495, 0
    %1508 = vmatprep.subr.mxu0 0.0
    %1509 = vmatpush1.msra.mxu0 0.0
    %1510 = vmatprep.subr.mxu0 0.0
    %1511 = vmatpush1.msra.mxu0 0.0
    %1512 = vmatprep.subr.mxu0 0.0
    %1513 = vmatpush1.msra.mxu0 0.0
    %1514 = vmatprep.subr.mxu0 0.0
    %1515 = vmatpush1.msra.mxu0 0.0
    %1516 = vmatprep.subr.mxu0 0.0
    %1517 = vmatpush1.msra.mxu0 0.0
    %1518 = vmatprep.subr.mxu0 0.0
    %1519 = vmatpush1.msra.mxu0 0.0
    %1520 = vmatprep.subr.mxu0 0.0
    %1521 = vmatpush1.msra.mxu0 0.0
    %1522 = vmatprep.subr.mxu0 0.0
    %1523 = vmatpush1.msra.mxu0 0.0
    %1524 = vmatprep.subr.mxu0 0.0
    %1525 = vmatpush1.msra.mxu0 %v416
    %1526 = vmatprep.subr.mxu0 0.0
    %1527 = vmatpush1.msra.mxu0 %v414
    %1528 = vmatprep.subr.mxu0 0.0
    %1529 = vmatpush1.msra.mxu0 %v410
    %1530 = vmatprep.subr.mxu0 0.0
    %1531 = vmatpush1.msra.mxu0 %v408
    %1532 = vmatprep.subr.mxu0 0.0
    %1533 = vmatpush1.msra.mxu0 %v404
    %1534 = vmatprep.subr.mxu0 0.0
    %1535 = vmatpush1.msra.mxu0 %v402
    %1536 = vmatprep.subr.mxu0 0.0
    %1537 = vmatpush1.msra.mxu0 %v395
    %1538 = vmatprep.subr.mxu0 0.0
    %1539 = vmatpush1.msra.mxu0 %v389
    %1540 = vmatprep.subr.mxu0 0.0
    %1541 = vmatpush2.msra.mxu0 0.0
    %1542 = vmatprep.subr.mxu0 0.0
    %1543 = vmatpush2.msra.mxu0 0.0
    %1544 = vmatprep.subr.mxu0 0.0
    %1545 = vmatpush2.msra.mxu0 0.0
    %1546 = vmatprep.subr.mxu0 0.0
    %1547 = vmatpush2.msra.mxu0 0.0
    %1548 = vmatprep.subr.mxu0 0.0
    %1549 = vmatpush2.msra.mxu0 0.0
    %1550 = vmatprep.subr.mxu0 0.0
    %1551 = vmatpush2.msra.mxu0 0.0
    %1552 = vmatprep.subr.mxu0 0.0
    %1553 = vmatpush2.msra.mxu0 0.0
    %1554 = vmatprep.subr.mxu0 0.0
    %1555 = vmatpush2.msra.mxu0 0.0
    %1556 = vmatprep.subr.mxu0 0.0
    %1557 = vmatpush2.msra.mxu0 0.0
    %1558 = vmatprep.subr.mxu0 0.0
    %1559 = vmatpush2.msra.mxu0 0.0
    %1560 = vmatprep.subr.mxu0 0.0
    %1561 = vmatpush2.msra.mxu0 0.0
    %1562 = vmatprep.subr.mxu0 0.0
    %1563 = vmatpush2.msra.mxu0 0.0
    %1564 = vmatprep.subr.mxu0 0.0
    %1565 = vmatpush2.msra.mxu0 0.0
    %1566 = vmatprep.subr.mxu0 0.0
    %1567 = vmatpush2.msra.mxu0 0.0
    %1568 = vmatprep.subr.mxu0 0.0
    %1569 = vmatpush2.msra.mxu0 0.0
    %1570 = vmatprep.subr.mxu0 0.0
    %1571 = vmatpush2.msra.mxu0 0.0
    %1572 = vmatprep.mubr.f32.mxu0 0.0
    %1573 = vmatmul.mubr.f32.gmra.mxu0 %v1503
    %v1574 = vpop.f32.mrf.mxu0
    %v1575 = vadd.f32 %v1500, %v1574
    %v1576 = vpop.f32.mrf.mxu0
    %1577 = vmatprep.mubr.f32.mxu0 0.0
    %1578 = vmatmul.mubr.f32.gmra.mxu0 %v1506
    %v1579 = vpop.f32.mrf.mxu0
    %v1580 = vadd.f32 %v1500, %v1579
    %v1581 = vpop.f32.mrf.mxu0
    %1582 = vdwg.mxu0
    %v1583 = vld [vmem:[#allocation5] sm:$0xff]
    %v1584 = vld [vmem:[#allocation5 + $0x8] sm:$0xff]
    %v1585 = vld [vmem:[#allocation20] sm:$0x1]
    %1586 = vrot.lane.b32.xlu0 %v1324, 96
    %v1587 = vpop.permute.xlu0 %1586
    %1588 = vrot.lane.b32.xlu0 %v1329, 96
    %v1589 = vpop.permute.xlu0 %1588
    %v1590 = vsel %vm500, %v1587, 0
    %v1592 = vsel %vm500, %v1589, 0
    %1594 = vmatprep.subr.mxu0 0.0
    %1595 = vmatpush1.msra.mxu0 0.0
    %1596 = vmatprep.subr.mxu0 0.0
    %1597 = vmatpush1.msra.mxu0 0.0
    %1598 = vmatprep.subr.mxu0 0.0
    %1599 = vmatpush1.msra.mxu0 0.0
    %1600 = vmatprep.subr.mxu0 0.0
    %1601 = vmatpush1.msra.mxu0 0.0
    %1602 = vmatprep.subr.mxu0 0.0
    %1603 = vmatpush1.msra.mxu0 0.0
    %1604 = vmatprep.subr.mxu0 0.0
    %1605 = vmatpush1.msra.mxu0 0.0
    %1606 = vmatprep.subr.mxu0 0.0
    %1607 = vmatpush1.msra.mxu0 0.0
    %1608 = vmatprep.subr.mxu0 0.0
    %1609 = vmatpush1.msra.mxu0 0.0
    %1610 = vmatprep.subr.mxu0 0.0
    %1611 = vmatpush1.msra.mxu0 0.0
    %1612 = vmatprep.subr.mxu0 0.0
    %1613 = vmatpush1.msra.mxu0 0.0
    %1614 = vmatprep.subr.mxu0 0.0
    %1615 = vmatpush1.msra.mxu0 0.0
    %1616 = vmatprep.subr.mxu0 0.0
    %1617 = vmatpush1.msra.mxu0 0.0
    %1618 = vmatprep.subr.mxu0 0.0
    %1619 = vmatpush1.msra.mxu0 %v762
    %1620 = vmatprep.subr.mxu0 0.0
    %1621 = vmatpush1.msra.mxu0 %v761
    %1622 = vmatprep.subr.mxu0 0.0
    %1623 = vmatpush1.msra.mxu0 %v760
    %1624 = vmatprep.subr.mxu0 0.0
    %1625 = vmatpush1.msra.mxu0 %v759
    %1626 = vmatprep.subr.mxu0 0.0
    %1627 = vmatpush2.msra.mxu0 0.0
    %1628 = vmatprep.subr.mxu0 0.0
    %1629 = vmatpush2.msra.mxu0 0.0
    %1630 = vmatprep.subr.mxu0 0.0
    %1631 = vmatpush2.msra.mxu0 0.0
    %1632 = vmatprep.subr.mxu0 0.0
    %1633 = vmatpush2.msra.mxu0 0.0
    %1634 = vmatprep.subr.mxu0 0.0
    %1635 = vmatpush2.msra.mxu0 0.0
    %1636 = vmatprep.subr.mxu0 0.0
    %1637 = vmatpush2.msra.mxu0 0.0
    %1638 = vmatprep.subr.mxu0 0.0
    %1639 = vmatpush2.msra.mxu0 0.0
    %1640 = vmatprep.subr.mxu0 0.0
    %1641 = vmatpush2.msra.mxu0 0.0
    %1642 = vmatprep.subr.mxu0 0.0
    %1643 = vmatpush2.msra.mxu0 0.0
    %1644 = vmatprep.subr.mxu0 0.0
    %1645 = vmatpush2.msra.mxu0 0.0
    %1646 = vmatprep.subr.mxu0 0.0
    %1647 = vmatpush2.msra.mxu0 0.0
    %1648 = vmatprep.subr.mxu0 0.0
    %1649 = vmatpush2.msra.mxu0 0.0
    %1650 = vmatprep.subr.mxu0 0.0
    %1651 = vmatpush2.msra.mxu0 0.0
    %1652 = vmatprep.subr.mxu0 0.0
    %1653 = vmatpush2.msra.mxu0 0.0
    %1654 = vmatprep.subr.mxu0 0.0
    %1655 = vmatpush2.msra.mxu0 0.0
    %1656 = vmatprep.subr.mxu0 0.0
    %1657 = vmatpush2.msra.mxu0 0.0
    %1658 = vmatprep.mubr.f32.mxu0 0.0
    %1659 = vmatmul.mubr.f32.gmra.mxu0 %v1590
    %v1660 = vpop.f32.mrf.mxu0
    %v1661 = vadd.f32 0.0, %v1660
    %v1662 = vpop.f32.mrf.mxu0
    %1663 = vmatprep.mubr.f32.mxu0 0.0
    %1664 = vmatmul.mubr.f32.gmra.mxu0 %v1592
    %v1665 = vpop.f32.mrf.mxu0
    %v1666 = vadd.f32 0.0, %v1665
    %v1667 = vpop.f32.mrf.mxu0
    %1668 = vdwg.mxu0
    %vm1669 = vcmask 654336
    %v1670 = vsel %vm1669, %v1661, -inf
    %1671 = vmax.xlane.f32.xlu0 %v1670
    %v1672 = vpop.xlane.xlu0 %1671
    %v1673 = vsel %vm1669, %v1666, -inf
    %1674 = vmax.xlane.f32.xlu0 %v1673
    %v1675 = vpop.xlane.xlu0 %1674
    %v1676 = vsub.f32 %v1661, %v1672
    %v1677 = vsub.f32 %v1666, %v1675
    %v1678 = vmul.f32 %v1676, 1.442695
    %v1679 = vpow.pop %v1678
    %v1680 = vmul.f32 %v1677, 1.442695
    %v1681 = vpow.pop %v1680
    %v1682 = vmul.f32 %v1679, %v1583
    %v1683 = vmul.f32 %v1681, %v1584
    %v1684 = vsel %vm745, %v1682, 0.0
    %1685 = vadd.xlane.f32.xlu0 %v1684
    %v1686 = vpop.xlane.xlu0 %1685
    %v1687 = vsel %vm745, %v1683, 0.0
    %1688 = vadd.xlane.f32.xlu0 %v1687
    %v1689 = vpop.xlane.xlu0 %1688
    %v1690 = vrcp.pop %v1686
    %v1691 = vrcp.pop %v1689
    %v1692 = vmul.f32 %v1682, %v1690
    %v1693 = vmul.f32 %v1683, %v1691
    %1696 = vrot.lane.b32.xlu0 %v1682, 108
    %v1697 = vpop.permute.xlu0 %1696
    %1698 = vrot.lane.b32.xlu0 %v1683, 108
    %v1699 = vpop.permute.xlu0 %1698
    %v1702 = vsel %vm745, %v1697, 0.0
    %1703 = vadd.xlane.f32.xlu0 %v1702
    %v1704 = vpop.xlane.xlu0 %1703
    %v1705 = vsel %vm745, %v1699, 0.0
    %1706 = vadd.xlane.f32.xlu0 %v1705
    %v1707 = vpop.xlane.xlu0 %1706
    %v1708 = vrcp.pop %v1704
    %v1709 = vrcp.pop %v1707
    %v1710 = vmul.f32 %v1682, %v1708
    %v1711 = vmul.f32 %v1683, %v1709
    %1712 = vrot.lane.b32.xlu0 %v1682, 88
    %v1713 = vpop.permute.xlu0 %1712
    %1714 = vrot.lane.b32.xlu0 %v1683, 88
    %v1715 = vpop.permute.xlu0 %1714
    %v1718 = vsel %vm745, %v1713, 0.0
    %1719 = vadd.xlane.f32.xlu0 %v1718
    %v1720 = vpop.xlane.xlu0 %1719
    %v1721 = vsel %vm745, %v1715, 0.0
    %1722 = vadd.xlane.f32.xlu0 %v1721
    %v1723 = vpop.xlane.xlu0 %1722
    %v1724 = vrcp.pop %v1720
    %v1725 = vrcp.pop %v1723
    %v1726 = vmul.f32 %v1682, %v1724
    %v1727 = vmul.f32 %v1683, %v1725
    %1728 = vrot.lane.b32.xlu0 %v1682, 68
    %v1729 = vpop.permute.xlu0 %1728
    %1730 = vrot.lane.b32.xlu0 %v1683, 68
    %v1731 = vpop.permute.xlu0 %1730
    %v1734 = vsel %vm745, %v1729, 0.0
    %1735 = vadd.xlane.f32.xlu0 %v1734
    %v1736 = vpop.xlane.xlu0 %1735
    %v1737 = vsel %vm745, %v1731, 0.0
    %1738 = vadd.xlane.f32.xlu0 %v1737
    %v1739 = vpop.xlane.xlu0 %1738
    %v1740 = vrcp.pop %v1736
    %v1741 = vrcp.pop %v1739
    %v1742 = vmul.f32 %v1682, %v1740
    %v1743 = vmul.f32 %v1683, %v1741
    %v1744 = vsel %vm745, %v1692, %v1710
    %v1745 = vsel %vm745, %v1693, %v1711
    %v1746 = vsel %vm538, %v1744, %v1726
    %v1747 = vsel %vm538, %v1745, %v1727
    %v1748 = vsel %vm754, %v1746, %v1742
    %v1749 = vsel %vm754, %v1747, %v1743
    %v1751 = vlaneseq
    %v1752 = vshrl.u32 %v1751, 7
    %v1753 = vsub.s32 0, %v1752
    %v1754 = vrot.slane %v1585, %v1753
    %v1757 = vsel %vm1669, %v1748, 0
    %v1760 = vsel %vm1669, %v1749, 0
    %1762 = vmatprep.subr.mxu0 0.0
    %1763 = vmatpush1.msra.mxu0 0.0
    %1764 = vmatprep.subr.mxu0 0.0
    %1765 = vmatpush1.msra.mxu0 0.0
    %1766 = vmatprep.subr.mxu0 0.0
    %1767 = vmatpush1.msra.mxu0 0.0
    %1768 = vmatprep.subr.mxu0 0.0
    %1769 = vmatpush1.msra.mxu0 0.0
    %1770 = vmatprep.subr.mxu0 0.0
    %1771 = vmatpush1.msra.mxu0 0.0
    %1772 = vmatprep.subr.mxu0 0.0
    %1773 = vmatpush1.msra.mxu0 0.0
    %1774 = vmatprep.subr.mxu0 0.0
    %1775 = vmatpush1.msra.mxu0 %v663
    %1776 = vmatprep.subr.mxu0 0.0
    %1777 = vmatpush1.msra.mxu0 %v661
    %1778 = vmatprep.subr.mxu0 0.0
    %1779 = vmatpush1.msra.mxu0 %v668
    %1780 = vmatprep.subr.mxu0 0.0
    %1781 = vmatpush1.msra.mxu0 %v652
    %1782 = vmatprep.subr.mxu0 0.0
    %1783 = vmatpush1.msra.mxu0 %v650
    %1784 = vmatprep.subr.mxu0 0.0
    %1785 = vmatpush1.msra.mxu0 %v645
    %1786 = vmatprep.subr.mxu0 0.0
    %1787 = vmatpush1.msra.mxu0 %v643
    %1788 = vmatprep.subr.mxu0 0.0
    %1789 = vmatpush1.msra.mxu0 %v667
    %1790 = vmatprep.subr.mxu0 0.0
    %1791 = vmatpush1.msra.mxu0 %v621
    %1792 = vmatprep.subr.mxu0 0.0
    %1793 = vmatpush1.msra.mxu0 %v615
    %1794 = vmatprep.subr.mxu0 0.0
    %1795 = vmatpush2.msra.mxu0 0.0
    %1796 = vmatprep.subr.mxu0 0.0
    %1797 = vmatpush2.msra.mxu0 0.0
    %1798 = vmatprep.subr.mxu0 0.0
    %1799 = vmatpush2.msra.mxu0 0.0
    %1800 = vmatprep.subr.mxu0 0.0
    %1801 = vmatpush2.msra.mxu0 0.0
    %1802 = vmatprep.subr.mxu0 0.0
    %1803 = vmatpush2.msra.mxu0 0.0
    %1804 = vmatprep.subr.mxu0 0.0
    %1805 = vmatpush2.msra.mxu0 0.0
    %1806 = vmatprep.subr.mxu0 0.0
    %1807 = vmatpush2.msra.mxu0 0.0
    %1808 = vmatprep.subr.mxu0 0.0
    %1809 = vmatpush2.msra.mxu0 0.0
    %1810 = vmatprep.subr.mxu0 0.0
    %1811 = vmatpush2.msra.mxu0 0.0
    %1812 = vmatprep.subr.mxu0 0.0
    %1813 = vmatpush2.msra.mxu0 0.0
    %1814 = vmatprep.subr.mxu0 0.0
    %1815 = vmatpush2.msra.mxu0 0.0
    %1816 = vmatprep.subr.mxu0 0.0
    %1817 = vmatpush2.msra.mxu0 0.0
    %1818 = vmatprep.subr.mxu0 0.0
    %1819 = vmatpush2.msra.mxu0 0.0
    %1820 = vmatprep.subr.mxu0 0.0
    %1821 = vmatpush2.msra.mxu0 0.0
    %1822 = vmatprep.subr.mxu0 0.0
    %1823 = vmatpush2.msra.mxu0 0.0
    %1824 = vmatprep.subr.mxu0 0.0
    %1825 = vmatpush2.msra.mxu0 0.0
    %1826 = vmatprep.mubr.f32.mxu0 0.0
    %1827 = vmatmul.mubr.f32.gmra.mxu0 %v1757
    %v1828 = vpop.f32.mrf.mxu0
    %v1829 = vadd.f32 %v1754, %v1828
    %v1830 = vpop.f32.mrf.mxu0
    %1831 = vmatprep.mubr.f32.mxu0 0.0
    %1832 = vmatmul.mubr.f32.gmra.mxu0 %v1760
    %v1833 = vpop.f32.mrf.mxu0
    %v1834 = vadd.f32 %v1754, %v1833
    %v1835 = vpop.f32.mrf.mxu0
    %1836 = vdwg.mxu0
    %v1837 = vadd.f32 %v1238, %v1575
    %v1838 = vadd.f32 %v1239, %v1580
    %v1839 = vadd.f32 %v1837, %v1829
    %v1840 = vadd.f32 %v1838, %v1834
    %v1841 = vld [vmem:[#allocation22] sm:$0xff]
    %v1842 = vld [vmem:[#allocation22 + $0x8] sm:$0xff]
    %v1843 = vld [vmem:[#allocation22 + $0x10] sm:$0xff]
    %v1844 = vld [vmem:[#allocation22 + $0x18] sm:$0xff]
    %v1845 = vld [vmem:[#allocation23] sm:$0x1]
    %v1847 = vlaneseq
    %v1848 = vshrl.u32 %v1847, 7
    %v1849 = vsub.s32 0, %v1848
    %v1850 = vrot.slane %v1845, %v1849
    %v1853 = vsel %vm500, %v1839, 0
    %v1856 = vsel %vm500, %v1840, 0
    %1858 = vmatprep.subr.mxu0 0.0
    %1859 = vmatpush1.msra.mxu0 0.0
    %1860 = vmatprep.subr.mxu0 0.0
    %1861 = vmatpush1.msra.mxu0 0.0
    %1862 = vmatprep.subr.mxu0 0.0
    %1863 = vmatpush1.msra.mxu0 0.0
    %1864 = vmatprep.subr.mxu0 0.0
    %1865 = vmatpush1.msra.mxu0 0.0
    %1866 = vmatprep.subr.mxu0 0.0
    %1867 = vmatpush1.msra.mxu0 0.0
    %1868 = vmatprep.subr.mxu0 0.0
    %1869 = vmatpush1.msra.mxu0 0.0
    %1870 = vmatprep.subr.mxu0 0.0
    %1871 = vmatpush1.msra.mxu0 0.0
    %1872 = vmatprep.subr.mxu0 0.0
    %1873 = vmatpush1.msra.mxu0 0.0
    %1874 = vmatprep.subr.mxu0 0.0
    %1875 = vmatpush1.msra.mxu0 0.0
    %1876 = vmatprep.subr.mxu0 0.0
    %1877 = vmatpush1.msra.mxu0 0.0
    %1878 = vmatprep.subr.mxu0 0.0
    %1879 = vmatpush1.msra.mxu0 0.0
    %1880 = vmatprep.subr.mxu0 0.0
    %1881 = vmatpush1.msra.mxu0 0.0
    %1882 = vmatprep.subr.mxu0 0.0
    %1883 = vmatpush1.msra.mxu0 %v1844
    %1884 = vmatprep.subr.mxu0 0.0
    %1885 = vmatpush1.msra.mxu0 %v1843
    %1886 = vmatprep.subr.mxu0 0.0
    %1887 = vmatpush1.msra.mxu0 %v1842
    %1888 = vmatprep.subr.mxu0 0.0
    %1889 = vmatpush1.msra.mxu0 %v1841
    %1890 = vmatprep.subr.mxu0 0.0
    %1891 = vmatpush2.msra.mxu0 0.0
    %1892 = vmatprep.subr.mxu0 0.0
    %1893 = vmatpush2.msra.mxu0 0.0
    %1894 = vmatprep.subr.mxu0 0.0
    %1895 = vmatpush2.msra.mxu0 0.0
    %1896 = vmatprep.subr.mxu0 0.0
    %1897 = vmatpush2.msra.mxu0 0.0
    %1898 = vmatprep.subr.mxu0 0.0
    %1899 = vmatpush2.msra.mxu0 0.0
    %1900 = vmatprep.subr.mxu0 0.0
    %1901 = vmatpush2.msra.mxu0 0.0
    %1902 = vmatprep.subr.mxu0 0.0
    %1903 = vmatpush2.msra.mxu0 0.0
    %1904 = vmatprep.subr.mxu0 0.0
    %1905 = vmatpush2.msra.mxu0 0.0
    %1906 = vmatprep.subr.mxu0 0.0
    %1907 = vmatpush2.msra.mxu0 0.0
    %1908 = vmatprep.subr.mxu0 0.0
    %1909 = vmatpush2.msra.mxu0 0.0
    %1910 = vmatprep.subr.mxu0 0.0
    %1911 = vmatpush2.msra.mxu0 0.0
    %1912 = vmatprep.subr.mxu0 0.0
    %1913 = vmatpush2.msra.mxu0 0.0
    %1914 = vmatprep.subr.mxu0 0.0
    %1915 = vmatpush2.msra.mxu0 0.0
    %1916 = vmatprep.subr.mxu0 0.0
    %1917 = vmatpush2.msra.mxu0 0.0
    %1918 = vmatprep.subr.mxu0 0.0
    %1919 = vmatpush2.msra.mxu0 0.0
    %1920 = vmatprep.subr.mxu0 0.0
    %1921 = vmatpush2.msra.mxu0 0.0
    %1922 = vmatprep.mubr.f32.mxu0 0.0
    %1923 = vmatmul.mubr.f32.gmra.mxu0 %v1853
    %v1924 = vpop.f32.mrf.mxu0
    %v1925 = vadd.f32 %v1850, %v1924
    %v1926 = vpop.f32.mrf.mxu0
    %1927 = vmatprep.mubr.f32.mxu0 0.0
    %1928 = vmatmul.mubr.f32.gmra.mxu0 %v1856
    %v1929 = vpop.f32.mrf.mxu0
    %v1930 = vadd.f32 %v1850, %v1929
    %v1931 = vpop.f32.mrf.mxu0
    %1932 = vdwg.mxu0
    %v1933 = vmax.f32 %v1925, 0.0
    %v1934 = vmax.f32 %v1930, 0.0
    %v1935 = vld [vmem:[#allocation25] sm:$0xff]
    %v1936 = vld [vmem:[#allocation25 + $0x8] sm:$0xff]
    %v1937 = vld [vmem:[#allocation25 + $0x10] sm:$0xff]
    %v1938 = vld [vmem:[#allocation25 + $0x18] sm:$0xff]
    %v1940 = vsel %vm500, %v1933, 0
    %v1943 = vsel %vm500, %v1934, 0
    %1945 = vmatprep.subr.mxu0 0.0
    %1946 = vmatpush1.msra.mxu0 0.0
    %1947 = vmatprep.subr.mxu0 0.0
    %1948 = vmatpush1.msra.mxu0 0.0
    %1949 = vmatprep.subr.mxu0 0.0
    %1950 = vmatpush1.msra.mxu0 0.0
    %1951 = vmatprep.subr.mxu0 0.0
    %1952 = vmatpush1.msra.mxu0 0.0
    %1953 = vmatprep.subr.mxu0 0.0
    %1954 = vmatpush1.msra.mxu0 0.0
    %1955 = vmatprep.subr.mxu0 0.0
    %1956 = vmatpush1.msra.mxu0 0.0
    %1957 = vmatprep.subr.mxu0 0.0
    %1958 = vmatpush1.msra.mxu0 0.0
    %1959 = vmatprep.subr.mxu0 0.0
    %1960 = vmatpush1.msra.mxu0 0.0
    %1961 = vmatprep.subr.mxu0 0.0
    %1962 = vmatpush1.msra.mxu0 0.0
    %1963 = vmatprep.subr.mxu0 0.0
    %1964 = vmatpush1.msra.mxu0 0.0
    %1965 = vmatprep.subr.mxu0 0.0
    %1966 = vmatpush1.msra.mxu0 0.0
    %1967 = vmatprep.subr.mxu0 0.0
    %1968 = vmatpush1.msra.mxu0 0.0
    %1969 = vmatprep.subr.mxu0 0.0
    %1970 = vmatpush1.msra.mxu0 %v1938
    %1971 = vmatprep.subr.mxu0 0.0
    %1972 = vmatpush1.msra.mxu0 %v1937
    %1973 = vmatprep.subr.mxu0 0.0
    %1974 = vmatpush1.msra.mxu0 %v1936
    %1975 = vmatprep.subr.mxu0 0.0
    %1976 = vmatpush1.msra.mxu0 %v1935
    %1977 = vmatprep.subr.mxu0 0.0
    %1978 = vmatpush2.msra.mxu0 0.0
    %1979 = vmatprep.subr.mxu0 0.0
    %1980 = vmatpush2.msra.mxu0 0.0
    %1981 = vmatprep.subr.mxu0 0.0
    %1982 = vmatpush2.msra.mxu0 0.0
    %1983 = vmatprep.subr.mxu0 0.0
    %1984 = vmatpush2.msra.mxu0 0.0
    %1985 = vmatprep.subr.mxu0 0.0
    %1986 = vmatpush2.msra.mxu0 0.0
    %1987 = vmatprep.subr.mxu0 0.0
    %1988 = vmatpush2.msra.mxu0 0.0
    %1989 = vmatprep.subr.mxu0 0.0
    %1990 = vmatpush2.msra.mxu0 0.0
    %1991 = vmatprep.subr.mxu0 0.0
    %1992 = vmatpush2.msra.mxu0 0.0
    %1993 = vmatprep.subr.mxu0 0.0
    %1994 = vmatpush2.msra.mxu0 0.0
    %1995 = vmatprep.subr.mxu0 0.0
    %1996 = vmatpush2.msra.mxu0 0.0
    %1997 = vmatprep.subr.mxu0 0.0
    %1998 = vmatpush2.msra.mxu0 0.0
    %1999 = vmatprep.subr.mxu0 0.0
    %2000 = vmatpush2.msra.mxu0 0.0
    %2001 = vmatprep.subr.mxu0 0.0
    %2002 = vmatpush2.msra.mxu0 0.0
    %2003 = vmatprep.subr.mxu0 0.0
    %2004 = vmatpush2.msra.mxu0 0.0
    %2005 = vmatprep.subr.mxu0 0.0
    %2006 = vmatpush2.msra.mxu0 0.0
    %2007 = vmatprep.subr.mxu0 0.0
    %2008 = vmatpush2.msra.mxu0 0.0
    %2009 = vmatprep.mubr.f32.mxu0 0.0
    %2010 = vmatmul.mubr.f32.gmra.mxu0 %v1940
    %v2011 = vpop.f32.mrf.mxu0
    %v2012 = vadd.f32 0.0, %v2011
    %v2013 = vpop.f32.mrf.mxu0
    %2014 = vmatprep.mubr.f32.mxu0 0.0
    %2015 = vmatmul.mubr.f32.gmra.mxu0 %v1943
    %v2016 = vpop.f32.mrf.mxu0
    %v2017 = vadd.f32 0.0, %v2016
    %v2018 = vpop.f32.mrf.mxu0
    %2019 = vdwg.mxu0
    %v2020 = vadd.f32 %v1839, %v2012
    %v2021 = vadd.f32 %v1840, %v2017
    %v2022 = vld [vmem:[#allocation26] sm:$0x1]
    %v2024 = vlaneseq
    %v2025 = vshrl.u32 %v2024, 7
    %v2026 = vsub.s32 0, %v2025
    %v2027 = vrot.slane %v2022, %v2026
    %v2029 = vadd.f32 %v2020, %v2027
    %v2030 = vadd.f32 %v2021, %v2027
    %s2031 = scalar_lea.vmem %s28, 16
    %2032 = vst.msk [vmem:[%s2031] sm:$0xff] %vm500, %v2029
    %2033 = vst.msk [vmem:[%s2031 + $0x8] sm:$0xff] %vm500, %v2030
    %v2034 = vld [vmem:[#allocation7] sm:$0xff]
    %v2035 = vld [vmem:[#allocation7 + $0x8] sm:$0xff]
    %v2036 = vld [vmem:[#allocation7 + $0x10] sm:$0xff]
    %v2037 = vld [vmem:[#allocation7 + $0x18] sm:$0xff]
    %v2038 = vld [vmem:[#allocation7 + $0x20] sm:$0xff]
    %v2039 = vld [vmem:[#allocation7 + $0x28] sm:$0xff]
    %v2040 = vld [vmem:[#allocation7 + $0x30] sm:$0xff]
    %v2041 = vld [vmem:[#allocation7 + $0x38] sm:$0xff]
    %v2042 = vld [vmem:[#allocation8] sm:$0x3]
    %v2044 = vlaneseq
    %v2045 = vshrl.u32 %v2044, 7
    %v2046 = vsub.s32 0, %v2045
    %v2047 = vrot.slane %v2042, %v2046
    %v2048 = vlaneseq
    %v2049 = vshrl.u32 %v2048, 7
    %v2050 = vsub.s32 1, %v2049
    %v2051 = vrot.slane %v2042, %v2050
    %v2055 = vsel %vm500, %v2029, 0
    %v2058 = vsel %vm500, %v2030, 0
    %2060 = vmatprep.subr.mxu0 0.0
    %2061 = vmatpush1.msra.mxu0 0.0
    %2062 = vmatprep.subr.mxu0 0.0
    %2063 = vmatpush1.msra.mxu0 0.0
    %2064 = vmatprep.subr.mxu0 0.0
    %2065 = vmatpush1.msra.mxu0 0.0
    %2066 = vmatprep.subr.mxu0 0.0
    %2067 = vmatpush1.msra.mxu0 0.0
    %2068 = vmatprep.subr.mxu0 0.0
    %2069 = vmatpush1.msra.mxu0 0.0
    %2070 = vmatprep.subr.mxu0 0.0
    %2071 = vmatpush1.msra.mxu0 0.0
    %2072 = vmatprep.subr.mxu0 0.0
    %2073 = vmatpush1.msra.mxu0 0.0
    %2074 = vmatprep.subr.mxu0 0.0
    %2075 = vmatpush1.msra.mxu0 0.0
    %2076 = vmatprep.subr.mxu0 0.0
    %2077 = vmatpush1.msra.mxu0 0.0
    %2078 = vmatprep.subr.mxu0 0.0
    %2079 = vmatpush1.msra.mxu0 0.0
    %2080 = vmatprep.subr.mxu0 0.0
    %2081 = vmatpush1.msra.mxu0 0.0
    %2082 = vmatprep.subr.mxu0 0.0
    %2083 = vmatpush1.msra.mxu0 0.0
    %2084 = vmatprep.subr.mxu0 %v2041
    %2085 = vmatpush1.msra.mxu0 %v2040
    %2086 = vmatprep.subr.mxu0 %v2039
    %2087 = vmatpush1.msra.mxu0 %v2038
    %2088 = vmatprep.subr.mxu0 %v2037
    %2089 = vmatpush1.msra.mxu0 %v2036
    %2090 = vmatprep.subr.mxu0 %v2035
    %2091 = vmatpush1.msra.mxu0 %v2034
    %2092 = vmatprep.subr.mxu0 0.0
    %2093 = vmatpush2.msra.mxu0 0.0
    %2094 = vmatprep.subr.mxu0 0.0
    %2095 = vmatpush2.msra.mxu0 0.0
    %2096 = vmatprep.subr.mxu0 0.0
    %2097 = vmatpush2.msra.mxu0 0.0
    %2098 = vmatprep.subr.mxu0 0.0
    %2099 = vmatpush2.msra.mxu0 0.0
    %2100 = vmatprep.subr.mxu0 0.0
    %2101 = vmatpush2.msra.mxu0 0.0
    %2102 = vmatprep.subr.mxu0 0.0
    %2103 = vmatpush2.msra.mxu0 0.0
    %2104 = vmatprep.subr.mxu0 0.0
    %2105 = vmatpush2.msra.mxu0 0.0
    %2106 = vmatprep.subr.mxu0 0.0
    %2107 = vmatpush2.msra.mxu0 0.0
    %2108 = vmatprep.subr.mxu0 0.0
    %2109 = vmatpush2.msra.mxu0 0.0
    %2110 = vmatprep.subr.mxu0 0.0
    %2111 = vmatpush2.msra.mxu0 0.0
    %2112 = vmatprep.subr.mxu0 0.0
    %2113 = vmatpush2.msra.mxu0 0.0
    %2114 = vmatprep.subr.mxu0 0.0
    %2115 = vmatpush2.msra.mxu0 0.0
    %2116 = vmatprep.subr.mxu0 0.0
    %2117 = vmatpush2.msra.mxu0 0.0
    %2118 = vmatprep.subr.mxu0 0.0
    %2119 = vmatpush2.msra.mxu0 0.0
    %2120 = vmatprep.subr.mxu0 0.0
    %2121 = vmatpush2.msra.mxu0 0.0
    %2122 = vmatprep.subr.mxu0 0.0
    %2123 = vmatpush2.msra.mxu0 0.0
    %2124 = vmatprep.mubr.f32.mxu0 0.0
    %2125 = vmatmul.mubr.f32.gmra.mxu0 %v2055
    %v2126 = vpop.f32.mrf.mxu0
    %v2127 = vadd.f32 %v2047, %v2126
    %v2128 = vpop.f32.mrf.mxu0
    %v2129 = vadd.f32 %v2051, %v2128
    %2130 = vmatprep.mubr.f32.mxu0 0.0
    %2131 = vmatmul.mubr.f32.gmra.mxu0 %v2058
    %v2132 = vpop.f32.mrf.mxu0
    %v2133 = vadd.f32 %v2047, %v2132
    %v2134 = vpop.f32.mrf.mxu0
    %v2135 = vadd.f32 %v2051, %v2134
    %2136 = vdwg.mxu0
    %2139 = vrot.lane.b32.xlu0 %v2127, 96
    %v2140 = vpop.permute.xlu0 %2139
    %2141 = vrot.lane.b32.xlu0 %v2133, 96
    %v2142 = vpop.permute.xlu0 %2141
    %2145 = vrot.lane.b32.xlu0 %v2127, 64
    %v2146 = vpop.permute.xlu0 %2145
    %2147 = vrot.lane.b32.xlu0 %v2133, 64
    %v2148 = vpop.permute.xlu0 %2147
    %2151 = vrot.lane.b32.xlu0 %v2127, 32
    %v2152 = vpop.permute.xlu0 %2151
    %2153 = vrot.lane.b32.xlu0 %v2133, 32
    %v2154 = vpop.permute.xlu0 %2153
    %v2157 = vld [vmem:[%s6] sm:$0xff]
    %v2158 = vld [vmem:[%s6 + $0x8] sm:$0xff]
    %v2159 = vld [vmem:[%s6 + $0x10] sm:$0xff]
    %v2160 = vld [vmem:[%s6 + $0x18] sm:$0xff]
    %2163 = vrot.lane.b32.xlu0 %v2129, 96
    %v2164 = vpop.permute.xlu0 %2163
    %2165 = vrot.lane.b32.xlu0 %v2135, 96
    %v2166 = vpop.permute.xlu0 %2165
    %2169 = vxpose.xlu0.b32.start [1/16] %v2164, 128
    %2170 = vxpose.xlu0.b32.cont [2/16] %v2166, 128
    %2171 = vxpose.xlu0.b32.cont [3/16] 0.0, 128
    %2172 = vxpose.xlu0.b32.cont [4/16] 0.0, 128
    %2173 = vxpose.xlu0.b32.cont [5/16] 0.0, 128
    %2174 = vxpose.xlu0.b32.cont [6/16] 0.0, 128
    %2175 = vxpose.xlu0.b32.cont [7/16] 0.0, 128
    %2176 = vxpose.xlu0.b32.cont [8/16] 0.0, 128
    %2177 = vxpose.xlu0.b32.cont [9/16] 0.0, 128
    %2178 = vxpose.xlu0.b32.cont [10/16] 0.0, 128
    %2179 = vxpose.xlu0.b32.cont [11/16] 0.0, 128
    %2180 = vxpose.xlu0.b32.cont [12/16] 0.0, 128
    %2181 = vxpose.xlu0.b32.cont [13/16] 0.0, 128
    %2182 = vxpose.xlu0.b32.cont [14/16] 0.0, 128
    %2183 = vxpose.xlu0.b32.cont [15/16] 0.0, 128
    %2184 = vxpose.xlu0.b32.end [16/16] 0.0, 128
    %v2185 = vpop.trf.xlu0
    %v2186 = vpop.trf.xlu0
    %v2187 = vpop.trf.xlu0
    %v2188 = vpop.trf.xlu0
    %v2189 = vpop.trf.xlu0
    %v2190 = vpop.trf.xlu0
    %v2191 = vpop.trf.xlu0
    %v2192 = vpop.trf.xlu0
    %v2193 = vpop.trf.xlu0
    %v2194 = vpop.trf.xlu0
    %v2195 = vpop.trf.xlu0
    %v2196 = vpop.trf.xlu0
    %v2197 = vpop.trf.xlu0
    %v2198 = vpop.trf.xlu0
    %v2199 = vpop.trf.xlu0
    %v2200 = vpop.trf.xlu0
    %2205 = vrot.lane.b32.xlu0 %v2185, 16
    %v2206 = vpop.permute.xlu0 %2205
    %2207 = vrot.lane.b32.xlu0 %v2186, 16
    %v2208 = vpop.permute.xlu0 %2207
    %2209 = vrot.lane.b32.xlu0 %v2187, 16
    %v2210 = vpop.permute.xlu0 %2209
    %2211 = vrot.lane.b32.xlu0 %v2188, 16
    %v2212 = vpop.permute.xlu0 %2211
    %2217 = vrot.lane.b32.xlu0 %v2185, 32
    %v2218 = vpop.permute.xlu0 %2217
    %2219 = vrot.lane.b32.xlu0 %v2186, 32
    %v2220 = vpop.permute.xlu0 %2219
    %2221 = vrot.lane.b32.xlu0 %v2187, 32
    %v2222 = vpop.permute.xlu0 %2221
    %2223 = vrot.lane.b32.xlu0 %v2188, 32
    %v2224 = vpop.permute.xlu0 %2223
    %2229 = vrot.lane.b32.xlu0 %v2185, 48
    %v2230 = vpop.permute.xlu0 %2229
    %2231 = vrot.lane.b32.xlu0 %v2186, 48
    %v2232 = vpop.permute.xlu0 %2231
    %2233 = vrot.lane.b32.xlu0 %v2187, 48
    %v2234 = vpop.permute.xlu0 %2233
    %2235 = vrot.lane.b32.xlu0 %v2188, 48
    %v2236 = vpop.permute.xlu0 %2235
    %v2241 = vsel %vm495, %v2185, %v2206
    %v2242 = vsel %vm495, %v2186, %v2208
    %v2243 = vsel %vm495, %v2187, %v2210
    %v2244 = vsel %vm495, %v2188, %v2212
    %v2245 = vsel %vm500, %v2241, %v2218
    %v2246 = vsel %vm500, %v2242, %v2220
    %v2247 = vsel %vm500, %v2243, %v2222
    %v2248 = vsel %vm500, %v2244, %v2224
    %v2249 = vsel %vm315, %v2245, %v2230
    %v2250 = vsel %vm315, %v2246, %v2232
    %v2251 = vsel %vm315, %v2247, %v2234
    %v2252 = vsel %vm315, %v2248, %v2236
    %v2253 = vmul.f32 %v2249, %v2157
    %v2254 = vmul.f32 %v2250, %v2158
    %v2255 = vmul.f32 %v2251, %v2159
    %v2256 = vmul.f32 %v2252, %v2160
    %v2257 = vld [vmem:[%s3] sm:$0xff]
    %v2258 = vld [vmem:[%s3 + $0x8] sm:$0xff]
    %v2259 = vld [vmem:[#allocation10] sm:$0x1]
    %v2260 = vsel %vm500, %v2129, 0
    %v2262 = vsel %vm500, %v2135, 0
    %2264 = vmatprep.subr.mxu0 0.0
    %2265 = vmatpush1.msra.mxu0 0.0
    %2266 = vmatprep.subr.mxu0 0.0
    %2267 = vmatpush1.msra.mxu0 0.0
    %2268 = vmatprep.subr.mxu0 0.0
    %2269 = vmatpush1.msra.mxu0 0.0
    %2270 = vmatprep.subr.mxu0 0.0
    %2271 = vmatpush1.msra.mxu0 0.0
    %2272 = vmatprep.subr.mxu0 0.0
    %2273 = vmatpush1.msra.mxu0 0.0
    %2274 = vmatprep.subr.mxu0 0.0
    %2275 = vmatpush1.msra.mxu0 0.0
    %2276 = vmatprep.subr.mxu0 0.0
    %2277 = vmatpush1.msra.mxu0 0.0
    %2278 = vmatprep.subr.mxu0 0.0
    %2279 = vmatpush1.msra.mxu0 0.0
    %2280 = vmatprep.subr.mxu0 0.0
    %2281 = vmatpush1.msra.mxu0 0.0
    %2282 = vmatprep.subr.mxu0 0.0
    %2283 = vmatpush1.msra.mxu0 0.0
    %2284 = vmatprep.subr.mxu0 0.0
    %2285 = vmatpush1.msra.mxu0 0.0
    %2286 = vmatprep.subr.mxu0 0.0
    %2287 = vmatpush1.msra.mxu0 0.0
    %2288 = vmatprep.subr.mxu0 0.0
    %2289 = vmatpush1.msra.mxu0 %v2256
    %2290 = vmatprep.subr.mxu0 0.0
    %2291 = vmatpush1.msra.mxu0 %v2255
    %2292 = vmatprep.subr.mxu0 0.0
    %2293 = vmatpush1.msra.mxu0 %v2254
    %2294 = vmatprep.subr.mxu0 0.0
    %2295 = vmatpush1.msra.mxu0 %v2253
    %2296 = vmatprep.subr.mxu0 0.0
    %2297 = vmatpush2.msra.mxu0 0.0
    %2298 = vmatprep.subr.mxu0 0.0
    %2299 = vmatpush2.msra.mxu0 0.0
    %2300 = vmatprep.subr.mxu0 0.0
    %2301 = vmatpush2.msra.mxu0 0.0
    %2302 = vmatprep.subr.mxu0 0.0
    %2303 = vmatpush2.msra.mxu0 0.0
    %2304 = vmatprep.subr.mxu0 0.0
    %2305 = vmatpush2.msra.mxu0 0.0
    %2306 = vmatprep.subr.mxu0 0.0
    %2307 = vmatpush2.msra.mxu0 0.0
    %2308 = vmatprep.subr.mxu0 0.0
    %2309 = vmatpush2.msra.mxu0 0.0
    %2310 = vmatprep.subr.mxu0 0.0
    %2311 = vmatpush2.msra.mxu0 0.0
    %2312 = vmatprep.subr.mxu0 0.0
    %2313 = vmatpush2.msra.mxu0 0.0
    %2314 = vmatprep.subr.mxu0 0.0
    %2315 = vmatpush2.msra.mxu0 0.0
    %2316 = vmatprep.subr.mxu0 0.0
    %2317 = vmatpush2.msra.mxu0 0.0
    %2318 = vmatprep.subr.mxu0 0.0
    %2319 = vmatpush2.msra.mxu0 0.0
    %2320 = vmatprep.subr.mxu0 0.0
    %2321 = vmatpush2.msra.mxu0 0.0
    %2322 = vmatprep.subr.mxu0 0.0
    %2323 = vmatpush2.msra.mxu0 0.0
    %2324 = vmatprep.subr.mxu0 0.0
    %2325 = vmatpush2.msra.mxu0 0.0
    %2326 = vmatprep.subr.mxu0 0.0
    %2327 = vmatpush2.msra.mxu0 0.0
    %2328 = vmatprep.mubr.f32.mxu0 0.0
    %2329 = vmatmul.mubr.f32.gmra.mxu0 %v2260
    %v2330 = vpop.f32.mrf.mxu0
    %v2331 = vadd.f32 0.0, %v2330
    %v2332 = vpop.f32.mrf.mxu0
    %2333 = vmatprep.mubr.f32.mxu0 0.0
    %2334 = vmatmul.mubr.f32.gmra.mxu0 %v2262
    %v2335 = vpop.f32.mrf.mxu0
    %v2336 = vadd.f32 0.0, %v2335
    %v2337 = vpop.f32.mrf.mxu0
    %2338 = vdwg.mxu0
    %v2339 = vsel %vm1070, %v2331, -inf
    %2340 = vmax.xlane.f32.xlu0 %v2339
    %v2341 = vpop.xlane.xlu0 %2340
    %v2342 = vsel %vm1070, %v2336, -inf
    %2343 = vmax.xlane.f32.xlu0 %v2342
    %v2344 = vpop.xlane.xlu0 %2343
    %v2345 = vsub.f32 %v2331, %v2341
    %v2346 = vsub.f32 %v2336, %v2344
    %v2347 = vmul.f32 %v2345, 1.442695
    %v2348 = vpow.pop %v2347
    %v2349 = vmul.f32 %v2346, 1.442695
    %v2350 = vpow.pop %v2349
    %v2351 = vmul.f32 %v2348, %v2257
    %v2352 = vmul.f32 %v2350, %v2258
    %v2353 = vsel %vm495, %v2351, 0.0
    %2354 = vadd.xlane.f32.xlu0 %v2353
    %v2355 = vpop.xlane.xlu0 %2354
    %v2356 = vsel %vm495, %v2352, 0.0
    %2357 = vadd.xlane.f32.xlu0 %v2356
    %v2358 = vpop.xlane.xlu0 %2357
    %v2359 = vrcp.pop %v2355
    %v2360 = vrcp.pop %v2358
    %v2361 = vmul.f32 %v2351, %v2359
    %v2362 = vmul.f32 %v2352, %v2360
    %2365 = vrot.lane.b32.xlu0 %v2351, 112
    %v2366 = vpop.permute.xlu0 %2365
    %2367 = vrot.lane.b32.xlu0 %v2352, 112
    %v2368 = vpop.permute.xlu0 %2367
    %v2371 = vsel %vm495, %v2366, 0.0
    %2372 = vadd.xlane.f32.xlu0 %v2371
    %v2373 = vpop.xlane.xlu0 %2372
    %v2374 = vsel %vm495, %v2368, 0.0
    %2375 = vadd.xlane.f32.xlu0 %v2374
    %v2376 = vpop.xlane.xlu0 %2375
    %v2377 = vrcp.pop %v2373
    %v2378 = vrcp.pop %v2376
    %v2379 = vmul.f32 %v2351, %v2377
    %v2380 = vmul.f32 %v2352, %v2378
    %2381 = vrot.lane.b32.xlu0 %v2351, 96
    %v2382 = vpop.permute.xlu0 %2381
    %2383 = vrot.lane.b32.xlu0 %v2352, 96
    %v2384 = vpop.permute.xlu0 %2383
    %v2387 = vsel %vm495, %v2382, 0.0
    %2388 = vadd.xlane.f32.xlu0 %v2387
    %v2389 = vpop.xlane.xlu0 %2388
    %v2390 = vsel %vm495, %v2384, 0.0
    %2391 = vadd.xlane.f32.xlu0 %v2390
    %v2392 = vpop.xlane.xlu0 %2391
    %v2393 = vrcp.pop %v2389
    %v2394 = vrcp.pop %v2392
    %v2395 = vmul.f32 %v2351, %v2393
    %v2396 = vmul.f32 %v2352, %v2394
    %2397 = vrot.lane.b32.xlu0 %v2351, 80
    %v2398 = vpop.permute.xlu0 %2397
    %2399 = vrot.lane.b32.xlu0 %v2352, 80
    %v2400 = vpop.permute.xlu0 %2399
    %v2403 = vsel %vm495, %v2398, 0.0
    %2404 = vadd.xlane.f32.xlu0 %v2403
    %v2405 = vpop.xlane.xlu0 %2404
    %v2406 = vsel %vm495, %v2400, 0.0
    %2407 = vadd.xlane.f32.xlu0 %v2406
    %v2408 = vpop.xlane.xlu0 %2407
    %v2409 = vrcp.pop %v2405
    %v2410 = vrcp.pop %v2408
    %v2411 = vmul.f32 %v2351, %v2409
    %v2412 = vmul.f32 %v2352, %v2410
    %v2413 = vsel %vm495, %v2361, %v2379
    %v2414 = vsel %vm495, %v2362, %v2380
    %v2415 = vsel %vm500, %v2413, %v2395
    %v2416 = vsel %vm500, %v2414, %v2396
    %v2417 = vsel %vm315, %v2415, %v2411
    %v2418 = vsel %vm315, %v2416, %v2412
    %v2420 = vlaneseq
    %v2421 = vshrl.u32 %v2420, 7
    %v2422 = vsub.s32 0, %v2421
    %v2423 = vrot.slane %v2259, %v2422
    %v2426 = vsel %vm1070, %v2417, 0
    %v2429 = vsel %vm1070, %v2418, 0
    %2431 = vmatprep.subr.mxu0 0.0
    %2432 = vmatpush1.msra.mxu0 0.0
    %2433 = vmatprep.subr.mxu0 0.0
    %2434 = vmatpush1.msra.mxu0 0.0
    %2435 = vmatprep.subr.mxu0 0.0
    %2436 = vmatpush1.msra.mxu0 0.0
    %2437 = vmatprep.subr.mxu0 0.0
    %2438 = vmatpush1.msra.mxu0 0.0
    %2439 = vmatprep.subr.mxu0 0.0
    %2440 = vmatpush1.msra.mxu0 0.0
    %2441 = vmatprep.subr.mxu0 0.0
    %2442 = vmatpush1.msra.mxu0 0.0
    %2443 = vmatprep.subr.mxu0 0.0
    %2444 = vmatpush1.msra.mxu0 0.0
    %2445 = vmatprep.subr.mxu0 0.0
    %2446 = vmatpush1.msra.mxu0 0.0
    %2447 = vmatprep.subr.mxu0 0.0
    %2448 = vmatpush1.msra.mxu0 %v2154
    %2449 = vmatprep.subr.mxu0 0.0
    %2450 = vmatpush1.msra.mxu0 %v2152
    %2451 = vmatprep.subr.mxu0 0.0
    %2452 = vmatpush1.msra.mxu0 %v2148
    %2453 = vmatprep.subr.mxu0 0.0
    %2454 = vmatpush1.msra.mxu0 %v2146
    %2455 = vmatprep.subr.mxu0 0.0
    %2456 = vmatpush1.msra.mxu0 %v2142
    %2457 = vmatprep.subr.mxu0 0.0
    %2458 = vmatpush1.msra.mxu0 %v2140
    %2459 = vmatprep.subr.mxu0 0.0
    %2460 = vmatpush1.msra.mxu0 %v2133
    %2461 = vmatprep.subr.mxu0 0.0
    %2462 = vmatpush1.msra.mxu0 %v2127
    %2463 = vmatprep.subr.mxu0 0.0
    %2464 = vmatpush2.msra.mxu0 0.0
    %2465 = vmatprep.subr.mxu0 0.0
    %2466 = vmatpush2.msra.mxu0 0.0
    %2467 = vmatprep.subr.mxu0 0.0
    %2468 = vmatpush2.msra.mxu0 0.0
    %2469 = vmatprep.subr.mxu0 0.0
    %2470 = vmatpush2.msra.mxu0 0.0
    %2471 = vmatprep.subr.mxu0 0.0
    %2472 = vmatpush2.msra.mxu0 0.0
    %2473 = vmatprep.subr.mxu0 0.0
    %2474 = vmatpush2.msra.mxu0 0.0
    %2475 = vmatprep.subr.mxu0 0.0
    %2476 = vmatpush2.msra.mxu0 0.0
    %2477 = vmatprep.subr.mxu0 0.0
    %2478 = vmatpush2.msra.mxu0 0.0
    %2479 = vmatprep.subr.mxu0 0.0
    %2480 = vmatpush2.msra.mxu0 0.0
    %2481 = vmatprep.subr.mxu0 0.0
    %2482 = vmatpush2.msra.mxu0 0.0
    %2483 = vmatprep.subr.mxu0 0.0
    %2484 = vmatpush2.msra.mxu0 0.0
    %2485 = vmatprep.subr.mxu0 0.0
    %2486 = vmatpush2.msra.mxu0 0.0
    %2487 = vmatprep.subr.mxu0 0.0
    %2488 = vmatpush2.msra.mxu0 0.0
    %2489 = vmatprep.subr.mxu0 0.0
    %2490 = vmatpush2.msra.mxu0 0.0
    %2491 = vmatprep.subr.mxu0 0.0
    %2492 = vmatpush2.msra.mxu0 0.0
    %2493 = vmatprep.subr.mxu0 0.0
    %2494 = vmatpush2.msra.mxu0 0.0
    %2495 = vmatprep.mubr.f32.mxu0 0.0
    %2496 = vmatmul.mubr.f32.gmra.mxu0 %v2426
    %v2497 = vpop.f32.mrf.mxu0
    %v2498 = vadd.f32 %v2423, %v2497
    %v2499 = vpop.f32.mrf.mxu0
    %2500 = vmatprep.mubr.f32.mxu0 0.0
    %2501 = vmatmul.mubr.f32.gmra.mxu0 %v2429
    %v2502 = vpop.f32.mrf.mxu0
    %v2503 = vadd.f32 %v2423, %v2502
    %v2504 = vpop.f32.mrf.mxu0
    %2505 = vdwg.mxu0
    %v2506 = vadd.f32 %v2029, %v2498
    %v2507 = vadd.f32 %v2030, %v2503
    %v2508 = vld [vmem:[#allocation11] sm:$0xff]
    %v2509 = vld [vmem:[#allocation11 + $0x8] sm:$0xff]
    %v2510 = vld [vmem:[#allocation11 + $0x10] sm:$0xff]
    %v2511 = vld [vmem:[#allocation11 + $0x18] sm:$0xff]
    %v2512 = vld [vmem:[#allocation13] sm:$0x1]
    %v2514 = vlaneseq
    %v2515 = vshrl.u32 %v2514, 7
    %v2516 = vsub.s32 0, %v2515
    %v2517 = vrot.slane %v2512, %v2516
    %v2520 = vsel %vm500, %v2506, 0
    %v2523 = vsel %vm500, %v2507, 0
    %2525 = vmatprep.subr.mxu0 0.0
    %2526 = vmatpush1.msra.mxu0 0.0
    %2527 = vmatprep.subr.mxu0 0.0
    %2528 = vmatpush1.msra.mxu0 0.0
    %2529 = vmatprep.subr.mxu0 0.0
    %2530 = vmatpush1.msra.mxu0 0.0
    %2531 = vmatprep.subr.mxu0 0.0
    %2532 = vmatpush1.msra.mxu0 0.0
    %2533 = vmatprep.subr.mxu0 0.0
    %2534 = vmatpush1.msra.mxu0 0.0
    %2535 = vmatprep.subr.mxu0 0.0
    %2536 = vmatpush1.msra.mxu0 0.0
    %2537 = vmatprep.subr.mxu0 0.0
    %2538 = vmatpush1.msra.mxu0 0.0
    %2539 = vmatprep.subr.mxu0 0.0
    %2540 = vmatpush1.msra.mxu0 0.0
    %2541 = vmatprep.subr.mxu0 0.0
    %2542 = vmatpush1.msra.mxu0 0.0
    %2543 = vmatprep.subr.mxu0 0.0
    %2544 = vmatpush1.msra.mxu0 0.0
    %2545 = vmatprep.subr.mxu0 0.0
    %2546 = vmatpush1.msra.mxu0 0.0
    %2547 = vmatprep.subr.mxu0 0.0
    %2548 = vmatpush1.msra.mxu0 0.0
    %2549 = vmatprep.subr.mxu0 0.0
    %2550 = vmatpush1.msra.mxu0 %v2511
    %2551 = vmatprep.subr.mxu0 0.0
    %2552 = vmatpush1.msra.mxu0 %v2510
    %2553 = vmatprep.subr.mxu0 0.0
    %2554 = vmatpush1.msra.mxu0 %v2509
    %2555 = vmatprep.subr.mxu0 0.0
    %2556 = vmatpush1.msra.mxu0 %v2508
    %2557 = vmatprep.subr.mxu0 0.0
    %2558 = vmatpush2.msra.mxu0 0.0
    %2559 = vmatprep.subr.mxu0 0.0
    %2560 = vmatpush2.msra.mxu0 0.0
    %2561 = vmatprep.subr.mxu0 0.0
    %2562 = vmatpush2.msra.mxu0 0.0
    %2563 = vmatprep.subr.mxu0 0.0
    %2564 = vmatpush2.msra.mxu0 0.0
    %2565 = vmatprep.subr.mxu0 0.0
    %2566 = vmatpush2.msra.mxu0 0.0
    %2567 = vmatprep.subr.mxu0 0.0
    %2568 = vmatpush2.msra.mxu0 0.0
    %2569 = vmatprep.subr.mxu0 0.0
    %2570 = vmatpush2.msra.mxu0 0.0
    %2571 = vmatprep.subr.mxu0 0.0
    %2572 = vmatpush2.msra.mxu0 0.0
    %2573 = vmatprep.subr.mxu0 0.0
    %2574 = vmatpush2.msra.mxu0 0.0
    %2575 = vmatprep.subr.mxu0 0.0
    %2576 = vmatpush2.msra.mxu0 0.0
    %2577 = vmatprep.subr.mxu0 0.0
    %2578 = vmatpush2.msra.mxu0 0.0
    %2579 = vmatprep.subr.mxu0 0.0
    %2580 = vmatpush2.msra.mxu0 0.0
    %2581 = vmatprep.subr.mxu0 0.0
    %2582 = vmatpush2.msra.mxu0 0.0
    %2583 = vmatprep.subr.mxu0 0.0
    %2584 = vmatpush2.msra.mxu0 0.0
    %2585 = vmatprep.subr.mxu0 0.0
    %2586 = vmatpush2.msra.mxu0 0.0
    %2587 = vmatprep.subr.mxu0 0.0
    %2588 = vmatpush2.msra.mxu0 0.0
    %2589 = vmatprep.mubr.f32.mxu0 0.0
    %2590 = vmatmul.mubr.f32.gmra.mxu0 %v2520
    %v2591 = vpop.f32.mrf.mxu0
    %v2592 = vadd.f32 %v2517, %v2591
    %v2593 = vpop.f32.mrf.mxu0
    %2594 = vmatprep.mubr.f32.mxu0 0.0
    %2595 = vmatmul.mubr.f32.gmra.mxu0 %v2523
    %v2596 = vpop.f32.mrf.mxu0
    %v2597 = vadd.f32 %v2517, %v2596
    %v2598 = vpop.f32.mrf.mxu0
    %2599 = vdwg.mxu0
    %v2600 = vld [vmem:[%s4] sm:$0xff]
    %v2601 = vld [vmem:[%s4 + $0x8] sm:$0xff]
    %v2602 = vld [vmem:[#allocation16] sm:$0x1]
    %v2604 = vsel %vm500, %v2592, 0
    %v2607 = vsel %vm500, %v2597, 0
    %2609 = vmatprep.subr.mxu0 0.0
    %2610 = vmatpush1.msra.mxu0 0.0
    %2611 = vmatprep.subr.mxu0 0.0
    %2612 = vmatpush1.msra.mxu0 0.0
    %2613 = vmatprep.subr.mxu0 0.0
    %2614 = vmatpush1.msra.mxu0 0.0
    %2615 = vmatprep.subr.mxu0 0.0
    %2616 = vmatpush1.msra.mxu0 0.0
    %2617 = vmatprep.subr.mxu0 0.0
    %2618 = vmatpush1.msra.mxu0 0.0
    %2619 = vmatprep.subr.mxu0 0.0
    %2620 = vmatpush1.msra.mxu0 0.0
    %2621 = vmatprep.subr.mxu0 0.0
    %2622 = vmatpush1.msra.mxu0 0.0
    %2623 = vmatprep.subr.mxu0 0.0
    %2624 = vmatpush1.msra.mxu0 0.0
    %2625 = vmatprep.subr.mxu0 0.0
    %2626 = vmatpush1.msra.mxu0 0.0
    %2627 = vmatprep.subr.mxu0 0.0
    %2628 = vmatpush1.msra.mxu0 0.0
    %2629 = vmatprep.subr.mxu0 0.0
    %2630 = vmatpush1.msra.mxu0 0.0
    %2631 = vmatprep.subr.mxu0 0.0
    %2632 = vmatpush1.msra.mxu0 0.0
    %2633 = vmatprep.subr.mxu0 0.0
    %2634 = vmatpush1.msra.mxu0 %v512
    %2635 = vmatprep.subr.mxu0 0.0
    %2636 = vmatpush1.msra.mxu0 %v511
    %2637 = vmatprep.subr.mxu0 0.0
    %2638 = vmatpush1.msra.mxu0 %v510
    %2639 = vmatprep.subr.mxu0 0.0
    %2640 = vmatpush1.msra.mxu0 %v509
    %2641 = vmatprep.subr.mxu0 0.0
    %2642 = vmatpush2.msra.mxu0 0.0
    %2643 = vmatprep.subr.mxu0 0.0
    %2644 = vmatpush2.msra.mxu0 0.0
    %2645 = vmatprep.subr.mxu0 0.0
    %2646 = vmatpush2.msra.mxu0 0.0
    %2647 = vmatprep.subr.mxu0 0.0
    %2648 = vmatpush2.msra.mxu0 0.0
    %2649 = vmatprep.subr.mxu0 0.0
    %2650 = vmatpush2.msra.mxu0 0.0
    %2651 = vmatprep.subr.mxu0 0.0
    %2652 = vmatpush2.msra.mxu0 0.0
    %2653 = vmatprep.subr.mxu0 0.0
    %2654 = vmatpush2.msra.mxu0 0.0
    %2655 = vmatprep.subr.mxu0 0.0
    %2656 = vmatpush2.msra.mxu0 0.0
    %2657 = vmatprep.subr.mxu0 0.0
    %2658 = vmatpush2.msra.mxu0 0.0
    %2659 = vmatprep.subr.mxu0 0.0
    %2660 = vmatpush2.msra.mxu0 0.0
    %2661 = vmatprep.subr.mxu0 0.0
    %2662 = vmatpush2.msra.mxu0 0.0
    %2663 = vmatprep.subr.mxu0 0.0
    %2664 = vmatpush2.msra.mxu0 0.0
    %2665 = vmatprep.subr.mxu0 0.0
    %2666 = vmatpush2.msra.mxu0 0.0
    %2667 = vmatprep.subr.mxu0 0.0
    %2668 = vmatpush2.msra.mxu0 0.0
    %2669 = vmatprep.subr.mxu0 0.0
    %2670 = vmatpush2.msra.mxu0 0.0
    %2671 = vmatprep.subr.mxu0 0.0
    %2672 = vmatpush2.msra.mxu0 0.0
    %2673 = vmatprep.mubr.f32.mxu0 0.0
    %2674 = vmatmul.mubr.f32.gmra.mxu0 %v2604
    %v2675 = vpop.f32.mrf.mxu0
    %v2676 = vadd.f32 0.0, %v2675
    %v2677 = vpop.f32.mrf.mxu0
    %2678 = vmatprep.mubr.f32.mxu0 0.0
    %2679 = vmatmul.mubr.f32.gmra.mxu0 %v2607
    %v2680 = vpop.f32.mrf.mxu0
    %v2681 = vadd.f32 0.0, %v2680
    %v2682 = vpop.f32.mrf.mxu0
    %2683 = vdwg.mxu0
    %v2684 = vsel %vm1070, %v2676, -inf
    %2685 = vmax.xlane.f32.xlu0 %v2684
    %v2686 = vpop.xlane.xlu0 %2685
    %v2687 = vsel %vm1070, %v2681, -inf
    %2688 = vmax.xlane.f32.xlu0 %v2687
    %v2689 = vpop.xlane.xlu0 %2688
    %v2690 = vsub.f32 %v2676, %v2686
    %v2691 = vsub.f32 %v2681, %v2689
    %v2692 = vmul.f32 %v2690, 1.442695
    %v2693 = vpow.pop %v2692
    %v2694 = vmul.f32 %v2691, 1.442695
    %v2695 = vpow.pop %v2694
    %v2696 = vmul.f32 %v2693, %v2600
    %v2697 = vmul.f32 %v2695, %v2601
    %v2698 = vsel %vm495, %v2696, 0.0
    %2699 = vadd.xlane.f32.xlu0 %v2698
    %v2700 = vpop.xlane.xlu0 %2699
    %v2701 = vsel %vm495, %v2697, 0.0
    %2702 = vadd.xlane.f32.xlu0 %v2701
    %v2703 = vpop.xlane.xlu0 %2702
    %v2704 = vrcp.pop %v2700
    %v2705 = vrcp.pop %v2703
    %v2706 = vmul.f32 %v2696, %v2704
    %v2707 = vmul.f32 %v2697, %v2705
    %2710 = vrot.lane.b32.xlu0 %v2696, 112
    %v2711 = vpop.permute.xlu0 %2710
    %2712 = vrot.lane.b32.xlu0 %v2697, 112
    %v2713 = vpop.permute.xlu0 %2712
    %v2716 = vsel %vm495, %v2711, 0.0
    %2717 = vadd.xlane.f32.xlu0 %v2716
    %v2718 = vpop.xlane.xlu0 %2717
    %v2719 = vsel %vm495, %v2713, 0.0
    %2720 = vadd.xlane.f32.xlu0 %v2719
    %v2721 = vpop.xlane.xlu0 %2720
    %v2722 = vrcp.pop %v2718
    %v2723 = vrcp.pop %v2721
    %v2724 = vmul.f32 %v2696, %v2722
    %v2725 = vmul.f32 %v2697, %v2723
    %2726 = vrot.lane.b32.xlu0 %v2696, 96
    %v2727 = vpop.permute.xlu0 %2726
    %2728 = vrot.lane.b32.xlu0 %v2697, 96
    %v2729 = vpop.permute.xlu0 %2728
    %v2732 = vsel %vm495, %v2727, 0.0
    %2733 = vadd.xlane.f32.xlu0 %v2732
    %v2734 = vpop.xlane.xlu0 %2733
    %v2735 = vsel %vm495, %v2729, 0.0
    %2736 = vadd.xlane.f32.xlu0 %v2735
    %v2737 = vpop.xlane.xlu0 %2736
    %v2738 = vrcp.pop %v2734
    %v2739 = vrcp.pop %v2737
    %v2740 = vmul.f32 %v2696, %v2738
    %v2741 = vmul.f32 %v2697, %v2739
    %2742 = vrot.lane.b32.xlu0 %v2696, 80
    %v2743 = vpop.permute.xlu0 %2742
    %2744 = vrot.lane.b32.xlu0 %v2697, 80
    %v2745 = vpop.permute.xlu0 %2744
    %v2748 = vsel %vm495, %v2743, 0.0
    %2749 = vadd.xlane.f32.xlu0 %v2748
    %v2750 = vpop.xlane.xlu0 %2749
    %v2751 = vsel %vm495, %v2745, 0.0
    %2752 = vadd.xlane.f32.xlu0 %v2751
    %v2753 = vpop.xlane.xlu0 %2752
    %v2754 = vrcp.pop %v2750
    %v2755 = vrcp.pop %v2753
    %v2756 = vmul.f32 %v2696, %v2754
    %v2757 = vmul.f32 %v2697, %v2755
    %v2758 = vsel %vm495, %v2706, %v2724
    %v2759 = vsel %vm495, %v2707, %v2725
    %v2760 = vsel %vm500, %v2758, %v2740
    %v2761 = vsel %vm500, %v2759, %v2741
    %v2762 = vsel %vm315, %v2760, %v2756
    %v2763 = vsel %vm315, %v2761, %v2757
    %v2765 = vlaneseq
    %v2766 = vshrl.u32 %v2765, 7
    %v2767 = vsub.s32 0, %v2766
    %v2768 = vrot.slane %v2602, %v2767
    %v2771 = vsel %vm1070, %v2762, 0
    %v2774 = vsel %vm1070, %v2763, 0
    %2776 = vmatprep.subr.mxu0 0.0
    %2777 = vmatpush1.msra.mxu0 0.0
    %2778 = vmatprep.subr.mxu0 0.0
    %2779 = vmatpush1.msra.mxu0 0.0
    %2780 = vmatprep.subr.mxu0 0.0
    %2781 = vmatpush1.msra.mxu0 0.0
    %2782 = vmatprep.subr.mxu0 0.0
    %2783 = vmatpush1.msra.mxu0 0.0
    %2784 = vmatprep.subr.mxu0 0.0
    %2785 = vmatpush1.msra.mxu0 0.0
    %2786 = vmatprep.subr.mxu0 0.0
    %2787 = vmatpush1.msra.mxu0 0.0
    %2788 = vmatprep.subr.mxu0 0.0
    %2789 = vmatpush1.msra.mxu0 0.0
    %2790 = vmatprep.subr.mxu0 0.0
    %2791 = vmatpush1.msra.mxu0 0.0
    %2792 = vmatprep.subr.mxu0 0.0
    %2793 = vmatpush1.msra.mxu0 %v416
    %2794 = vmatprep.subr.mxu0 0.0
    %2795 = vmatpush1.msra.mxu0 %v414
    %2796 = vmatprep.subr.mxu0 0.0
    %2797 = vmatpush1.msra.mxu0 %v410
    %2798 = vmatprep.subr.mxu0 0.0
    %2799 = vmatpush1.msra.mxu0 %v408
    %2800 = vmatprep.subr.mxu0 0.0
    %2801 = vmatpush1.msra.mxu0 %v404
    %2802 = vmatprep.subr.mxu0 0.0
    %2803 = vmatpush1.msra.mxu0 %v402
    %2804 = vmatprep.subr.mxu0 0.0
    %2805 = vmatpush1.msra.mxu0 %v395
    %2806 = vmatprep.subr.mxu0 0.0
    %2807 = vmatpush1.msra.mxu0 %v389
    %2808 = vmatprep.subr.mxu0 0.0
    %2809 = vmatpush2.msra.mxu0 0.0
    %2810 = vmatprep.subr.mxu0 0.0
    %2811 = vmatpush2.msra.mxu0 0.0
    %2812 = vmatprep.subr.mxu0 0.0
    %2813 = vmatpush2.msra.mxu0 0.0
    %2814 = vmatprep.subr.mxu0 0.0
    %2815 = vmatpush2.msra.mxu0 0.0
    %2816 = vmatprep.subr.mxu0 0.0
    %2817 = vmatpush2.msra.mxu0 0.0
    %2818 = vmatprep.subr.mxu0 0.0
    %2819 = vmatpush2.msra.mxu0 0.0
    %2820 = vmatprep.subr.mxu0 0.0
    %2821 = vmatpush2.msra.mxu0 0.0
    %2822 = vmatprep.subr.mxu0 0.0
    %2823 = vmatpush2.msra.mxu0 0.0
    %2824 = vmatprep.subr.mxu0 0.0
    %2825 = vmatpush2.msra.mxu0 0.0
    %2826 = vmatprep.subr.mxu0 0.0
    %2827 = vmatpush2.msra.mxu0 0.0
    %2828 = vmatprep.subr.mxu0 0.0
    %2829 = vmatpush2.msra.mxu0 0.0
    %2830 = vmatprep.subr.mxu0 0.0
    %2831 = vmatpush2.msra.mxu0 0.0
    %2832 = vmatprep.subr.mxu0 0.0
    %2833 = vmatpush2.msra.mxu0 0.0
    %2834 = vmatprep.subr.mxu0 0.0
    %2835 = vmatpush2.msra.mxu0 0.0
    %2836 = vmatprep.subr.mxu0 0.0
    %2837 = vmatpush2.msra.mxu0 0.0
    %2838 = vmatprep.subr.mxu0 0.0
    %2839 = vmatpush2.msra.mxu0 0.0
    %2840 = vmatprep.mubr.f32.mxu0 0.0
    %2841 = vmatmul.mubr.f32.gmra.mxu0 %v2771
    %v2842 = vpop.f32.mrf.mxu0
    %v2843 = vadd.f32 %v2768, %v2842
    %v2844 = vpop.f32.mrf.mxu0
    %2845 = vmatprep.mubr.f32.mxu0 0.0
    %2846 = vmatmul.mubr.f32.gmra.mxu0 %v2774
    %v2847 = vpop.f32.mrf.mxu0
    %v2848 = vadd.f32 %v2768, %v2847
    %v2849 = vpop.f32.mrf.mxu0
    %2850 = vdwg.mxu0
    %v2851 = vld [vmem:[#allocation5] sm:$0xff]
    %v2852 = vld [vmem:[#allocation5 + $0x8] sm:$0xff]
    %v2853 = vld [vmem:[#allocation20] sm:$0x1]
    %2854 = vrot.lane.b32.xlu0 %v2592, 96
    %v2855 = vpop.permute.xlu0 %2854
    %2856 = vrot.lane.b32.xlu0 %v2597, 96
    %v2857 = vpop.permute.xlu0 %2856
    %v2858 = vsel %vm500, %v2855, 0
    %v2860 = vsel %vm500, %v2857, 0
    %2862 = vmatprep.subr.mxu0 0.0
    %2863 = vmatpush1.msra.mxu0 0.0
    %2864 = vmatprep.subr.mxu0 0.0
    %2865 = vmatpush1.msra.mxu0 0.0
    %2866 = vmatprep.subr.mxu0 0.0
    %2867 = vmatpush1.msra.mxu0 0.0
    %2868 = vmatprep.subr.mxu0 0.0
    %2869 = vmatpush1.msra.mxu0 0.0
    %2870 = vmatprep.subr.mxu0 0.0
    %2871 = vmatpush1.msra.mxu0 0.0
    %2872 = vmatprep.subr.mxu0 0.0
    %2873 = vmatpush1.msra.mxu0 0.0
    %2874 = vmatprep.subr.mxu0 0.0
    %2875 = vmatpush1.msra.mxu0 0.0
    %2876 = vmatprep.subr.mxu0 0.0
    %2877 = vmatpush1.msra.mxu0 0.0
    %2878 = vmatprep.subr.mxu0 0.0
    %2879 = vmatpush1.msra.mxu0 0.0
    %2880 = vmatprep.subr.mxu0 0.0
    %2881 = vmatpush1.msra.mxu0 0.0
    %2882 = vmatprep.subr.mxu0 0.0
    %2883 = vmatpush1.msra.mxu0 0.0
    %2884 = vmatprep.subr.mxu0 0.0
    %2885 = vmatpush1.msra.mxu0 0.0
    %2886 = vmatprep.subr.mxu0 0.0
    %2887 = vmatpush1.msra.mxu0 %v762
    %2888 = vmatprep.subr.mxu0 0.0
    %2889 = vmatpush1.msra.mxu0 %v761
    %2890 = vmatprep.subr.mxu0 0.0
    %2891 = vmatpush1.msra.mxu0 %v760
    %2892 = vmatprep.subr.mxu0 0.0
    %2893 = vmatpush1.msra.mxu0 %v759
    %2894 = vmatprep.subr.mxu0 0.0
    %2895 = vmatpush2.msra.mxu0 0.0
    %2896 = vmatprep.subr.mxu0 0.0
    %2897 = vmatpush2.msra.mxu0 0.0
    %2898 = vmatprep.subr.mxu0 0.0
    %2899 = vmatpush2.msra.mxu0 0.0
    %2900 = vmatprep.subr.mxu0 0.0
    %2901 = vmatpush2.msra.mxu0 0.0
    %2902 = vmatprep.subr.mxu0 0.0
    %2903 = vmatpush2.msra.mxu0 0.0
    %2904 = vmatprep.subr.mxu0 0.0
    %2905 = vmatpush2.msra.mxu0 0.0
    %2906 = vmatprep.subr.mxu0 0.0
    %2907 = vmatpush2.msra.mxu0 0.0
    %2908 = vmatprep.subr.mxu0 0.0
    %2909 = vmatpush2.msra.mxu0 0.0
    %2910 = vmatprep.subr.mxu0 0.0
    %2911 = vmatpush2.msra.mxu0 0.0
    %2912 = vmatprep.subr.mxu0 0.0
    %2913 = vmatpush2.msra.mxu0 0.0
    %2914 = vmatprep.subr.mxu0 0.0
    %2915 = vmatpush2.msra.mxu0 0.0
    %2916 = vmatprep.subr.mxu0 0.0
    %2917 = vmatpush2.msra.mxu0 0.0
    %2918 = vmatprep.subr.mxu0 0.0
    %2919 = vmatpush2.msra.mxu0 0.0
    %2920 = vmatprep.subr.mxu0 0.0
    %2921 = vmatpush2.msra.mxu0 0.0
    %2922 = vmatprep.subr.mxu0 0.0
    %2923 = vmatpush2.msra.mxu0 0.0
    %2924 = vmatprep.subr.mxu0 0.0
    %2925 = vmatpush2.msra.mxu0 0.0
    %2926 = vmatprep.mubr.f32.mxu0 0.0
    %2927 = vmatmul.mubr.f32.gmra.mxu0 %v2858
    %v2928 = vpop.f32.mrf.mxu0
    %v2929 = vadd.f32 0.0, %v2928
    %v2930 = vpop.f32.mrf.mxu0
    %2931 = vmatprep.mubr.f32.mxu0 0.0
    %2932 = vmatmul.mubr.f32.gmra.mxu0 %v2860
    %v2933 = vpop.f32.mrf.mxu0
    %v2934 = vadd.f32 0.0, %v2933
    %v2935 = vpop.f32.mrf.mxu0
    %2936 = vdwg.mxu0
    %v2937 = vsel %vm1669, %v2929, -inf
    %2938 = vmax.xlane.f32.xlu0 %v2937
    %v2939 = vpop.xlane.xlu0 %2938
    %v2940 = vsel %vm1669, %v2934, -inf
    %2941 = vmax.xlane.f32.xlu0 %v2940
    %v2942 = vpop.xlane.xlu0 %2941
    %v2943 = vsub.f32 %v2929, %v2939
    %v2944 = vsub.f32 %v2934, %v2942
    %v2945 = vmul.f32 %v2943, 1.442695
    %v2946 = vpow.pop %v2945
    %v2947 = vmul.f32 %v2944, 1.442695
    %v2948 = vpow.pop %v2947
    %v2949 = vmul.f32 %v2946, %v2851
    %v2950 = vmul.f32 %v2948, %v2852
    %v2951 = vsel %vm745, %v2949, 0.0
    %2952 = vadd.xlane.f32.xlu0 %v2951
    %v2953 = vpop.xlane.xlu0 %2952
    %v2954 = vsel %vm745, %v2950, 0.0
    %2955 = vadd.xlane.f32.xlu0 %v2954
    %v2956 = vpop.xlane.xlu0 %2955
    %v2957 = vrcp.pop %v2953
    %v2958 = vrcp.pop %v2956
    %v2959 = vmul.f32 %v2949, %v2957
    %v2960 = vmul.f32 %v2950, %v2958
    %2963 = vrot.lane.b32.xlu0 %v2949, 108
    %v2964 = vpop.permute.xlu0 %2963
    %2965 = vrot.lane.b32.xlu0 %v2950, 108
    %v2966 = vpop.permute.xlu0 %2965
    %v2969 = vsel %vm745, %v2964, 0.0
    %2970 = vadd.xlane.f32.xlu0 %v2969
    %v2971 = vpop.xlane.xlu0 %2970
    %v2972 = vsel %vm745, %v2966, 0.0
    %2973 = vadd.xlane.f32.xlu0 %v2972
    %v2974 = vpop.xlane.xlu0 %2973
    %v2975 = vrcp.pop %v2971
    %v2976 = vrcp.pop %v2974
    %v2977 = vmul.f32 %v2949, %v2975
    %v2978 = vmul.f32 %v2950, %v2976
    %2979 = vrot.lane.b32.xlu0 %v2949, 88
    %v2980 = vpop.permute.xlu0 %2979
    %2981 = vrot.lane.b32.xlu0 %v2950, 88
    %v2982 = vpop.permute.xlu0 %2981
    %v2985 = vsel %vm745, %v2980, 0.0
    %2986 = vadd.xlane.f32.xlu0 %v2985
    %v2987 = vpop.xlane.xlu0 %2986
    %v2988 = vsel %vm745, %v2982, 0.0
    %2989 = vadd.xlane.f32.xlu0 %v2988
    %v2990 = vpop.xlane.xlu0 %2989
    %v2991 = vrcp.pop %v2987
    %v2992 = vrcp.pop %v2990
    %v2993 = vmul.f32 %v2949, %v2991
    %v2994 = vmul.f32 %v2950, %v2992
    %2995 = vrot.lane.b32.xlu0 %v2949, 68
    %v2996 = vpop.permute.xlu0 %2995
    %2997 = vrot.lane.b32.xlu0 %v2950, 68
    %v2998 = vpop.permute.xlu0 %2997
    %v3001 = vsel %vm745, %v2996, 0.0
    %3002 = vadd.xlane.f32.xlu0 %v3001
    %v3003 = vpop.xlane.xlu0 %3002
    %v3004 = vsel %vm745, %v2998, 0.0
    %3005 = vadd.xlane.f32.xlu0 %v3004
    %v3006 = vpop.xlane.xlu0 %3005
    %v3007 = vrcp.pop %v3003
    %v3008 = vrcp.pop %v3006
    %v3009 = vmul.f32 %v2949, %v3007
    %v3010 = vmul.f32 %v2950, %v3008
    %v3011 = vsel %vm745, %v2959, %v2977
    %v3012 = vsel %vm745, %v2960, %v2978
    %v3013 = vsel %vm538, %v3011, %v2993
    %v3014 = vsel %vm538, %v3012, %v2994
    %v3015 = vsel %vm754, %v3013, %v3009
    %v3016 = vsel %vm754, %v3014, %v3010
    %v3018 = vlaneseq
    %v3019 = vshrl.u32 %v3018, 7
    %v3020 = vsub.s32 0, %v3019
    %v3021 = vrot.slane %v2853, %v3020
    %v3024 = vsel %vm1669, %v3015, 0
    %v3027 = vsel %vm1669, %v3016, 0
    %3029 = vmatprep.subr.mxu0 0.0
    %3030 = vmatpush1.msra.mxu0 0.0
    %3031 = vmatprep.subr.mxu0 0.0
    %3032 = vmatpush1.msra.mxu0 0.0
    %3033 = vmatprep.subr.mxu0 0.0
    %3034 = vmatpush1.msra.mxu0 0.0
    %3035 = vmatprep.subr.mxu0 0.0
    %3036 = vmatpush1.msra.mxu0 0.0
    %3037 = vmatprep.subr.mxu0 0.0
    %3038 = vmatpush1.msra.mxu0 0.0
    %3039 = vmatprep.subr.mxu0 0.0
    %3040 = vmatpush1.msra.mxu0 0.0
    %3041 = vmatprep.subr.mxu0 0.0
    %3042 = vmatpush1.msra.mxu0 %v663
    %3043 = vmatprep.subr.mxu0 0.0
    %3044 = vmatpush1.msra.mxu0 %v661
    %3045 = vmatprep.subr.mxu0 0.0
    %3046 = vmatpush1.msra.mxu0 %v668
    %3047 = vmatprep.subr.mxu0 0.0
    %3048 = vmatpush1.msra.mxu0 %v652
    %3049 = vmatprep.subr.mxu0 0.0
    %3050 = vmatpush1.msra.mxu0 %v650
    %3051 = vmatprep.subr.mxu0 0.0
    %3052 = vmatpush1.msra.mxu0 %v645
    %3053 = vmatprep.subr.mxu0 0.0
    %3054 = vmatpush1.msra.mxu0 %v643
    %3055 = vmatprep.subr.mxu0 0.0
    %3056 = vmatpush1.msra.mxu0 %v667
    %3057 = vmatprep.subr.mxu0 0.0
    %3058 = vmatpush1.msra.mxu0 %v621
    %3059 = vmatprep.subr.mxu0 0.0
    %3060 = vmatpush1.msra.mxu0 %v615
    %3061 = vmatprep.subr.mxu0 0.0
    %3062 = vmatpush2.msra.mxu0 0.0
    %3063 = vmatprep.subr.mxu0 0.0
    %3064 = vmatpush2.msra.mxu0 0.0
    %3065 = vmatprep.subr.mxu0 0.0
    %3066 = vmatpush2.msra.mxu0 0.0
    %3067 = vmatprep.subr.mxu0 0.0
    %3068 = vmatpush2.msra.mxu0 0.0
    %3069 = vmatprep.subr.mxu0 0.0
    %3070 = vmatpush2.msra.mxu0 0.0
    %3071 = vmatprep.subr.mxu0 0.0
    %3072 = vmatpush2.msra.mxu0 0.0
    %3073 = vmatprep.subr.mxu0 0.0
    %3074 = vmatpush2.msra.mxu0 0.0
    %3075 = vmatprep.subr.mxu0 0.0
    %3076 = vmatpush2.msra.mxu0 0.0
    %3077 = vmatprep.subr.mxu0 0.0
    %3078 = vmatpush2.msra.mxu0 0.0
    %3079 = vmatprep.subr.mxu0 0.0
    %3080 = vmatpush2.msra.mxu0 0.0
    %3081 = vmatprep.subr.mxu0 0.0
    %3082 = vmatpush2.msra.mxu0 0.0
    %3083 = vmatprep.subr.mxu0 0.0
    %3084 = vmatpush2.msra.mxu0 0.0
    %3085 = vmatprep.subr.mxu0 0.0
    %3086 = vmatpush2.msra.mxu0 0.0
    %3087 = vmatprep.subr.mxu0 0.0
    %3088 = vmatpush2.msra.mxu0 0.0
    %3089 = vmatprep.subr.mxu0 0.0
    %3090 = vmatpush2.msra.mxu0 0.0
    %3091 = vmatprep.subr.mxu0 0.0
    %3092 = vmatpush2.msra.mxu0 0.0
    %3093 = vmatprep.mubr.f32.mxu0 0.0
    %3094 = vmatmul.mubr.f32.gmra.mxu0 %v3024
    %v3095 = vpop.f32.mrf.mxu0
    %v3096 = vadd.f32 %v3021, %v3095
    %v3097 = vpop.f32.mrf.mxu0
    %3098 = vmatprep.mubr.f32.mxu0 0.0
    %3099 = vmatmul.mubr.f32.gmra.mxu0 %v3027
    %v3100 = vpop.f32.mrf.mxu0
    %v3101 = vadd.f32 %v3021, %v3100
    %v3102 = vpop.f32.mrf.mxu0
    %3103 = vdwg.mxu0
    %v3104 = vadd.f32 %v2506, %v2843
    %v3105 = vadd.f32 %v2507, %v2848
    %v3106 = vadd.f32 %v3104, %v3096
    %v3107 = vadd.f32 %v3105, %v3101
    %v3108 = vld [vmem:[#allocation22] sm:$0xff]
    %v3109 = vld [vmem:[#allocation22 + $0x8] sm:$0xff]
    %v3110 = vld [vmem:[#allocation22 + $0x10] sm:$0xff]
    %v3111 = vld [vmem:[#allocation22 + $0x18] sm:$0xff]
    %v3112 = vld [vmem:[#allocation23] sm:$0x1]
    %v3114 = vlaneseq
    %v3115 = vshrl.u32 %v3114, 7
    %v3116 = vsub.s32 0, %v3115
    %v3117 = vrot.slane %v3112, %v3116
    %v3120 = vsel %vm500, %v3106, 0
    %v3123 = vsel %vm500, %v3107, 0
    %3125 = vmatprep.subr.mxu0 0.0
    %3126 = vmatpush1.msra.mxu0 0.0
    %3127 = vmatprep.subr.mxu0 0.0
    %3128 = vmatpush1.msra.mxu0 0.0
    %3129 = vmatprep.subr.mxu0 0.0
    %3130 = vmatpush1.msra.mxu0 0.0
    %3131 = vmatprep.subr.mxu0 0.0
    %3132 = vmatpush1.msra.mxu0 0.0
    %3133 = vmatprep.subr.mxu0 0.0
    %3134 = vmatpush1.msra.mxu0 0.0
    %3135 = vmatprep.subr.mxu0 0.0
    %3136 = vmatpush1.msra.mxu0 0.0
    %3137 = vmatprep.subr.mxu0 0.0
    %3138 = vmatpush1.msra.mxu0 0.0
    %3139 = vmatprep.subr.mxu0 0.0
    %3140 = vmatpush1.msra.mxu0 0.0
    %3141 = vmatprep.subr.mxu0 0.0
    %3142 = vmatpush1.msra.mxu0 0.0
    %3143 = vmatprep.subr.mxu0 0.0
    %3144 = vmatpush1.msra.mxu0 0.0
    %3145 = vmatprep.subr.mxu0 0.0
    %3146 = vmatpush1.msra.mxu0 0.0
    %3147 = vmatprep.subr.mxu0 0.0
    %3148 = vmatpush1.msra.mxu0 0.0
    %3149 = vmatprep.subr.mxu0 0.0
    %3150 = vmatpush1.msra.mxu0 %v3111
    %3151 = vmatprep.subr.mxu0 0.0
    %3152 = vmatpush1.msra.mxu0 %v3110
    %3153 = vmatprep.subr.mxu0 0.0
    %3154 = vmatpush1.msra.mxu0 %v3109
    %3155 = vmatprep.subr.mxu0 0.0
    %3156 = vmatpush1.msra.mxu0 %v3108
    %3157 = vmatprep.subr.mxu0 0.0
    %3158 = vmatpush2.msra.mxu0 0.0
    %3159 = vmatprep.subr.mxu0 0.0
    %3160 = vmatpush2.msra.mxu0 0.0
    %3161 = vmatprep.subr.mxu0 0.0
    %3162 = vmatpush2.msra.mxu0 0.0
    %3163 = vmatprep.subr.mxu0 0.0
    %3164 = vmatpush2.msra.mxu0 0.0
    %3165 = vmatprep.subr.mxu0 0.0
    %3166 = vmatpush2.msra.mxu0 0.0
    %3167 = vmatprep.subr.mxu0 0.0
    %3168 = vmatpush2.msra.mxu0 0.0
    %3169 = vmatprep.subr.mxu0 0.0
    %3170 = vmatpush2.msra.mxu0 0.0
    %3171 = vmatprep.subr.mxu0 0.0
    %3172 = vmatpush2.msra.mxu0 0.0
    %3173 = vmatprep.subr.mxu0 0.0
    %3174 = vmatpush2.msra.mxu0 0.0
    %3175 = vmatprep.subr.mxu0 0.0
    %3176 = vmatpush2.msra.mxu0 0.0
    %3177 = vmatprep.subr.mxu0 0.0
    %3178 = vmatpush2.msra.mxu0 0.0
    %3179 = vmatprep.subr.mxu0 0.0
    %3180 = vmatpush2.msra.mxu0 0.0
    %3181 = vmatprep.subr.mxu0 0.0
    %3182 = vmatpush2.msra.mxu0 0.0
    %3183 = vmatprep.subr.mxu0 0.0
    %3184 = vmatpush2.msra.mxu0 0.0
    %3185 = vmatprep.subr.mxu0 0.0
    %3186 = vmatpush2.msra.mxu0 0.0
    %3187 = vmatprep.subr.mxu0 0.0
    %3188 = vmatpush2.msra.mxu0 0.0
    %3189 = vmatprep.mubr.f32.mxu0 0.0
    %3190 = vmatmul.mubr.f32.gmra.mxu0 %v3120
    %v3191 = vpop.f32.mrf.mxu0
    %v3192 = vadd.f32 %v3117, %v3191
    %v3193 = vpop.f32.mrf.mxu0
    %3194 = vmatprep.mubr.f32.mxu0 0.0
    %3195 = vmatmul.mubr.f32.gmra.mxu0 %v3123
    %v3196 = vpop.f32.mrf.mxu0
    %v3197 = vadd.f32 %v3117, %v3196
    %v3198 = vpop.f32.mrf.mxu0
    %3199 = vdwg.mxu0
    %v3200 = vmax.f32 %v3192, 0.0
    %v3201 = vmax.f32 %v3197, 0.0
    %v3202 = vld [vmem:[#allocation25] sm:$0xff]
    %v3203 = vld [vmem:[#allocation25 + $0x8] sm:$0xff]
    %v3204 = vld [vmem:[#allocation25 + $0x10] sm:$0xff]
    %v3205 = vld [vmem:[#allocation25 + $0x18] sm:$0xff]
    %v3207 = vsel %vm500, %v3200, 0
    %v3210 = vsel %vm500, %v3201, 0
    %3212 = vmatprep.subr.mxu0 0.0
    %3213 = vmatpush1.msra.mxu0 0.0
    %3214 = vmatprep.subr.mxu0 0.0
    %3215 = vmatpush1.msra.mxu0 0.0
    %3216 = vmatprep.subr.mxu0 0.0
    %3217 = vmatpush1.msra.mxu0 0.0
    %3218 = vmatprep.subr.mxu0 0.0
    %3219 = vmatpush1.msra.mxu0 0.0
    %3220 = vmatprep.subr.mxu0 0.0
    %3221 = vmatpush1.msra.mxu0 0.0
    %3222 = vmatprep.subr.mxu0 0.0
    %3223 = vmatpush1.msra.mxu0 0.0
    %3224 = vmatprep.subr.mxu0 0.0
    %3225 = vmatpush1.msra.mxu0 0.0
    %3226 = vmatprep.subr.mxu0 0.0
    %3227 = vmatpush1.msra.mxu0 0.0
    %3228 = vmatprep.subr.mxu0 0.0
    %3229 = vmatpush1.msra.mxu0 0.0
    %3230 = vmatprep.subr.mxu0 0.0
    %3231 = vmatpush1.msra.mxu0 0.0
    %3232 = vmatprep.subr.mxu0 0.0
    %3233 = vmatpush1.msra.mxu0 0.0
    %3234 = vmatprep.subr.mxu0 0.0
    %3235 = vmatpush1.msra.mxu0 0.0
    %3236 = vmatprep.subr.mxu0 0.0
    %3237 = vmatpush1.msra.mxu0 %v3205
    %3238 = vmatprep.subr.mxu0 0.0
    %3239 = vmatpush1.msra.mxu0 %v3204
    %3240 = vmatprep.subr.mxu0 0.0
    %3241 = vmatpush1.msra.mxu0 %v3203
    %3242 = vmatprep.subr.mxu0 0.0
    %3243 = vmatpush1.msra.mxu0 %v3202
    %3244 = vmatprep.subr.mxu0 0.0
    %3245 = vmatpush2.msra.mxu0 0.0
    %3246 = vmatprep.subr.mxu0 0.0
    %3247 = vmatpush2.msra.mxu0 0.0
    %3248 = vmatprep.subr.mxu0 0.0
    %3249 = vmatpush2.msra.mxu0 0.0
    %3250 = vmatprep.subr.mxu0 0.0
    %3251 = vmatpush2.msra.mxu0 0.0
    %3252 = vmatprep.subr.mxu0 0.0
    %3253 = vmatpush2.msra.mxu0 0.0
    %3254 = vmatprep.subr.mxu0 0.0
    %3255 = vmatpush2.msra.mxu0 0.0
    %3256 = vmatprep.subr.mxu0 0.0
    %3257 = vmatpush2.msra.mxu0 0.0
    %3258 = vmatprep.subr.mxu0 0.0
    %3259 = vmatpush2.msra.mxu0 0.0
    %3260 = vmatprep.subr.mxu0 0.0
    %3261 = vmatpush2.msra.mxu0 0.0
    %3262 = vmatprep.subr.mxu0 0.0
    %3263 = vmatpush2.msra.mxu0 0.0
    %3264 = vmatprep.subr.mxu0 0.0
    %3265 = vmatpush2.msra.mxu0 0.0
    %3266 = vmatprep.subr.mxu0 0.0
    %3267 = vmatpush2.msra.mxu0 0.0
    %3268 = vmatprep.subr.mxu0 0.0
    %3269 = vmatpush2.msra.mxu0 0.0
    %3270 = vmatprep.subr.mxu0 0.0
    %3271 = vmatpush2.msra.mxu0 0.0
    %3272 = vmatprep.subr.mxu0 0.0
    %3273 = vmatpush2.msra.mxu0 0.0
    %3274 = vmatprep.subr.mxu0 0.0
    %3275 = vmatpush2.msra.mxu0 0.0
    %3276 = vmatprep.mubr.f32.mxu0 0.0
    %3277 = vmatmul.mubr.f32.gmra.mxu0 %v3207
    %v3278 = vpop.f32.mrf.mxu0
    %v3279 = vadd.f32 0.0, %v3278
    %v3280 = vpop.f32.mrf.mxu0
    %3281 = vmatprep.mubr.f32.mxu0 0.0
    %3282 = vmatmul.mubr.f32.gmra.mxu0 %v3210
    %v3283 = vpop.f32.mrf.mxu0
    %v3284 = vadd.f32 0.0, %v3283
    %v3285 = vpop.f32.mrf.mxu0
    %3286 = vdwg.mxu0
    %v3287 = vadd.f32 %v3106, %v3279
    %v3288 = vadd.f32 %v3107, %v3284
    %v3289 = vld [vmem:[#allocation26] sm:$0x1]
    %v3291 = vlaneseq
    %v3292 = vshrl.u32 %v3291, 7
    %v3293 = vsub.s32 0, %v3292
    %v3294 = vrot.slane %v3289, %v3293
    %v3296 = vadd.f32 %v3287, %v3294
    %v3297 = vadd.f32 %v3288, %v3294
    %s3298 = scalar_lea.vmem %s28, 32
    %3299 = vst.msk [vmem:[%s3298] sm:$0xff] %vm500, %v3296
    %3300 = vst.msk [vmem:[%s3298 + $0x8] sm:$0xff] %vm500, %v3297
    %v3301 = vld [vmem:[#allocation7] sm:$0xff]
    %v3302 = vld [vmem:[#allocation7 + $0x8] sm:$0xff]
    %v3303 = vld [vmem:[#allocation7 + $0x10] sm:$0xff]
    %v3304 = vld [vmem:[#allocation7 + $0x18] sm:$0xff]
    %v3305 = vld [vmem:[#allocation7 + $0x20] sm:$0xff]
    %v3306 = vld [vmem:[#allocation7 + $0x28] sm:$0xff]
    %v3307 = vld [vmem:[#allocation7 + $0x30] sm:$0xff]
    %v3308 = vld [vmem:[#allocation7 + $0x38] sm:$0xff]
    %v3309 = vld [vmem:[#allocation8] sm:$0x3]
    %v3311 = vlaneseq
    %v3312 = vshrl.u32 %v3311, 7
    %v3313 = vsub.s32 0, %v3312
    %v3314 = vrot.slane %v3309, %v3313
    %v3315 = vlaneseq
    %v3316 = vshrl.u32 %v3315, 7
    %v3317 = vsub.s32 1, %v3316
    %v3318 = vrot.slane %v3309, %v3317
    %v3322 = vsel %vm500, %v3296, 0
    %v3325 = vsel %vm500, %v3297, 0
    %3327 = vmatprep.subr.mxu0 0.0
    %3328 = vmatpush1.msra.mxu0 0.0
    %3329 = vmatprep.subr.mxu0 0.0
    %3330 = vmatpush1.msra.mxu0 0.0
    %3331 = vmatprep.subr.mxu0 0.0
    %3332 = vmatpush1.msra.mxu0 0.0
    %3333 = vmatprep.subr.mxu0 0.0
    %3334 = vmatpush1.msra.mxu0 0.0
    %3335 = vmatprep.subr.mxu0 0.0
    %3336 = vmatpush1.msra.mxu0 0.0
    %3337 = vmatprep.subr.mxu0 0.0
    %3338 = vmatpush1.msra.mxu0 0.0
    %3339 = vmatprep.subr.mxu0 0.0
    %3340 = vmatpush1.msra.mxu0 0.0
    %3341 = vmatprep.subr.mxu0 0.0
    %3342 = vmatpush1.msra.mxu0 0.0
    %3343 = vmatprep.subr.mxu0 0.0
    %3344 = vmatpush1.msra.mxu0 0.0
    %3345 = vmatprep.subr.mxu0 0.0
    %3346 = vmatpush1.msra.mxu0 0.0
    %3347 = vmatprep.subr.mxu0 0.0
    %3348 = vmatpush1.msra.mxu0 0.0
    %3349 = vmatprep.subr.mxu0 0.0
    %3350 = vmatpush1.msra.mxu0 0.0
    %3351 = vmatprep.subr.mxu0 %v3308
    %3352 = vmatpush1.msra.mxu0 %v3307
    %3353 = vmatprep.subr.mxu0 %v3306
    %3354 = vmatpush1.msra.mxu0 %v3305
    %3355 = vmatprep.subr.mxu0 %v3304
    %3356 = vmatpush1.msra.mxu0 %v3303
    %3357 = vmatprep.subr.mxu0 %v3302
    %3358 = vmatpush1.msra.mxu0 %v3301
    %3359 = vmatprep.subr.mxu0 0.0
    %3360 = vmatpush2.msra.mxu0 0.0
    %3361 = vmatprep.subr.mxu0 0.0
    %3362 = vmatpush2.msra.mxu0 0.0
    %3363 = vmatprep.subr.mxu0 0.0
    %3364 = vmatpush2.msra.mxu0 0.0
    %3365 = vmatprep.subr.mxu0 0.0
    %3366 = vmatpush2.msra.mxu0 0.0
    %3367 = vmatprep.subr.mxu0 0.0
    %3368 = vmatpush2.msra.mxu0 0.0
    %3369 = vmatprep.subr.mxu0 0.0
    %3370 = vmatpush2.msra.mxu0 0.0
    %3371 = vmatprep.subr.mxu0 0.0
    %3372 = vmatpush2.msra.mxu0 0.0
    %3373 = vmatprep.subr.mxu0 0.0
    %3374 = vmatpush2.msra.mxu0 0.0
    %3375 = vmatprep.subr.mxu0 0.0
    %3376 = vmatpush2.msra.mxu0 0.0
    %3377 = vmatprep.subr.mxu0 0.0
    %3378 = vmatpush2.msra.mxu0 0.0
    %3379 = vmatprep.subr.mxu0 0.0
    %3380 = vmatpush2.msra.mxu0 0.0
    %3381 = vmatprep.subr.mxu0 0.0
    %3382 = vmatpush2.msra.mxu0 0.0
    %3383 = vmatprep.subr.mxu0 0.0
    %3384 = vmatpush2.msra.mxu0 0.0
    %3385 = vmatprep.subr.mxu0 0.0
    %3386 = vmatpush2.msra.mxu0 0.0
    %3387 = vmatprep.subr.mxu0 0.0
    %3388 = vmatpush2.msra.mxu0 0.0
    %3389 = vmatprep.subr.mxu0 0.0
    %3390 = vmatpush2.msra.mxu0 0.0
    %3391 = vmatprep.mubr.f32.mxu0 0.0
    %3392 = vmatmul.mubr.f32.gmra.mxu0 %v3322
    %v3393 = vpop.f32.mrf.mxu0
    %v3394 = vadd.f32 %v3314, %v3393
    %v3395 = vpop.f32.mrf.mxu0
    %v3396 = vadd.f32 %v3318, %v3395
    %3397 = vmatprep.mubr.f32.mxu0 0.0
    %3398 = vmatmul.mubr.f32.gmra.mxu0 %v3325
    %v3399 = vpop.f32.mrf.mxu0
    %v3400 = vadd.f32 %v3314, %v3399
    %v3401 = vpop.f32.mrf.mxu0
    %v3402 = vadd.f32 %v3318, %v3401
    %3403 = vdwg.mxu0
    %3406 = vrot.lane.b32.xlu0 %v3394, 96
    %v3407 = vpop.permute.xlu0 %3406
    %3408 = vrot.lane.b32.xlu0 %v3400, 96
    %v3409 = vpop.permute.xlu0 %3408
    %3412 = vrot.lane.b32.xlu0 %v3394, 64
    %v3413 = vpop.permute.xlu0 %3412
    %3414 = vrot.lane.b32.xlu0 %v3400, 64
    %v3415 = vpop.permute.xlu0 %3414
    %3418 = vrot.lane.b32.xlu0 %v3394, 32
    %v3419 = vpop.permute.xlu0 %3418
    %3420 = vrot.lane.b32.xlu0 %v3400, 32
    %v3421 = vpop.permute.xlu0 %3420
    %v3424 = vld [vmem:[%s6] sm:$0xff]
    %v3425 = vld [vmem:[%s6 + $0x8] sm:$0xff]
    %v3426 = vld [vmem:[%s6 + $0x10] sm:$0xff]
    %v3427 = vld [vmem:[%s6 + $0x18] sm:$0xff]
    %3430 = vrot.lane.b32.xlu0 %v3396, 96
    %v3431 = vpop.permute.xlu0 %3430
    %3432 = vrot.lane.b32.xlu0 %v3402, 96
    %v3433 = vpop.permute.xlu0 %3432
    %3436 = vxpose.xlu0.b32.start [1/16] %v3431, 128
    %3437 = vxpose.xlu0.b32.cont [2/16] %v3433, 128
    %3438 = vxpose.xlu0.b32.cont [3/16] 0.0, 128
    %3439 = vxpose.xlu0.b32.cont [4/16] 0.0, 128
    %3440 = vxpose.xlu0.b32.cont [5/16] 0.0, 128
    %3441 = vxpose.xlu0.b32.cont [6/16] 0.0, 128
    %3442 = vxpose.xlu0.b32.cont [7/16] 0.0, 128
    %3443 = vxpose.xlu0.b32.cont [8/16] 0.0, 128
    %3444 = vxpose.xlu0.b32.cont [9/16] 0.0, 128
    %3445 = vxpose.xlu0.b32.cont [10/16] 0.0, 128
    %3446 = vxpose.xlu0.b32.cont [11/16] 0.0, 128
    %3447 = vxpose.xlu0.b32.cont [12/16] 0.0, 128
    %3448 = vxpose.xlu0.b32.cont [13/16] 0.0, 128
    %3449 = vxpose.xlu0.b32.cont [14/16] 0.0, 128
    %3450 = vxpose.xlu0.b32.cont [15/16] 0.0, 128
    %3451 = vxpose.xlu0.b32.end [16/16] 0.0, 128
    %v3452 = vpop.trf.xlu0
    %v3453 = vpop.trf.xlu0
    %v3454 = vpop.trf.xlu0
    %v3455 = vpop.trf.xlu0
    %v3456 = vpop.trf.xlu0
    %v3457 = vpop.trf.xlu0
    %v3458 = vpop.trf.xlu0
    %v3459 = vpop.trf.xlu0
    %v3460 = vpop.trf.xlu0
    %v3461 = vpop.trf.xlu0
    %v3462 = vpop.trf.xlu0
    %v3463 = vpop.trf.xlu0
    %v3464 = vpop.trf.xlu0
    %v3465 = vpop.trf.xlu0
    %v3466 = vpop.trf.xlu0
    %v3467 = vpop.trf.xlu0
    %3472 = vrot.lane.b32.xlu0 %v3452, 16
    %v3473 = vpop.permute.xlu0 %3472
    %3474 = vrot.lane.b32.xlu0 %v3453, 16
    %v3475 = vpop.permute.xlu0 %3474
    %3476 = vrot.lane.b32.xlu0 %v3454, 16
    %v3477 = vpop.permute.xlu0 %3476
    %3478 = vrot.lane.b32.xlu0 %v3455, 16
    %v3479 = vpop.permute.xlu0 %3478
    %3484 = vrot.lane.b32.xlu0 %v3452, 32
    %v3485 = vpop.permute.xlu0 %3484
    %3486 = vrot.lane.b32.xlu0 %v3453, 32
    %v3487 = vpop.permute.xlu0 %3486
    %3488 = vrot.lane.b32.xlu0 %v3454, 32
    %v3489 = vpop.permute.xlu0 %3488
    %3490 = vrot.lane.b32.xlu0 %v3455, 32
    %v3491 = vpop.permute.xlu0 %3490
    %3496 = vrot.lane.b32.xlu0 %v3452, 48
    %v3497 = vpop.permute.xlu0 %3496
    %3498 = vrot.lane.b32.xlu0 %v3453, 48
    %v3499 = vpop.permute.xlu0 %3498
    %3500 = vrot.lane.b32.xlu0 %v3454, 48
    %v3501 = vpop.permute.xlu0 %3500
    %3502 = vrot.lane.b32.xlu0 %v3455, 48
    %v3503 = vpop.permute.xlu0 %3502
    %v3508 = vsel %vm495, %v3452, %v3473
    %v3509 = vsel %vm495, %v3453, %v3475
    %v3510 = vsel %vm495, %v3454, %v3477
    %v3511 = vsel %vm495, %v3455, %v3479
    %v3512 = vsel %vm500, %v3508, %v3485
    %v3513 = vsel %vm500, %v3509, %v3487
    %v3514 = vsel %vm500, %v3510, %v3489
    %v3515 = vsel %vm500, %v3511, %v3491
    %v3516 = vsel %vm315, %v3512, %v3497
    %v3517 = vsel %vm315, %v3513, %v3499
    %v3518 = vsel %vm315, %v3514, %v3501
    %v3519 = vsel %vm315, %v3515, %v3503
    %v3520 = vmul.f32 %v3516, %v3424
    %v3521 = vmul.f32 %v3517, %v3425
    %v3522 = vmul.f32 %v3518, %v3426
    %v3523 = vmul.f32 %v3519, %v3427
    %v3524 = vld [vmem:[%s3] sm:$0xff]
    %v3525 = vld [vmem:[%s3 + $0x8] sm:$0xff]
    %v3526 = vld [vmem:[#allocation10] sm:$0x1]
    %v3527 = vsel %vm500, %v3396, 0
    %v3529 = vsel %vm500, %v3402, 0
    %3531 = vmatprep.subr.mxu0 0.0
    %3532 = vmatpush1.msra.mxu0 0.0
    %3533 = vmatprep.subr.mxu0 0.0
    %3534 = vmatpush1.msra.mxu0 0.0
    %3535 = vmatprep.subr.mxu0 0.0
    %3536 = vmatpush1.msra.mxu0 0.0
    %3537 = vmatprep.subr.mxu0 0.0
    %3538 = vmatpush1.msra.mxu0 0.0
    %3539 = vmatprep.subr.mxu0 0.0
    %3540 = vmatpush1.msra.mxu0 0.0
    %3541 = vmatprep.subr.mxu0 0.0
    %3542 = vmatpush1.msra.mxu0 0.0
    %3543 = vmatprep.subr.mxu0 0.0
    %3544 = vmatpush1.msra.mxu0 0.0
    %3545 = vmatprep.subr.mxu0 0.0
    %3546 = vmatpush1.msra.mxu0 0.0
    %3547 = vmatprep.subr.mxu0 0.0
    %3548 = vmatpush1.msra.mxu0 0.0
    %3549 = vmatprep.subr.mxu0 0.0
    %3550 = vmatpush1.msra.mxu0 0.0
    %3551 = vmatprep.subr.mxu0 0.0
    %3552 = vmatpush1.msra.mxu0 0.0
    %3553 = vmatprep.subr.mxu0 0.0
    %3554 = vmatpush1.msra.mxu0 0.0
    %3555 = vmatprep.subr.mxu0 0.0
    %3556 = vmatpush1.msra.mxu0 %v3523
    %3557 = vmatprep.subr.mxu0 0.0
    %3558 = vmatpush1.msra.mxu0 %v3522
    %3559 = vmatprep.subr.mxu0 0.0
    %3560 = vmatpush1.msra.mxu0 %v3521
    %3561 = vmatprep.subr.mxu0 0.0
    %3562 = vmatpush1.msra.mxu0 %v3520
    %3563 = vmatprep.subr.mxu0 0.0
    %3564 = vmatpush2.msra.mxu0 0.0
    %3565 = vmatprep.subr.mxu0 0.0
    %3566 = vmatpush2.msra.mxu0 0.0
    %3567 = vmatprep.subr.mxu0 0.0
    %3568 = vmatpush2.msra.mxu0 0.0
    %3569 = vmatprep.subr.mxu0 0.0
    %3570 = vmatpush2.msra.mxu0 0.0
    %3571 = vmatprep.subr.mxu0 0.0
    %3572 = vmatpush2.msra.mxu0 0.0
    %3573 = vmatprep.subr.mxu0 0.0
    %3574 = vmatpush2.msra.mxu0 0.0
    %3575 = vmatprep.subr.mxu0 0.0
    %3576 = vmatpush2.msra.mxu0 0.0
    %3577 = vmatprep.subr.mxu0 0.0
    %3578 = vmatpush2.msra.mxu0 0.0
    %3579 = vmatprep.subr.mxu0 0.0
    %3580 = vmatpush2.msra.mxu0 0.0
    %3581 = vmatprep.subr.mxu0 0.0
    %3582 = vmatpush2.msra.mxu0 0.0
    %3583 = vmatprep.subr.mxu0 0.0
    %3584 = vmatpush2.msra.mxu0 0.0
    %3585 = vmatprep.subr.mxu0 0.0
    %3586 = vmatpush2.msra.mxu0 0.0
    %3587 = vmatprep.subr.mxu0 0.0
    %3588 = vmatpush2.msra.mxu0 0.0
    %3589 = vmatprep.subr.mxu0 0.0
    %3590 = vmatpush2.msra.mxu0 0.0
    %3591 = vmatprep.subr.mxu0 0.0
    %3592 = vmatpush2.msra.mxu0 0.0
    %3593 = vmatprep.subr.mxu0 0.0
    %3594 = vmatpush2.msra.mxu0 0.0
    %3595 = vmatprep.mubr.f32.mxu0 0.0
    %3596 = vmatmul.mubr.f32.gmra.mxu0 %v3527
    %v3597 = vpop.f32.mrf.mxu0
    %v3598 = vadd.f32 0.0, %v3597
    %v3599 = vpop.f32.mrf.mxu0
    %3600 = vmatprep.mubr.f32.mxu0 0.0
    %3601 = vmatmul.mubr.f32.gmra.mxu0 %v3529
    %v3602 = vpop.f32.mrf.mxu0
    %v3603 = vadd.f32 0.0, %v3602
    %v3604 = vpop.f32.mrf.mxu0
    %3605 = vdwg.mxu0
    %v3606 = vsel %vm1070, %v3598, -inf
    %3607 = vmax.xlane.f32.xlu0 %v3606
    %v3608 = vpop.xlane.xlu0 %3607
    %v3609 = vsel %vm1070, %v3603, -inf
    %3610 = vmax.xlane.f32.xlu0 %v3609
    %v3611 = vpop.xlane.xlu0 %3610
    %v3612 = vsub.f32 %v3598, %v3608
    %v3613 = vsub.f32 %v3603, %v3611
    %v3614 = vmul.f32 %v3612, 1.442695
    %v3615 = vpow.pop %v3614
    %v3616 = vmul.f32 %v3613, 1.442695
    %v3617 = vpow.pop %v3616
    %v3618 = vmul.f32 %v3615, %v3524
    %v3619 = vmul.f32 %v3617, %v3525
    %v3620 = vsel %vm495, %v3618, 0.0
    %3621 = vadd.xlane.f32.xlu0 %v3620
    %v3622 = vpop.xlane.xlu0 %3621
    %v3623 = vsel %vm495, %v3619, 0.0
    %3624 = vadd.xlane.f32.xlu0 %v3623
    %v3625 = vpop.xlane.xlu0 %3624
    %v3626 = vrcp.pop %v3622
    %v3627 = vrcp.pop %v3625
    %v3628 = vmul.f32 %v3618, %v3626
    %v3629 = vmul.f32 %v3619, %v3627
    %3632 = vrot.lane.b32.xlu0 %v3618, 112
    %v3633 = vpop.permute.xlu0 %3632
    %3634 = vrot.lane.b32.xlu0 %v3619, 112
    %v3635 = vpop.permute.xlu0 %3634
    %v3638 = vsel %vm495, %v3633, 0.0
    %3639 = vadd.xlane.f32.xlu0 %v3638
    %v3640 = vpop.xlane.xlu0 %3639
    %v3641 = vsel %vm495, %v3635, 0.0
    %3642 = vadd.xlane.f32.xlu0 %v3641
    %v3643 = vpop.xlane.xlu0 %3642
    %v3644 = vrcp.pop %v3640
    %v3645 = vrcp.pop %v3643
    %v3646 = vmul.f32 %v3618, %v3644
    %v3647 = vmul.f32 %v3619, %v3645
    %3648 = vrot.lane.b32.xlu0 %v3618, 96
    %v3649 = vpop.permute.xlu0 %3648
    %3650 = vrot.lane.b32.xlu0 %v3619, 96
    %v3651 = vpop.permute.xlu0 %3650
    %v3654 = vsel %vm495, %v3649, 0.0
    %3655 = vadd.xlane.f32.xlu0 %v3654
    %v3656 = vpop.xlane.xlu0 %3655
    %v3657 = vsel %vm495, %v3651, 0.0
    %3658 = vadd.xlane.f32.xlu0 %v3657
    %v3659 = vpop.xlane.xlu0 %3658
    %v3660 = vrcp.pop %v3656
    %v3661 = vrcp.pop %v3659
    %v3662 = vmul.f32 %v3618, %v3660
    %v3663 = vmul.f32 %v3619, %v3661
    %3664 = vrot.lane.b32.xlu0 %v3618, 80
    %v3665 = vpop.permute.xlu0 %3664
    %3666 = vrot.lane.b32.xlu0 %v3619, 80
    %v3667 = vpop.permute.xlu0 %3666
    %v3670 = vsel %vm495, %v3665, 0.0
    %3671 = vadd.xlane.f32.xlu0 %v3670
    %v3672 = vpop.xlane.xlu0 %3671
    %v3673 = vsel %vm495, %v3667, 0.0
    %3674 = vadd.xlane.f32.xlu0 %v3673
    %v3675 = vpop.xlane.xlu0 %3674
    %v3676 = vrcp.pop %v3672
    %v3677 = vrcp.pop %v3675
    %v3678 = vmul.f32 %v3618, %v3676
    %v3679 = vmul.f32 %v3619, %v3677
    %v3680 = vsel %vm495, %v3628, %v3646
    %v3681 = vsel %vm495, %v3629, %v3647
    %v3682 = vsel %vm500, %v3680, %v3662
    %v3683 = vsel %vm500, %v3681, %v3663
    %v3684 = vsel %vm315, %v3682, %v3678
    %v3685 = vsel %vm315, %v3683, %v3679
    %v3687 = vlaneseq
    %v3688 = vshrl.u32 %v3687, 7
    %v3689 = vsub.s32 0, %v3688
    %v3690 = vrot.slane %v3526, %v3689
    %v3693 = vsel %vm1070, %v3684, 0
    %v3696 = vsel %vm1070, %v3685, 0
    %3698 = vmatprep.subr.mxu0 0.0
    %3699 = vmatpush1.msra.mxu0 0.0
    %3700 = vmatprep.subr.mxu0 0.0
    %3701 = vmatpush1.msra.mxu0 0.0
    %3702 = vmatprep.subr.mxu0 0.0
    %3703 = vmatpush1.msra.mxu0 0.0
    %3704 = vmatprep.subr.mxu0 0.0
    %3705 = vmatpush1.msra.mxu0 0.0
    %3706 = vmatprep.subr.mxu0 0.0
    %3707 = vmatpush1.msra.mxu0 0.0
    %3708 = vmatprep.subr.mxu0 0.0
    %3709 = vmatpush1.msra.mxu0 0.0
    %3710 = vmatprep.subr.mxu0 0.0
    %3711 = vmatpush1.msra.mxu0 0.0
    %3712 = vmatprep.subr.mxu0 0.0
    %3713 = vmatpush1.msra.mxu0 0.0
    %3714 = vmatprep.subr.mxu0 0.0
    %3715 = vmatpush1.msra.mxu0 %v3421
    %3716 = vmatprep.subr.mxu0 0.0
    %3717 = vmatpush1.msra.mxu0 %v3419
    %3718 = vmatprep.subr.mxu0 0.0
    %3719 = vmatpush1.msra.mxu0 %v3415
    %3720 = vmatprep.subr.mxu0 0.0
    %3721 = vmatpush1.msra.mxu0 %v3413
    %3722 = vmatprep.subr.mxu0 0.0
    %3723 = vmatpush1.msra.mxu0 %v3409
    %3724 = vmatprep.subr.mxu0 0.0
    %3725 = vmatpush1.msra.mxu0 %v3407
    %3726 = vmatprep.subr.mxu0 0.0
    %3727 = vmatpush1.msra.mxu0 %v3400
    %3728 = vmatprep.subr.mxu0 0.0
    %3729 = vmatpush1.msra.mxu0 %v3394
    %3730 = vmatprep.subr.mxu0 0.0
    %3731 = vmatpush2.msra.mxu0 0.0
    %3732 = vmatprep.subr.mxu0 0.0
    %3733 = vmatpush2.msra.mxu0 0.0
    %3734 = vmatprep.subr.mxu0 0.0
    %3735 = vmatpush2.msra.mxu0 0.0
    %3736 = vmatprep.subr.mxu0 0.0
    %3737 = vmatpush2.msra.mxu0 0.0
    %3738 = vmatprep.subr.mxu0 0.0
    %3739 = vmatpush2.msra.mxu0 0.0
    %3740 = vmatprep.subr.mxu0 0.0
    %3741 = vmatpush2.msra.mxu0 0.0
    %3742 = vmatprep.subr.mxu0 0.0
    %3743 = vmatpush2.msra.mxu0 0.0
    %3744 = vmatprep.subr.mxu0 0.0
    %3745 = vmatpush2.msra.mxu0 0.0
    %3746 = vmatprep.subr.mxu0 0.0
    %3747 = vmatpush2.msra.mxu0 0.0
    %3748 = vmatprep.subr.mxu0 0.0
    %3749 = vmatpush2.msra.mxu0 0.0
    %3750 = vmatprep.subr.mxu0 0.0
    %3751 = vmatpush2.msra.mxu0 0.0
    %3752 = vmatprep.subr.mxu0 0.0
    %3753 = vmatpush2.msra.mxu0 0.0
    %3754 = vmatprep.subr.mxu0 0.0
    %3755 = vmatpush2.msra.mxu0 0.0
    %3756 = vmatprep.subr.mxu0 0.0
    %3757 = vmatpush2.msra.mxu0 0.0
    %3758 = vmatprep.subr.mxu0 0.0
    %3759 = vmatpush2.msra.mxu0 0.0
    %3760 = vmatprep.subr.mxu0 0.0
    %3761 = vmatpush2.msra.mxu0 0.0
    %3762 = vmatprep.mubr.f32.mxu0 0.0
    %3763 = vmatmul.mubr.f32.gmra.mxu0 %v3693
    %v3764 = vpop.f32.mrf.mxu0
    %v3765 = vadd.f32 %v3690, %v3764
    %v3766 = vpop.f32.mrf.mxu0
    %3767 = vmatprep.mubr.f32.mxu0 0.0
    %3768 = vmatmul.mubr.f32.gmra.mxu0 %v3696
    %v3769 = vpop.f32.mrf.mxu0
    %v3770 = vadd.f32 %v3690, %v3769
    %v3771 = vpop.f32.mrf.mxu0
    %3772 = vdwg.mxu0
    %v3773 = vadd.f32 %v3296, %v3765
    %v3774 = vadd.f32 %v3297, %v3770
    %v3775 = vld [vmem:[#allocation11] sm:$0xff]
    %v3776 = vld [vmem:[#allocation11 + $0x8] sm:$0xff]
    %v3777 = vld [vmem:[#allocation11 + $0x10] sm:$0xff]
    %v3778 = vld [vmem:[#allocation11 + $0x18] sm:$0xff]
    %v3779 = vld [vmem:[#allocation13] sm:$0x1]
    %v3781 = vlaneseq
    %v3782 = vshrl.u32 %v3781, 7
    %v3783 = vsub.s32 0, %v3782
    %v3784 = vrot.slane %v3779, %v3783
    %v3787 = vsel %vm500, %v3773, 0
    %v3790 = vsel %vm500, %v3774, 0
    %3792 = vmatprep.subr.mxu0 0.0
    %3793 = vmatpush1.msra.mxu0 0.0
    %3794 = vmatprep.subr.mxu0 0.0
    %3795 = vmatpush1.msra.mxu0 0.0
    %3796 = vmatprep.subr.mxu0 0.0
    %3797 = vmatpush1.msra.mxu0 0.0
    %3798 = vmatprep.subr.mxu0 0.0
    %3799 = vmatpush1.msra.mxu0 0.0
    %3800 = vmatprep.subr.mxu0 0.0
    %3801 = vmatpush1.msra.mxu0 0.0
    %3802 = vmatprep.subr.mxu0 0.0
    %3803 = vmatpush1.msra.mxu0 0.0
    %3804 = vmatprep.subr.mxu0 0.0
    %3805 = vmatpush1.msra.mxu0 0.0
    %3806 = vmatprep.subr.mxu0 0.0
    %3807 = vmatpush1.msra.mxu0 0.0
    %3808 = vmatprep.subr.mxu0 0.0
    %3809 = vmatpush1.msra.mxu0 0.0
    %3810 = vmatprep.subr.mxu0 0.0
    %3811 = vmatpush1.msra.mxu0 0.0
    %3812 = vmatprep.subr.mxu0 0.0
    %3813 = vmatpush1.msra.mxu0 0.0
    %3814 = vmatprep.subr.mxu0 0.0
    %3815 = vmatpush1.msra.mxu0 0.0
    %3816 = vmatprep.subr.mxu0 0.0
    %3817 = vmatpush1.msra.mxu0 %v3778
    %3818 = vmatprep.subr.mxu0 0.0
    %3819 = vmatpush1.msra.mxu0 %v3777
    %3820 = vmatprep.subr.mxu0 0.0
    %3821 = vmatpush1.msra.mxu0 %v3776
    %3822 = vmatprep.subr.mxu0 0.0
    %3823 = vmatpush1.msra.mxu0 %v3775
    %3824 = vmatprep.subr.mxu0 0.0
    %3825 = vmatpush2.msra.mxu0 0.0
    %3826 = vmatprep.subr.mxu0 0.0
    %3827 = vmatpush2.msra.mxu0 0.0
    %3828 = vmatprep.subr.mxu0 0.0
    %3829 = vmatpush2.msra.mxu0 0.0
    %3830 = vmatprep.subr.mxu0 0.0
    %3831 = vmatpush2.msra.mxu0 0.0
    %3832 = vmatprep.subr.mxu0 0.0
    %3833 = vmatpush2.msra.mxu0 0.0
    %3834 = vmatprep.subr.mxu0 0.0
    %3835 = vmatpush2.msra.mxu0 0.0
    %3836 = vmatprep.subr.mxu0 0.0
    %3837 = vmatpush2.msra.mxu0 0.0
    %3838 = vmatprep.subr.mxu0 0.0
    %3839 = vmatpush2.msra.mxu0 0.0
    %3840 = vmatprep.subr.mxu0 0.0
    %3841 = vmatpush2.msra.mxu0 0.0
    %3842 = vmatprep.subr.mxu0 0.0
    %3843 = vmatpush2.msra.mxu0 0.0
    %3844 = vmatprep.subr.mxu0 0.0
    %3845 = vmatpush2.msra.mxu0 0.0
    %3846 = vmatprep.subr.mxu0 0.0
    %3847 = vmatpush2.msra.mxu0 0.0
    %3848 = vmatprep.subr.mxu0 0.0
    %3849 = vmatpush2.msra.mxu0 0.0
    %3850 = vmatprep.subr.mxu0 0.0
    %3851 = vmatpush2.msra.mxu0 0.0
    %3852 = vmatprep.subr.mxu0 0.0
    %3853 = vmatpush2.msra.mxu0 0.0
    %3854 = vmatprep.subr.mxu0 0.0
    %3855 = vmatpush2.msra.mxu0 0.0
    %3856 = vmatprep.mubr.f32.mxu0 0.0
    %3857 = vmatmul.mubr.f32.gmra.mxu0 %v3787
    %v3858 = vpop.f32.mrf.mxu0
    %v3859 = vadd.f32 %v3784, %v3858
    %v3860 = vpop.f32.mrf.mxu0
    %3861 = vmatprep.mubr.f32.mxu0 0.0
    %3862 = vmatmul.mubr.f32.gmra.mxu0 %v3790
    %v3863 = vpop.f32.mrf.mxu0
    %v3864 = vadd.f32 %v3784, %v3863
    %v3865 = vpop.f32.mrf.mxu0
    %3866 = vdwg.mxu0
    %v3867 = vld [vmem:[%s4] sm:$0xff]
    %v3868 = vld [vmem:[%s4 + $0x8] sm:$0xff]
    %v3869 = vld [vmem:[#allocation16] sm:$0x1]
    %v3871 = vsel %vm500, %v3859, 0
    %v3874 = vsel %vm500, %v3864, 0
    %3876 = vmatprep.subr.mxu0 0.0
    %3877 = vmatpush1.msra.mxu0 0.0
    %3878 = vmatprep.subr.mxu0 0.0
    %3879 = vmatpush1.msra.mxu0 0.0
    %3880 = vmatprep.subr.mxu0 0.0
    %3881 = vmatpush1.msra.mxu0 0.0
    %3882 = vmatprep.subr.mxu0 0.0
    %3883 = vmatpush1.msra.mxu0 0.0
    %3884 = vmatprep.subr.mxu0 0.0
    %3885 = vmatpush1.msra.mxu0 0.0
    %3886 = vmatprep.subr.mxu0 0.0
    %3887 = vmatpush1.msra.mxu0 0.0
    %3888 = vmatprep.subr.mxu0 0.0
    %3889 = vmatpush1.msra.mxu0 0.0
    %3890 = vmatprep.subr.mxu0 0.0
    %3891 = vmatpush1.msra.mxu0 0.0
    %3892 = vmatprep.subr.mxu0 0.0
    %3893 = vmatpush1.msra.mxu0 0.0
    %3894 = vmatprep.subr.mxu0 0.0
    %3895 = vmatpush1.msra.mxu0 0.0
    %3896 = vmatprep.subr.mxu0 0.0
    %3897 = vmatpush1.msra.mxu0 0.0
    %3898 = vmatprep.subr.mxu0 0.0
    %3899 = vmatpush1.msra.mxu0 0.0
    %3900 = vmatprep.subr.mxu0 0.0
    %3901 = vmatpush1.msra.mxu0 %v512
    %3902 = vmatprep.subr.mxu0 0.0
    %3903 = vmatpush1.msra.mxu0 %v511
    %3904 = vmatprep.subr.mxu0 0.0
    %3905 = vmatpush1.msra.mxu0 %v510
    %3906 = vmatprep.subr.mxu0 0.0
    %3907 = vmatpush1.msra.mxu0 %v509
    %3908 = vmatprep.subr.mxu0 0.0
    %3909 = vmatpush2.msra.mxu0 0.0
    %3910 = vmatprep.subr.mxu0 0.0
    %3911 = vmatpush2.msra.mxu0 0.0
    %3912 = vmatprep.subr.mxu0 0.0
    %3913 = vmatpush2.msra.mxu0 0.0
    %3914 = vmatprep.subr.mxu0 0.0
    %3915 = vmatpush2.msra.mxu0 0.0
    %3916 = vmatprep.subr.mxu0 0.0
    %3917 = vmatpush2.msra.mxu0 0.0
    %3918 = vmatprep.subr.mxu0 0.0
    %3919 = vmatpush2.msra.mxu0 0.0
    %3920 = vmatprep.subr.mxu0 0.0
    %3921 = vmatpush2.msra.mxu0 0.0
    %3922 = vmatprep.subr.mxu0 0.0
    %3923 = vmatpush2.msra.mxu0 0.0
    %3924 = vmatprep.subr.mxu0 0.0
    %3925 = vmatpush2.msra.mxu0 0.0
    %3926 = vmatprep.subr.mxu0 0.0
    %3927 = vmatpush2.msra.mxu0 0.0
    %3928 = vmatprep.subr.mxu0 0.0
    %3929 = vmatpush2.msra.mxu0 0.0
    %3930 = vmatprep.subr.mxu0 0.0
    %3931 = vmatpush2.msra.mxu0 0.0
    %3932 = vmatprep.subr.mxu0 0.0
    %3933 = vmatpush2.msra.mxu0 0.0
    %3934 = vmatprep.subr.mxu0 0.0
    %3935 = vmatpush2.msra.mxu0 0.0
    %3936 = vmatprep.subr.mxu0 0.0
    %3937 = vmatpush2.msra.mxu0 0.0
    %3938 = vmatprep.subr.mxu0 0.0
    %3939 = vmatpush2.msra.mxu0 0.0
    %3940 = vmatprep.mubr.f32.mxu0 0.0
    %3941 = vmatmul.mubr.f32.gmra.mxu0 %v3871
    %v3942 = vpop.f32.mrf.mxu0
    %v3943 = vadd.f32 0.0, %v3942
    %v3944 = vpop.f32.mrf.mxu0
    %3945 = vmatprep.mubr.f32.mxu0 0.0
    %3946 = vmatmul.mubr.f32.gmra.mxu0 %v3874
    %v3947 = vpop.f32.mrf.mxu0
    %v3948 = vadd.f32 0.0, %v3947
    %v3949 = vpop.f32.mrf.mxu0
    %3950 = vdwg.mxu0
    %v3951 = vsel %vm1070, %v3943, -inf
    %3952 = vmax.xlane.f32.xlu0 %v3951
    %v3953 = vpop.xlane.xlu0 %3952
    %v3954 = vsel %vm1070, %v3948, -inf
    %3955 = vmax.xlane.f32.xlu0 %v3954
    %v3956 = vpop.xlane.xlu0 %3955
    %v3957 = vsub.f32 %v3943, %v3953
    %v3958 = vsub.f32 %v3948, %v3956
    %v3959 = vmul.f32 %v3957, 1.442695
    %v3960 = vpow.pop %v3959
    %v3961 = vmul.f32 %v3958, 1.442695
    %v3962 = vpow.pop %v3961
    %v3963 = vmul.f32 %v3960, %v3867
    %v3964 = vmul.f32 %v3962, %v3868
    %v3965 = vsel %vm495, %v3963, 0.0
    %3966 = vadd.xlane.f32.xlu0 %v3965
    %v3967 = vpop.xlane.xlu0 %3966
    %v3968 = vsel %vm495, %v3964, 0.0
    %3969 = vadd.xlane.f32.xlu0 %v3968
    %v3970 = vpop.xlane.xlu0 %3969
    %v3971 = vrcp.pop %v3967
    %v3972 = vrcp.pop %v3970
    %v3973 = vmul.f32 %v3963, %v3971
    %v3974 = vmul.f32 %v3964, %v3972
    %3977 = vrot.lane.b32.xlu0 %v3963, 112
    %v3978 = vpop.permute.xlu0 %3977
    %3979 = vrot.lane.b32.xlu0 %v3964, 112
    %v3980 = vpop.permute.xlu0 %3979
    %v3983 = vsel %vm495, %v3978, 0.0
    %3984 = vadd.xlane.f32.xlu0 %v3983
    %v3985 = vpop.xlane.xlu0 %3984
    %v3986 = vsel %vm495, %v3980, 0.0
    %3987 = vadd.xlane.f32.xlu0 %v3986
    %v3988 = vpop.xlane.xlu0 %3987
    %v3989 = vrcp.pop %v3985
    %v3990 = vrcp.pop %v3988
    %v3991 = vmul.f32 %v3963, %v3989
    %v3992 = vmul.f32 %v3964, %v3990
    %3993 = vrot.lane.b32.xlu0 %v3963, 96
    %v3994 = vpop.permute.xlu0 %3993
    %3995 = vrot.lane.b32.xlu0 %v3964, 96
    %v3996 = vpop.permute.xlu0 %3995
    %v3999 = vsel %vm495, %v3994, 0.0
    %4000 = vadd.xlane.f32.xlu0 %v3999
    %v4001 = vpop.xlane.xlu0 %4000
    %v4002 = vsel %vm495, %v3996, 0.0
    %4003 = vadd.xlane.f32.xlu0 %v4002
    %v4004 = vpop.xlane.xlu0 %4003
    %v4005 = vrcp.pop %v4001
    %v4006 = vrcp.pop %v4004
    %v4007 = vmul.f32 %v3963, %v4005
    %v4008 = vmul.f32 %v3964, %v4006
    %4009 = vrot.lane.b32.xlu0 %v3963, 80
    %v4010 = vpop.permute.xlu0 %4009
    %4011 = vrot.lane.b32.xlu0 %v3964, 80
    %v4012 = vpop.permute.xlu0 %4011
    %v4015 = vsel %vm495, %v4010, 0.0
    %4016 = vadd.xlane.f32.xlu0 %v4015
    %v4017 = vpop.xlane.xlu0 %4016
    %v4018 = vsel %vm495, %v4012, 0.0
    %4019 = vadd.xlane.f32.xlu0 %v4018
    %v4020 = vpop.xlane.xlu0 %4019
    %v4021 = vrcp.pop %v4017
    %v4022 = vrcp.pop %v4020
    %v4023 = vmul.f32 %v3963, %v4021
    %v4024 = vmul.f32 %v3964, %v4022
    %v4025 = vsel %vm495, %v3973, %v3991
    %v4026 = vsel %vm495, %v3974, %v3992
    %v4027 = vsel %vm500, %v4025, %v4007
    %v4028 = vsel %vm500, %v4026, %v4008
    %v4029 = vsel %vm315, %v4027, %v4023
    %v4030 = vsel %vm315, %v4028, %v4024
    %v4032 = vlaneseq
    %v4033 = vshrl.u32 %v4032, 7
    %v4034 = vsub.s32 0, %v4033
    %v4035 = vrot.slane %v3869, %v4034
    %v4038 = vsel %vm1070, %v4029, 0
    %v4041 = vsel %vm1070, %v4030, 0
    %4043 = vmatprep.subr.mxu0 0.0
    %4044 = vmatpush1.msra.mxu0 0.0
    %4045 = vmatprep.subr.mxu0 0.0
    %4046 = vmatpush1.msra.mxu0 0.0
    %4047 = vmatprep.subr.mxu0 0.0
    %4048 = vmatpush1.msra.mxu0 0.0
    %4049 = vmatprep.subr.mxu0 0.0
    %4050 = vmatpush1.msra.mxu0 0.0
    %4051 = vmatprep.subr.mxu0 0.0
    %4052 = vmatpush1.msra.mxu0 0.0
    %4053 = vmatprep.subr.mxu0 0.0
    %4054 = vmatpush1.msra.mxu0 0.0
    %4055 = vmatprep.subr.mxu0 0.0
    %4056 = vmatpush1.msra.mxu0 0.0
    %4057 = vmatprep.subr.mxu0 0.0
    %4058 = vmatpush1.msra.mxu0 0.0
    %4059 = vmatprep.subr.mxu0 0.0
    %4060 = vmatpush1.msra.mxu0 %v416
    %4061 = vmatprep.subr.mxu0 0.0
    %4062 = vmatpush1.msra.mxu0 %v414
    %4063 = vmatprep.subr.mxu0 0.0
    %4064 = vmatpush1.msra.mxu0 %v410
    %4065 = vmatprep.subr.mxu0 0.0
    %4066 = vmatpush1.msra.mxu0 %v408
    %4067 = vmatprep.subr.mxu0 0.0
    %4068 = vmatpush1.msra.mxu0 %v404
    %4069 = vmatprep.subr.mxu0 0.0
    %4070 = vmatpush1.msra.mxu0 %v402
    %4071 = vmatprep.subr.mxu0 0.0
    %4072 = vmatpush1.msra.mxu0 %v395
    %4073 = vmatprep.subr.mxu0 0.0
    %4074 = vmatpush1.msra.mxu0 %v389
    %4075 = vmatprep.subr.mxu0 0.0
    %4076 = vmatpush2.msra.mxu0 0.0
    %4077 = vmatprep.subr.mxu0 0.0
    %4078 = vmatpush2.msra.mxu0 0.0
    %4079 = vmatprep.subr.mxu0 0.0
    %4080 = vmatpush2.msra.mxu0 0.0
    %4081 = vmatprep.subr.mxu0 0.0
    %4082 = vmatpush2.msra.mxu0 0.0
    %4083 = vmatprep.subr.mxu0 0.0
    %4084 = vmatpush2.msra.mxu0 0.0
    %4085 = vmatprep.subr.mxu0 0.0
    %4086 = vmatpush2.msra.mxu0 0.0
    %4087 = vmatprep.subr.mxu0 0.0
    %4088 = vmatpush2.msra.mxu0 0.0
    %4089 = vmatprep.subr.mxu0 0.0
    %4090 = vmatpush2.msra.mxu0 0.0
    %4091 = vmatprep.subr.mxu0 0.0
    %4092 = vmatpush2.msra.mxu0 0.0
    %4093 = vmatprep.subr.mxu0 0.0
    %4094 = vmatpush2.msra.mxu0 0.0
    %4095 = vmatprep.subr.mxu0 0.0
    %4096 = vmatpush2.msra.mxu0 0.0
    %4097 = vmatprep.subr.mxu0 0.0
    %4098 = vmatpush2.msra.mxu0 0.0
    %4099 = vmatprep.subr.mxu0 0.0
    %4100 = vmatpush2.msra.mxu0 0.0
    %4101 = vmatprep.subr.mxu0 0.0
    %4102 = vmatpush2.msra.mxu0 0.0
    %4103 = vmatprep.subr.mxu0 0.0
    %4104 = vmatpush2.msra.mxu0 0.0
    %4105 = vmatprep.subr.mxu0 0.0
    %4106 = vmatpush2.msra.mxu0 0.0
    %4107 = vmatprep.mubr.f32.mxu0 0.0
    %4108 = vmatmul.mubr.f32.gmra.mxu0 %v4038
    %v4109 = vpop.f32.mrf.mxu0
    %v4110 = vadd.f32 %v4035, %v4109
    %v4111 = vpop.f32.mrf.mxu0
    %4112 = vmatprep.mubr.f32.mxu0 0.0
    %4113 = vmatmul.mubr.f32.gmra.mxu0 %v4041
    %v4114 = vpop.f32.mrf.mxu0
    %v4115 = vadd.f32 %v4035, %v4114
    %v4116 = vpop.f32.mrf.mxu0
    %4117 = vdwg.mxu0
    %v4118 = vld [vmem:[#allocation5] sm:$0xff]
    %v4119 = vld [vmem:[#allocation5 + $0x8] sm:$0xff]
    %v4120 = vld [vmem:[#allocation20] sm:$0x1]
    %4121 = vrot.lane.b32.xlu0 %v3859, 96
    %v4122 = vpop.permute.xlu0 %4121
    %4123 = vrot.lane.b32.xlu0 %v3864, 96
    %v4124 = vpop.permute.xlu0 %4123
    %v4125 = vsel %vm500, %v4122, 0
    %v4127 = vsel %vm500, %v4124, 0
    %4129 = vmatprep.subr.mxu0 0.0
    %4130 = vmatpush1.msra.mxu0 0.0
    %4131 = vmatprep.subr.mxu0 0.0
    %4132 = vmatpush1.msra.mxu0 0.0
    %4133 = vmatprep.subr.mxu0 0.0
    %4134 = vmatpush1.msra.mxu0 0.0
    %4135 = vmatprep.subr.mxu0 0.0
    %4136 = vmatpush1.msra.mxu0 0.0
    %4137 = vmatprep.subr.mxu0 0.0
    %4138 = vmatpush1.msra.mxu0 0.0
    %4139 = vmatprep.subr.mxu0 0.0
    %4140 = vmatpush1.msra.mxu0 0.0
    %4141 = vmatprep.subr.mxu0 0.0
    %4142 = vmatpush1.msra.mxu0 0.0
    %4143 = vmatprep.subr.mxu0 0.0
    %4144 = vmatpush1.msra.mxu0 0.0
    %4145 = vmatprep.subr.mxu0 0.0
    %4146 = vmatpush1.msra.mxu0 0.0
    %4147 = vmatprep.subr.mxu0 0.0
    %4148 = vmatpush1.msra.mxu0 0.0
    %4149 = vmatprep.subr.mxu0 0.0
    %4150 = vmatpush1.msra.mxu0 0.0
    %4151 = vmatprep.subr.mxu0 0.0
    %4152 = vmatpush1.msra.mxu0 0.0
    %4153 = vmatprep.subr.mxu0 0.0
    %4154 = vmatpush1.msra.mxu0 %v762
    %4155 = vmatprep.subr.mxu0 0.0
    %4156 = vmatpush1.msra.mxu0 %v761
    %4157 = vmatprep.subr.mxu0 0.0
    %4158 = vmatpush1.msra.mxu0 %v760
    %4159 = vmatprep.subr.mxu0 0.0
    %4160 = vmatpush1.msra.mxu0 %v759
    %4161 = vmatprep.subr.mxu0 0.0
    %4162 = vmatpush2.msra.mxu0 0.0
    %4163 = vmatprep.subr.mxu0 0.0
    %4164 = vmatpush2.msra.mxu0 0.0
    %4165 = vmatprep.subr.mxu0 0.0
    %4166 = vmatpush2.msra.mxu0 0.0
    %4167 = vmatprep.subr.mxu0 0.0
    %4168 = vmatpush2.msra.mxu0 0.0
    %4169 = vmatprep.subr.mxu0 0.0
    %4170 = vmatpush2.msra.mxu0 0.0
    %4171 = vmatprep.subr.mxu0 0.0
    %4172 = vmatpush2.msra.mxu0 0.0
    %4173 = vmatprep.subr.mxu0 0.0
    %4174 = vmatpush2.msra.mxu0 0.0
    %4175 = vmatprep.subr.mxu0 0.0
    %4176 = vmatpush2.msra.mxu0 0.0
    %4177 = vmatprep.subr.mxu0 0.0
    %4178 = vmatpush2.msra.mxu0 0.0
    %4179 = vmatprep.subr.mxu0 0.0
    %4180 = vmatpush2.msra.mxu0 0.0
    %4181 = vmatprep.subr.mxu0 0.0
    %4182 = vmatpush2.msra.mxu0 0.0
    %4183 = vmatprep.subr.mxu0 0.0
    %4184 = vmatpush2.msra.mxu0 0.0
    %4185 = vmatprep.subr.mxu0 0.0
    %4186 = vmatpush2.msra.mxu0 0.0
    %4187 = vmatprep.subr.mxu0 0.0
    %4188 = vmatpush2.msra.mxu0 0.0
    %4189 = vmatprep.subr.mxu0 0.0
    %4190 = vmatpush2.msra.mxu0 0.0
    %4191 = vmatprep.subr.mxu0 0.0
    %4192 = vmatpush2.msra.mxu0 0.0
    %4193 = vmatprep.mubr.f32.mxu0 0.0
    %4194 = vmatmul.mubr.f32.gmra.mxu0 %v4125
    %v4195 = vpop.f32.mrf.mxu0
    %v4196 = vadd.f32 0.0, %v4195
    %v4197 = vpop.f32.mrf.mxu0
    %4198 = vmatprep.mubr.f32.mxu0 0.0
    %4199 = vmatmul.mubr.f32.gmra.mxu0 %v4127
    %v4200 = vpop.f32.mrf.mxu0
    %v4201 = vadd.f32 0.0, %v4200
    %v4202 = vpop.f32.mrf.mxu0
    %4203 = vdwg.mxu0
    %v4204 = vsel %vm1669, %v4196, -inf
    %4205 = vmax.xlane.f32.xlu0 %v4204
    %v4206 = vpop.xlane.xlu0 %4205
    %v4207 = vsel %vm1669, %v4201, -inf
    %4208 = vmax.xlane.f32.xlu0 %v4207
    %v4209 = vpop.xlane.xlu0 %4208
    %v4210 = vsub.f32 %v4196, %v4206
    %v4211 = vsub.f32 %v4201, %v4209
    %v4212 = vmul.f32 %v4210, 1.442695
    %v4213 = vpow.pop %v4212
    %v4214 = vmul.f32 %v4211, 1.442695
    %v4215 = vpow.pop %v4214
    %v4216 = vmul.f32 %v4213, %v4118
    %v4217 = vmul.f32 %v4215, %v4119
    %v4218 = vsel %vm745, %v4216, 0.0
    %4219 = vadd.xlane.f32.xlu0 %v4218
    %v4220 = vpop.xlane.xlu0 %4219
    %v4221 = vsel %vm745, %v4217, 0.0
    %4222 = vadd.xlane.f32.xlu0 %v4221
    %v4223 = vpop.xlane.xlu0 %4222
    %v4224 = vrcp.pop %v4220
    %v4225 = vrcp.pop %v4223
    %v4226 = vmul.f32 %v4216, %v4224
    %v4227 = vmul.f32 %v4217, %v4225
    %4230 = vrot.lane.b32.xlu0 %v4216, 108
    %v4231 = vpop.permute.xlu0 %4230
    %4232 = vrot.lane.b32.xlu0 %v4217, 108
    %v4233 = vpop.permute.xlu0 %4232
    %v4236 = vsel %vm745, %v4231, 0.0
    %4237 = vadd.xlane.f32.xlu0 %v4236
    %v4238 = vpop.xlane.xlu0 %4237
    %v4239 = vsel %vm745, %v4233, 0.0
    %4240 = vadd.xlane.f32.xlu0 %v4239
    %v4241 = vpop.xlane.xlu0 %4240
    %v4242 = vrcp.pop %v4238
    %v4243 = vrcp.pop %v4241
    %v4244 = vmul.f32 %v4216, %v4242
    %v4245 = vmul.f32 %v4217, %v4243
    %4246 = vrot.lane.b32.xlu0 %v4216, 88
    %v4247 = vpop.permute.xlu0 %4246
    %4248 = vrot.lane.b32.xlu0 %v4217, 88
    %v4249 = vpop.permute.xlu0 %4248
    %v4252 = vsel %vm745, %v4247, 0.0
    %4253 = vadd.xlane.f32.xlu0 %v4252
    %v4254 = vpop.xlane.xlu0 %4253
    %v4255 = vsel %vm745, %v4249, 0.0
    %4256 = vadd.xlane.f32.xlu0 %v4255
    %v4257 = vpop.xlane.xlu0 %4256
    %v4258 = vrcp.pop %v4254
    %v4259 = vrcp.pop %v4257
    %v4260 = vmul.f32 %v4216, %v4258
    %v4261 = vmul.f32 %v4217, %v4259
    %4262 = vrot.lane.b32.xlu0 %v4216, 68
    %v4263 = vpop.permute.xlu0 %4262
    %4264 = vrot.lane.b32.xlu0 %v4217, 68
    %v4265 = vpop.permute.xlu0 %4264
    %v4268 = vsel %vm745, %v4263, 0.0
    %4269 = vadd.xlane.f32.xlu0 %v4268
    %v4270 = vpop.xlane.xlu0 %4269
    %v4271 = vsel %vm745, %v4265, 0.0
    %4272 = vadd.xlane.f32.xlu0 %v4271
    %v4273 = vpop.xlane.xlu0 %4272
    %v4274 = vrcp.pop %v4270
    %v4275 = vrcp.pop %v4273
    %v4276 = vmul.f32 %v4216, %v4274
    %v4277 = vmul.f32 %v4217, %v4275
    %v4278 = vsel %vm745, %v4226, %v4244
    %v4279 = vsel %vm745, %v4227, %v4245
    %v4280 = vsel %vm538, %v4278, %v4260
    %v4281 = vsel %vm538, %v4279, %v4261
    %v4282 = vsel %vm754, %v4280, %v4276
    %v4283 = vsel %vm754, %v4281, %v4277
    %v4285 = vlaneseq
    %v4286 = vshrl.u32 %v4285, 7
    %v4287 = vsub.s32 0, %v4286
    %v4288 = vrot.slane %v4120, %v4287
    %v4291 = vsel %vm1669, %v4282, 0
    %v4294 = vsel %vm1669, %v4283, 0
    %4296 = vmatprep.subr.mxu0 0.0
    %4297 = vmatpush1.msra.mxu0 0.0
    %4298 = vmatprep.subr.mxu0 0.0
    %4299 = vmatpush1.msra.mxu0 0.0
    %4300 = vmatprep.subr.mxu0 0.0
    %4301 = vmatpush1.msra.mxu0 0.0
    %4302 = vmatprep.subr.mxu0 0.0
    %4303 = vmatpush1.msra.mxu0 0.0
    %4304 = vmatprep.subr.mxu0 0.0
    %4305 = vmatpush1.msra.mxu0 0.0
    %4306 = vmatprep.subr.mxu0 0.0
    %4307 = vmatpush1.msra.mxu0 0.0
    %4308 = vmatprep.subr.mxu0 0.0
    %4309 = vmatpush1.msra.mxu0 %v663
    %4310 = vmatprep.subr.mxu0 0.0
    %4311 = vmatpush1.msra.mxu0 %v661
    %4312 = vmatprep.subr.mxu0 0.0
    %4313 = vmatpush1.msra.mxu0 %v668
    %4314 = vmatprep.subr.mxu0 0.0
    %4315 = vmatpush1.msra.mxu0 %v652
    %4316 = vmatprep.subr.mxu0 0.0
    %4317 = vmatpush1.msra.mxu0 %v650
    %4318 = vmatprep.subr.mxu0 0.0
    %4319 = vmatpush1.msra.mxu0 %v645
    %4320 = vmatprep.subr.mxu0 0.0
    %4321 = vmatpush1.msra.mxu0 %v643
    %4322 = vmatprep.subr.mxu0 0.0
    %4323 = vmatpush1.msra.mxu0 %v667
    %4324 = vmatprep.subr.mxu0 0.0
    %4325 = vmatpush1.msra.mxu0 %v621
    %4326 = vmatprep.subr.mxu0 0.0
    %4327 = vmatpush1.msra.mxu0 %v615
    %4328 = vmatprep.subr.mxu0 0.0
    %4329 = vmatpush2.msra.mxu0 0.0
    %4330 = vmatprep.subr.mxu0 0.0
    %4331 = vmatpush2.msra.mxu0 0.0
    %4332 = vmatprep.subr.mxu0 0.0
    %4333 = vmatpush2.msra.mxu0 0.0
    %4334 = vmatprep.subr.mxu0 0.0
    %4335 = vmatpush2.msra.mxu0 0.0
    %4336 = vmatprep.subr.mxu0 0.0
    %4337 = vmatpush2.msra.mxu0 0.0
    %4338 = vmatprep.subr.mxu0 0.0
    %4339 = vmatpush2.msra.mxu0 0.0
    %4340 = vmatprep.subr.mxu0 0.0
    %4341 = vmatpush2.msra.mxu0 0.0
    %4342 = vmatprep.subr.mxu0 0.0
    %4343 = vmatpush2.msra.mxu0 0.0
    %4344 = vmatprep.subr.mxu0 0.0
    %4345 = vmatpush2.msra.mxu0 0.0
    %4346 = vmatprep.subr.mxu0 0.0
    %4347 = vmatpush2.msra.mxu0 0.0
    %4348 = vmatprep.subr.mxu0 0.0
    %4349 = vmatpush2.msra.mxu0 0.0
    %4350 = vmatprep.subr.mxu0 0.0
    %4351 = vmatpush2.msra.mxu0 0.0
    %4352 = vmatprep.subr.mxu0 0.0
    %4353 = vmatpush2.msra.mxu0 0.0
    %4354 = vmatprep.subr.mxu0 0.0
    %4355 = vmatpush2.msra.mxu0 0.0
    %4356 = vmatprep.subr.mxu0 0.0
    %4357 = vmatpush2.msra.mxu0 0.0
    %4358 = vmatprep.subr.mxu0 0.0
    %4359 = vmatpush2.msra.mxu0 0.0
    %4360 = vmatprep.mubr.f32.mxu0 0.0
    %4361 = vmatmul.mubr.f32.gmra.mxu0 %v4291
    %v4362 = vpop.f32.mrf.mxu0
    %v4363 = vadd.f32 %v4288, %v4362
    %v4364 = vpop.f32.mrf.mxu0
    %4365 = vmatprep.mubr.f32.mxu0 0.0
    %4366 = vmatmul.mubr.f32.gmra.mxu0 %v4294
    %v4367 = vpop.f32.mrf.mxu0
    %v4368 = vadd.f32 %v4288, %v4367
    %v4369 = vpop.f32.mrf.mxu0
    %4370 = vdwg.mxu0
    %v4371 = vadd.f32 %v3773, %v4110
    %v4372 = vadd.f32 %v3774, %v4115
    %v4373 = vadd.f32 %v4371, %v4363
    %v4374 = vadd.f32 %v4372, %v4368
    %v4375 = vld [vmem:[#allocation22] sm:$0xff]
    %v4376 = vld [vmem:[#allocation22 + $0x8] sm:$0xff]
    %v4377 = vld [vmem:[#allocation22 + $0x10] sm:$0xff]
    %v4378 = vld [vmem:[#allocation22 + $0x18] sm:$0xff]
    %v4379 = vld [vmem:[#allocation23] sm:$0x1]
    %v4381 = vlaneseq
    %v4382 = vshrl.u32 %v4381, 7
    %v4383 = vsub.s32 0, %v4382
    %v4384 = vrot.slane %v4379, %v4383
    %v4387 = vsel %vm500, %v4373, 0
    %v4390 = vsel %vm500, %v4374, 0
    %4392 = vmatprep.subr.mxu0 0.0
    %4393 = vmatpush1.msra.mxu0 0.0
    %4394 = vmatprep.subr.mxu0 0.0
    %4395 = vmatpush1.msra.mxu0 0.0
    %4396 = vmatprep.subr.mxu0 0.0
    %4397 = vmatpush1.msra.mxu0 0.0
    %4398 = vmatprep.subr.mxu0 0.0
    %4399 = vmatpush1.msra.mxu0 0.0
    %4400 = vmatprep.subr.mxu0 0.0
    %4401 = vmatpush1.msra.mxu0 0.0
    %4402 = vmatprep.subr.mxu0 0.0
    %4403 = vmatpush1.msra.mxu0 0.0
    %4404 = vmatprep.subr.mxu0 0.0
    %4405 = vmatpush1.msra.mxu0 0.0
    %4406 = vmatprep.subr.mxu0 0.0
    %4407 = vmatpush1.msra.mxu0 0.0
    %4408 = vmatprep.subr.mxu0 0.0
    %4409 = vmatpush1.msra.mxu0 0.0
    %4410 = vmatprep.subr.mxu0 0.0
    %4411 = vmatpush1.msra.mxu0 0.0
    %4412 = vmatprep.subr.mxu0 0.0
    %4413 = vmatpush1.msra.mxu0 0.0
    %4414 = vmatprep.subr.mxu0 0.0
    %4415 = vmatpush1.msra.mxu0 0.0
    %4416 = vmatprep.subr.mxu0 0.0
    %4417 = vmatpush1.msra.mxu0 %v4378
    %4418 = vmatprep.subr.mxu0 0.0
    %4419 = vmatpush1.msra.mxu0 %v4377
    %4420 = vmatprep.subr.mxu0 0.0
    %4421 = vmatpush1.msra.mxu0 %v4376
    %4422 = vmatprep.subr.mxu0 0.0
    %4423 = vmatpush1.msra.mxu0 %v4375
    %4424 = vmatprep.subr.mxu0 0.0
    %4425 = vmatpush2.msra.mxu0 0.0
    %4426 = vmatprep.subr.mxu0 0.0
    %4427 = vmatpush2.msra.mxu0 0.0
    %4428 = vmatprep.subr.mxu0 0.0
    %4429 = vmatpush2.msra.mxu0 0.0
    %4430 = vmatprep.subr.mxu0 0.0
    %4431 = vmatpush2.msra.mxu0 0.0
    %4432 = vmatprep.subr.mxu0 0.0
    %4433 = vmatpush2.msra.mxu0 0.0
    %4434 = vmatprep.subr.mxu0 0.0
    %4435 = vmatpush2.msra.mxu0 0.0
    %4436 = vmatprep.subr.mxu0 0.0
    %4437 = vmatpush2.msra.mxu0 0.0
    %4438 = vmatprep.subr.mxu0 0.0
    %4439 = vmatpush2.msra.mxu0 0.0
    %4440 = vmatprep.subr.mxu0 0.0
    %4441 = vmatpush2.msra.mxu0 0.0
    %4442 = vmatprep.subr.mxu0 0.0
    %4443 = vmatpush2.msra.mxu0 0.0
    %4444 = vmatprep.subr.mxu0 0.0
    %4445 = vmatpush2.msra.mxu0 0.0
    %4446 = vmatprep.subr.mxu0 0.0
    %4447 = vmatpush2.msra.mxu0 0.0
    %4448 = vmatprep.subr.mxu0 0.0
    %4449 = vmatpush2.msra.mxu0 0.0
    %4450 = vmatprep.subr.mxu0 0.0
    %4451 = vmatpush2.msra.mxu0 0.0
    %4452 = vmatprep.subr.mxu0 0.0
    %4453 = vmatpush2.msra.mxu0 0.0
    %4454 = vmatprep.subr.mxu0 0.0
    %4455 = vmatpush2.msra.mxu0 0.0
    %4456 = vmatprep.mubr.f32.mxu0 0.0
    %4457 = vmatmul.mubr.f32.gmra.mxu0 %v4387
    %v4458 = vpop.f32.mrf.mxu0
    %v4459 = vadd.f32 %v4384, %v4458
    %v4460 = vpop.f32.mrf.mxu0
    %4461 = vmatprep.mubr.f32.mxu0 0.0
    %4462 = vmatmul.mubr.f32.gmra.mxu0 %v4390
    %v4463 = vpop.f32.mrf.mxu0
    %v4464 = vadd.f32 %v4384, %v4463
    %v4465 = vpop.f32.mrf.mxu0
    %4466 = vdwg.mxu0
    %v4467 = vmax.f32 %v4459, 0.0
    %v4468 = vmax.f32 %v4464, 0.0
    %v4469 = vld [vmem:[#allocation25] sm:$0xff]
    %v4470 = vld [vmem:[#allocation25 + $0x8] sm:$0xff]
    %v4471 = vld [vmem:[#allocation25 + $0x10] sm:$0xff]
    %v4472 = vld [vmem:[#allocation25 + $0x18] sm:$0xff]
    %v4474 = vsel %vm500, %v4467, 0
    %v4477 = vsel %vm500, %v4468, 0
    %4479 = vmatprep.subr.mxu0 0.0
    %4480 = vmatpush1.msra.mxu0 0.0
    %4481 = vmatprep.subr.mxu0 0.0
    %4482 = vmatpush1.msra.mxu0 0.0
    %4483 = vmatprep.subr.mxu0 0.0
    %4484 = vmatpush1.msra.mxu0 0.0
    %4485 = vmatprep.subr.mxu0 0.0
    %4486 = vmatpush1.msra.mxu0 0.0
    %4487 = vmatprep.subr.mxu0 0.0
    %4488 = vmatpush1.msra.mxu0 0.0
    %4489 = vmatprep.subr.mxu0 0.0
    %4490 = vmatpush1.msra.mxu0 0.0
    %4491 = vmatprep.subr.mxu0 0.0
    %4492 = vmatpush1.msra.mxu0 0.0
    %4493 = vmatprep.subr.mxu0 0.0
    %4494 = vmatpush1.msra.mxu0 0.0
    %4495 = vmatprep.subr.mxu0 0.0
    %4496 = vmatpush1.msra.mxu0 0.0
    %4497 = vmatprep.subr.mxu0 0.0
    %4498 = vmatpush1.msra.mxu0 0.0
    %4499 = vmatprep.subr.mxu0 0.0
    %4500 = vmatpush1.msra.mxu0 0.0
    %4501 = vmatprep.subr.mxu0 0.0
    %4502 = vmatpush1.msra.mxu0 0.0
    %4503 = vmatprep.subr.mxu0 0.0
    %4504 = vmatpush1.msra.mxu0 %v4472
    %4505 = vmatprep.subr.mxu0 0.0
    %4506 = vmatpush1.msra.mxu0 %v4471
    %4507 = vmatprep.subr.mxu0 0.0
    %4508 = vmatpush1.msra.mxu0 %v4470
    %4509 = vmatprep.subr.mxu0 0.0
    %4510 = vmatpush1.msra.mxu0 %v4469
    %4511 = vmatprep.subr.mxu0 0.0
    %4512 = vmatpush2.msra.mxu0 0.0
    %4513 = vmatprep.subr.mxu0 0.0
    %4514 = vmatpush2.msra.mxu0 0.0
    %4515 = vmatprep.subr.mxu0 0.0
    %4516 = vmatpush2.msra.mxu0 0.0
    %4517 = vmatprep.subr.mxu0 0.0
    %4518 = vmatpush2.msra.mxu0 0.0
    %4519 = vmatprep.subr.mxu0 0.0
    %4520 = vmatpush2.msra.mxu0 0.0
    %4521 = vmatprep.subr.mxu0 0.0
    %4522 = vmatpush2.msra.mxu0 0.0
    %4523 = vmatprep.subr.mxu0 0.0
    %4524 = vmatpush2.msra.mxu0 0.0
    %4525 = vmatprep.subr.mxu0 0.0
    %4526 = vmatpush2.msra.mxu0 0.0
    %4527 = vmatprep.subr.mxu0 0.0
    %4528 = vmatpush2.msra.mxu0 0.0
    %4529 = vmatprep.subr.mxu0 0.0
    %4530 = vmatpush2.msra.mxu0 0.0
    %4531 = vmatprep.subr.mxu0 0.0
    %4532 = vmatpush2.msra.mxu0 0.0
    %4533 = vmatprep.subr.mxu0 0.0
    %4534 = vmatpush2.msra.mxu0 0.0
    %4535 = vmatprep.subr.mxu0 0.0
    %4536 = vmatpush2.msra.mxu0 0.0
    %4537 = vmatprep.subr.mxu0 0.0
    %4538 = vmatpush2.msra.mxu0 0.0
    %4539 = vmatprep.subr.mxu0 0.0
    %4540 = vmatpush2.msra.mxu0 0.0
    %4541 = vmatprep.subr.mxu0 0.0
    %4542 = vmatpush2.msra.mxu0 0.0
    %4543 = vmatprep.mubr.f32.mxu0 0.0
    %4544 = vmatmul.mubr.f32.gmra.mxu0 %v4474
    %v4545 = vpop.f32.mrf.mxu0
    %v4546 = vadd.f32 0.0, %v4545
    %v4547 = vpop.f32.mrf.mxu0
    %4548 = vmatprep.mubr.f32.mxu0 0.0
    %4549 = vmatmul.mubr.f32.gmra.mxu0 %v4477
    %v4550 = vpop.f32.mrf.mxu0
    %v4551 = vadd.f32 0.0, %v4550
    %v4552 = vpop.f32.mrf.mxu0
    %4553 = vdwg.mxu0
    %v4554 = vadd.f32 %v4373, %v4546
    %v4555 = vadd.f32 %v4374, %v4551
    %v4556 = vld [vmem:[#allocation26] sm:$0x1]
    %v4558 = vlaneseq
    %v4559 = vshrl.u32 %v4558, 7
    %v4560 = vsub.s32 0, %v4559
    %v4561 = vrot.slane %v4556, %v4560
    %v4563 = vadd.f32 %v4554, %v4561
    %v4564 = vadd.f32 %v4555, %v4561
    %s4565 = scalar_lea.vmem %s28, 48
    %4566 = vst.msk [vmem:[%s4565] sm:$0xff] %vm500, %v4563
    %4567 = vst.msk [vmem:[%s4565 + $0x8] sm:$0xff] %vm500, %v4564
    %v4568 = vld [vmem:[#allocation7] sm:$0xff]
    %v4569 = vld [vmem:[#allocation7 + $0x8] sm:$0xff]
    %v4570 = vld [vmem:[#allocation7 + $0x10] sm:$0xff]
    %v4571 = vld [vmem:[#allocation7 + $0x18] sm:$0xff]
    %v4572 = vld [vmem:[#allocation7 + $0x20] sm:$0xff]
    %v4573 = vld [vmem:[#allocation7 + $0x28] sm:$0xff]
    %v4574 = vld [vmem:[#allocation7 + $0x30] sm:$0xff]
    %v4575 = vld [vmem:[#allocation7 + $0x38] sm:$0xff]
    %v4576 = vld [vmem:[#allocation8] sm:$0x3]
    %v4578 = vlaneseq
    %v4579 = vshrl.u32 %v4578, 7
    %v4580 = vsub.s32 0, %v4579
    %v4581 = vrot.slane %v4576, %v4580
    %v4582 = vlaneseq
    %v4583 = vshrl.u32 %v4582, 7
    %v4584 = vsub.s32 1, %v4583
    %v4585 = vrot.slane %v4576, %v4584
    %v4589 = vsel %vm500, %v4563, 0
    %v4592 = vsel %vm500, %v4564, 0
    %4594 = vmatprep.subr.mxu0 0.0
    %4595 = vmatpush1.msra.mxu0 0.0
    %4596 = vmatprep.subr.mxu0 0.0
    %4597 = vmatpush1.msra.mxu0 0.0
    %4598 = vmatprep.subr.mxu0 0.0
    %4599 = vmatpush1.msra.mxu0 0.0
    %4600 = vmatprep.subr.mxu0 0.0
    %4601 = vmatpush1.msra.mxu0 0.0
    %4602 = vmatprep.subr.mxu0 0.0
    %4603 = vmatpush1.msra.mxu0 0.0
    %4604 = vmatprep.subr.mxu0 0.0
    %4605 = vmatpush1.msra.mxu0 0.0
    %4606 = vmatprep.subr.mxu0 0.0
    %4607 = vmatpush1.msra.mxu0 0.0
    %4608 = vmatprep.subr.mxu0 0.0
    %4609 = vmatpush1.msra.mxu0 0.0
    %4610 = vmatprep.subr.mxu0 0.0
    %4611 = vmatpush1.msra.mxu0 0.0
    %4612 = vmatprep.subr.mxu0 0.0
    %4613 = vmatpush1.msra.mxu0 0.0
    %4614 = vmatprep.subr.mxu0 0.0
    %4615 = vmatpush1.msra.mxu0 0.0
    %4616 = vmatprep.subr.mxu0 0.0
    %4617 = vmatpush1.msra.mxu0 0.0
    %4618 = vmatprep.subr.mxu0 %v4575
    %4619 = vmatpush1.msra.mxu0 %v4574
    %4620 = vmatprep.subr.mxu0 %v4573
    %4621 = vmatpush1.msra.mxu0 %v4572
    %4622 = vmatprep.subr.mxu0 %v4571
    %4623 = vmatpush1.msra.mxu0 %v4570
    %4624 = vmatprep.subr.mxu0 %v4569
    %4625 = vmatpush1.msra.mxu0 %v4568
    %4626 = vmatprep.subr.mxu0 0.0
    %4627 = vmatpush2.msra.mxu0 0.0
    %4628 = vmatprep.subr.mxu0 0.0
    %4629 = vmatpush2.msra.mxu0 0.0
    %4630 = vmatprep.subr.mxu0 0.0
    %4631 = vmatpush2.msra.mxu0 0.0
    %4632 = vmatprep.subr.mxu0 0.0
    %4633 = vmatpush2.msra.mxu0 0.0
    %4634 = vmatprep.subr.mxu0 0.0
    %4635 = vmatpush2.msra.mxu0 0.0
    %4636 = vmatprep.subr.mxu0 0.0
    %4637 = vmatpush2.msra.mxu0 0.0
    %4638 = vmatprep.subr.mxu0 0.0
    %4639 = vmatpush2.msra.mxu0 0.0
    %4640 = vmatprep.subr.mxu0 0.0
    %4641 = vmatpush2.msra.mxu0 0.0
    %4642 = vmatprep.subr.mxu0 0.0
    %4643 = vmatpush2.msra.mxu0 0.0
    %4644 = vmatprep.subr.mxu0 0.0
    %4645 = vmatpush2.msra.mxu0 0.0
    %4646 = vmatprep.subr.mxu0 0.0
    %4647 = vmatpush2.msra.mxu0 0.0
    %4648 = vmatprep.subr.mxu0 0.0
    %4649 = vmatpush2.msra.mxu0 0.0
    %4650 = vmatprep.subr.mxu0 0.0
    %4651 = vmatpush2.msra.mxu0 0.0
    %4652 = vmatprep.subr.mxu0 0.0
    %4653 = vmatpush2.msra.mxu0 0.0
    %4654 = vmatprep.subr.mxu0 0.0
    %4655 = vmatpush2.msra.mxu0 0.0
    %4656 = vmatprep.subr.mxu0 0.0
    %4657 = vmatpush2.msra.mxu0 0.0
    %4658 = vmatprep.mubr.f32.mxu0 0.0
    %4659 = vmatmul.mubr.f32.gmra.mxu0 %v4589
    %v4660 = vpop.f32.mrf.mxu0
    %v4661 = vadd.f32 %v4581, %v4660
    %v4662 = vpop.f32.mrf.mxu0
    %v4663 = vadd.f32 %v4585, %v4662
    %4664 = vmatprep.mubr.f32.mxu0 0.0
    %4665 = vmatmul.mubr.f32.gmra.mxu0 %v4592
    %v4666 = vpop.f32.mrf.mxu0
    %v4667 = vadd.f32 %v4581, %v4666
    %v4668 = vpop.f32.mrf.mxu0
    %v4669 = vadd.f32 %v4585, %v4668
    %4670 = vdwg.mxu0
    %4673 = vrot.lane.b32.xlu0 %v4661, 96
    %v4674 = vpop.permute.xlu0 %4673
    %4675 = vrot.lane.b32.xlu0 %v4667, 96
    %v4676 = vpop.permute.xlu0 %4675
    %4679 = vrot.lane.b32.xlu0 %v4661, 64
    %v4680 = vpop.permute.xlu0 %4679
    %4681 = vrot.lane.b32.xlu0 %v4667, 64
    %v4682 = vpop.permute.xlu0 %4681
    %4685 = vrot.lane.b32.xlu0 %v4661, 32
    %v4686 = vpop.permute.xlu0 %4685
    %4687 = vrot.lane.b32.xlu0 %v4667, 32
    %v4688 = vpop.permute.xlu0 %4687
    %v4691 = vld [vmem:[%s6] sm:$0xff]
    %v4692 = vld [vmem:[%s6 + $0x8] sm:$0xff]
    %v4693 = vld [vmem:[%s6 + $0x10] sm:$0xff]
    %v4694 = vld [vmem:[%s6 + $0x18] sm:$0xff]
    %4697 = vrot.lane.b32.xlu0 %v4663, 96
    %v4698 = vpop.permute.xlu0 %4697
    %4699 = vrot.lane.b32.xlu0 %v4669, 96
    %v4700 = vpop.permute.xlu0 %4699
    %4703 = vxpose.xlu0.b32.start [1/16] %v4698, 128
    %4704 = vxpose.xlu0.b32.cont [2/16] %v4700, 128
    %4705 = vxpose.xlu0.b32.cont [3/16] 0.0, 128
    %4706 = vxpose.xlu0.b32.cont [4/16] 0.0, 128
    %4707 = vxpose.xlu0.b32.cont [5/16] 0.0, 128
    %4708 = vxpose.xlu0.b32.cont [6/16] 0.0, 128
    %4709 = vxpose.xlu0.b32.cont [7/16] 0.0, 128
    %4710 = vxpose.xlu0.b32.cont [8/16] 0.0, 128
    %4711 = vxpose.xlu0.b32.cont [9/16] 0.0, 128
    %4712 = vxpose.xlu0.b32.cont [10/16] 0.0, 128
    %4713 = vxpose.xlu0.b32.cont [11/16] 0.0, 128
    %4714 = vxpose.xlu0.b32.cont [12/16] 0.0, 128
    %4715 = vxpose.xlu0.b32.cont [13/16] 0.0, 128
    %4716 = vxpose.xlu0.b32.cont [14/16] 0.0, 128
    %4717 = vxpose.xlu0.b32.cont [15/16] 0.0, 128
    %4718 = vxpose.xlu0.b32.end [16/16] 0.0, 128
    %v4719 = vpop.trf.xlu0
    %v4720 = vpop.trf.xlu0
    %v4721 = vpop.trf.xlu0
    %v4722 = vpop.trf.xlu0
    %v4723 = vpop.trf.xlu0
    %v4724 = vpop.trf.xlu0
    %v4725 = vpop.trf.xlu0
    %v4726 = vpop.trf.xlu0
    %v4727 = vpop.trf.xlu0
    %v4728 = vpop.trf.xlu0
    %v4729 = vpop.trf.xlu0
    %v4730 = vpop.trf.xlu0
    %v4731 = vpop.trf.xlu0
    %v4732 = vpop.trf.xlu0
    %v4733 = vpop.trf.xlu0
    %v4734 = vpop.trf.xlu0
    %4739 = vrot.lane.b32.xlu0 %v4719, 16
    %v4740 = vpop.permute.xlu0 %4739
    %4741 = vrot.lane.b32.xlu0 %v4720, 16
    %v4742 = vpop.permute.xlu0 %4741
    %4743 = vrot.lane.b32.xlu0 %v4721, 16
    %v4744 = vpop.permute.xlu0 %4743
    %4745 = vrot.lane.b32.xlu0 %v4722, 16
    %v4746 = vpop.permute.xlu0 %4745
    %4751 = vrot.lane.b32.xlu0 %v4719, 32
    %v4752 = vpop.permute.xlu0 %4751
    %4753 = vrot.lane.b32.xlu0 %v4720, 32
    %v4754 = vpop.permute.xlu0 %4753
    %4755 = vrot.lane.b32.xlu0 %v4721, 32
    %v4756 = vpop.permute.xlu0 %4755
    %4757 = vrot.lane.b32.xlu0 %v4722, 32
    %v4758 = vpop.permute.xlu0 %4757
    %4763 = vrot.lane.b32.xlu0 %v4719, 48
    %v4764 = vpop.permute.xlu0 %4763
    %4765 = vrot.lane.b32.xlu0 %v4720, 48
    %v4766 = vpop.permute.xlu0 %4765
    %4767 = vrot.lane.b32.xlu0 %v4721, 48
    %v4768 = vpop.permute.xlu0 %4767
    %4769 = vrot.lane.b32.xlu0 %v4722, 48
    %v4770 = vpop.permute.xlu0 %4769
    %v4775 = vsel %vm495, %v4719, %v4740
    %v4776 = vsel %vm495, %v4720, %v4742
    %v4777 = vsel %vm495, %v4721, %v4744
    %v4778 = vsel %vm495, %v4722, %v4746
    %v4779 = vsel %vm500, %v4775, %v4752
    %v4780 = vsel %vm500, %v4776, %v4754
    %v4781 = vsel %vm500, %v4777, %v4756
    %v4782 = vsel %vm500, %v4778, %v4758
    %v4783 = vsel %vm315, %v4779, %v4764
    %v4784 = vsel %vm315, %v4780, %v4766
    %v4785 = vsel %vm315, %v4781, %v4768
    %v4786 = vsel %vm315, %v4782, %v4770
    %v4787 = vmul.f32 %v4783, %v4691
    %v4788 = vmul.f32 %v4784, %v4692
    %v4789 = vmul.f32 %v4785, %v4693
    %v4790 = vmul.f32 %v4786, %v4694
    %v4791 = vld [vmem:[%s3] sm:$0xff]
    %v4792 = vld [vmem:[%s3 + $0x8] sm:$0xff]
    %v4793 = vld [vmem:[#allocation10] sm:$0x1]
    %v4794 = vsel %vm500, %v4663, 0
    %v4796 = vsel %vm500, %v4669, 0
    %4798 = vmatprep.subr.mxu0 0.0
    %4799 = vmatpush1.msra.mxu0 0.0
    %4800 = vmatprep.subr.mxu0 0.0
    %4801 = vmatpush1.msra.mxu0 0.0
    %4802 = vmatprep.subr.mxu0 0.0
    %4803 = vmatpush1.msra.mxu0 0.0
    %4804 = vmatprep.subr.mxu0 0.0
    %4805 = vmatpush1.msra.mxu0 0.0
    %4806 = vmatprep.subr.mxu0 0.0
    %4807 = vmatpush1.msra.mxu0 0.0
    %4808 = vmatprep.subr.mxu0 0.0
    %4809 = vmatpush1.msra.mxu0 0.0
    %4810 = vmatprep.subr.mxu0 0.0
    %4811 = vmatpush1.msra.mxu0 0.0
    %4812 = vmatprep.subr.mxu0 0.0
    %4813 = vmatpush1.msra.mxu0 0.0
    %4814 = vmatprep.subr.mxu0 0.0
    %4815 = vmatpush1.msra.mxu0 0.0
    %4816 = vmatprep.subr.mxu0 0.0
    %4817 = vmatpush1.msra.mxu0 0.0
    %4818 = vmatprep.subr.mxu0 0.0
    %4819 = vmatpush1.msra.mxu0 0.0
    %4820 = vmatprep.subr.mxu0 0.0
    %4821 = vmatpush1.msra.mxu0 0.0
    %4822 = vmatprep.subr.mxu0 0.0
    %4823 = vmatpush1.msra.mxu0 %v4790
    %4824 = vmatprep.subr.mxu0 0.0
    %4825 = vmatpush1.msra.mxu0 %v4789
    %4826 = vmatprep.subr.mxu0 0.0
    %4827 = vmatpush1.msra.mxu0 %v4788
    %4828 = vmatprep.subr.mxu0 0.0
    %4829 = vmatpush1.msra.mxu0 %v4787
    %4830 = vmatprep.subr.mxu0 0.0
    %4831 = vmatpush2.msra.mxu0 0.0
    %4832 = vmatprep.subr.mxu0 0.0
    %4833 = vmatpush2.msra.mxu0 0.0
    %4834 = vmatprep.subr.mxu0 0.0
    %4835 = vmatpush2.msra.mxu0 0.0
    %4836 = vmatprep.subr.mxu0 0.0
    %4837 = vmatpush2.msra.mxu0 0.0
    %4838 = vmatprep.subr.mxu0 0.0
    %4839 = vmatpush2.msra.mxu0 0.0
    %4840 = vmatprep.subr.mxu0 0.0
    %4841 = vmatpush2.msra.mxu0 0.0
    %4842 = vmatprep.subr.mxu0 0.0
    %4843 = vmatpush2.msra.mxu0 0.0
    %4844 = vmatprep.subr.mxu0 0.0
    %4845 = vmatpush2.msra.mxu0 0.0
    %4846 = vmatprep.subr.mxu0 0.0
    %4847 = vmatpush2.msra.mxu0 0.0
    %4848 = vmatprep.subr.mxu0 0.0
    %4849 = vmatpush2.msra.mxu0 0.0
    %4850 = vmatprep.subr.mxu0 0.0
    %4851 = vmatpush2.msra.mxu0 0.0
    %4852 = vmatprep.subr.mxu0 0.0
    %4853 = vmatpush2.msra.mxu0 0.0
    %4854 = vmatprep.subr.mxu0 0.0
    %4855 = vmatpush2.msra.mxu0 0.0
    %4856 = vmatprep.subr.mxu0 0.0
    %4857 = vmatpush2.msra.mxu0 0.0
    %4858 = vmatprep.subr.mxu0 0.0
    %4859 = vmatpush2.msra.mxu0 0.0
    %4860 = vmatprep.subr.mxu0 0.0
    %4861 = vmatpush2.msra.mxu0 0.0
    %4862 = vmatprep.mubr.f32.mxu0 0.0
    %4863 = vmatmul.mubr.f32.gmra.mxu0 %v4794
    %v4864 = vpop.f32.mrf.mxu0
    %v4865 = vadd.f32 0.0, %v4864
    %v4866 = vpop.f32.mrf.mxu0
    %4867 = vmatprep.mubr.f32.mxu0 0.0
    %4868 = vmatmul.mubr.f32.gmra.mxu0 %v4796
    %v4869 = vpop.f32.mrf.mxu0
    %v4870 = vadd.f32 0.0, %v4869
    %v4871 = vpop.f32.mrf.mxu0
    %4872 = vdwg.mxu0
    %v4873 = vsel %vm1070, %v4865, -inf
    %4874 = vmax.xlane.f32.xlu0 %v4873
    %v4875 = vpop.xlane.xlu0 %4874
    %v4876 = vsel %vm1070, %v4870, -inf
    %4877 = vmax.xlane.f32.xlu0 %v4876
    %v4878 = vpop.xlane.xlu0 %4877
    %v4879 = vsub.f32 %v4865, %v4875
    %v4880 = vsub.f32 %v4870, %v4878
    %v4881 = vmul.f32 %v4879, 1.442695
    %v4882 = vpow.pop %v4881
    %v4883 = vmul.f32 %v4880, 1.442695
    %v4884 = vpow.pop %v4883
    %v4885 = vmul.f32 %v4882, %v4791
    %v4886 = vmul.f32 %v4884, %v4792
    %v4887 = vsel %vm495, %v4885, 0.0
    %4888 = vadd.xlane.f32.xlu0 %v4887
    %v4889 = vpop.xlane.xlu0 %4888
    %v4890 = vsel %vm495, %v4886, 0.0
    %4891 = vadd.xlane.f32.xlu0 %v4890
    %v4892 = vpop.xlane.xlu0 %4891
    %v4893 = vrcp.pop %v4889
    %v4894 = vrcp.pop %v4892
    %v4895 = vmul.f32 %v4885, %v4893
    %v4896 = vmul.f32 %v4886, %v4894
    %4899 = vrot.lane.b32.xlu0 %v4885, 112
    %v4900 = vpop.permute.xlu0 %4899
    %4901 = vrot.lane.b32.xlu0 %v4886, 112
    %v4902 = vpop.permute.xlu0 %4901
    %v4905 = vsel %vm495, %v4900, 0.0
    %4906 = vadd.xlane.f32.xlu0 %v4905
    %v4907 = vpop.xlane.xlu0 %4906
    %v4908 = vsel %vm495, %v4902, 0.0
    %4909 = vadd.xlane.f32.xlu0 %v4908
    %v4910 = vpop.xlane.xlu0 %4909
    %v4911 = vrcp.pop %v4907
    %v4912 = vrcp.pop %v4910
    %v4913 = vmul.f32 %v4885, %v4911
    %v4914 = vmul.f32 %v4886, %v4912
    %4915 = vrot.lane.b32.xlu0 %v4885, 96
    %v4916 = vpop.permute.xlu0 %4915
    %4917 = vrot.lane.b32.xlu0 %v4886, 96
    %v4918 = vpop.permute.xlu0 %4917
    %v4921 = vsel %vm495, %v4916, 0.0
    %4922 = vadd.xlane.f32.xlu0 %v4921
    %v4923 = vpop.xlane.xlu0 %4922
    %v4924 = vsel %vm495, %v4918, 0.0
    %4925 = vadd.xlane.f32.xlu0 %v4924
    %v4926 = vpop.xlane.xlu0 %4925
    %v4927 = vrcp.pop %v4923
    %v4928 = vrcp.pop %v4926
    %v4929 = vmul.f32 %v4885, %v4927
    %v4930 = vmul.f32 %v4886, %v4928
    %4931 = vrot.lane.b32.xlu0 %v4885, 80
    %v4932 = vpop.permute.xlu0 %4931
    %4933 = vrot.lane.b32.xlu0 %v4886, 80
    %v4934 = vpop.permute.xlu0 %4933
    %v4937 = vsel %vm495, %v4932, 0.0
    %4938 = vadd.xlane.f32.xlu0 %v4937
    %v4939 = vpop.xlane.xlu0 %4938
    %v4940 = vsel %vm495, %v4934, 0.0
    %4941 = vadd.xlane.f32.xlu0 %v4940
    %v4942 = vpop.xlane.xlu0 %4941
    %v4943 = vrcp.pop %v4939
    %v4944 = vrcp.pop %v4942
    %v4945 = vmul.f32 %v4885, %v4943
    %v4946 = vmul.f32 %v4886, %v4944
    %v4947 = vsel %vm495, %v4895, %v4913
    %v4948 = vsel %vm495, %v4896, %v4914
    %v4949 = vsel %vm500, %v4947, %v4929
    %v4950 = vsel %vm500, %v4948, %v4930
    %v4951 = vsel %vm315, %v4949, %v4945
    %v4952 = vsel %vm315, %v4950, %v4946
    %v4954 = vlaneseq
    %v4955 = vshrl.u32 %v4954, 7
    %v4956 = vsub.s32 0, %v4955
    %v4957 = vrot.slane %v4793, %v4956
    %v4960 = vsel %vm1070, %v4951, 0
    %v4963 = vsel %vm1070, %v4952, 0
    %4965 = vmatprep.subr.mxu0 0.0
    %4966 = vmatpush1.msra.mxu0 0.0
    %4967 = vmatprep.subr.mxu0 0.0
    %4968 = vmatpush1.msra.mxu0 0.0
    %4969 = vmatprep.subr.mxu0 0.0
    %4970 = vmatpush1.msra.mxu0 0.0
    %4971 = vmatprep.subr.mxu0 0.0
    %4972 = vmatpush1.msra.mxu0 0.0
    %4973 = vmatprep.subr.mxu0 0.0
    %4974 = vmatpush1.msra.mxu0 0.0
    %4975 = vmatprep.subr.mxu0 0.0
    %4976 = vmatpush1.msra.mxu0 0.0
    %4977 = vmatprep.subr.mxu0 0.0
    %4978 = vmatpush1.msra.mxu0 0.0
    %4979 = vmatprep.subr.mxu0 0.0
    %4980 = vmatpush1.msra.mxu0 0.0
    %4981 = vmatprep.subr.mxu0 0.0
    %4982 = vmatpush1.msra.mxu0 %v4688
    %4983 = vmatprep.subr.mxu0 0.0
    %4984 = vmatpush1.msra.mxu0 %v4686
    %4985 = vmatprep.subr.mxu0 0.0
    %4986 = vmatpush1.msra.mxu0 %v4682
    %4987 = vmatprep.subr.mxu0 0.0
    %4988 = vmatpush1.msra.mxu0 %v4680
    %4989 = vmatprep.subr.mxu0 0.0
    %4990 = vmatpush1.msra.mxu0 %v4676
    %4991 = vmatprep.subr.mxu0 0.0
    %4992 = vmatpush1.msra.mxu0 %v4674
    %4993 = vmatprep.subr.mxu0 0.0
    %4994 = vmatpush1.msra.mxu0 %v4667
    %4995 = vmatprep.subr.mxu0 0.0
    %4996 = vmatpush1.msra.mxu0 %v4661
    %4997 = vmatprep.subr.mxu0 0.0
    %4998 = vmatpush2.msra.mxu0 0.0
    %4999 = vmatprep.subr.mxu0 0.0
    %5000 = vmatpush2.msra.mxu0 0.0
    %5001 = vmatprep.subr.mxu0 0.0
    %5002 = vmatpush2.msra.mxu0 0.0
    %5003 = vmatprep.subr.mxu0 0.0
    %5004 = vmatpush2.msra.mxu0 0.0
    %5005 = vmatprep.subr.mxu0 0.0
    %5006 = vmatpush2.msra.mxu0 0.0
    %5007 = vmatprep.subr.mxu0 0.0
    %5008 = vmatpush2.msra.mxu0 0.0
    %5009 = vmatprep.subr.mxu0 0.0
    %5010 = vmatpush2.msra.mxu0 0.0
    %5011 = vmatprep.subr.mxu0 0.0
    %5012 = vmatpush2.msra.mxu0 0.0
    %5013 = vmatprep.subr.mxu0 0.0
    %5014 = vmatpush2.msra.mxu0 0.0
    %5015 = vmatprep.subr.mxu0 0.0
    %5016 = vmatpush2.msra.mxu0 0.0
    %5017 = vmatprep.subr.mxu0 0.0
    %5018 = vmatpush2.msra.mxu0 0.0
    %5019 = vmatprep.subr.mxu0 0.0
    %5020 = vmatpush2.msra.mxu0 0.0
    %5021 = vmatprep.subr.mxu0 0.0
    %5022 = vmatpush2.msra.mxu0 0.0
    %5023 = vmatprep.subr.mxu0 0.0
    %5024 = vmatpush2.msra.mxu0 0.0
    %5025 = vmatprep.subr.mxu0 0.0
    %5026 = vmatpush2.msra.mxu0 0.0
    %5027 = vmatprep.subr.mxu0 0.0
    %5028 = vmatpush2.msra.mxu0 0.0
    %5029 = vmatprep.mubr.f32.mxu0 0.0
    %5030 = vmatmul.mubr.f32.gmra.mxu0 %v4960
    %v5031 = vpop.f32.mrf.mxu0
    %v5032 = vadd.f32 %v4957, %v5031
    %v5033 = vpop.f32.mrf.mxu0
    %5034 = vmatprep.mubr.f32.mxu0 0.0
    %5035 = vmatmul.mubr.f32.gmra.mxu0 %v4963
    %v5036 = vpop.f32.mrf.mxu0
    %v5037 = vadd.f32 %v4957, %v5036
    %v5038 = vpop.f32.mrf.mxu0
    %5039 = vdwg.mxu0
    %v5040 = vadd.f32 %v4563, %v5032
    %v5041 = vadd.f32 %v4564, %v5037
    %v5042 = vld [vmem:[#allocation11] sm:$0xff]
    %v5043 = vld [vmem:[#allocation11 + $0x8] sm:$0xff]
    %v5044 = vld [vmem:[#allocation11 + $0x10] sm:$0xff]
    %v5045 = vld [vmem:[#allocation11 + $0x18] sm:$0xff]
    %v5046 = vld [vmem:[#allocation13] sm:$0x1]
    %v5048 = vlaneseq
    %v5049 = vshrl.u32 %v5048, 7
    %v5050 = vsub.s32 0, %v5049
    %v5051 = vrot.slane %v5046, %v5050
    %v5054 = vsel %vm500, %v5040, 0
    %v5057 = vsel %vm500, %v5041, 0
    %5059 = vmatprep.subr.mxu0 0.0
    %5060 = vmatpush1.msra.mxu0 0.0
    %5061 = vmatprep.subr.mxu0 0.0
    %5062 = vmatpush1.msra.mxu0 0.0
    %5063 = vmatprep.subr.mxu0 0.0
    %5064 = vmatpush1.msra.mxu0 0.0
    %5065 = vmatprep.subr.mxu0 0.0
    %5066 = vmatpush1.msra.mxu0 0.0
    %5067 = vmatprep.subr.mxu0 0.0
    %5068 = vmatpush1.msra.mxu0 0.0
    %5069 = vmatprep.subr.mxu0 0.0
    %5070 = vmatpush1.msra.mxu0 0.0
    %5071 = vmatprep.subr.mxu0 0.0
    %5072 = vmatpush1.msra.mxu0 0.0
    %5073 = vmatprep.subr.mxu0 0.0
    %5074 = vmatpush1.msra.mxu0 0.0
    %5075 = vmatprep.subr.mxu0 0.0
    %5076 = vmatpush1.msra.mxu0 0.0
    %5077 = vmatprep.subr.mxu0 0.0
    %5078 = vmatpush1.msra.mxu0 0.0
    %5079 = vmatprep.subr.mxu0 0.0
    %5080 = vmatpush1.msra.mxu0 0.0
    %5081 = vmatprep.subr.mxu0 0.0
    %5082 = vmatpush1.msra.mxu0 0.0
    %5083 = vmatprep.subr.mxu0 0.0
    %5084 = vmatpush1.msra.mxu0 %v5045
    %5085 = vmatprep.subr.mxu0 0.0
    %5086 = vmatpush1.msra.mxu0 %v5044
    %5087 = vmatprep.subr.mxu0 0.0
    %5088 = vmatpush1.msra.mxu0 %v5043
    %5089 = vmatprep.subr.mxu0 0.0
    %5090 = vmatpush1.msra.mxu0 %v5042
    %5091 = vmatprep.subr.mxu0 0.0
    %5092 = vmatpush2.msra.mxu0 0.0
    %5093 = vmatprep.subr.mxu0 0.0
    %5094 = vmatpush2.msra.mxu0 0.0
    %5095 = vmatprep.subr.mxu0 0.0
    %5096 = vmatpush2.msra.mxu0 0.0
    %5097 = vmatprep.subr.mxu0 0.0
    %5098 = vmatpush2.msra.mxu0 0.0
    %5099 = vmatprep.subr.mxu0 0.0
    %5100 = vmatpush2.msra.mxu0 0.0
    %5101 = vmatprep.subr.mxu0 0.0
    %5102 = vmatpush2.msra.mxu0 0.0
    %5103 = vmatprep.subr.mxu0 0.0
    %5104 = vmatpush2.msra.mxu0 0.0
    %5105 = vmatprep.subr.mxu0 0.0
    %5106 = vmatpush2.msra.mxu0 0.0
    %5107 = vmatprep.subr.mxu0 0.0
    %5108 = vmatpush2.msra.mxu0 0.0
    %5109 = vmatprep.subr.mxu0 0.0
    %5110 = vmatpush2.msra.mxu0 0.0
    %5111 = vmatprep.subr.mxu0 0.0
    %5112 = vmatpush2.msra.mxu0 0.0
    %5113 = vmatprep.subr.mxu0 0.0
    %5114 = vmatpush2.msra.mxu0 0.0
    %5115 = vmatprep.subr.mxu0 0.0
    %5116 = vmatpush2.msra.mxu0 0.0
    %5117 = vmatprep.subr.mxu0 0.0
    %5118 = vmatpush2.msra.mxu0 0.0
    %5119 = vmatprep.subr.mxu0 0.0
    %5120 = vmatpush2.msra.mxu0 0.0
    %5121 = vmatprep.subr.mxu0 0.0
    %5122 = vmatpush2.msra.mxu0 0.0
    %5123 = vmatprep.mubr.f32.mxu0 0.0
    %5124 = vmatmul.mubr.f32.gmra.mxu0 %v5054
    %v5125 = vpop.f32.mrf.mxu0
    %v5126 = vadd.f32 %v5051, %v5125
    %v5127 = vpop.f32.mrf.mxu0
    %5128 = vmatprep.mubr.f32.mxu0 0.0
    %5129 = vmatmul.mubr.f32.gmra.mxu0 %v5057
    %v5130 = vpop.f32.mrf.mxu0
    %v5131 = vadd.f32 %v5051, %v5130
    %v5132 = vpop.f32.mrf.mxu0
    %5133 = vdwg.mxu0
    %v5134 = vld [vmem:[%s4] sm:$0xff]
    %v5135 = vld [vmem:[%s4 + $0x8] sm:$0xff]
    %v5136 = vld [vmem:[#allocation16] sm:$0x1]
    %v5138 = vsel %vm500, %v5126, 0
    %v5141 = vsel %vm500, %v5131, 0
    %5143 = vmatprep.subr.mxu0 0.0
    %5144 = vmatpush1.msra.mxu0 0.0
    %5145 = vmatprep.subr.mxu0 0.0
    %5146 = vmatpush1.msra.mxu0 0.0
    %5147 = vmatprep.subr.mxu0 0.0
    %5148 = vmatpush1.msra.mxu0 0.0
    %5149 = vmatprep.subr.mxu0 0.0
    %5150 = vmatpush1.msra.mxu0 0.0
    %5151 = vmatprep.subr.mxu0 0.0
    %5152 = vmatpush1.msra.mxu0 0.0
    %5153 = vmatprep.subr.mxu0 0.0
    %5154 = vmatpush1.msra.mxu0 0.0
    %5155 = vmatprep.subr.mxu0 0.0
    %5156 = vmatpush1.msra.mxu0 0.0
    %5157 = vmatprep.subr.mxu0 0.0
    %5158 = vmatpush1.msra.mxu0 0.0
    %5159 = vmatprep.subr.mxu0 0.0
    %5160 = vmatpush1.msra.mxu0 0.0
    %5161 = vmatprep.subr.mxu0 0.0
    %5162 = vmatpush1.msra.mxu0 0.0
    %5163 = vmatprep.subr.mxu0 0.0
    %5164 = vmatpush1.msra.mxu0 0.0
    %5165 = vmatprep.subr.mxu0 0.0
    %5166 = vmatpush1.msra.mxu0 0.0
    %5167 = vmatprep.subr.mxu0 0.0
    %5168 = vmatpush1.msra.mxu0 %v512
    %5169 = vmatprep.subr.mxu0 0.0
    %5170 = vmatpush1.msra.mxu0 %v511
    %5171 = vmatprep.subr.mxu0 0.0
    %5172 = vmatpush1.msra.mxu0 %v510
    %5173 = vmatprep.subr.mxu0 0.0
    %5174 = vmatpush1.msra.mxu0 %v509
    %5175 = vmatprep.subr.mxu0 0.0
    %5176 = vmatpush2.msra.mxu0 0.0
    %5177 = vmatprep.subr.mxu0 0.0
    %5178 = vmatpush2.msra.mxu0 0.0
    %5179 = vmatprep.subr.mxu0 0.0
    %5180 = vmatpush2.msra.mxu0 0.0
    %5181 = vmatprep.subr.mxu0 0.0
    %5182 = vmatpush2.msra.mxu0 0.0
    %5183 = vmatprep.subr.mxu0 0.0
    %5184 = vmatpush2.msra.mxu0 0.0
    %5185 = vmatprep.subr.mxu0 0.0
    %5186 = vmatpush2.msra.mxu0 0.0
    %5187 = vmatprep.subr.mxu0 0.0
    %5188 = vmatpush2.msra.mxu0 0.0
    %5189 = vmatprep.subr.mxu0 0.0
    %5190 = vmatpush2.msra.mxu0 0.0
    %5191 = vmatprep.subr.mxu0 0.0
    %5192 = vmatpush2.msra.mxu0 0.0
    %5193 = vmatprep.subr.mxu0 0.0
    %5194 = vmatpush2.msra.mxu0 0.0
    %5195 = vmatprep.subr.mxu0 0.0
    %5196 = vmatpush2.msra.mxu0 0.0
    %5197 = vmatprep.subr.mxu0 0.0
    %5198 = vmatpush2.msra.mxu0 0.0
    %5199 = vmatprep.subr.mxu0 0.0
    %5200 = vmatpush2.msra.mxu0 0.0
    %5201 = vmatprep.subr.mxu0 0.0
    %5202 = vmatpush2.msra.mxu0 0.0
    %5203 = vmatprep.subr.mxu0 0.0
    %5204 = vmatpush2.msra.mxu0 0.0
    %5205 = vmatprep.subr.mxu0 0.0
    %5206 = vmatpush2.msra.mxu0 0.0
    %5207 = vmatprep.mubr.f32.mxu0 0.0
    %5208 = vmatmul.mubr.f32.gmra.mxu0 %v5138
    %v5209 = vpop.f32.mrf.mxu0
    %v5210 = vadd.f32 0.0, %v5209
    %v5211 = vpop.f32.mrf.mxu0
    %5212 = vmatprep.mubr.f32.mxu0 0.0
    %5213 = vmatmul.mubr.f32.gmra.mxu0 %v5141
    %v5214 = vpop.f32.mrf.mxu0
    %v5215 = vadd.f32 0.0, %v5214
    %v5216 = vpop.f32.mrf.mxu0
    %5217 = vdwg.mxu0
    %v5218 = vsel %vm1070, %v5210, -inf
    %5219 = vmax.xlane.f32.xlu0 %v5218
    %v5220 = vpop.xlane.xlu0 %5219
    %v5221 = vsel %vm1070, %v5215, -inf
    %5222 = vmax.xlane.f32.xlu0 %v5221
    %v5223 = vpop.xlane.xlu0 %5222
    %v5224 = vsub.f32 %v5210, %v5220
    %v5225 = vsub.f32 %v5215, %v5223
    %v5226 = vmul.f32 %v5224, 1.442695
    %v5227 = vpow.pop %v5226
    %v5228 = vmul.f32 %v5225, 1.442695
    %v5229 = vpow.pop %v5228
    %v5230 = vmul.f32 %v5227, %v5134
    %v5231 = vmul.f32 %v5229, %v5135
    %v5232 = vsel %vm495, %v5230, 0.0
    %5233 = vadd.xlane.f32.xlu0 %v5232
    %v5234 = vpop.xlane.xlu0 %5233
    %v5235 = vsel %vm495, %v5231, 0.0
    %5236 = vadd.xlane.f32.xlu0 %v5235
    %v5237 = vpop.xlane.xlu0 %5236
    %v5238 = vrcp.pop %v5234
    %v5239 = vrcp.pop %v5237
    %v5240 = vmul.f32 %v5230, %v5238
    %v5241 = vmul.f32 %v5231, %v5239
    %5244 = vrot.lane.b32.xlu0 %v5230, 112
    %v5245 = vpop.permute.xlu0 %5244
    %5246 = vrot.lane.b32.xlu0 %v5231, 112
    %v5247 = vpop.permute.xlu0 %5246
    %v5250 = vsel %vm495, %v5245, 0.0
    %5251 = vadd.xlane.f32.xlu0 %v5250
    %v5252 = vpop.xlane.xlu0 %5251
    %v5253 = vsel %vm495, %v5247, 0.0
    %5254 = vadd.xlane.f32.xlu0 %v5253
    %v5255 = vpop.xlane.xlu0 %5254
    %v5256 = vrcp.pop %v5252
    %v5257 = vrcp.pop %v5255
    %v5258 = vmul.f32 %v5230, %v5256
    %v5259 = vmul.f32 %v5231, %v5257
    %5260 = vrot.lane.b32.xlu0 %v5230, 96
    %v5261 = vpop.permute.xlu0 %5260
    %5262 = vrot.lane.b32.xlu0 %v5231, 96
    %v5263 = vpop.permute.xlu0 %5262
    %v5266 = vsel %vm495, %v5261, 0.0
    %5267 = vadd.xlane.f32.xlu0 %v5266
    %v5268 = vpop.xlane.xlu0 %5267
    %v5269 = vsel %vm495, %v5263, 0.0
    %5270 = vadd.xlane.f32.xlu0 %v5269
    %v5271 = vpop.xlane.xlu0 %5270
    %v5272 = vrcp.pop %v5268
    %v5273 = vrcp.pop %v5271
    %v5274 = vmul.f32 %v5230, %v5272
    %v5275 = vmul.f32 %v5231, %v5273
    %5276 = vrot.lane.b32.xlu0 %v5230, 80
    %v5277 = vpop.permute.xlu0 %5276
    %5278 = vrot.lane.b32.xlu0 %v5231, 80
    %v5279 = vpop.permute.xlu0 %5278
    %v5282 = vsel %vm495, %v5277, 0.0
    %5283 = vadd.xlane.f32.xlu0 %v5282
    %v5284 = vpop.xlane.xlu0 %5283
    %v5285 = vsel %vm495, %v5279, 0.0
    %5286 = vadd.xlane.f32.xlu0 %v5285
    %v5287 = vpop.xlane.xlu0 %5286
    %v5288 = vrcp.pop %v5284
    %v5289 = vrcp.pop %v5287
    %v5290 = vmul.f32 %v5230, %v5288
    %v5291 = vmul.f32 %v5231, %v5289
    %v5292 = vsel %vm495, %v5240, %v5258
    %v5293 = vsel %vm495, %v5241, %v5259
    %v5294 = vsel %vm500, %v5292, %v5274
    %v5295 = vsel %vm500, %v5293, %v5275
    %v5296 = vsel %vm315, %v5294, %v5290
    %v5297 = vsel %vm315, %v5295, %v5291
    %v5299 = vlaneseq
    %v5300 = vshrl.u32 %v5299, 7
    %v5301 = vsub.s32 0, %v5300
    %v5302 = vrot.slane %v5136, %v5301
    %v5305 = vsel %vm1070, %v5296, 0
    %v5308 = vsel %vm1070, %v5297, 0
    %5310 = vmatprep.subr.mxu0 0.0
    %5311 = vmatpush1.msra.mxu0 0.0
    %5312 = vmatprep.subr.mxu0 0.0
    %5313 = vmatpush1.msra.mxu0 0.0
    %5314 = vmatprep.subr.mxu0 0.0
    %5315 = vmatpush1.msra.mxu0 0.0
    %5316 = vmatprep.subr.mxu0 0.0
    %5317 = vmatpush1.msra.mxu0 0.0
    %5318 = vmatprep.subr.mxu0 0.0
    %5319 = vmatpush1.msra.mxu0 0.0
    %5320 = vmatprep.subr.mxu0 0.0
    %5321 = vmatpush1.msra.mxu0 0.0
    %5322 = vmatprep.subr.mxu0 0.0
    %5323 = vmatpush1.msra.mxu0 0.0
    %5324 = vmatprep.subr.mxu0 0.0
    %5325 = vmatpush1.msra.mxu0 0.0
    %5326 = vmatprep.subr.mxu0 0.0
    %5327 = vmatpush1.msra.mxu0 %v416
    %5328 = vmatprep.subr.mxu0 0.0
    %5329 = vmatpush1.msra.mxu0 %v414
    %5330 = vmatprep.subr.mxu0 0.0
    %5331 = vmatpush1.msra.mxu0 %v410
    %5332 = vmatprep.subr.mxu0 0.0
    %5333 = vmatpush1.msra.mxu0 %v408
    %5334 = vmatprep.subr.mxu0 0.0
    %5335 = vmatpush1.msra.mxu0 %v404
    %5336 = vmatprep.subr.mxu0 0.0
    %5337 = vmatpush1.msra.mxu0 %v402
    %5338 = vmatprep.subr.mxu0 0.0
    %5339 = vmatpush1.msra.mxu0 %v395
    %5340 = vmatprep.subr.mxu0 0.0
    %5341 = vmatpush1.msra.mxu0 %v389
    %5342 = vmatprep.subr.mxu0 0.0
    %5343 = vmatpush2.msra.mxu0 0.0
    %5344 = vmatprep.subr.mxu0 0.0
    %5345 = vmatpush2.msra.mxu0 0.0
    %5346 = vmatprep.subr.mxu0 0.0
    %5347 = vmatpush2.msra.mxu0 0.0
    %5348 = vmatprep.subr.mxu0 0.0
    %5349 = vmatpush2.msra.mxu0 0.0
    %5350 = vmatprep.subr.mxu0 0.0
    %5351 = vmatpush2.msra.mxu0 0.0
    %5352 = vmatprep.subr.mxu0 0.0
    %5353 = vmatpush2.msra.mxu0 0.0
    %5354 = vmatprep.subr.mxu0 0.0
    %5355 = vmatpush2.msra.mxu0 0.0
    %5356 = vmatprep.subr.mxu0 0.0
    %5357 = vmatpush2.msra.mxu0 0.0
    %5358 = vmatprep.subr.mxu0 0.0
    %5359 = vmatpush2.msra.mxu0 0.0
    %5360 = vmatprep.subr.mxu0 0.0
    %5361 = vmatpush2.msra.mxu0 0.0
    %5362 = vmatprep.subr.mxu0 0.0
    %5363 = vmatpush2.msra.mxu0 0.0
    %5364 = vmatprep.subr.mxu0 0.0
    %5365 = vmatpush2.msra.mxu0 0.0
    %5366 = vmatprep.subr.mxu0 0.0
    %5367 = vmatpush2.msra.mxu0 0.0
    %5368 = vmatprep.subr.mxu0 0.0
    %5369 = vmatpush2.msra.mxu0 0.0
    %5370 = vmatprep.subr.mxu0 0.0
    %5371 = vmatpush2.msra.mxu0 0.0
    %5372 = vmatprep.subr.mxu0 0.0
    %5373 = vmatpush2.msra.mxu0 0.0
    %5374 = vmatprep.mubr.f32.mxu0 0.0
    %5375 = vmatmul.mubr.f32.gmra.mxu0 %v5305
    %v5376 = vpop.f32.mrf.mxu0
    %v5377 = vadd.f32 %v5302, %v5376
    %v5378 = vpop.f32.mrf.mxu0
    %5379 = vmatprep.mubr.f32.mxu0 0.0
    %5380 = vmatmul.mubr.f32.gmra.mxu0 %v5308
    %v5381 = vpop.f32.mrf.mxu0
    %v5382 = vadd.f32 %v5302, %v5381
    %v5383 = vpop.f32.mrf.mxu0
    %5384 = vdwg.mxu0
    %v5385 = vld [vmem:[#allocation5] sm:$0xff]
    %v5386 = vld [vmem:[#allocation5 + $0x8] sm:$0xff]
    %v5387 = vld [vmem:[#allocation20] sm:$0x1]
    %5388 = vrot.lane.b32.xlu0 %v5126, 96
    %v5389 = vpop.permute.xlu0 %5388
    %5390 = vrot.lane.b32.xlu0 %v5131, 96
    %v5391 = vpop.permute.xlu0 %5390
    %v5392 = vsel %vm500, %v5389, 0
    %v5394 = vsel %vm500, %v5391, 0
    %5396 = vmatprep.subr.mxu0 0.0
    %5397 = vmatpush1.msra.mxu0 0.0
    %5398 = vmatprep.subr.mxu0 0.0
    %5399 = vmatpush1.msra.mxu0 0.0
    %5400 = vmatprep.subr.mxu0 0.0
    %5401 = vmatpush1.msra.mxu0 0.0
    %5402 = vmatprep.subr.mxu0 0.0
    %5403 = vmatpush1.msra.mxu0 0.0
    %5404 = vmatprep.subr.mxu0 0.0
    %5405 = vmatpush1.msra.mxu0 0.0
    %5406 = vmatprep.subr.mxu0 0.0
    %5407 = vmatpush1.msra.mxu0 0.0
    %5408 = vmatprep.subr.mxu0 0.0
    %5409 = vmatpush1.msra.mxu0 0.0
    %5410 = vmatprep.subr.mxu0 0.0
    %5411 = vmatpush1.msra.mxu0 0.0
    %5412 = vmatprep.subr.mxu0 0.0
    %5413 = vmatpush1.msra.mxu0 0.0
    %5414 = vmatprep.subr.mxu0 0.0
    %5415 = vmatpush1.msra.mxu0 0.0
    %5416 = vmatprep.subr.mxu0 0.0
    %5417 = vmatpush1.msra.mxu0 0.0
    %5418 = vmatprep.subr.mxu0 0.0
    %5419 = vmatpush1.msra.mxu0 0.0
    %5420 = vmatprep.subr.mxu0 0.0
    %5421 = vmatpush1.msra.mxu0 %v762
    %5422 = vmatprep.subr.mxu0 0.0
    %5423 = vmatpush1.msra.mxu0 %v761
    %5424 = vmatprep.subr.mxu0 0.0
    %5425 = vmatpush1.msra.mxu0 %v760
    %5426 = vmatprep.subr.mxu0 0.0
    %5427 = vmatpush1.msra.mxu0 %v759
    %5428 = vmatprep.subr.mxu0 0.0
    %5429 = vmatpush2.msra.mxu0 0.0
    %5430 = vmatprep.subr.mxu0 0.0
    %5431 = vmatpush2.msra.mxu0 0.0
    %5432 = vmatprep.subr.mxu0 0.0
    %5433 = vmatpush2.msra.mxu0 0.0
    %5434 = vmatprep.subr.mxu0 0.0
    %5435 = vmatpush2.msra.mxu0 0.0
    %5436 = vmatprep.subr.mxu0 0.0
    %5437 = vmatpush2.msra.mxu0 0.0
    %5438 = vmatprep.subr.mxu0 0.0
    %5439 = vmatpush2.msra.mxu0 0.0
    %5440 = vmatprep.subr.mxu0 0.0
    %5441 = vmatpush2.msra.mxu0 0.0
    %5442 = vmatprep.subr.mxu0 0.0
    %5443 = vmatpush2.msra.mxu0 0.0
    %5444 = vmatprep.subr.mxu0 0.0
    %5445 = vmatpush2.msra.mxu0 0.0
    %5446 = vmatprep.subr.mxu0 0.0
    %5447 = vmatpush2.msra.mxu0 0.0
    %5448 = vmatprep.subr.mxu0 0.0
    %5449 = vmatpush2.msra.mxu0 0.0
    %5450 = vmatprep.subr.mxu0 0.0
    %5451 = vmatpush2.msra.mxu0 0.0
    %5452 = vmatprep.subr.mxu0 0.0
    %5453 = vmatpush2.msra.mxu0 0.0
    %5454 = vmatprep.subr.mxu0 0.0
    %5455 = vmatpush2.msra.mxu0 0.0
    %5456 = vmatprep.subr.mxu0 0.0
    %5457 = vmatpush2.msra.mxu0 0.0
    %5458 = vmatprep.subr.mxu0 0.0
    %5459 = vmatpush2.msra.mxu0 0.0
    %5460 = vmatprep.mubr.f32.mxu0 0.0
    %5461 = vmatmul.mubr.f32.gmra.mxu0 %v5392
    %v5462 = vpop.f32.mrf.mxu0
    %v5463 = vadd.f32 0.0, %v5462
    %v5464 = vpop.f32.mrf.mxu0
    %5465 = vmatprep.mubr.f32.mxu0 0.0
    %5466 = vmatmul.mubr.f32.gmra.mxu0 %v5394
    %v5467 = vpop.f32.mrf.mxu0
    %v5468 = vadd.f32 0.0, %v5467
    %v5469 = vpop.f32.mrf.mxu0
    %5470 = vdwg.mxu0
    %v5471 = vsel %vm1669, %v5463, -inf
    %5472 = vmax.xlane.f32.xlu0 %v5471
    %v5473 = vpop.xlane.xlu0 %5472
    %v5474 = vsel %vm1669, %v5468, -inf
    %5475 = vmax.xlane.f32.xlu0 %v5474
    %v5476 = vpop.xlane.xlu0 %5475
    %v5477 = vsub.f32 %v5463, %v5473
    %v5478 = vsub.f32 %v5468, %v5476
    %v5479 = vmul.f32 %v5477, 1.442695
    %v5480 = vpow.pop %v5479
    %v5481 = vmul.f32 %v5478, 1.442695
    %v5482 = vpow.pop %v5481
    %v5483 = vmul.f32 %v5480, %v5385
    %v5484 = vmul.f32 %v5482, %v5386
    %v5485 = vsel %vm745, %v5483, 0.0
    %5486 = vadd.xlane.f32.xlu0 %v5485
    %v5487 = vpop.xlane.xlu0 %5486
    %v5488 = vsel %vm745, %v5484, 0.0
    %5489 = vadd.xlane.f32.xlu0 %v5488
    %v5490 = vpop.xlane.xlu0 %5489
    %v5491 = vrcp.pop %v5487
    %v5492 = vrcp.pop %v5490
    %v5493 = vmul.f32 %v5483, %v5491
    %v5494 = vmul.f32 %v5484, %v5492
    %5497 = vrot.lane.b32.xlu0 %v5483, 108
    %v5498 = vpop.permute.xlu0 %5497
    %5499 = vrot.lane.b32.xlu0 %v5484, 108
    %v5500 = vpop.permute.xlu0 %5499
    %v5503 = vsel %vm745, %v5498, 0.0
    %5504 = vadd.xlane.f32.xlu0 %v5503
    %v5505 = vpop.xlane.xlu0 %5504
    %v5506 = vsel %vm745, %v5500, 0.0
    %5507 = vadd.xlane.f32.xlu0 %v5506
    %v5508 = vpop.xlane.xlu0 %5507
    %v5509 = vrcp.pop %v5505
    %v5510 = vrcp.pop %v5508
    %v5511 = vmul.f32 %v5483, %v5509
    %v5512 = vmul.f32 %v5484, %v5510
    %5513 = vrot.lane.b32.xlu0 %v5483, 88
    %v5514 = vpop.permute.xlu0 %5513
    %5515 = vrot.lane.b32.xlu0 %v5484, 88
    %v5516 = vpop.permute.xlu0 %5515
    %v5519 = vsel %vm745, %v5514, 0.0
    %5520 = vadd.xlane.f32.xlu0 %v5519
    %v5521 = vpop.xlane.xlu0 %5520
    %v5522 = vsel %vm745, %v5516, 0.0
    %5523 = vadd.xlane.f32.xlu0 %v5522
    %v5524 = vpop.xlane.xlu0 %5523
    %v5525 = vrcp.pop %v5521
    %v5526 = vrcp.pop %v5524
    %v5527 = vmul.f32 %v5483, %v5525
    %v5528 = vmul.f32 %v5484, %v5526
    %5529 = vrot.lane.b32.xlu0 %v5483, 68
    %v5530 = vpop.permute.xlu0 %5529
    %5531 = vrot.lane.b32.xlu0 %v5484, 68
    %v5532 = vpop.permute.xlu0 %5531
    %v5535 = vsel %vm745, %v5530, 0.0
    %5536 = vadd.xlane.f32.xlu0 %v5535
    %v5537 = vpop.xlane.xlu0 %5536
    %v5538 = vsel %vm745, %v5532, 0.0
    %5539 = vadd.xlane.f32.xlu0 %v5538
    %v5540 = vpop.xlane.xlu0 %5539
    %v5541 = vrcp.pop %v5537
    %v5542 = vrcp.pop %v5540
    %v5543 = vmul.f32 %v5483, %v5541
    %v5544 = vmul.f32 %v5484, %v5542
    %v5545 = vsel %vm745, %v5493, %v5511
    %v5546 = vsel %vm745, %v5494, %v5512
    %v5547 = vsel %vm538, %v5545, %v5527
    %v5548 = vsel %vm538, %v5546, %v5528
    %v5549 = vsel %vm754, %v5547, %v5543
    %v5550 = vsel %vm754, %v5548, %v5544
    %v5552 = vlaneseq
    %v5553 = vshrl.u32 %v5552, 7
    %v5554 = vsub.s32 0, %v5553
    %v5555 = vrot.slane %v5387, %v5554
    %v5558 = vsel %vm1669, %v5549, 0
    %v5561 = vsel %vm1669, %v5550, 0
    %5563 = vmatprep.subr.mxu0 0.0
    %5564 = vmatpush1.msra.mxu0 0.0
    %5565 = vmatprep.subr.mxu0 0.0
    %5566 = vmatpush1.msra.mxu0 0.0
    %5567 = vmatprep.subr.mxu0 0.0
    %5568 = vmatpush1.msra.mxu0 0.0
    %5569 = vmatprep.subr.mxu0 0.0
    %5570 = vmatpush1.msra.mxu0 0.0
    %5571 = vmatprep.subr.mxu0 0.0
    %5572 = vmatpush1.msra.mxu0 0.0
    %5573 = vmatprep.subr.mxu0 0.0
    %5574 = vmatpush1.msra.mxu0 0.0
    %5575 = vmatprep.subr.mxu0 0.0
    %5576 = vmatpush1.msra.mxu0 %v663
    %5577 = vmatprep.subr.mxu0 0.0
    %5578 = vmatpush1.msra.mxu0 %v661
    %5579 = vmatprep.subr.mxu0 0.0
    %5580 = vmatpush1.msra.mxu0 %v668
    %5581 = vmatprep.subr.mxu0 0.0
    %5582 = vmatpush1.msra.mxu0 %v652
    %5583 = vmatprep.subr.mxu0 0.0
    %5584 = vmatpush1.msra.mxu0 %v650
    %5585 = vmatprep.subr.mxu0 0.0
    %5586 = vmatpush1.msra.mxu0 %v645
    %5587 = vmatprep.subr.mxu0 0.0
    %5588 = vmatpush1.msra.mxu0 %v643
    %5589 = vmatprep.subr.mxu0 0.0
    %5590 = vmatpush1.msra.mxu0 %v667
    %5591 = vmatprep.subr.mxu0 0.0
    %5592 = vmatpush1.msra.mxu0 %v621
    %5593 = vmatprep.subr.mxu0 0.0
    %5594 = vmatpush1.msra.mxu0 %v615
    %5595 = vmatprep.subr.mxu0 0.0
    %5596 = vmatpush2.msra.mxu0 0.0
    %5597 = vmatprep.subr.mxu0 0.0
    %5598 = vmatpush2.msra.mxu0 0.0
    %5599 = vmatprep.subr.mxu0 0.0
    %5600 = vmatpush2.msra.mxu0 0.0
    %5601 = vmatprep.subr.mxu0 0.0
    %5602 = vmatpush2.msra.mxu0 0.0
    %5603 = vmatprep.subr.mxu0 0.0
    %5604 = vmatpush2.msra.mxu0 0.0
    %5605 = vmatprep.subr.mxu0 0.0
    %5606 = vmatpush2.msra.mxu0 0.0
    %5607 = vmatprep.subr.mxu0 0.0
    %5608 = vmatpush2.msra.mxu0 0.0
    %5609 = vmatprep.subr.mxu0 0.0
    %5610 = vmatpush2.msra.mxu0 0.0
    %5611 = vmatprep.subr.mxu0 0.0
    %5612 = vmatpush2.msra.mxu0 0.0
    %5613 = vmatprep.subr.mxu0 0.0
    %5614 = vmatpush2.msra.mxu0 0.0
    %5615 = vmatprep.subr.mxu0 0.0
    %5616 = vmatpush2.msra.mxu0 0.0
    %5617 = vmatprep.subr.mxu0 0.0
    %5618 = vmatpush2.msra.mxu0 0.0
    %5619 = vmatprep.subr.mxu0 0.0
    %5620 = vmatpush2.msra.mxu0 0.0
    %5621 = vmatprep.subr.mxu0 0.0
    %5622 = vmatpush2.msra.mxu0 0.0
    %5623 = vmatprep.subr.mxu0 0.0
    %5624 = vmatpush2.msra.mxu0 0.0
    %5625 = vmatprep.subr.mxu0 0.0
    %5626 = vmatpush2.msra.mxu0 0.0
    %5627 = vmatprep.mubr.f32.mxu0 0.0
    %5628 = vmatmul.mubr.f32.gmra.mxu0 %v5558
    %v5629 = vpop.f32.mrf.mxu0
    %v5630 = vadd.f32 %v5555, %v5629
    %v5631 = vpop.f32.mrf.mxu0
    %5632 = vmatprep.mubr.f32.mxu0 0.0
    %5633 = vmatmul.mubr.f32.gmra.mxu0 %v5561
    %v5634 = vpop.f32.mrf.mxu0
    %v5635 = vadd.f32 %v5555, %v5634
    %v5636 = vpop.f32.mrf.mxu0
    %5637 = vdwg.mxu0
    %v5638 = vadd.f32 %v5040, %v5377
    %v5639 = vadd.f32 %v5041, %v5382
    %v5640 = vadd.f32 %v5638, %v5630
    %v5641 = vadd.f32 %v5639, %v5635
    %v5642 = vld [vmem:[#allocation22] sm:$0xff]
    %v5643 = vld [vmem:[#allocation22 + $0x8] sm:$0xff]
    %v5644 = vld [vmem:[#allocation22 + $0x10] sm:$0xff]
    %v5645 = vld [vmem:[#allocation22 + $0x18] sm:$0xff]
    %v5646 = vld [vmem:[#allocation23] sm:$0x1]
    %v5648 = vlaneseq
    %v5649 = vshrl.u32 %v5648, 7
    %v5650 = vsub.s32 0, %v5649
    %v5651 = vrot.slane %v5646, %v5650
    %v5654 = vsel %vm500, %v5640, 0
    %v5657 = vsel %vm500, %v5641, 0
    %5659 = vmatprep.subr.mxu0 0.0
    %5660 = vmatpush1.msra.mxu0 0.0
    %5661 = vmatprep.subr.mxu0 0.0
    %5662 = vmatpush1.msra.mxu0 0.0
    %5663 = vmatprep.subr.mxu0 0.0
    %5664 = vmatpush1.msra.mxu0 0.0
    %5665 = vmatprep.subr.mxu0 0.0
    %5666 = vmatpush1.msra.mxu0 0.0
    %5667 = vmatprep.subr.mxu0 0.0
    %5668 = vmatpush1.msra.mxu0 0.0
    %5669 = vmatprep.subr.mxu0 0.0
    %5670 = vmatpush1.msra.mxu0 0.0
    %5671 = vmatprep.subr.mxu0 0.0
    %5672 = vmatpush1.msra.mxu0 0.0
    %5673 = vmatprep.subr.mxu0 0.0
    %5674 = vmatpush1.msra.mxu0 0.0
    %5675 = vmatprep.subr.mxu0 0.0
    %5676 = vmatpush1.msra.mxu0 0.0
    %5677 = vmatprep.subr.mxu0 0.0
    %5678 = vmatpush1.msra.mxu0 0.0
    %5679 = vmatprep.subr.mxu0 0.0
    %5680 = vmatpush1.msra.mxu0 0.0
    %5681 = vmatprep.subr.mxu0 0.0
    %5682 = vmatpush1.msra.mxu0 0.0
    %5683 = vmatprep.subr.mxu0 0.0
    %5684 = vmatpush1.msra.mxu0 %v5645
    %5685 = vmatprep.subr.mxu0 0.0
    %5686 = vmatpush1.msra.mxu0 %v5644
    %5687 = vmatprep.subr.mxu0 0.0
    %5688 = vmatpush1.msra.mxu0 %v5643
    %5689 = vmatprep.subr.mxu0 0.0
    %5690 = vmatpush1.msra.mxu0 %v5642
    %5691 = vmatprep.subr.mxu0 0.0
    %5692 = vmatpush2.msra.mxu0 0.0
    %5693 = vmatprep.subr.mxu0 0.0
    %5694 = vmatpush2.msra.mxu0 0.0
    %5695 = vmatprep.subr.mxu0 0.0
    %5696 = vmatpush2.msra.mxu0 0.0
    %5697 = vmatprep.subr.mxu0 0.0
    %5698 = vmatpush2.msra.mxu0 0.0
    %5699 = vmatprep.subr.mxu0 0.0
    %5700 = vmatpush2.msra.mxu0 0.0
    %5701 = vmatprep.subr.mxu0 0.0
    %5702 = vmatpush2.msra.mxu0 0.0
    %5703 = vmatprep.subr.mxu0 0.0
    %5704 = vmatpush2.msra.mxu0 0.0
    %5705 = vmatprep.subr.mxu0 0.0
    %5706 = vmatpush2.msra.mxu0 0.0
    %5707 = vmatprep.subr.mxu0 0.0
    %5708 = vmatpush2.msra.mxu0 0.0
    %5709 = vmatprep.subr.mxu0 0.0
    %5710 = vmatpush2.msra.mxu0 0.0
    %5711 = vmatprep.subr.mxu0 0.0
    %5712 = vmatpush2.msra.mxu0 0.0
    %5713 = vmatprep.subr.mxu0 0.0
    %5714 = vmatpush2.msra.mxu0 0.0
    %5715 = vmatprep.subr.mxu0 0.0
    %5716 = vmatpush2.msra.mxu0 0.0
    %5717 = vmatprep.subr.mxu0 0.0
    %5718 = vmatpush2.msra.mxu0 0.0
    %5719 = vmatprep.subr.mxu0 0.0
    %5720 = vmatpush2.msra.mxu0 0.0
    %5721 = vmatprep.subr.mxu0 0.0
    %5722 = vmatpush2.msra.mxu0 0.0
    %5723 = vmatprep.mubr.f32.mxu0 0.0
    %5724 = vmatmul.mubr.f32.gmra.mxu0 %v5654
    %v5725 = vpop.f32.mrf.mxu0
    %v5726 = vadd.f32 %v5651, %v5725
    %v5727 = vpop.f32.mrf.mxu0
    %5728 = vmatprep.mubr.f32.mxu0 0.0
    %5729 = vmatmul.mubr.f32.gmra.mxu0 %v5657
    %v5730 = vpop.f32.mrf.mxu0
    %v5731 = vadd.f32 %v5651, %v5730
    %v5732 = vpop.f32.mrf.mxu0
    %5733 = vdwg.mxu0
    %v5734 = vmax.f32 %v5726, 0.0
    %v5735 = vmax.f32 %v5731, 0.0
    %v5736 = vld [vmem:[#allocation25] sm:$0xff]
    %v5737 = vld [vmem:[#allocation25 + $0x8] sm:$0xff]
    %v5738 = vld [vmem:[#allocation25 + $0x10] sm:$0xff]
    %v5739 = vld [vmem:[#allocation25 + $0x18] sm:$0xff]
    %v5741 = vsel %vm500, %v5734, 0
    %v5744 = vsel %vm500, %v5735, 0
    %5746 = vmatprep.subr.mxu0 0.0
    %5747 = vmatpush1.msra.mxu0 0.0
    %5748 = vmatprep.subr.mxu0 0.0
    %5749 = vmatpush1.msra.mxu0 0.0
    %5750 = vmatprep.subr.mxu0 0.0
    %5751 = vmatpush1.msra.mxu0 0.0
    %5752 = vmatprep.subr.mxu0 0.0
    %5753 = vmatpush1.msra.mxu0 0.0
    %5754 = vmatprep.subr.mxu0 0.0
    %5755 = vmatpush1.msra.mxu0 0.0
    %5756 = vmatprep.subr.mxu0 0.0
    %5757 = vmatpush1.msra.mxu0 0.0
    %5758 = vmatprep.subr.mxu0 0.0
    %5759 = vmatpush1.msra.mxu0 0.0
    %5760 = vmatprep.subr.mxu0 0.0
    %5761 = vmatpush1.msra.mxu0 0.0
    %5762 = vmatprep.subr.mxu0 0.0
    %5763 = vmatpush1.msra.mxu0 0.0
    %5764 = vmatprep.subr.mxu0 0.0
    %5765 = vmatpush1.msra.mxu0 0.0
    %5766 = vmatprep.subr.mxu0 0.0
    %5767 = vmatpush1.msra.mxu0 0.0
    %5768 = vmatprep.subr.mxu0 0.0
    %5769 = vmatpush1.msra.mxu0 0.0
    %5770 = vmatprep.subr.mxu0 0.0
    %5771 = vmatpush1.msra.mxu0 %v5739
    %5772 = vmatprep.subr.mxu0 0.0
    %5773 = vmatpush1.msra.mxu0 %v5738
    %5774 = vmatprep.subr.mxu0 0.0
    %5775 = vmatpush1.msra.mxu0 %v5737
    %5776 = vmatprep.subr.mxu0 0.0
    %5777 = vmatpush1.msra.mxu0 %v5736
    %5778 = vmatprep.subr.mxu0 0.0
    %5779 = vmatpush2.msra.mxu0 0.0
    %5780 = vmatprep.subr.mxu0 0.0
    %5781 = vmatpush2.msra.mxu0 0.0
    %5782 = vmatprep.subr.mxu0 0.0
    %5783 = vmatpush2.msra.mxu0 0.0
    %5784 = vmatprep.subr.mxu0 0.0
    %5785 = vmatpush2.msra.mxu0 0.0
    %5786 = vmatprep.subr.mxu0 0.0
    %5787 = vmatpush2.msra.mxu0 0.0
    %5788 = vmatprep.subr.mxu0 0.0
    %5789 = vmatpush2.msra.mxu0 0.0
    %5790 = vmatprep.subr.mxu0 0.0
    %5791 = vmatpush2.msra.mxu0 0.0
    %5792 = vmatprep.subr.mxu0 0.0
    %5793 = vmatpush2.msra.mxu0 0.0
    %5794 = vmatprep.subr.mxu0 0.0
    %5795 = vmatpush2.msra.mxu0 0.0
    %5796 = vmatprep.subr.mxu0 0.0
    %5797 = vmatpush2.msra.mxu0 0.0
    %5798 = vmatprep.subr.mxu0 0.0
    %5799 = vmatpush2.msra.mxu0 0.0
    %5800 = vmatprep.subr.mxu0 0.0
    %5801 = vmatpush2.msra.mxu0 0.0
    %5802 = vmatprep.subr.mxu0 0.0
    %5803 = vmatpush2.msra.mxu0 0.0
    %5804 = vmatprep.subr.mxu0 0.0
    %5805 = vmatpush2.msra.mxu0 0.0
    %5806 = vmatprep.subr.mxu0 0.0
    %5807 = vmatpush2.msra.mxu0 0.0
    %5808 = vmatprep.subr.mxu0 0.0
    %5809 = vmatpush2.msra.mxu0 0.0
    %5810 = vmatprep.mubr.f32.mxu0 0.0
    %5811 = vmatmul.mubr.f32.gmra.mxu0 %v5741
    %v5812 = vpop.f32.mrf.mxu0
    %v5813 = vadd.f32 0.0, %v5812
    %v5814 = vpop.f32.mrf.mxu0
    %5815 = vmatprep.mubr.f32.mxu0 0.0
    %5816 = vmatmul.mubr.f32.gmra.mxu0 %v5744
    %v5817 = vpop.f32.mrf.mxu0
    %v5818 = vadd.f32 0.0, %v5817
    %v5819 = vpop.f32.mrf.mxu0
    %5820 = vdwg.mxu0
    %v5821 = vadd.f32 %v5640, %v5813
    %v5822 = vadd.f32 %v5641, %v5818
    %v5823 = vld [vmem:[#allocation26] sm:$0x1]
    %v5825 = vlaneseq
    %v5826 = vshrl.u32 %v5825, 7
    %v5827 = vsub.s32 0, %v5826
    %v5828 = vrot.slane %v5823, %v5827
    %v5830 = vadd.f32 %v5821, %v5828
    %v5831 = vadd.f32 %v5822, %v5828
    %s5832 = scalar_lea.vmem %s28, 64
    %5833 = vst.msk [vmem:[%s5832] sm:$0xff] %vm500, %v5830
    %5834 = vst.msk [vmem:[%s5832 + $0x8] sm:$0xff] %vm500, %v5831
    %v5835 = vld [vmem:[#allocation7] sm:$0xff]
    %v5836 = vld [vmem:[#allocation7 + $0x8] sm:$0xff]
    %v5837 = vld [vmem:[#allocation7 + $0x10] sm:$0xff]
    %v5838 = vld [vmem:[#allocation7 + $0x18] sm:$0xff]
    %v5839 = vld [vmem:[#allocation7 + $0x20] sm:$0xff]
    %v5840 = vld [vmem:[#allocation7 + $0x28] sm:$0xff]
    %v5841 = vld [vmem:[#allocation7 + $0x30] sm:$0xff]
    %v5842 = vld [vmem:[#allocation7 + $0x38] sm:$0xff]
    %v5843 = vld [vmem:[#allocation8] sm:$0x3]
    %v5845 = vlaneseq
    %v5846 = vshrl.u32 %v5845, 7
    %v5847 = vsub.s32 0, %v5846
    %v5848 = vrot.slane %v5843, %v5847
    %v5849 = vlaneseq
    %v5850 = vshrl.u32 %v5849, 7
    %v5851 = vsub.s32 1, %v5850
    %v5852 = vrot.slane %v5843, %v5851
    %v5856 = vsel %vm500, %v5830, 0
    %v5859 = vsel %vm500, %v5831, 0
    %5861 = vmatprep.subr.mxu0 0.0
    %5862 = vmatpush1.msra.mxu0 0.0
    %5863 = vmatprep.subr.mxu0 0.0
    %5864 = vmatpush1.msra.mxu0 0.0
    %5865 = vmatprep.subr.mxu0 0.0
    %5866 = vmatpush1.msra.mxu0 0.0
    %5867 = vmatprep.subr.mxu0 0.0
    %5868 = vmatpush1.msra.mxu0 0.0
    %5869 = vmatprep.subr.mxu0 0.0
    %5870 = vmatpush1.msra.mxu0 0.0
    %5871 = vmatprep.subr.mxu0 0.0
    %5872 = vmatpush1.msra.mxu0 0.0
    %5873 = vmatprep.subr.mxu0 0.0
    %5874 = vmatpush1.msra.mxu0 0.0
    %5875 = vmatprep.subr.mxu0 0.0
    %5876 = vmatpush1.msra.mxu0 0.0
    %5877 = vmatprep.subr.mxu0 0.0
    %5878 = vmatpush1.msra.mxu0 0.0
    %5879 = vmatprep.subr.mxu0 0.0
    %5880 = vmatpush1.msra.mxu0 0.0
    %5881 = vmatprep.subr.mxu0 0.0
    %5882 = vmatpush1.msra.mxu0 0.0
    %5883 = vmatprep.subr.mxu0 0.0
    %5884 = vmatpush1.msra.mxu0 0.0
    %5885 = vmatprep.subr.mxu0 %v5842
    %5886 = vmatpush1.msra.mxu0 %v5841
    %5887 = vmatprep.subr.mxu0 %v5840
    %5888 = vmatpush1.msra.mxu0 %v5839
    %5889 = vmatprep.subr.mxu0 %v5838
    %5890 = vmatpush1.msra.mxu0 %v5837
    %5891 = vmatprep.subr.mxu0 %v5836
    %5892 = vmatpush1.msra.mxu0 %v5835
    %5893 = vmatprep.subr.mxu0 0.0
    %5894 = vmatpush2.msra.mxu0 0.0
    %5895 = vmatprep.subr.mxu0 0.0
    %5896 = vmatpush2.msra.mxu0 0.0
    %5897 = vmatprep.subr.mxu0 0.0
    %5898 = vmatpush2.msra.mxu0 0.0
    %5899 = vmatprep.subr.mxu0 0.0
    %5900 = vmatpush2.msra.mxu0 0.0
    %5901 = vmatprep.subr.mxu0 0.0
    %5902 = vmatpush2.msra.mxu0 0.0
    %5903 = vmatprep.subr.mxu0 0.0
    %5904 = vmatpush2.msra.mxu0 0.0
    %5905 = vmatprep.subr.mxu0 0.0
    %5906 = vmatpush2.msra.mxu0 0.0
    %5907 = vmatprep.subr.mxu0 0.0
    %5908 = vmatpush2.msra.mxu0 0.0
    %5909 = vmatprep.subr.mxu0 0.0
    %5910 = vmatpush2.msra.mxu0 0.0
    %5911 = vmatprep.subr.mxu0 0.0
    %5912 = vmatpush2.msra.mxu0 0.0
    %5913 = vmatprep.subr.mxu0 0.0
    %5914 = vmatpush2.msra.mxu0 0.0
    %5915 = vmatprep.subr.mxu0 0.0
    %5916 = vmatpush2.msra.mxu0 0.0
    %5917 = vmatprep.subr.mxu0 0.0
    %5918 = vmatpush2.msra.mxu0 0.0
    %5919 = vmatprep.subr.mxu0 0.0
    %5920 = vmatpush2.msra.mxu0 0.0
    %5921 = vmatprep.subr.mxu0 0.0
    %5922 = vmatpush2.msra.mxu0 0.0
    %5923 = vmatprep.subr.mxu0 0.0
    %5924 = vmatpush2.msra.mxu0 0.0
    %5925 = vmatprep.mubr.f32.mxu0 0.0
    %5926 = vmatmul.mubr.f32.gmra.mxu0 %v5856
    %v5927 = vpop.f32.mrf.mxu0
    %v5928 = vadd.f32 %v5848, %v5927
    %v5929 = vpop.f32.mrf.mxu0
    %v5930 = vadd.f32 %v5852, %v5929
    %5931 = vmatprep.mubr.f32.mxu0 0.0
    %5932 = vmatmul.mubr.f32.gmra.mxu0 %v5859
    %v5933 = vpop.f32.mrf.mxu0
    %v5934 = vadd.f32 %v5848, %v5933
    %v5935 = vpop.f32.mrf.mxu0
    %v5936 = vadd.f32 %v5852, %v5935
    %5937 = vdwg.mxu0
    %5940 = vrot.lane.b32.xlu0 %v5928, 96
    %v5941 = vpop.permute.xlu0 %5940
    %5942 = vrot.lane.b32.xlu0 %v5934, 96
    %v5943 = vpop.permute.xlu0 %5942
    %5946 = vrot.lane.b32.xlu0 %v5928, 64
    %v5947 = vpop.permute.xlu0 %5946
    %5948 = vrot.lane.b32.xlu0 %v5934, 64
    %v5949 = vpop.permute.xlu0 %5948
    %5952 = vrot.lane.b32.xlu0 %v5928, 32
    %v5953 = vpop.permute.xlu0 %5952
    %5954 = vrot.lane.b32.xlu0 %v5934, 32
    %v5955 = vpop.permute.xlu0 %5954
    %v5958 = vld [vmem:[%s6] sm:$0xff]
    %v5959 = vld [vmem:[%s6 + $0x8] sm:$0xff]
    %v5960 = vld [vmem:[%s6 + $0x10] sm:$0xff]
    %v5961 = vld [vmem:[%s6 + $0x18] sm:$0xff]
    %5964 = vrot.lane.b32.xlu0 %v5930, 96
    %v5965 = vpop.permute.xlu0 %5964
    %5966 = vrot.lane.b32.xlu0 %v5936, 96
    %v5967 = vpop.permute.xlu0 %5966
    %5970 = vxpose.xlu0.b32.start [1/16] %v5965, 128
    %5971 = vxpose.xlu0.b32.cont [2/16] %v5967, 128
    %5972 = vxpose.xlu0.b32.cont [3/16] 0.0, 128
    %5973 = vxpose.xlu0.b32.cont [4/16] 0.0, 128
    %5974 = vxpose.xlu0.b32.cont [5/16] 0.0, 128
    %5975 = vxpose.xlu0.b32.cont [6/16] 0.0, 128
    %5976 = vxpose.xlu0.b32.cont [7/16] 0.0, 128
    %5977 = vxpose.xlu0.b32.cont [8/16] 0.0, 128
    %5978 = vxpose.xlu0.b32.cont [9/16] 0.0, 128
    %5979 = vxpose.xlu0.b32.cont [10/16] 0.0, 128
    %5980 = vxpose.xlu0.b32.cont [11/16] 0.0, 128
    %5981 = vxpose.xlu0.b32.cont [12/16] 0.0, 128
    %5982 = vxpose.xlu0.b32.cont [13/16] 0.0, 128
    %5983 = vxpose.xlu0.b32.cont [14/16] 0.0, 128
    %5984 = vxpose.xlu0.b32.cont [15/16] 0.0, 128
    %5985 = vxpose.xlu0.b32.end [16/16] 0.0, 128
    %v5986 = vpop.trf.xlu0
    %v5987 = vpop.trf.xlu0
    %v5988 = vpop.trf.xlu0
    %v5989 = vpop.trf.xlu0
    %v5990 = vpop.trf.xlu0
    %v5991 = vpop.trf.xlu0
    %v5992 = vpop.trf.xlu0
    %v5993 = vpop.trf.xlu0
    %v5994 = vpop.trf.xlu0
    %v5995 = vpop.trf.xlu0
    %v5996 = vpop.trf.xlu0
    %v5997 = vpop.trf.xlu0
    %v5998 = vpop.trf.xlu0
    %v5999 = vpop.trf.xlu0
    %v6000 = vpop.trf.xlu0
    %v6001 = vpop.trf.xlu0
    %6006 = vrot.lane.b32.xlu0 %v5986, 16
    %v6007 = vpop.permute.xlu0 %6006
    %6008 = vrot.lane.b32.xlu0 %v5987, 16
    %v6009 = vpop.permute.xlu0 %6008
    %6010 = vrot.lane.b32.xlu0 %v5988, 16
    %v6011 = vpop.permute.xlu0 %6010
    %6012 = vrot.lane.b32.xlu0 %v5989, 16
    %v6013 = vpop.permute.xlu0 %6012
    %6018 = vrot.lane.b32.xlu0 %v5986, 32
    %v6019 = vpop.permute.xlu0 %6018
    %6020 = vrot.lane.b32.xlu0 %v5987, 32
    %v6021 = vpop.permute.xlu0 %6020
    %6022 = vrot.lane.b32.xlu0 %v5988, 32
    %v6023 = vpop.permute.xlu0 %6022
    %6024 = vrot.lane.b32.xlu0 %v5989, 32
    %v6025 = vpop.permute.xlu0 %6024
    %6030 = vrot.lane.b32.xlu0 %v5986, 48
    %v6031 = vpop.permute.xlu0 %6030
    %6032 = vrot.lane.b32.xlu0 %v5987, 48
    %v6033 = vpop.permute.xlu0 %6032
    %6034 = vrot.lane.b32.xlu0 %v5988, 48
    %v6035 = vpop.permute.xlu0 %6034
    %6036 = vrot.lane.b32.xlu0 %v5989, 48
    %v6037 = vpop.permute.xlu0 %6036
    %v6042 = vsel %vm495, %v5986, %v6007
    %v6043 = vsel %vm495, %v5987, %v6009
    %v6044 = vsel %vm495, %v5988, %v6011
    %v6045 = vsel %vm495, %v5989, %v6013
    %v6046 = vsel %vm500, %v6042, %v6019
    %v6047 = vsel %vm500, %v6043, %v6021
    %v6048 = vsel %vm500, %v6044, %v6023
    %v6049 = vsel %vm500, %v6045, %v6025
    %v6050 = vsel %vm315, %v6046, %v6031
    %v6051 = vsel %vm315, %v6047, %v6033
    %v6052 = vsel %vm315, %v6048, %v6035
    %v6053 = vsel %vm315, %v6049, %v6037
    %v6054 = vmul.f32 %v6050, %v5958
    %v6055 = vmul.f32 %v6051, %v5959
    %v6056 = vmul.f32 %v6052, %v5960
    %v6057 = vmul.f32 %v6053, %v5961
    %v6058 = vld [vmem:[%s3] sm:$0xff]
    %v6059 = vld [vmem:[%s3 + $0x8] sm:$0xff]
    %v6060 = vld [vmem:[#allocation10] sm:$0x1]
    %v6061 = vsel %vm500, %v5930, 0
    %v6063 = vsel %vm500, %v5936, 0
    %6065 = vmatprep.subr.mxu0 0.0
    %6066 = vmatpush1.msra.mxu0 0.0
    %6067 = vmatprep.subr.mxu0 0.0
    %6068 = vmatpush1.msra.mxu0 0.0
    %6069 = vmatprep.subr.mxu0 0.0
    %6070 = vmatpush1.msra.mxu0 0.0
    %6071 = vmatprep.subr.mxu0 0.0
    %6072 = vmatpush1.msra.mxu0 0.0
    %6073 = vmatprep.subr.mxu0 0.0
    %6074 = vmatpush1.msra.mxu0 0.0
    %6075 = vmatprep.subr.mxu0 0.0
    %6076 = vmatpush1.msra.mxu0 0.0
    %6077 = vmatprep.subr.mxu0 0.0
    %6078 = vmatpush1.msra.mxu0 0.0
    %6079 = vmatprep.subr.mxu0 0.0
    %6080 = vmatpush1.msra.mxu0 0.0
    %6081 = vmatprep.subr.mxu0 0.0
    %6082 = vmatpush1.msra.mxu0 0.0
    %6083 = vmatprep.subr.mxu0 0.0
    %6084 = vmatpush1.msra.mxu0 0.0
    %6085 = vmatprep.subr.mxu0 0.0
    %6086 = vmatpush1.msra.mxu0 0.0
    %6087 = vmatprep.subr.mxu0 0.0
    %6088 = vmatpush1.msra.mxu0 0.0
    %6089 = vmatprep.subr.mxu0 0.0
    %6090 = vmatpush1.msra.mxu0 %v6057
    %6091 = vmatprep.subr.mxu0 0.0
    %6092 = vmatpush1.msra.mxu0 %v6056
    %6093 = vmatprep.subr.mxu0 0.0
    %6094 = vmatpush1.msra.mxu0 %v6055
    %6095 = vmatprep.subr.mxu0 0.0
    %6096 = vmatpush1.msra.mxu0 %v6054
    %6097 = vmatprep.subr.mxu0 0.0
    %6098 = vmatpush2.msra.mxu0 0.0
    %6099 = vmatprep.subr.mxu0 0.0
    %6100 = vmatpush2.msra.mxu0 0.0
    %6101 = vmatprep.subr.mxu0 0.0
    %6102 = vmatpush2.msra.mxu0 0.0
    %6103 = vmatprep.subr.mxu0 0.0
    %6104 = vmatpush2.msra.mxu0 0.0
    %6105 = vmatprep.subr.mxu0 0.0
    %6106 = vmatpush2.msra.mxu0 0.0
    %6107 = vmatprep.subr.mxu0 0.0
    %6108 = vmatpush2.msra.mxu0 0.0
    %6109 = vmatprep.subr.mxu0 0.0
    %6110 = vmatpush2.msra.mxu0 0.0
    %6111 = vmatprep.subr.mxu0 0.0
    %6112 = vmatpush2.msra.mxu0 0.0
    %6113 = vmatprep.subr.mxu0 0.0
    %6114 = vmatpush2.msra.mxu0 0.0
    %6115 = vmatprep.subr.mxu0 0.0
    %6116 = vmatpush2.msra.mxu0 0.0
    %6117 = vmatprep.subr.mxu0 0.0
    %6118 = vmatpush2.msra.mxu0 0.0
    %6119 = vmatprep.subr.mxu0 0.0
    %6120 = vmatpush2.msra.mxu0 0.0
    %6121 = vmatprep.subr.mxu0 0.0
    %6122 = vmatpush2.msra.mxu0 0.0
    %6123 = vmatprep.subr.mxu0 0.0
    %6124 = vmatpush2.msra.mxu0 0.0
    %6125 = vmatprep.subr.mxu0 0.0
    %6126 = vmatpush2.msra.mxu0 0.0
    %6127 = vmatprep.subr.mxu0 0.0
    %6128 = vmatpush2.msra.mxu0 0.0
    %6129 = vmatprep.mubr.f32.mxu0 0.0
    %6130 = vmatmul.mubr.f32.gmra.mxu0 %v6061
    %v6131 = vpop.f32.mrf.mxu0
    %v6132 = vadd.f32 0.0, %v6131
    %v6133 = vpop.f32.mrf.mxu0
    %6134 = vmatprep.mubr.f32.mxu0 0.0
    %6135 = vmatmul.mubr.f32.gmra.mxu0 %v6063
    %v6136 = vpop.f32.mrf.mxu0
    %v6137 = vadd.f32 0.0, %v6136
    %v6138 = vpop.f32.mrf.mxu0
    %6139 = vdwg.mxu0
    %v6140 = vsel %vm1070, %v6132, -inf
    %6141 = vmax.xlane.f32.xlu0 %v6140
    %v6142 = vpop.xlane.xlu0 %6141
    %v6143 = vsel %vm1070, %v6137, -inf
    %6144 = vmax.xlane.f32.xlu0 %v6143
    %v6145 = vpop.xlane.xlu0 %6144
    %v6146 = vsub.f32 %v6132, %v6142
    %v6147 = vsub.f32 %v6137, %v6145
    %v6148 = vmul.f32 %v6146, 1.442695
    %v6149 = vpow.pop %v6148
    %v6150 = vmul.f32 %v6147, 1.442695
    %v6151 = vpow.pop %v6150
    %v6152 = vmul.f32 %v6149, %v6058
    %v6153 = vmul.f32 %v6151, %v6059
    %v6154 = vsel %vm495, %v6152, 0.0
    %6155 = vadd.xlane.f32.xlu0 %v6154
    %v6156 = vpop.xlane.xlu0 %6155
    %v6157 = vsel %vm495, %v6153, 0.0
    %6158 = vadd.xlane.f32.xlu0 %v6157
    %v6159 = vpop.xlane.xlu0 %6158
    %v6160 = vrcp.pop %v6156
    %v6161 = vrcp.pop %v6159
    %v6162 = vmul.f32 %v6152, %v6160
    %v6163 = vmul.f32 %v6153, %v6161
    %6166 = vrot.lane.b32.xlu0 %v6152, 112
    %v6167 = vpop.permute.xlu0 %6166
    %6168 = vrot.lane.b32.xlu0 %v6153, 112
    %v6169 = vpop.permute.xlu0 %6168
    %v6172 = vsel %vm495, %v6167, 0.0
    %6173 = vadd.xlane.f32.xlu0 %v6172
    %v6174 = vpop.xlane.xlu0 %6173
    %v6175 = vsel %vm495, %v6169, 0.0
    %6176 = vadd.xlane.f32.xlu0 %v6175
    %v6177 = vpop.xlane.xlu0 %6176
    %v6178 = vrcp.pop %v6174
    %v6179 = vrcp.pop %v6177
    %v6180 = vmul.f32 %v6152, %v6178
    %v6181 = vmul.f32 %v6153, %v6179
    %6182 = vrot.lane.b32.xlu0 %v6152, 96
    %v6183 = vpop.permute.xlu0 %6182
    %6184 = vrot.lane.b32.xlu0 %v6153, 96
    %v6185 = vpop.permute.xlu0 %6184
    %v6188 = vsel %vm495, %v6183, 0.0
    %6189 = vadd.xlane.f32.xlu0 %v6188
    %v6190 = vpop.xlane.xlu0 %6189
    %v6191 = vsel %vm495, %v6185, 0.0
    %6192 = vadd.xlane.f32.xlu0 %v6191
    %v6193 = vpop.xlane.xlu0 %6192
    %v6194 = vrcp.pop %v6190
    %v6195 = vrcp.pop %v6193
    %v6196 = vmul.f32 %v6152, %v6194
    %v6197 = vmul.f32 %v6153, %v6195
    %6198 = vrot.lane.b32.xlu0 %v6152, 80
    %v6199 = vpop.permute.xlu0 %6198
    %6200 = vrot.lane.b32.xlu0 %v6153, 80
    %v6201 = vpop.permute.xlu0 %6200
    %v6204 = vsel %vm495, %v6199, 0.0
    %6205 = vadd.xlane.f32.xlu0 %v6204
    %v6206 = vpop.xlane.xlu0 %6205
    %v6207 = vsel %vm495, %v6201, 0.0
    %6208 = vadd.xlane.f32.xlu0 %v6207
    %v6209 = vpop.xlane.xlu0 %6208
    %v6210 = vrcp.pop %v6206
    %v6211 = vrcp.pop %v6209
    %v6212 = vmul.f32 %v6152, %v6210
    %v6213 = vmul.f32 %v6153, %v6211
    %v6214 = vsel %vm495, %v6162, %v6180
    %v6215 = vsel %vm495, %v6163, %v6181
    %v6216 = vsel %vm500, %v6214, %v6196
    %v6217 = vsel %vm500, %v6215, %v6197
    %v6218 = vsel %vm315, %v6216, %v6212
    %v6219 = vsel %vm315, %v6217, %v6213
    %v6221 = vlaneseq
    %v6222 = vshrl.u32 %v6221, 7
    %v6223 = vsub.s32 0, %v6222
    %v6224 = vrot.slane %v6060, %v6223
    %v6227 = vsel %vm1070, %v6218, 0
    %v6230 = vsel %vm1070, %v6219, 0
    %6232 = vmatprep.subr.mxu0 0.0
    %6233 = vmatpush1.msra.mxu0 0.0
    %6234 = vmatprep.subr.mxu0 0.0
    %6235 = vmatpush1.msra.mxu0 0.0
    %6236 = vmatprep.subr.mxu0 0.0
    %6237 = vmatpush1.msra.mxu0 0.0
    %6238 = vmatprep.subr.mxu0 0.0
    %6239 = vmatpush1.msra.mxu0 0.0
    %6240 = vmatprep.subr.mxu0 0.0
    %6241 = vmatpush1.msra.mxu0 0.0
    %6242 = vmatprep.subr.mxu0 0.0
    %6243 = vmatpush1.msra.mxu0 0.0
    %6244 = vmatprep.subr.mxu0 0.0
    %6245 = vmatpush1.msra.mxu0 0.0
    %6246 = vmatprep.subr.mxu0 0.0
    %6247 = vmatpush1.msra.mxu0 0.0
    %6248 = vmatprep.subr.mxu0 0.0
    %6249 = vmatpush1.msra.mxu0 %v5955
    %6250 = vmatprep.subr.mxu0 0.0
    %6251 = vmatpush1.msra.mxu0 %v5953
    %6252 = vmatprep.subr.mxu0 0.0
    %6253 = vmatpush1.msra.mxu0 %v5949
    %6254 = vmatprep.subr.mxu0 0.0
    %6255 = vmatpush1.msra.mxu0 %v5947
    %6256 = vmatprep.subr.mxu0 0.0
    %6257 = vmatpush1.msra.mxu0 %v5943
    %6258 = vmatprep.subr.mxu0 0.0
    %6259 = vmatpush1.msra.mxu0 %v5941
    %6260 = vmatprep.subr.mxu0 0.0
    %6261 = vmatpush1.msra.mxu0 %v5934
    %6262 = vmatprep.subr.mxu0 0.0
    %6263 = vmatpush1.msra.mxu0 %v5928
    %6264 = vmatprep.subr.mxu0 0.0
    %6265 = vmatpush2.msra.mxu0 0.0
    %6266 = vmatprep.subr.mxu0 0.0
    %6267 = vmatpush2.msra.mxu0 0.0
    %6268 = vmatprep.subr.mxu0 0.0
    %6269 = vmatpush2.msra.mxu0 0.0
    %6270 = vmatprep.subr.mxu0 0.0
    %6271 = vmatpush2.msra.mxu0 0.0
    %6272 = vmatprep.subr.mxu0 0.0
    %6273 = vmatpush2.msra.mxu0 0.0
    %6274 = vmatprep.subr.mxu0 0.0
    %6275 = vmatpush2.msra.mxu0 0.0
    %6276 = vmatprep.subr.mxu0 0.0
    %6277 = vmatpush2.msra.mxu0 0.0
    %6278 = vmatprep.subr.mxu0 0.0
    %6279 = vmatpush2.msra.mxu0 0.0
    %6280 = vmatprep.subr.mxu0 0.0
    %6281 = vmatpush2.msra.mxu0 0.0
    %6282 = vmatprep.subr.mxu0 0.0
    %6283 = vmatpush2.msra.mxu0 0.0
    %6284 = vmatprep.subr.mxu0 0.0
    %6285 = vmatpush2.msra.mxu0 0.0
    %6286 = vmatprep.subr.mxu0 0.0
    %6287 = vmatpush2.msra.mxu0 0.0
    %6288 = vmatprep.subr.mxu0 0.0
    %6289 = vmatpush2.msra.mxu0 0.0
    %6290 = vmatprep.subr.mxu0 0.0
    %6291 = vmatpush2.msra.mxu0 0.0
    %6292 = vmatprep.subr.mxu0 0.0
    %6293 = vmatpush2.msra.mxu0 0.0
    %6294 = vmatprep.subr.mxu0 0.0
    %6295 = vmatpush2.msra.mxu0 0.0
    %6296 = vmatprep.mubr.f32.mxu0 0.0
    %6297 = vmatmul.mubr.f32.gmra.mxu0 %v6227
    %v6298 = vpop.f32.mrf.mxu0
    %v6299 = vadd.f32 %v6224, %v6298
    %v6300 = vpop.f32.mrf.mxu0
    %6301 = vmatprep.mubr.f32.mxu0 0.0
    %6302 = vmatmul.mubr.f32.gmra.mxu0 %v6230
    %v6303 = vpop.f32.mrf.mxu0
    %v6304 = vadd.f32 %v6224, %v6303
    %v6305 = vpop.f32.mrf.mxu0
    %6306 = vdwg.mxu0
    %v6307 = vadd.f32 %v5830, %v6299
    %v6308 = vadd.f32 %v5831, %v6304
    %v6309 = vld [vmem:[#allocation11] sm:$0xff]
    %v6310 = vld [vmem:[#allocation11 + $0x8] sm:$0xff]
    %v6311 = vld [vmem:[#allocation11 + $0x10] sm:$0xff]
    %v6312 = vld [vmem:[#allocation11 + $0x18] sm:$0xff]
    %v6313 = vld [vmem:[#allocation13] sm:$0x1]
    %v6315 = vlaneseq
    %v6316 = vshrl.u32 %v6315, 7
    %v6317 = vsub.s32 0, %v6316
    %v6318 = vrot.slane %v6313, %v6317
    %v6321 = vsel %vm500, %v6307, 0
    %v6324 = vsel %vm500, %v6308, 0
    %6326 = vmatprep.subr.mxu0 0.0
    %6327 = vmatpush1.msra.mxu0 0.0
    %6328 = vmatprep.subr.mxu0 0.0
    %6329 = vmatpush1.msra.mxu0 0.0
    %6330 = vmatprep.subr.mxu0 0.0
    %6331 = vmatpush1.msra.mxu0 0.0
    %6332 = vmatprep.subr.mxu0 0.0
    %6333 = vmatpush1.msra.mxu0 0.0
    %6334 = vmatprep.subr.mxu0 0.0
    %6335 = vmatpush1.msra.mxu0 0.0
    %6336 = vmatprep.subr.mxu0 0.0
    %6337 = vmatpush1.msra.mxu0 0.0
    %6338 = vmatprep.subr.mxu0 0.0
    %6339 = vmatpush1.msra.mxu0 0.0
    %6340 = vmatprep.subr.mxu0 0.0
    %6341 = vmatpush1.msra.mxu0 0.0
    %6342 = vmatprep.subr.mxu0 0.0
    %6343 = vmatpush1.msra.mxu0 0.0
    %6344 = vmatprep.subr.mxu0 0.0
    %6345 = vmatpush1.msra.mxu0 0.0
    %6346 = vmatprep.subr.mxu0 0.0
    %6347 = vmatpush1.msra.mxu0 0.0
    %6348 = vmatprep.subr.mxu0 0.0
    %6349 = vmatpush1.msra.mxu0 0.0
    %6350 = vmatprep.subr.mxu0 0.0
    %6351 = vmatpush1.msra.mxu0 %v6312
    %6352 = vmatprep.subr.mxu0 0.0
    %6353 = vmatpush1.msra.mxu0 %v6311
    %6354 = vmatprep.subr.mxu0 0.0
    %6355 = vmatpush1.msra.mxu0 %v6310
    %6356 = vmatprep.subr.mxu0 0.0
    %6357 = vmatpush1.msra.mxu0 %v6309
    %6358 = vmatprep.subr.mxu0 0.0
    %6359 = vmatpush2.msra.mxu0 0.0
    %6360 = vmatprep.subr.mxu0 0.0
    %6361 = vmatpush2.msra.mxu0 0.0
    %6362 = vmatprep.subr.mxu0 0.0
    %6363 = vmatpush2.msra.mxu0 0.0
    %6364 = vmatprep.subr.mxu0 0.0
    %6365 = vmatpush2.msra.mxu0 0.0
    %6366 = vmatprep.subr.mxu0 0.0
    %6367 = vmatpush2.msra.mxu0 0.0
    %6368 = vmatprep.subr.mxu0 0.0
    %6369 = vmatpush2.msra.mxu0 0.0
    %6370 = vmatprep.subr.mxu0 0.0
    %6371 = vmatpush2.msra.mxu0 0.0
    %6372 = vmatprep.subr.mxu0 0.0
    %6373 = vmatpush2.msra.mxu0 0.0
    %6374 = vmatprep.subr.mxu0 0.0
    %6375 = vmatpush2.msra.mxu0 0.0
    %6376 = vmatprep.subr.mxu0 0.0
    %6377 = vmatpush2.msra.mxu0 0.0
    %6378 = vmatprep.subr.mxu0 0.0
    %6379 = vmatpush2.msra.mxu0 0.0
    %6380 = vmatprep.subr.mxu0 0.0
    %6381 = vmatpush2.msra.mxu0 0.0
    %6382 = vmatprep.subr.mxu0 0.0
    %6383 = vmatpush2.msra.mxu0 0.0
    %6384 = vmatprep.subr.mxu0 0.0
    %6385 = vmatpush2.msra.mxu0 0.0
    %6386 = vmatprep.subr.mxu0 0.0
    %6387 = vmatpush2.msra.mxu0 0.0
    %6388 = vmatprep.subr.mxu0 0.0
    %6389 = vmatpush2.msra.mxu0 0.0
    %6390 = vmatprep.mubr.f32.mxu0 0.0
    %6391 = vmatmul.mubr.f32.gmra.mxu0 %v6321
    %v6392 = vpop.f32.mrf.mxu0
    %v6393 = vadd.f32 %v6318, %v6392
    %v6394 = vpop.f32.mrf.mxu0
    %6395 = vmatprep.mubr.f32.mxu0 0.0
    %6396 = vmatmul.mubr.f32.gmra.mxu0 %v6324
    %v6397 = vpop.f32.mrf.mxu0
    %v6398 = vadd.f32 %v6318, %v6397
    %v6399 = vpop.f32.mrf.mxu0
    %6400 = vdwg.mxu0
    %v6401 = vld [vmem:[%s4] sm:$0xff]
    %v6402 = vld [vmem:[%s4 + $0x8] sm:$0xff]
    %v6403 = vld [vmem:[#allocation16] sm:$0x1]
    %v6405 = vsel %vm500, %v6393, 0
    %v6408 = vsel %vm500, %v6398, 0
    %6410 = vmatprep.subr.mxu0 0.0
    %6411 = vmatpush1.msra.mxu0 0.0
    %6412 = vmatprep.subr.mxu0 0.0
    %6413 = vmatpush1.msra.mxu0 0.0
    %6414 = vmatprep.subr.mxu0 0.0
    %6415 = vmatpush1.msra.mxu0 0.0
    %6416 = vmatprep.subr.mxu0 0.0
    %6417 = vmatpush1.msra.mxu0 0.0
    %6418 = vmatprep.subr.mxu0 0.0
    %6419 = vmatpush1.msra.mxu0 0.0
    %6420 = vmatprep.subr.mxu0 0.0
    %6421 = vmatpush1.msra.mxu0 0.0
    %6422 = vmatprep.subr.mxu0 0.0
    %6423 = vmatpush1.msra.mxu0 0.0
    %6424 = vmatprep.subr.mxu0 0.0
    %6425 = vmatpush1.msra.mxu0 0.0
    %6426 = vmatprep.subr.mxu0 0.0
    %6427 = vmatpush1.msra.mxu0 0.0
    %6428 = vmatprep.subr.mxu0 0.0
    %6429 = vmatpush1.msra.mxu0 0.0
    %6430 = vmatprep.subr.mxu0 0.0
    %6431 = vmatpush1.msra.mxu0 0.0
    %6432 = vmatprep.subr.mxu0 0.0
    %6433 = vmatpush1.msra.mxu0 0.0
    %6434 = vmatprep.subr.mxu0 0.0
    %6435 = vmatpush1.msra.mxu0 %v512
    %6436 = vmatprep.subr.mxu0 0.0
    %6437 = vmatpush1.msra.mxu0 %v511
    %6438 = vmatprep.subr.mxu0 0.0
    %6439 = vmatpush1.msra.mxu0 %v510
    %6440 = vmatprep.subr.mxu0 0.0
    %6441 = vmatpush1.msra.mxu0 %v509
    %6442 = vmatprep.subr.mxu0 0.0
    %6443 = vmatpush2.msra.mxu0 0.0
    %6444 = vmatprep.subr.mxu0 0.0
    %6445 = vmatpush2.msra.mxu0 0.0
    %6446 = vmatprep.subr.mxu0 0.0
    %6447 = vmatpush2.msra.mxu0 0.0
    %6448 = vmatprep.subr.mxu0 0.0
    %6449 = vmatpush2.msra.mxu0 0.0
    %6450 = vmatprep.subr.mxu0 0.0
    %6451 = vmatpush2.msra.mxu0 0.0
    %6452 = vmatprep.subr.mxu0 0.0
    %6453 = vmatpush2.msra.mxu0 0.0
    %6454 = vmatprep.subr.mxu0 0.0
    %6455 = vmatpush2.msra.mxu0 0.0
    %6456 = vmatprep.subr.mxu0 0.0
    %6457 = vmatpush2.msra.mxu0 0.0
    %6458 = vmatprep.subr.mxu0 0.0
    %6459 = vmatpush2.msra.mxu0 0.0
    %6460 = vmatprep.subr.mxu0 0.0
    %6461 = vmatpush2.msra.mxu0 0.0
    %6462 = vmatprep.subr.mxu0 0.0
    %6463 = vmatpush2.msra.mxu0 0.0
    %6464 = vmatprep.subr.mxu0 0.0
    %6465 = vmatpush2.msra.mxu0 0.0
    %6466 = vmatprep.subr.mxu0 0.0
    %6467 = vmatpush2.msra.mxu0 0.0
    %6468 = vmatprep.subr.mxu0 0.0
    %6469 = vmatpush2.msra.mxu0 0.0
    %6470 = vmatprep.subr.mxu0 0.0
    %6471 = vmatpush2.msra.mxu0 0.0
    %6472 = vmatprep.subr.mxu0 0.0
    %6473 = vmatpush2.msra.mxu0 0.0
    %6474 = vmatprep.mubr.f32.mxu0 0.0
    %6475 = vmatmul.mubr.f32.gmra.mxu0 %v6405
    %v6476 = vpop.f32.mrf.mxu0
    %v6477 = vadd.f32 0.0, %v6476
    %v6478 = vpop.f32.mrf.mxu0
    %6479 = vmatprep.mubr.f32.mxu0 0.0
    %6480 = vmatmul.mubr.f32.gmra.mxu0 %v6408
    %v6481 = vpop.f32.mrf.mxu0
    %v6482 = vadd.f32 0.0, %v6481
    %v6483 = vpop.f32.mrf.mxu0
    %6484 = vdwg.mxu0
    %v6485 = vsel %vm1070, %v6477, -inf
    %6486 = vmax.xlane.f32.xlu0 %v6485
    %v6487 = vpop.xlane.xlu0 %6486
    %v6488 = vsel %vm1070, %v6482, -inf
    %6489 = vmax.xlane.f32.xlu0 %v6488
    %v6490 = vpop.xlane.xlu0 %6489
    %v6491 = vsub.f32 %v6477, %v6487
    %v6492 = vsub.f32 %v6482, %v6490
    %v6493 = vmul.f32 %v6491, 1.442695
    %v6494 = vpow.pop %v6493
    %v6495 = vmul.f32 %v6492, 1.442695
    %v6496 = vpow.pop %v6495
    %v6497 = vmul.f32 %v6494, %v6401
    %v6498 = vmul.f32 %v6496, %v6402
    %v6499 = vsel %vm495, %v6497, 0.0
    %6500 = vadd.xlane.f32.xlu0 %v6499
    %v6501 = vpop.xlane.xlu0 %6500
    %v6502 = vsel %vm495, %v6498, 0.0
    %6503 = vadd.xlane.f32.xlu0 %v6502
    %v6504 = vpop.xlane.xlu0 %6503
    %v6505 = vrcp.pop %v6501
    %v6506 = vrcp.pop %v6504
    %v6507 = vmul.f32 %v6497, %v6505
    %v6508 = vmul.f32 %v6498, %v6506
    %6511 = vrot.lane.b32.xlu0 %v6497, 112
    %v6512 = vpop.permute.xlu0 %6511
    %6513 = vrot.lane.b32.xlu0 %v6498, 112
    %v6514 = vpop.permute.xlu0 %6513
    %v6517 = vsel %vm495, %v6512, 0.0
    %6518 = vadd.xlane.f32.xlu0 %v6517
    %v6519 = vpop.xlane.xlu0 %6518
    %v6520 = vsel %vm495, %v6514, 0.0
    %6521 = vadd.xlane.f32.xlu0 %v6520
    %v6522 = vpop.xlane.xlu0 %6521
    %v6523 = vrcp.pop %v6519
    %v6524 = vrcp.pop %v6522
    %v6525 = vmul.f32 %v6497, %v6523
    %v6526 = vmul.f32 %v6498, %v6524
    %6527 = vrot.lane.b32.xlu0 %v6497, 96
    %v6528 = vpop.permute.xlu0 %6527
    %6529 = vrot.lane.b32.xlu0 %v6498, 96
    %v6530 = vpop.permute.xlu0 %6529
    %v6533 = vsel %vm495, %v6528, 0.0
    %6534 = vadd.xlane.f32.xlu0 %v6533
    %v6535 = vpop.xlane.xlu0 %6534
    %v6536 = vsel %vm495, %v6530, 0.0
    %6537 = vadd.xlane.f32.xlu0 %v6536
    %v6538 = vpop.xlane.xlu0 %6537
    %v6539 = vrcp.pop %v6535
    %v6540 = vrcp.pop %v6538
    %v6541 = vmul.f32 %v6497, %v6539
    %v6542 = vmul.f32 %v6498, %v6540
    %6543 = vrot.lane.b32.xlu0 %v6497, 80
    %v6544 = vpop.permute.xlu0 %6543
    %6545 = vrot.lane.b32.xlu0 %v6498, 80
    %v6546 = vpop.permute.xlu0 %6545
    %v6549 = vsel %vm495, %v6544, 0.0
    %6550 = vadd.xlane.f32.xlu0 %v6549
    %v6551 = vpop.xlane.xlu0 %6550
    %v6552 = vsel %vm495, %v6546, 0.0
    %6553 = vadd.xlane.f32.xlu0 %v6552
    %v6554 = vpop.xlane.xlu0 %6553
    %v6555 = vrcp.pop %v6551
    %v6556 = vrcp.pop %v6554
    %v6557 = vmul.f32 %v6497, %v6555
    %v6558 = vmul.f32 %v6498, %v6556
    %v6559 = vsel %vm495, %v6507, %v6525
    %v6560 = vsel %vm495, %v6508, %v6526
    %v6561 = vsel %vm500, %v6559, %v6541
    %v6562 = vsel %vm500, %v6560, %v6542
    %v6563 = vsel %vm315, %v6561, %v6557
    %v6564 = vsel %vm315, %v6562, %v6558
    %v6566 = vlaneseq
    %v6567 = vshrl.u32 %v6566, 7
    %v6568 = vsub.s32 0, %v6567
    %v6569 = vrot.slane %v6403, %v6568
    %v6572 = vsel %vm1070, %v6563, 0
    %v6575 = vsel %vm1070, %v6564, 0
    %6577 = vmatprep.subr.mxu0 0.0
    %6578 = vmatpush1.msra.mxu0 0.0
    %6579 = vmatprep.subr.mxu0 0.0
    %6580 = vmatpush1.msra.mxu0 0.0
    %6581 = vmatprep.subr.mxu0 0.0
    %6582 = vmatpush1.msra.mxu0 0.0
    %6583 = vmatprep.subr.mxu0 0.0
    %6584 = vmatpush1.msra.mxu0 0.0
    %6585 = vmatprep.subr.mxu0 0.0
    %6586 = vmatpush1.msra.mxu0 0.0
    %6587 = vmatprep.subr.mxu0 0.0
    %6588 = vmatpush1.msra.mxu0 0.0
    %6589 = vmatprep.subr.mxu0 0.0
    %6590 = vmatpush1.msra.mxu0 0.0
    %6591 = vmatprep.subr.mxu0 0.0
    %6592 = vmatpush1.msra.mxu0 0.0
    %6593 = vmatprep.subr.mxu0 0.0
    %6594 = vmatpush1.msra.mxu0 %v416
    %6595 = vmatprep.subr.mxu0 0.0
    %6596 = vmatpush1.msra.mxu0 %v414
    %6597 = vmatprep.subr.mxu0 0.0
    %6598 = vmatpush1.msra.mxu0 %v410
    %6599 = vmatprep.subr.mxu0 0.0
    %6600 = vmatpush1.msra.mxu0 %v408
    %6601 = vmatprep.subr.mxu0 0.0
    %6602 = vmatpush1.msra.mxu0 %v404
    %6603 = vmatprep.subr.mxu0 0.0
    %6604 = vmatpush1.msra.mxu0 %v402
    %6605 = vmatprep.subr.mxu0 0.0
    %6606 = vmatpush1.msra.mxu0 %v395
    %6607 = vmatprep.subr.mxu0 0.0
    %6608 = vmatpush1.msra.mxu0 %v389
    %6609 = vmatprep.subr.mxu0 0.0
    %6610 = vmatpush2.msra.mxu0 0.0
    %6611 = vmatprep.subr.mxu0 0.0
    %6612 = vmatpush2.msra.mxu0 0.0
    %6613 = vmatprep.subr.mxu0 0.0
    %6614 = vmatpush2.msra.mxu0 0.0
    %6615 = vmatprep.subr.mxu0 0.0
    %6616 = vmatpush2.msra.mxu0 0.0
    %6617 = vmatprep.subr.mxu0 0.0
    %6618 = vmatpush2.msra.mxu0 0.0
    %6619 = vmatprep.subr.mxu0 0.0
    %6620 = vmatpush2.msra.mxu0 0.0
    %6621 = vmatprep.subr.mxu0 0.0
    %6622 = vmatpush2.msra.mxu0 0.0
    %6623 = vmatprep.subr.mxu0 0.0
    %6624 = vmatpush2.msra.mxu0 0.0
    %6625 = vmatprep.subr.mxu0 0.0
    %6626 = vmatpush2.msra.mxu0 0.0
    %6627 = vmatprep.subr.mxu0 0.0
    %6628 = vmatpush2.msra.mxu0 0.0
    %6629 = vmatprep.subr.mxu0 0.0
    %6630 = vmatpush2.msra.mxu0 0.0
    %6631 = vmatprep.subr.mxu0 0.0
    %6632 = vmatpush2.msra.mxu0 0.0
    %6633 = vmatprep.subr.mxu0 0.0
    %6634 = vmatpush2.msra.mxu0 0.0
    %6635 = vmatprep.subr.mxu0 0.0
    %6636 = vmatpush2.msra.mxu0 0.0
    %6637 = vmatprep.subr.mxu0 0.0
    %6638 = vmatpush2.msra.mxu0 0.0
    %6639 = vmatprep.subr.mxu0 0.0
    %6640 = vmatpush2.msra.mxu0 0.0
    %6641 = vmatprep.mubr.f32.mxu0 0.0
    %6642 = vmatmul.mubr.f32.gmra.mxu0 %v6572
    %v6643 = vpop.f32.mrf.mxu0
    %v6644 = vadd.f32 %v6569, %v6643
    %v6645 = vpop.f32.mrf.mxu0
    %6646 = vmatprep.mubr.f32.mxu0 0.0
    %6647 = vmatmul.mubr.f32.gmra.mxu0 %v6575
    %v6648 = vpop.f32.mrf.mxu0
    %v6649 = vadd.f32 %v6569, %v6648
    %v6650 = vpop.f32.mrf.mxu0
    %6651 = vdwg.mxu0
    %v6652 = vld [vmem:[#allocation5] sm:$0xff]
    %v6653 = vld [vmem:[#allocation5 + $0x8] sm:$0xff]
    %v6654 = vld [vmem:[#allocation20] sm:$0x1]
    %6655 = vrot.lane.b32.xlu0 %v6393, 96
    %v6656 = vpop.permute.xlu0 %6655
    %6657 = vrot.lane.b32.xlu0 %v6398, 96
    %v6658 = vpop.permute.xlu0 %6657
    %v6659 = vsel %vm500, %v6656, 0
    %v6661 = vsel %vm500, %v6658, 0
    %6663 = vmatprep.subr.mxu0 0.0
    %6664 = vmatpush1.msra.mxu0 0.0
    %6665 = vmatprep.subr.mxu0 0.0
    %6666 = vmatpush1.msra.mxu0 0.0
    %6667 = vmatprep.subr.mxu0 0.0
    %6668 = vmatpush1.msra.mxu0 0.0
    %6669 = vmatprep.subr.mxu0 0.0
    %6670 = vmatpush1.msra.mxu0 0.0
    %6671 = vmatprep.subr.mxu0 0.0
    %6672 = vmatpush1.msra.mxu0 0.0
    %6673 = vmatprep.subr.mxu0 0.0
    %6674 = vmatpush1.msra.mxu0 0.0
    %6675 = vmatprep.subr.mxu0 0.0
    %6676 = vmatpush1.msra.mxu0 0.0
    %6677 = vmatprep.subr.mxu0 0.0
    %6678 = vmatpush1.msra.mxu0 0.0
    %6679 = vmatprep.subr.mxu0 0.0
    %6680 = vmatpush1.msra.mxu0 0.0
    %6681 = vmatprep.subr.mxu0 0.0
    %6682 = vmatpush1.msra.mxu0 0.0
    %6683 = vmatprep.subr.mxu0 0.0
    %6684 = vmatpush1.msra.mxu0 0.0
    %6685 = vmatprep.subr.mxu0 0.0
    %6686 = vmatpush1.msra.mxu0 0.0
    %6687 = vmatprep.subr.mxu0 0.0
    %6688 = vmatpush1.msra.mxu0 %v762
    %6689 = vmatprep.subr.mxu0 0.0
    %6690 = vmatpush1.msra.mxu0 %v761
    %6691 = vmatprep.subr.mxu0 0.0
    %6692 = vmatpush1.msra.mxu0 %v760
    %6693 = vmatprep.subr.mxu0 0.0
    %6694 = vmatpush1.msra.mxu0 %v759
    %6695 = vmatprep.subr.mxu0 0.0
    %6696 = vmatpush2.msra.mxu0 0.0
    %6697 = vmatprep.subr.mxu0 0.0
    %6698 = vmatpush2.msra.mxu0 0.0
    %6699 = vmatprep.subr.mxu0 0.0
    %6700 = vmatpush2.msra.mxu0 0.0
    %6701 = vmatprep.subr.mxu0 0.0
    %6702 = vmatpush2.msra.mxu0 0.0
    %6703 = vmatprep.subr.mxu0 0.0
    %6704 = vmatpush2.msra.mxu0 0.0
    %6705 = vmatprep.subr.mxu0 0.0
    %6706 = vmatpush2.msra.mxu0 0.0
    %6707 = vmatprep.subr.mxu0 0.0
    %6708 = vmatpush2.msra.mxu0 0.0
    %6709 = vmatprep.subr.mxu0 0.0
    %6710 = vmatpush2.msra.mxu0 0.0
    %6711 = vmatprep.subr.mxu0 0.0
    %6712 = vmatpush2.msra.mxu0 0.0
    %6713 = vmatprep.subr.mxu0 0.0
    %6714 = vmatpush2.msra.mxu0 0.0
    %6715 = vmatprep.subr.mxu0 0.0
    %6716 = vmatpush2.msra.mxu0 0.0
    %6717 = vmatprep.subr.mxu0 0.0
    %6718 = vmatpush2.msra.mxu0 0.0
    %6719 = vmatprep.subr.mxu0 0.0
    %6720 = vmatpush2.msra.mxu0 0.0
    %6721 = vmatprep.subr.mxu0 0.0
    %6722 = vmatpush2.msra.mxu0 0.0
    %6723 = vmatprep.subr.mxu0 0.0
    %6724 = vmatpush2.msra.mxu0 0.0
    %6725 = vmatprep.subr.mxu0 0.0
    %6726 = vmatpush2.msra.mxu0 0.0
    %6727 = vmatprep.mubr.f32.mxu0 0.0
    %6728 = vmatmul.mubr.f32.gmra.mxu0 %v6659
    %v6729 = vpop.f32.mrf.mxu0
    %v6730 = vadd.f32 0.0, %v6729
    %v6731 = vpop.f32.mrf.mxu0
    %6732 = vmatprep.mubr.f32.mxu0 0.0
    %6733 = vmatmul.mubr.f32.gmra.mxu0 %v6661
    %v6734 = vpop.f32.mrf.mxu0
    %v6735 = vadd.f32 0.0, %v6734
    %v6736 = vpop.f32.mrf.mxu0
    %6737 = vdwg.mxu0
    %v6738 = vsel %vm1669, %v6730, -inf
    %6739 = vmax.xlane.f32.xlu0 %v6738
    %v6740 = vpop.xlane.xlu0 %6739
    %v6741 = vsel %vm1669, %v6735, -inf
    %6742 = vmax.xlane.f32.xlu0 %v6741
    %v6743 = vpop.xlane.xlu0 %6742
    %v6744 = vsub.f32 %v6730, %v6740
    %v6745 = vsub.f32 %v6735, %v6743
    %v6746 = vmul.f32 %v6744, 1.442695
    %v6747 = vpow.pop %v6746
    %v6748 = vmul.f32 %v6745, 1.442695
    %v6749 = vpow.pop %v6748
    %v6750 = vmul.f32 %v6747, %v6652
    %v6751 = vmul.f32 %v6749, %v6653
    %v6752 = vsel %vm745, %v6750, 0.0
    %6753 = vadd.xlane.f32.xlu0 %v6752
    %v6754 = vpop.xlane.xlu0 %6753
    %v6755 = vsel %vm745, %v6751, 0.0
    %6756 = vadd.xlane.f32.xlu0 %v6755
    %v6757 = vpop.xlane.xlu0 %6756
    %v6758 = vrcp.pop %v6754
    %v6759 = vrcp.pop %v6757
    %v6760 = vmul.f32 %v6750, %v6758
    %v6761 = vmul.f32 %v6751, %v6759
    %6764 = vrot.lane.b32.xlu0 %v6750, 108
    %v6765 = vpop.permute.xlu0 %6764
    %6766 = vrot.lane.b32.xlu0 %v6751, 108
    %v6767 = vpop.permute.xlu0 %6766
    %v6770 = vsel %vm745, %v6765, 0.0
    %6771 = vadd.xlane.f32.xlu0 %v6770
    %v6772 = vpop.xlane.xlu0 %6771
    %v6773 = vsel %vm745, %v6767, 0.0
    %6774 = vadd.xlane.f32.xlu0 %v6773
    %v6775 = vpop.xlane.xlu0 %6774
    %v6776 = vrcp.pop %v6772
    %v6777 = vrcp.pop %v6775
    %v6778 = vmul.f32 %v6750, %v6776
    %v6779 = vmul.f32 %v6751, %v6777
    %6780 = vrot.lane.b32.xlu0 %v6750, 88
    %v6781 = vpop.permute.xlu0 %6780
    %6782 = vrot.lane.b32.xlu0 %v6751, 88
    %v6783 = vpop.permute.xlu0 %6782
    %v6786 = vsel %vm745, %v6781, 0.0
    %6787 = vadd.xlane.f32.xlu0 %v6786
    %v6788 = vpop.xlane.xlu0 %6787
    %v6789 = vsel %vm745, %v6783, 0.0
    %6790 = vadd.xlane.f32.xlu0 %v6789
    %v6791 = vpop.xlane.xlu0 %6790
    %v6792 = vrcp.pop %v6788
    %v6793 = vrcp.pop %v6791
    %v6794 = vmul.f32 %v6750, %v6792
    %v6795 = vmul.f32 %v6751, %v6793
    %6796 = vrot.lane.b32.xlu0 %v6750, 68
    %v6797 = vpop.permute.xlu0 %6796
    %6798 = vrot.lane.b32.xlu0 %v6751, 68
    %v6799 = vpop.permute.xlu0 %6798
    %v6802 = vsel %vm745, %v6797, 0.0
    %6803 = vadd.xlane.f32.xlu0 %v6802
    %v6804 = vpop.xlane.xlu0 %6803
    %v6805 = vsel %vm745, %v6799, 0.0
    %6806 = vadd.xlane.f32.xlu0 %v6805
    %v6807 = vpop.xlane.xlu0 %6806
    %v6808 = vrcp.pop %v6804
    %v6809 = vrcp.pop %v6807
    %v6810 = vmul.f32 %v6750, %v6808
    %v6811 = vmul.f32 %v6751, %v6809
    %v6812 = vsel %vm745, %v6760, %v6778
    %v6813 = vsel %vm745, %v6761, %v6779
    %v6814 = vsel %vm538, %v6812, %v6794
    %v6815 = vsel %vm538, %v6813, %v6795
    %v6816 = vsel %vm754, %v6814, %v6810
    %v6817 = vsel %vm754, %v6815, %v6811
    %v6819 = vlaneseq
    %v6820 = vshrl.u32 %v6819, 7
    %v6821 = vsub.s32 0, %v6820
    %v6822 = vrot.slane %v6654, %v6821
    %v6825 = vsel %vm1669, %v6816, 0
    %v6828 = vsel %vm1669, %v6817, 0
    %6830 = vmatprep.subr.mxu0 0.0
    %6831 = vmatpush1.msra.mxu0 0.0
    %6832 = vmatprep.subr.mxu0 0.0
    %6833 = vmatpush1.msra.mxu0 0.0
    %6834 = vmatprep.subr.mxu0 0.0
    %6835 = vmatpush1.msra.mxu0 0.0
    %6836 = vmatprep.subr.mxu0 0.0
    %6837 = vmatpush1.msra.mxu0 0.0
    %6838 = vmatprep.subr.mxu0 0.0
    %6839 = vmatpush1.msra.mxu0 0.0
    %6840 = vmatprep.subr.mxu0 0.0
    %6841 = vmatpush1.msra.mxu0 0.0
    %6842 = vmatprep.subr.mxu0 0.0
    %6843 = vmatpush1.msra.mxu0 %v663
    %6844 = vmatprep.subr.mxu0 0.0
    %6845 = vmatpush1.msra.mxu0 %v661
    %6846 = vmatprep.subr.mxu0 0.0
    %6847 = vmatpush1.msra.mxu0 %v668
    %6848 = vmatprep.subr.mxu0 0.0
    %6849 = vmatpush1.msra.mxu0 %v652
    %6850 = vmatprep.subr.mxu0 0.0
    %6851 = vmatpush1.msra.mxu0 %v650
    %6852 = vmatprep.subr.mxu0 0.0
    %6853 = vmatpush1.msra.mxu0 %v645
    %6854 = vmatprep.subr.mxu0 0.0
    %6855 = vmatpush1.msra.mxu0 %v643
    %6856 = vmatprep.subr.mxu0 0.0
    %6857 = vmatpush1.msra.mxu0 %v667
    %6858 = vmatprep.subr.mxu0 0.0
    %6859 = vmatpush1.msra.mxu0 %v621
    %6860 = vmatprep.subr.mxu0 0.0
    %6861 = vmatpush1.msra.mxu0 %v615
    %6862 = vmatprep.subr.mxu0 0.0
    %6863 = vmatpush2.msra.mxu0 0.0
    %6864 = vmatprep.subr.mxu0 0.0
    %6865 = vmatpush2.msra.mxu0 0.0
    %6866 = vmatprep.subr.mxu0 0.0
    %6867 = vmatpush2.msra.mxu0 0.0
    %6868 = vmatprep.subr.mxu0 0.0
    %6869 = vmatpush2.msra.mxu0 0.0
    %6870 = vmatprep.subr.mxu0 0.0
    %6871 = vmatpush2.msra.mxu0 0.0
    %6872 = vmatprep.subr.mxu0 0.0
    %6873 = vmatpush2.msra.mxu0 0.0
    %6874 = vmatprep.subr.mxu0 0.0
    %6875 = vmatpush2.msra.mxu0 0.0
    %6876 = vmatprep.subr.mxu0 0.0
    %6877 = vmatpush2.msra.mxu0 0.0
    %6878 = vmatprep.subr.mxu0 0.0
    %6879 = vmatpush2.msra.mxu0 0.0
    %6880 = vmatprep.subr.mxu0 0.0
    %6881 = vmatpush2.msra.mxu0 0.0
    %6882 = vmatprep.subr.mxu0 0.0
    %6883 = vmatpush2.msra.mxu0 0.0
    %6884 = vmatprep.subr.mxu0 0.0
    %6885 = vmatpush2.msra.mxu0 0.0
    %6886 = vmatprep.subr.mxu0 0.0
    %6887 = vmatpush2.msra.mxu0 0.0
    %6888 = vmatprep.subr.mxu0 0.0
    %6889 = vmatpush2.msra.mxu0 0.0
    %6890 = vmatprep.subr.mxu0 0.0
    %6891 = vmatpush2.msra.mxu0 0.0
    %6892 = vmatprep.subr.mxu0 0.0
    %6893 = vmatpush2.msra.mxu0 0.0
    %6894 = vmatprep.mubr.f32.mxu0 0.0
    %6895 = vmatmul.mubr.f32.gmra.mxu0 %v6825
    %v6896 = vpop.f32.mrf.mxu0
    %v6897 = vadd.f32 %v6822, %v6896
    %v6898 = vpop.f32.mrf.mxu0
    %6899 = vmatprep.mubr.f32.mxu0 0.0
    %6900 = vmatmul.mubr.f32.gmra.mxu0 %v6828
    %v6901 = vpop.f32.mrf.mxu0
    %v6902 = vadd.f32 %v6822, %v6901
    %v6903 = vpop.f32.mrf.mxu0
    %6904 = vdwg.mxu0
    %v6905 = vadd.f32 %v6307, %v6644
    %v6906 = vadd.f32 %v6308, %v6649
    %v6907 = vadd.f32 %v6905, %v6897
    %v6908 = vadd.f32 %v6906, %v6902
    %v6909 = vld [vmem:[#allocation22] sm:$0xff]
    %v6910 = vld [vmem:[#allocation22 + $0x8] sm:$0xff]
    %v6911 = vld [vmem:[#allocation22 + $0x10] sm:$0xff]
    %v6912 = vld [vmem:[#allocation22 + $0x18] sm:$0xff]
    %v6913 = vld [vmem:[#allocation23] sm:$0x1]
    %v6915 = vlaneseq
    %v6916 = vshrl.u32 %v6915, 7
    %v6917 = vsub.s32 0, %v6916
    %v6918 = vrot.slane %v6913, %v6917
    %v6921 = vsel %vm500, %v6907, 0
    %v6924 = vsel %vm500, %v6908, 0
    %6926 = vmatprep.subr.mxu0 0.0
    %6927 = vmatpush1.msra.mxu0 0.0
    %6928 = vmatprep.subr.mxu0 0.0
    %6929 = vmatpush1.msra.mxu0 0.0
    %6930 = vmatprep.subr.mxu0 0.0
    %6931 = vmatpush1.msra.mxu0 0.0
    %6932 = vmatprep.subr.mxu0 0.0
    %6933 = vmatpush1.msra.mxu0 0.0
    %6934 = vmatprep.subr.mxu0 0.0
    %6935 = vmatpush1.msra.mxu0 0.0
    %6936 = vmatprep.subr.mxu0 0.0
    %6937 = vmatpush1.msra.mxu0 0.0
    %6938 = vmatprep.subr.mxu0 0.0
    %6939 = vmatpush1.msra.mxu0 0.0
    %6940 = vmatprep.subr.mxu0 0.0
    %6941 = vmatpush1.msra.mxu0 0.0
    %6942 = vmatprep.subr.mxu0 0.0
    %6943 = vmatpush1.msra.mxu0 0.0
    %6944 = vmatprep.subr.mxu0 0.0
    %6945 = vmatpush1.msra.mxu0 0.0
    %6946 = vmatprep.subr.mxu0 0.0
    %6947 = vmatpush1.msra.mxu0 0.0
    %6948 = vmatprep.subr.mxu0 0.0
    %6949 = vmatpush1.msra.mxu0 0.0
    %6950 = vmatprep.subr.mxu0 0.0
    %6951 = vmatpush1.msra.mxu0 %v6912
    %6952 = vmatprep.subr.mxu0 0.0
    %6953 = vmatpush1.msra.mxu0 %v6911
    %6954 = vmatprep.subr.mxu0 0.0
    %6955 = vmatpush1.msra.mxu0 %v6910
    %6956 = vmatprep.subr.mxu0 0.0
    %6957 = vmatpush1.msra.mxu0 %v6909
    %6958 = vmatprep.subr.mxu0 0.0
    %6959 = vmatpush2.msra.mxu0 0.0
    %6960 = vmatprep.subr.mxu0 0.0
    %6961 = vmatpush2.msra.mxu0 0.0
    %6962 = vmatprep.subr.mxu0 0.0
    %6963 = vmatpush2.msra.mxu0 0.0
    %6964 = vmatprep.subr.mxu0 0.0
    %6965 = vmatpush2.msra.mxu0 0.0
    %6966 = vmatprep.subr.mxu0 0.0
    %6967 = vmatpush2.msra.mxu0 0.0
    %6968 = vmatprep.subr.mxu0 0.0
    %6969 = vmatpush2.msra.mxu0 0.0
    %6970 = vmatprep.subr.mxu0 0.0
    %6971 = vmatpush2.msra.mxu0 0.0
    %6972 = vmatprep.subr.mxu0 0.0
    %6973 = vmatpush2.msra.mxu0 0.0
    %6974 = vmatprep.subr.mxu0 0.0
    %6975 = vmatpush2.msra.mxu0 0.0
    %6976 = vmatprep.subr.mxu0 0.0
    %6977 = vmatpush2.msra.mxu0 0.0
    %6978 = vmatprep.subr.mxu0 0.0
    %6979 = vmatpush2.msra.mxu0 0.0
    %6980 = vmatprep.subr.mxu0 0.0
    %6981 = vmatpush2.msra.mxu0 0.0
    %6982 = vmatprep.subr.mxu0 0.0
    %6983 = vmatpush2.msra.mxu0 0.0
    %6984 = vmatprep.subr.mxu0 0.0
    %6985 = vmatpush2.msra.mxu0 0.0
    %6986 = vmatprep.subr.mxu0 0.0
    %6987 = vmatpush2.msra.mxu0 0.0
    %6988 = vmatprep.subr.mxu0 0.0
    %6989 = vmatpush2.msra.mxu0 0.0
    %6990 = vmatprep.mubr.f32.mxu0 0.0
    %6991 = vmatmul.mubr.f32.gmra.mxu0 %v6921
    %v6992 = vpop.f32.mrf.mxu0
    %v6993 = vadd.f32 %v6918, %v6992
    %v6994 = vpop.f32.mrf.mxu0
    %6995 = vmatprep.mubr.f32.mxu0 0.0
    %6996 = vmatmul.mubr.f32.gmra.mxu0 %v6924
    %v6997 = vpop.f32.mrf.mxu0
    %v6998 = vadd.f32 %v6918, %v6997
    %v6999 = vpop.f32.mrf.mxu0
    %7000 = vdwg.mxu0
    %v7001 = vmax.f32 %v6993, 0.0
    %v7002 = vmax.f32 %v6998, 0.0
    %v7003 = vld [vmem:[#allocation25] sm:$0xff]
    %v7004 = vld [vmem:[#allocation25 + $0x8] sm:$0xff]
    %v7005 = vld [vmem:[#allocation25 + $0x10] sm:$0xff]
    %v7006 = vld [vmem:[#allocation25 + $0x18] sm:$0xff]
    %v7008 = vsel %vm500, %v7001, 0
    %v7011 = vsel %vm500, %v7002, 0
    %7013 = vmatprep.subr.mxu0 0.0
    %7014 = vmatpush1.msra.mxu0 0.0
    %7015 = vmatprep.subr.mxu0 0.0
    %7016 = vmatpush1.msra.mxu0 0.0
    %7017 = vmatprep.subr.mxu0 0.0
    %7018 = vmatpush1.msra.mxu0 0.0
    %7019 = vmatprep.subr.mxu0 0.0
    %7020 = vmatpush1.msra.mxu0 0.0
    %7021 = vmatprep.subr.mxu0 0.0
    %7022 = vmatpush1.msra.mxu0 0.0
    %7023 = vmatprep.subr.mxu0 0.0
    %7024 = vmatpush1.msra.mxu0 0.0
    %7025 = vmatprep.subr.mxu0 0.0
    %7026 = vmatpush1.msra.mxu0 0.0
    %7027 = vmatprep.subr.mxu0 0.0
    %7028 = vmatpush1.msra.mxu0 0.0
    %7029 = vmatprep.subr.mxu0 0.0
    %7030 = vmatpush1.msra.mxu0 0.0
    %7031 = vmatprep.subr.mxu0 0.0
    %7032 = vmatpush1.msra.mxu0 0.0
    %7033 = vmatprep.subr.mxu0 0.0
    %7034 = vmatpush1.msra.mxu0 0.0
    %7035 = vmatprep.subr.mxu0 0.0
    %7036 = vmatpush1.msra.mxu0 0.0
    %7037 = vmatprep.subr.mxu0 0.0
    %7038 = vmatpush1.msra.mxu0 %v7006
    %7039 = vmatprep.subr.mxu0 0.0
    %7040 = vmatpush1.msra.mxu0 %v7005
    %7041 = vmatprep.subr.mxu0 0.0
    %7042 = vmatpush1.msra.mxu0 %v7004
    %7043 = vmatprep.subr.mxu0 0.0
    %7044 = vmatpush1.msra.mxu0 %v7003
    %7045 = vmatprep.subr.mxu0 0.0
    %7046 = vmatpush2.msra.mxu0 0.0
    %7047 = vmatprep.subr.mxu0 0.0
    %7048 = vmatpush2.msra.mxu0 0.0
    %7049 = vmatprep.subr.mxu0 0.0
    %7050 = vmatpush2.msra.mxu0 0.0
    %7051 = vmatprep.subr.mxu0 0.0
    %7052 = vmatpush2.msra.mxu0 0.0
    %7053 = vmatprep.subr.mxu0 0.0
    %7054 = vmatpush2.msra.mxu0 0.0
    %7055 = vmatprep.subr.mxu0 0.0
    %7056 = vmatpush2.msra.mxu0 0.0
    %7057 = vmatprep.subr.mxu0 0.0
    %7058 = vmatpush2.msra.mxu0 0.0
    %7059 = vmatprep.subr.mxu0 0.0
    %7060 = vmatpush2.msra.mxu0 0.0
    %7061 = vmatprep.subr.mxu0 0.0
    %7062 = vmatpush2.msra.mxu0 0.0
    %7063 = vmatprep.subr.mxu0 0.0
    %7064 = vmatpush2.msra.mxu0 0.0
    %7065 = vmatprep.subr.mxu0 0.0
    %7066 = vmatpush2.msra.mxu0 0.0
    %7067 = vmatprep.subr.mxu0 0.0
    %7068 = vmatpush2.msra.mxu0 0.0
    %7069 = vmatprep.subr.mxu0 0.0
    %7070 = vmatpush2.msra.mxu0 0.0
    %7071 = vmatprep.subr.mxu0 0.0
    %7072 = vmatpush2.msra.mxu0 0.0
    %7073 = vmatprep.subr.mxu0 0.0
    %7074 = vmatpush2.msra.mxu0 0.0
    %7075 = vmatprep.subr.mxu0 0.0
    %7076 = vmatpush2.msra.mxu0 0.0
    %7077 = vmatprep.mubr.f32.mxu0 0.0
    %7078 = vmatmul.mubr.f32.gmra.mxu0 %v7008
    %v7079 = vpop.f32.mrf.mxu0
    %v7080 = vadd.f32 0.0, %v7079
    %v7081 = vpop.f32.mrf.mxu0
    %7082 = vmatprep.mubr.f32.mxu0 0.0
    %7083 = vmatmul.mubr.f32.gmra.mxu0 %v7011
    %v7084 = vpop.f32.mrf.mxu0
    %v7085 = vadd.f32 0.0, %v7084
    %v7086 = vpop.f32.mrf.mxu0
    %7087 = vdwg.mxu0
    %v7088 = vadd.f32 %v6907, %v7080
    %v7089 = vadd.f32 %v6908, %v7085
    %v7090 = vld [vmem:[#allocation26] sm:$0x1]
    %v7092 = vlaneseq
    %v7093 = vshrl.u32 %v7092, 7
    %v7094 = vsub.s32 0, %v7093
    %v7095 = vrot.slane %v7090, %v7094
    %v7097 = vadd.f32 %v7088, %v7095
    %v7098 = vadd.f32 %v7089, %v7095
    %s7099 = scalar_lea.vmem %s28, 80
    %7100 = vst.msk [vmem:[%s7099] sm:$0xff] %vm500, %v7097
    %7101 = vst.msk [vmem:[%s7099 + $0x8] sm:$0xff] %vm500, %v7098
    %v7102 = vld [vmem:[#allocation7] sm:$0xff]
    %v7103 = vld [vmem:[#allocation7 + $0x8] sm:$0xff]
    %v7104 = vld [vmem:[#allocation7 + $0x10] sm:$0xff]
    %v7105 = vld [vmem:[#allocation7 + $0x18] sm:$0xff]
    %v7106 = vld [vmem:[#allocation7 + $0x20] sm:$0xff]
    %v7107 = vld [vmem:[#allocation7 + $0x28] sm:$0xff]
    %v7108 = vld [vmem:[#allocation7 + $0x30] sm:$0xff]
    %v7109 = vld [vmem:[#allocation7 + $0x38] sm:$0xff]
    %v7110 = vld [vmem:[#allocation8] sm:$0x3]
    %v7112 = vlaneseq
    %v7113 = vshrl.u32 %v7112, 7
    %v7114 = vsub.s32 0, %v7113
    %v7115 = vrot.slane %v7110, %v7114
    %v7116 = vlaneseq
    %v7117 = vshrl.u32 %v7116, 7
    %v7118 = vsub.s32 1, %v7117
    %v7119 = vrot.slane %v7110, %v7118
    %v7123 = vsel %vm500, %v7097, 0
    %v7126 = vsel %vm500, %v7098, 0
    %7128 = vmatprep.subr.mxu0 0.0
    %7129 = vmatpush1.msra.mxu0 0.0
    %7130 = vmatprep.subr.mxu0 0.0
    %7131 = vmatpush1.msra.mxu0 0.0
    %7132 = vmatprep.subr.mxu0 0.0
    %7133 = vmatpush1.msra.mxu0 0.0
    %7134 = vmatprep.subr.mxu0 0.0
    %7135 = vmatpush1.msra.mxu0 0.0
    %7136 = vmatprep.subr.mxu0 0.0
    %7137 = vmatpush1.msra.mxu0 0.0
    %7138 = vmatprep.subr.mxu0 0.0
    %7139 = vmatpush1.msra.mxu0 0.0
    %7140 = vmatprep.subr.mxu0 0.0
    %7141 = vmatpush1.msra.mxu0 0.0
    %7142 = vmatprep.subr.mxu0 0.0
    %7143 = vmatpush1.msra.mxu0 0.0
    %7144 = vmatprep.subr.mxu0 0.0
    %7145 = vmatpush1.msra.mxu0 0.0
    %7146 = vmatprep.subr.mxu0 0.0
    %7147 = vmatpush1.msra.mxu0 0.0
    %7148 = vmatprep.subr.mxu0 0.0
    %7149 = vmatpush1.msra.mxu0 0.0
    %7150 = vmatprep.subr.mxu0 0.0
    %7151 = vmatpush1.msra.mxu0 0.0
    %7152 = vmatprep.subr.mxu0 %v7109
    %7153 = vmatpush1.msra.mxu0 %v7108
    %7154 = vmatprep.subr.mxu0 %v7107
    %7155 = vmatpush1.msra.mxu0 %v7106
    %7156 = vmatprep.subr.mxu0 %v7105
    %7157 = vmatpush1.msra.mxu0 %v7104
    %7158 = vmatprep.subr.mxu0 %v7103
    %7159 = vmatpush1.msra.mxu0 %v7102
    %7160 = vmatprep.subr.mxu0 0.0
    %7161 = vmatpush2.msra.mxu0 0.0
    %7162 = vmatprep.subr.mxu0 0.0
    %7163 = vmatpush2.msra.mxu0 0.0
    %7164 = vmatprep.subr.mxu0 0.0
    %7165 = vmatpush2.msra.mxu0 0.0
    %7166 = vmatprep.subr.mxu0 0.0
    %7167 = vmatpush2.msra.mxu0 0.0
    %7168 = vmatprep.subr.mxu0 0.0
    %7169 = vmatpush2.msra.mxu0 0.0
    %7170 = vmatprep.subr.mxu0 0.0
    %7171 = vmatpush2.msra.mxu0 0.0
    %7172 = vmatprep.subr.mxu0 0.0
    %7173 = vmatpush2.msra.mxu0 0.0
    %7174 = vmatprep.subr.mxu0 0.0
    %7175 = vmatpush2.msra.mxu0 0.0
    %7176 = vmatprep.subr.mxu0 0.0
    %7177 = vmatpush2.msra.mxu0 0.0
    %7178 = vmatprep.subr.mxu0 0.0
    %7179 = vmatpush2.msra.mxu0 0.0
    %7180 = vmatprep.subr.mxu0 0.0
    %7181 = vmatpush2.msra.mxu0 0.0
    %7182 = vmatprep.subr.mxu0 0.0
    %7183 = vmatpush2.msra.mxu0 0.0
    %7184 = vmatprep.subr.mxu0 0.0
    %7185 = vmatpush2.msra.mxu0 0.0
    %7186 = vmatprep.subr.mxu0 0.0
    %7187 = vmatpush2.msra.mxu0 0.0
    %7188 = vmatprep.subr.mxu0 0.0
    %7189 = vmatpush2.msra.mxu0 0.0
    %7190 = vmatprep.subr.mxu0 0.0
    %7191 = vmatpush2.msra.mxu0 0.0
    %7192 = vmatprep.mubr.f32.mxu0 0.0
    %7193 = vmatmul.mubr.f32.gmra.mxu0 %v7123
    %v7194 = vpop.f32.mrf.mxu0
    %v7195 = vadd.f32 %v7115, %v7194
    %v7196 = vpop.f32.mrf.mxu0
    %v7197 = vadd.f32 %v7119, %v7196
    %7198 = vmatprep.mubr.f32.mxu0 0.0
    %7199 = vmatmul.mubr.f32.gmra.mxu0 %v7126
    %v7200 = vpop.f32.mrf.mxu0
    %v7201 = vadd.f32 %v7115, %v7200
    %v7202 = vpop.f32.mrf.mxu0
    %v7203 = vadd.f32 %v7119, %v7202
    %7204 = vdwg.mxu0
    %7207 = vrot.lane.b32.xlu0 %v7195, 96
    %v7208 = vpop.permute.xlu0 %7207
    %7209 = vrot.lane.b32.xlu0 %v7201, 96
    %v7210 = vpop.permute.xlu0 %7209
    %7213 = vrot.lane.b32.xlu0 %v7195, 64
    %v7214 = vpop.permute.xlu0 %7213
    %7215 = vrot.lane.b32.xlu0 %v7201, 64
    %v7216 = vpop.permute.xlu0 %7215
    %7219 = vrot.lane.b32.xlu0 %v7195, 32
    %v7220 = vpop.permute.xlu0 %7219
    %7221 = vrot.lane.b32.xlu0 %v7201, 32
    %v7222 = vpop.permute.xlu0 %7221
    %v7225 = vld [vmem:[%s6] sm:$0xff]
    %v7226 = vld [vmem:[%s6 + $0x8] sm:$0xff]
    %v7227 = vld [vmem:[%s6 + $0x10] sm:$0xff]
    %v7228 = vld [vmem:[%s6 + $0x18] sm:$0xff]
    %7231 = vrot.lane.b32.xlu0 %v7197, 96
    %v7232 = vpop.permute.xlu0 %7231
    %7233 = vrot.lane.b32.xlu0 %v7203, 96
    %v7234 = vpop.permute.xlu0 %7233
    %7237 = vxpose.xlu0.b32.start [1/16] %v7232, 128
    %7238 = vxpose.xlu0.b32.cont [2/16] %v7234, 128
    %7239 = vxpose.xlu0.b32.cont [3/16] 0.0, 128
    %7240 = vxpose.xlu0.b32.cont [4/16] 0.0, 128
    %7241 = vxpose.xlu0.b32.cont [5/16] 0.0, 128
    %7242 = vxpose.xlu0.b32.cont [6/16] 0.0, 128
    %7243 = vxpose.xlu0.b32.cont [7/16] 0.0, 128
    %7244 = vxpose.xlu0.b32.cont [8/16] 0.0, 128
    %7245 = vxpose.xlu0.b32.cont [9/16] 0.0, 128
    %7246 = vxpose.xlu0.b32.cont [10/16] 0.0, 128
    %7247 = vxpose.xlu0.b32.cont [11/16] 0.0, 128
    %7248 = vxpose.xlu0.b32.cont [12/16] 0.0, 128
    %7249 = vxpose.xlu0.b32.cont [13/16] 0.0, 128
    %7250 = vxpose.xlu0.b32.cont [14/16] 0.0, 128
    %7251 = vxpose.xlu0.b32.cont [15/16] 0.0, 128
    %7252 = vxpose.xlu0.b32.end [16/16] 0.0, 128
    %v7253 = vpop.trf.xlu0
    %v7254 = vpop.trf.xlu0
    %v7255 = vpop.trf.xlu0
    %v7256 = vpop.trf.xlu0
    %v7257 = vpop.trf.xlu0
    %v7258 = vpop.trf.xlu0
    %v7259 = vpop.trf.xlu0
    %v7260 = vpop.trf.xlu0
    %v7261 = vpop.trf.xlu0
    %v7262 = vpop.trf.xlu0
    %v7263 = vpop.trf.xlu0
    %v7264 = vpop.trf.xlu0
    %v7265 = vpop.trf.xlu0
    %v7266 = vpop.trf.xlu0
    %v7267 = vpop.trf.xlu0
    %v7268 = vpop.trf.xlu0
    %7273 = vrot.lane.b32.xlu0 %v7253, 16
    %v7274 = vpop.permute.xlu0 %7273
    %7275 = vrot.lane.b32.xlu0 %v7254, 16
    %v7276 = vpop.permute.xlu0 %7275
    %7277 = vrot.lane.b32.xlu0 %v7255, 16
    %v7278 = vpop.permute.xlu0 %7277
    %7279 = vrot.lane.b32.xlu0 %v7256, 16
    %v7280 = vpop.permute.xlu0 %7279
    %7285 = vrot.lane.b32.xlu0 %v7253, 32
    %v7286 = vpop.permute.xlu0 %7285
    %7287 = vrot.lane.b32.xlu0 %v7254, 32
    %v7288 = vpop.permute.xlu0 %7287
    %7289 = vrot.lane.b32.xlu0 %v7255, 32
    %v7290 = vpop.permute.xlu0 %7289
    %7291 = vrot.lane.b32.xlu0 %v7256, 32
    %v7292 = vpop.permute.xlu0 %7291
    %7297 = vrot.lane.b32.xlu0 %v7253, 48
    %v7298 = vpop.permute.xlu0 %7297
    %7299 = vrot.lane.b32.xlu0 %v7254, 48
    %v7300 = vpop.permute.xlu0 %7299
    %7301 = vrot.lane.b32.xlu0 %v7255, 48
    %v7302 = vpop.permute.xlu0 %7301
    %7303 = vrot.lane.b32.xlu0 %v7256, 48
    %v7304 = vpop.permute.xlu0 %7303
    %v7309 = vsel %vm495, %v7253, %v7274
    %v7310 = vsel %vm495, %v7254, %v7276
    %v7311 = vsel %vm495, %v7255, %v7278
    %v7312 = vsel %vm495, %v7256, %v7280
    %v7313 = vsel %vm500, %v7309, %v7286
    %v7314 = vsel %vm500, %v7310, %v7288
    %v7315 = vsel %vm500, %v7311, %v7290
    %v7316 = vsel %vm500, %v7312, %v7292
    %v7317 = vsel %vm315, %v7313, %v7298
    %v7318 = vsel %vm315, %v7314, %v7300
    %v7319 = vsel %vm315, %v7315, %v7302
    %v7320 = vsel %vm315, %v7316, %v7304
    %v7321 = vmul.f32 %v7317, %v7225
    %v7322 = vmul.f32 %v7318, %v7226
    %v7323 = vmul.f32 %v7319, %v7227
    %v7324 = vmul.f32 %v7320, %v7228
    %v7325 = vld [vmem:[%s3] sm:$0xff]
    %v7326 = vld [vmem:[%s3 + $0x8] sm:$0xff]
    %v7327 = vld [vmem:[#allocation10] sm:$0x1]
    %v7328 = vsel %vm500, %v7197, 0
    %v7330 = vsel %vm500, %v7203, 0
    %7332 = vmatprep.subr.mxu0 0.0
    %7333 = vmatpush1.msra.mxu0 0.0
    %7334 = vmatprep.subr.mxu0 0.0
    %7335 = vmatpush1.msra.mxu0 0.0
    %7336 = vmatprep.subr.mxu0 0.0
    %7337 = vmatpush1.msra.mxu0 0.0
    %7338 = vmatprep.subr.mxu0 0.0
    %7339 = vmatpush1.msra.mxu0 0.0
    %7340 = vmatprep.subr.mxu0 0.0
    %7341 = vmatpush1.msra.mxu0 0.0
    %7342 = vmatprep.subr.mxu0 0.0
    %7343 = vmatpush1.msra.mxu0 0.0
    %7344 = vmatprep.subr.mxu0 0.0
    %7345 = vmatpush1.msra.mxu0 0.0
    %7346 = vmatprep.subr.mxu0 0.0
    %7347 = vmatpush1.msra.mxu0 0.0
    %7348 = vmatprep.subr.mxu0 0.0
    %7349 = vmatpush1.msra.mxu0 0.0
    %7350 = vmatprep.subr.mxu0 0.0
    %7351 = vmatpush1.msra.mxu0 0.0
    %7352 = vmatprep.subr.mxu0 0.0
    %7353 = vmatpush1.msra.mxu0 0.0
    %7354 = vmatprep.subr.mxu0 0.0
    %7355 = vmatpush1.msra.mxu0 0.0
    %7356 = vmatprep.subr.mxu0 0.0
    %7357 = vmatpush1.msra.mxu0 %v7324
    %7358 = vmatprep.subr.mxu0 0.0
    %7359 = vmatpush1.msra.mxu0 %v7323
    %7360 = vmatprep.subr.mxu0 0.0
    %7361 = vmatpush1.msra.mxu0 %v7322
    %7362 = vmatprep.subr.mxu0 0.0
    %7363 = vmatpush1.msra.mxu0 %v7321
    %7364 = vmatprep.subr.mxu0 0.0
    %7365 = vmatpush2.msra.mxu0 0.0
    %7366 = vmatprep.subr.mxu0 0.0
    %7367 = vmatpush2.msra.mxu0 0.0
    %7368 = vmatprep.subr.mxu0 0.0
    %7369 = vmatpush2.msra.mxu0 0.0
    %7370 = vmatprep.subr.mxu0 0.0
    %7371 = vmatpush2.msra.mxu0 0.0
    %7372 = vmatprep.subr.mxu0 0.0
    %7373 = vmatpush2.msra.mxu0 0.0
    %7374 = vmatprep.subr.mxu0 0.0
    %7375 = vmatpush2.msra.mxu0 0.0
    %7376 = vmatprep.subr.mxu0 0.0
    %7377 = vmatpush2.msra.mxu0 0.0
    %7378 = vmatprep.subr.mxu0 0.0
    %7379 = vmatpush2.msra.mxu0 0.0
    %7380 = vmatprep.subr.mxu0 0.0
    %7381 = vmatpush2.msra.mxu0 0.0
    %7382 = vmatprep.subr.mxu0 0.0
    %7383 = vmatpush2.msra.mxu0 0.0
    %7384 = vmatprep.subr.mxu0 0.0
    %7385 = vmatpush2.msra.mxu0 0.0
    %7386 = vmatprep.subr.mxu0 0.0
    %7387 = vmatpush2.msra.mxu0 0.0
    %7388 = vmatprep.subr.mxu0 0.0
    %7389 = vmatpush2.msra.mxu0 0.0
    %7390 = vmatprep.subr.mxu0 0.0
    %7391 = vmatpush2.msra.mxu0 0.0
    %7392 = vmatprep.subr.mxu0 0.0
    %7393 = vmatpush2.msra.mxu0 0.0
    %7394 = vmatprep.subr.mxu0 0.0
    %7395 = vmatpush2.msra.mxu0 0.0
    %7396 = vmatprep.mubr.f32.mxu0 0.0
    %7397 = vmatmul.mubr.f32.gmra.mxu0 %v7328
    %v7398 = vpop.f32.mrf.mxu0
    %v7399 = vadd.f32 0.0, %v7398
    %v7400 = vpop.f32.mrf.mxu0
    %7401 = vmatprep.mubr.f32.mxu0 0.0
    %7402 = vmatmul.mubr.f32.gmra.mxu0 %v7330
    %v7403 = vpop.f32.mrf.mxu0
    %v7404 = vadd.f32 0.0, %v7403
    %v7405 = vpop.f32.mrf.mxu0
    %7406 = vdwg.mxu0
    %v7407 = vsel %vm1070, %v7399, -inf
    %7408 = vmax.xlane.f32.xlu0 %v7407
    %v7409 = vpop.xlane.xlu0 %7408
    %v7410 = vsel %vm1070, %v7404, -inf
    %7411 = vmax.xlane.f32.xlu0 %v7410
    %v7412 = vpop.xlane.xlu0 %7411
    %v7413 = vsub.f32 %v7399, %v7409
    %v7414 = vsub.f32 %v7404, %v7412
    %v7415 = vmul.f32 %v7413, 1.442695
    %v7416 = vpow.pop %v7415
    %v7417 = vmul.f32 %v7414, 1.442695
    %v7418 = vpow.pop %v7417
    %v7419 = vmul.f32 %v7416, %v7325
    %v7420 = vmul.f32 %v7418, %v7326
    %v7421 = vsel %vm495, %v7419, 0.0
    %7422 = vadd.xlane.f32.xlu0 %v7421
    %v7423 = vpop.xlane.xlu0 %7422
    %v7424 = vsel %vm495, %v7420, 0.0
    %7425 = vadd.xlane.f32.xlu0 %v7424
    %v7426 = vpop.xlane.xlu0 %7425
    %v7427 = vrcp.pop %v7423
    %v7428 = vrcp.pop %v7426
    %v7429 = vmul.f32 %v7419, %v7427
    %v7430 = vmul.f32 %v7420, %v7428
    %7433 = vrot.lane.b32.xlu0 %v7419, 112
    %v7434 = vpop.permute.xlu0 %7433
    %7435 = vrot.lane.b32.xlu0 %v7420, 112
    %v7436 = vpop.permute.xlu0 %7435
    %v7439 = vsel %vm495, %v7434, 0.0
    %7440 = vadd.xlane.f32.xlu0 %v7439
    %v7441 = vpop.xlane.xlu0 %7440
    %v7442 = vsel %vm495, %v7436, 0.0
    %7443 = vadd.xlane.f32.xlu0 %v7442
    %v7444 = vpop.xlane.xlu0 %7443
    %v7445 = vrcp.pop %v7441
    %v7446 = vrcp.pop %v7444
    %v7447 = vmul.f32 %v7419, %v7445
    %v7448 = vmul.f32 %v7420, %v7446
    %7449 = vrot.lane.b32.xlu0 %v7419, 96
    %v7450 = vpop.permute.xlu0 %7449
    %7451 = vrot.lane.b32.xlu0 %v7420, 96
    %v7452 = vpop.permute.xlu0 %7451
    %v7455 = vsel %vm495, %v7450, 0.0
    %7456 = vadd.xlane.f32.xlu0 %v7455
    %v7457 = vpop.xlane.xlu0 %7456
    %v7458 = vsel %vm495, %v7452, 0.0
    %7459 = vadd.xlane.f32.xlu0 %v7458
    %v7460 = vpop.xlane.xlu0 %7459
    %v7461 = vrcp.pop %v7457
    %v7462 = vrcp.pop %v7460
    %v7463 = vmul.f32 %v7419, %v7461
    %v7464 = vmul.f32 %v7420, %v7462
    %7465 = vrot.lane.b32.xlu0 %v7419, 80
    %v7466 = vpop.permute.xlu0 %7465
    %7467 = vrot.lane.b32.xlu0 %v7420, 80
    %v7468 = vpop.permute.xlu0 %7467
    %v7471 = vsel %vm495, %v7466, 0.0
    %7472 = vadd.xlane.f32.xlu0 %v7471
    %v7473 = vpop.xlane.xlu0 %7472
    %v7474 = vsel %vm495, %v7468, 0.0
    %7475 = vadd.xlane.f32.xlu0 %v7474
    %v7476 = vpop.xlane.xlu0 %7475
    %v7477 = vrcp.pop %v7473
    %v7478 = vrcp.pop %v7476
    %v7479 = vmul.f32 %v7419, %v7477
    %v7480 = vmul.f32 %v7420, %v7478
    %v7481 = vsel %vm495, %v7429, %v7447
    %v7482 = vsel %vm495, %v7430, %v7448
    %v7483 = vsel %vm500, %v7481, %v7463
    %v7484 = vsel %vm500, %v7482, %v7464
    %v7485 = vsel %vm315, %v7483, %v7479
    %v7486 = vsel %vm315, %v7484, %v7480
    %v7488 = vlaneseq
    %v7489 = vshrl.u32 %v7488, 7
    %v7490 = vsub.s32 0, %v7489
    %v7491 = vrot.slane %v7327, %v7490
    %v7494 = vsel %vm1070, %v7485, 0
    %v7497 = vsel %vm1070, %v7486, 0
    %7499 = vmatprep.subr.mxu0 0.0
    %7500 = vmatpush1.msra.mxu0 0.0
    %7501 = vmatprep.subr.mxu0 0.0
    %7502 = vmatpush1.msra.mxu0 0.0
    %7503 = vmatprep.subr.mxu0 0.0
    %7504 = vmatpush1.msra.mxu0 0.0
    %7505 = vmatprep.subr.mxu0 0.0
    %7506 = vmatpush1.msra.mxu0 0.0
    %7507 = vmatprep.subr.mxu0 0.0
    %7508 = vmatpush1.msra.mxu0 0.0
    %7509 = vmatprep.subr.mxu0 0.0
    %7510 = vmatpush1.msra.mxu0 0.0
    %7511 = vmatprep.subr.mxu0 0.0
    %7512 = vmatpush1.msra.mxu0 0.0
    %7513 = vmatprep.subr.mxu0 0.0
    %7514 = vmatpush1.msra.mxu0 0.0
    %7515 = vmatprep.subr.mxu0 0.0
    %7516 = vmatpush1.msra.mxu0 %v7222
    %7517 = vmatprep.subr.mxu0 0.0
    %7518 = vmatpush1.msra.mxu0 %v7220
    %7519 = vmatprep.subr.mxu0 0.0
    %7520 = vmatpush1.msra.mxu0 %v7216
    %7521 = vmatprep.subr.mxu0 0.0
    %7522 = vmatpush1.msra.mxu0 %v7214
    %7523 = vmatprep.subr.mxu0 0.0
    %7524 = vmatpush1.msra.mxu0 %v7210
    %7525 = vmatprep.subr.mxu0 0.0
    %7526 = vmatpush1.msra.mxu0 %v7208
    %7527 = vmatprep.subr.mxu0 0.0
    %7528 = vmatpush1.msra.mxu0 %v7201
    %7529 = vmatprep.subr.mxu0 0.0
    %7530 = vmatpush1.msra.mxu0 %v7195
    %7531 = vmatprep.subr.mxu0 0.0
    %7532 = vmatpush2.msra.mxu0 0.0
    %7533 = vmatprep.subr.mxu0 0.0
    %7534 = vmatpush2.msra.mxu0 0.0
    %7535 = vmatprep.subr.mxu0 0.0
    %7536 = vmatpush2.msra.mxu0 0.0
    %7537 = vmatprep.subr.mxu0 0.0
    %7538 = vmatpush2.msra.mxu0 0.0
    %7539 = vmatprep.subr.mxu0 0.0
    %7540 = vmatpush2.msra.mxu0 0.0
    %7541 = vmatprep.subr.mxu0 0.0
    %7542 = vmatpush2.msra.mxu0 0.0
    %7543 = vmatprep.subr.mxu0 0.0
    %7544 = vmatpush2.msra.mxu0 0.0
    %7545 = vmatprep.subr.mxu0 0.0
    %7546 = vmatpush2.msra.mxu0 0.0
    %7547 = vmatprep.subr.mxu0 0.0
    %7548 = vmatpush2.msra.mxu0 0.0
    %7549 = vmatprep.subr.mxu0 0.0
    %7550 = vmatpush2.msra.mxu0 0.0
    %7551 = vmatprep.subr.mxu0 0.0
    %7552 = vmatpush2.msra.mxu0 0.0
    %7553 = vmatprep.subr.mxu0 0.0
    %7554 = vmatpush2.msra.mxu0 0.0
    %7555 = vmatprep.subr.mxu0 0.0
    %7556 = vmatpush2.msra.mxu0 0.0
    %7557 = vmatprep.subr.mxu0 0.0
    %7558 = vmatpush2.msra.mxu0 0.0
    %7559 = vmatprep.subr.mxu0 0.0
    %7560 = vmatpush2.msra.mxu0 0.0
    %7561 = vmatprep.subr.mxu0 0.0
    %7562 = vmatpush2.msra.mxu0 0.0
    %7563 = vmatprep.mubr.f32.mxu0 0.0
    %7564 = vmatmul.mubr.f32.gmra.mxu0 %v7494
    %v7565 = vpop.f32.mrf.mxu0
    %v7566 = vadd.f32 %v7491, %v7565
    %v7567 = vpop.f32.mrf.mxu0
    %7568 = vmatprep.mubr.f32.mxu0 0.0
    %7569 = vmatmul.mubr.f32.gmra.mxu0 %v7497
    %v7570 = vpop.f32.mrf.mxu0
    %v7571 = vadd.f32 %v7491, %v7570
    %v7572 = vpop.f32.mrf.mxu0
    %7573 = vdwg.mxu0
    %v7574 = vadd.f32 %v7097, %v7566
    %v7575 = vadd.f32 %v7098, %v7571
    %v7576 = vld [vmem:[#allocation11] sm:$0xff]
    %v7577 = vld [vmem:[#allocation11 + $0x8] sm:$0xff]
    %v7578 = vld [vmem:[#allocation11 + $0x10] sm:$0xff]
    %v7579 = vld [vmem:[#allocation11 + $0x18] sm:$0xff]
    %v7580 = vld [vmem:[#allocation13] sm:$0x1]
    %v7582 = vlaneseq
    %v7583 = vshrl.u32 %v7582, 7
    %v7584 = vsub.s32 0, %v7583
    %v7585 = vrot.slane %v7580, %v7584
    %v7588 = vsel %vm500, %v7574, 0
    %v7591 = vsel %vm500, %v7575, 0
    %7593 = vmatprep.subr.mxu0 0.0
    %7594 = vmatpush1.msra.mxu0 0.0
    %7595 = vmatprep.subr.mxu0 0.0
    %7596 = vmatpush1.msra.mxu0 0.0
    %7597 = vmatprep.subr.mxu0 0.0
    %7598 = vmatpush1.msra.mxu0 0.0
    %7599 = vmatprep.subr.mxu0 0.0
    %7600 = vmatpush1.msra.mxu0 0.0
    %7601 = vmatprep.subr.mxu0 0.0
    %7602 = vmatpush1.msra.mxu0 0.0
    %7603 = vmatprep.subr.mxu0 0.0
    %7604 = vmatpush1.msra.mxu0 0.0
    %7605 = vmatprep.subr.mxu0 0.0
    %7606 = vmatpush1.msra.mxu0 0.0
    %7607 = vmatprep.subr.mxu0 0.0
    %7608 = vmatpush1.msra.mxu0 0.0
    %7609 = vmatprep.subr.mxu0 0.0
    %7610 = vmatpush1.msra.mxu0 0.0
    %7611 = vmatprep.subr.mxu0 0.0
    %7612 = vmatpush1.msra.mxu0 0.0
    %7613 = vmatprep.subr.mxu0 0.0
    %7614 = vmatpush1.msra.mxu0 0.0
    %7615 = vmatprep.subr.mxu0 0.0
    %7616 = vmatpush1.msra.mxu0 0.0
    %7617 = vmatprep.subr.mxu0 0.0
    %7618 = vmatpush1.msra.mxu0 %v7579
    %7619 = vmatprep.subr.mxu0 0.0
    %7620 = vmatpush1.msra.mxu0 %v7578
    %7621 = vmatprep.subr.mxu0 0.0
    %7622 = vmatpush1.msra.mxu0 %v7577
    %7623 = vmatprep.subr.mxu0 0.0
    %7624 = vmatpush1.msra.mxu0 %v7576
    %7625 = vmatprep.subr.mxu0 0.0
    %7626 = vmatpush2.msra.mxu0 0.0
    %7627 = vmatprep.subr.mxu0 0.0
    %7628 = vmatpush2.msra.mxu0 0.0
    %7629 = vmatprep.subr.mxu0 0.0
    %7630 = vmatpush2.msra.mxu0 0.0
    %7631 = vmatprep.subr.mxu0 0.0
    %7632 = vmatpush2.msra.mxu0 0.0
    %7633 = vmatprep.subr.mxu0 0.0
    %7634 = vmatpush2.msra.mxu0 0.0
    %7635 = vmatprep.subr.mxu0 0.0
    %7636 = vmatpush2.msra.mxu0 0.0
    %7637 = vmatprep.subr.mxu0 0.0
    %7638 = vmatpush2.msra.mxu0 0.0
    %7639 = vmatprep.subr.mxu0 0.0
    %7640 = vmatpush2.msra.mxu0 0.0
    %7641 = vmatprep.subr.mxu0 0.0
    %7642 = vmatpush2.msra.mxu0 0.0
    %7643 = vmatprep.subr.mxu0 0.0
    %7644 = vmatpush2.msra.mxu0 0.0
    %7645 = vmatprep.subr.mxu0 0.0
    %7646 = vmatpush2.msra.mxu0 0.0
    %7647 = vmatprep.subr.mxu0 0.0
    %7648 = vmatpush2.msra.mxu0 0.0
    %7649 = vmatprep.subr.mxu0 0.0
    %7650 = vmatpush2.msra.mxu0 0.0
    %7651 = vmatprep.subr.mxu0 0.0
    %7652 = vmatpush2.msra.mxu0 0.0
    %7653 = vmatprep.subr.mxu0 0.0
    %7654 = vmatpush2.msra.mxu0 0.0
    %7655 = vmatprep.subr.mxu0 0.0
    %7656 = vmatpush2.msra.mxu0 0.0
    %7657 = vmatprep.mubr.f32.mxu0 0.0
    %7658 = vmatmul.mubr.f32.gmra.mxu0 %v7588
    %v7659 = vpop.f32.mrf.mxu0
    %v7660 = vadd.f32 %v7585, %v7659
    %v7661 = vpop.f32.mrf.mxu0
    %7662 = vmatprep.mubr.f32.mxu0 0.0
    %7663 = vmatmul.mubr.f32.gmra.mxu0 %v7591
    %v7664 = vpop.f32.mrf.mxu0
    %v7665 = vadd.f32 %v7585, %v7664
    %v7666 = vpop.f32.mrf.mxu0
    %7667 = vdwg.mxu0
    %v7668 = vld [vmem:[%s4] sm:$0xff]
    %v7669 = vld [vmem:[%s4 + $0x8] sm:$0xff]
    %v7670 = vld [vmem:[#allocation16] sm:$0x1]
    %v7672 = vsel %vm500, %v7660, 0
    %v7675 = vsel %vm500, %v7665, 0
    %7677 = vmatprep.subr.mxu0 0.0
    %7678 = vmatpush1.msra.mxu0 0.0
    %7679 = vmatprep.subr.mxu0 0.0
    %7680 = vmatpush1.msra.mxu0 0.0
    %7681 = vmatprep.subr.mxu0 0.0
    %7682 = vmatpush1.msra.mxu0 0.0
    %7683 = vmatprep.subr.mxu0 0.0
    %7684 = vmatpush1.msra.mxu0 0.0
    %7685 = vmatprep.subr.mxu0 0.0
    %7686 = vmatpush1.msra.mxu0 0.0
    %7687 = vmatprep.subr.mxu0 0.0
    %7688 = vmatpush1.msra.mxu0 0.0
    %7689 = vmatprep.subr.mxu0 0.0
    %7690 = vmatpush1.msra.mxu0 0.0
    %7691 = vmatprep.subr.mxu0 0.0
    %7692 = vmatpush1.msra.mxu0 0.0
    %7693 = vmatprep.subr.mxu0 0.0
    %7694 = vmatpush1.msra.mxu0 0.0
    %7695 = vmatprep.subr.mxu0 0.0
    %7696 = vmatpush1.msra.mxu0 0.0
    %7697 = vmatprep.subr.mxu0 0.0
    %7698 = vmatpush1.msra.mxu0 0.0
    %7699 = vmatprep.subr.mxu0 0.0
    %7700 = vmatpush1.msra.mxu0 0.0
    %7701 = vmatprep.subr.mxu0 0.0
    %7702 = vmatpush1.msra.mxu0 %v512
    %7703 = vmatprep.subr.mxu0 0.0
    %7704 = vmatpush1.msra.mxu0 %v511
    %7705 = vmatprep.subr.mxu0 0.0
    %7706 = vmatpush1.msra.mxu0 %v510
    %7707 = vmatprep.subr.mxu0 0.0
    %7708 = vmatpush1.msra.mxu0 %v509
    %7709 = vmatprep.subr.mxu0 0.0
    %7710 = vmatpush2.msra.mxu0 0.0
    %7711 = vmatprep.subr.mxu0 0.0
    %7712 = vmatpush2.msra.mxu0 0.0
    %7713 = vmatprep.subr.mxu0 0.0
    %7714 = vmatpush2.msra.mxu0 0.0
    %7715 = vmatprep.subr.mxu0 0.0
    %7716 = vmatpush2.msra.mxu0 0.0
    %7717 = vmatprep.subr.mxu0 0.0
    %7718 = vmatpush2.msra.mxu0 0.0
    %7719 = vmatprep.subr.mxu0 0.0
    %7720 = vmatpush2.msra.mxu0 0.0
    %7721 = vmatprep.subr.mxu0 0.0
    %7722 = vmatpush2.msra.mxu0 0.0
    %7723 = vmatprep.subr.mxu0 0.0
    %7724 = vmatpush2.msra.mxu0 0.0
    %7725 = vmatprep.subr.mxu0 0.0
    %7726 = vmatpush2.msra.mxu0 0.0
    %7727 = vmatprep.subr.mxu0 0.0
    %7728 = vmatpush2.msra.mxu0 0.0
    %7729 = vmatprep.subr.mxu0 0.0
    %7730 = vmatpush2.msra.mxu0 0.0
    %7731 = vmatprep.subr.mxu0 0.0
    %7732 = vmatpush2.msra.mxu0 0.0
    %7733 = vmatprep.subr.mxu0 0.0
    %7734 = vmatpush2.msra.mxu0 0.0
    %7735 = vmatprep.subr.mxu0 0.0
    %7736 = vmatpush2.msra.mxu0 0.0
    %7737 = vmatprep.subr.mxu0 0.0
    %7738 = vmatpush2.msra.mxu0 0.0
    %7739 = vmatprep.subr.mxu0 0.0
    %7740 = vmatpush2.msra.mxu0 0.0
    %7741 = vmatprep.mubr.f32.mxu0 0.0
    %7742 = vmatmul.mubr.f32.gmra.mxu0 %v7672
    %v7743 = vpop.f32.mrf.mxu0
    %v7744 = vadd.f32 0.0, %v7743
    %v7745 = vpop.f32.mrf.mxu0
    %7746 = vmatprep.mubr.f32.mxu0 0.0
    %7747 = vmatmul.mubr.f32.gmra.mxu0 %v7675
    %v7748 = vpop.f32.mrf.mxu0
    %v7749 = vadd.f32 0.0, %v7748
    %v7750 = vpop.f32.mrf.mxu0
    %7751 = vdwg.mxu0
    %v7752 = vsel %vm1070, %v7744, -inf
    %7753 = vmax.xlane.f32.xlu0 %v7752
    %v7754 = vpop.xlane.xlu0 %7753
    %v7755 = vsel %vm1070, %v7749, -inf
    %7756 = vmax.xlane.f32.xlu0 %v7755
    %v7757 = vpop.xlane.xlu0 %7756
    %v7758 = vsub.f32 %v7744, %v7754
    %v7759 = vsub.f32 %v7749, %v7757
    %v7760 = vmul.f32 %v7758, 1.442695
    %v7761 = vpow.pop %v7760
    %v7762 = vmul.f32 %v7759, 1.442695
    %v7763 = vpow.pop %v7762
    %v7764 = vmul.f32 %v7761, %v7668
    %v7765 = vmul.f32 %v7763, %v7669
    %v7766 = vsel %vm495, %v7764, 0.0
    %7767 = vadd.xlane.f32.xlu0 %v7766
    %v7768 = vpop.xlane.xlu0 %7767
    %v7769 = vsel %vm495, %v7765, 0.0
    %7770 = vadd.xlane.f32.xlu0 %v7769
    %v7771 = vpop.xlane.xlu0 %7770
    %v7772 = vrcp.pop %v7768
    %v7773 = vrcp.pop %v7771
    %v7774 = vmul.f32 %v7764, %v7772
    %v7775 = vmul.f32 %v7765, %v7773
    %7778 = vrot.lane.b32.xlu0 %v7764, 112
    %v7779 = vpop.permute.xlu0 %7778
    %7780 = vrot.lane.b32.xlu0 %v7765, 112
    %v7781 = vpop.permute.xlu0 %7780
    %v7784 = vsel %vm495, %v7779, 0.0
    %7785 = vadd.xlane.f32.xlu0 %v7784
    %v7786 = vpop.xlane.xlu0 %7785
    %v7787 = vsel %vm495, %v7781, 0.0
    %7788 = vadd.xlane.f32.xlu0 %v7787
    %v7789 = vpop.xlane.xlu0 %7788
    %v7790 = vrcp.pop %v7786
    %v7791 = vrcp.pop %v7789
    %v7792 = vmul.f32 %v7764, %v7790
    %v7793 = vmul.f32 %v7765, %v7791
    %7794 = vrot.lane.b32.xlu0 %v7764, 96
    %v7795 = vpop.permute.xlu0 %7794
    %7796 = vrot.lane.b32.xlu0 %v7765, 96
    %v7797 = vpop.permute.xlu0 %7796
    %v7800 = vsel %vm495, %v7795, 0.0
    %7801 = vadd.xlane.f32.xlu0 %v7800
    %v7802 = vpop.xlane.xlu0 %7801
    %v7803 = vsel %vm495, %v7797, 0.0
    %7804 = vadd.xlane.f32.xlu0 %v7803
    %v7805 = vpop.xlane.xlu0 %7804
    %v7806 = vrcp.pop %v7802
    %v7807 = vrcp.pop %v7805
    %v7808 = vmul.f32 %v7764, %v7806
    %v7809 = vmul.f32 %v7765, %v7807
    %7810 = vrot.lane.b32.xlu0 %v7764, 80
    %v7811 = vpop.permute.xlu0 %7810
    %7812 = vrot.lane.b32.xlu0 %v7765, 80
    %v7813 = vpop.permute.xlu0 %7812
    %v7816 = vsel %vm495, %v7811, 0.0
    %7817 = vadd.xlane.f32.xlu0 %v7816
    %v7818 = vpop.xlane.xlu0 %7817
    %v7819 = vsel %vm495, %v7813, 0.0
    %7820 = vadd.xlane.f32.xlu0 %v7819
    %v7821 = vpop.xlane.xlu0 %7820
    %v7822 = vrcp.pop %v7818
    %v7823 = vrcp.pop %v7821
    %v7824 = vmul.f32 %v7764, %v7822
    %v7825 = vmul.f32 %v7765, %v7823
    %v7826 = vsel %vm495, %v7774, %v7792
    %v7827 = vsel %vm495, %v7775, %v7793
    %v7828 = vsel %vm500, %v7826, %v7808
    %v7829 = vsel %vm500, %v7827, %v7809
    %v7830 = vsel %vm315, %v7828, %v7824
    %v7831 = vsel %vm315, %v7829, %v7825
    %v7833 = vlaneseq
    %v7834 = vshrl.u32 %v7833, 7
    %v7835 = vsub.s32 0, %v7834
    %v7836 = vrot.slane %v7670, %v7835
    %v7839 = vsel %vm1070, %v7830, 0
    %v7842 = vsel %vm1070, %v7831, 0
    %7844 = vmatprep.subr.mxu0 0.0
    %7845 = vmatpush1.msra.mxu0 0.0
    %7846 = vmatprep.subr.mxu0 0.0
    %7847 = vmatpush1.msra.mxu0 0.0
    %7848 = vmatprep.subr.mxu0 0.0
    %7849 = vmatpush1.msra.mxu0 0.0
    %7850 = vmatprep.subr.mxu0 0.0
    %7851 = vmatpush1.msra.mxu0 0.0
    %7852 = vmatprep.subr.mxu0 0.0
    %7853 = vmatpush1.msra.mxu0 0.0
    %7854 = vmatprep.subr.mxu0 0.0
    %7855 = vmatpush1.msra.mxu0 0.0
    %7856 = vmatprep.subr.mxu0 0.0
    %7857 = vmatpush1.msra.mxu0 0.0
    %7858 = vmatprep.subr.mxu0 0.0
    %7859 = vmatpush1.msra.mxu0 0.0
    %7860 = vmatprep.subr.mxu0 0.0
    %7861 = vmatpush1.msra.mxu0 %v416
    %7862 = vmatprep.subr.mxu0 0.0
    %7863 = vmatpush1.msra.mxu0 %v414
    %7864 = vmatprep.subr.mxu0 0.0
    %7865 = vmatpush1.msra.mxu0 %v410
    %7866 = vmatprep.subr.mxu0 0.0
    %7867 = vmatpush1.msra.mxu0 %v408
    %7868 = vmatprep.subr.mxu0 0.0
    %7869 = vmatpush1.msra.mxu0 %v404
    %7870 = vmatprep.subr.mxu0 0.0
    %7871 = vmatpush1.msra.mxu0 %v402
    %7872 = vmatprep.subr.mxu0 0.0
    %7873 = vmatpush1.msra.mxu0 %v395
    %7874 = vmatprep.subr.mxu0 0.0
    %7875 = vmatpush1.msra.mxu0 %v389
    %7876 = vmatprep.subr.mxu0 0.0
    %7877 = vmatpush2.msra.mxu0 0.0
    %7878 = vmatprep.subr.mxu0 0.0
    %7879 = vmatpush2.msra.mxu0 0.0
    %7880 = vmatprep.subr.mxu0 0.0
    %7881 = vmatpush2.msra.mxu0 0.0
    %7882 = vmatprep.subr.mxu0 0.0
    %7883 = vmatpush2.msra.mxu0 0.0
    %7884 = vmatprep.subr.mxu0 0.0
    %7885 = vmatpush2.msra.mxu0 0.0
    %7886 = vmatprep.subr.mxu0 0.0
    %7887 = vmatpush2.msra.mxu0 0.0
    %7888 = vmatprep.subr.mxu0 0.0
    %7889 = vmatpush2.msra.mxu0 0.0
    %7890 = vmatprep.subr.mxu0 0.0
    %7891 = vmatpush2.msra.mxu0 0.0
    %7892 = vmatprep.subr.mxu0 0.0
    %7893 = vmatpush2.msra.mxu0 0.0
    %7894 = vmatprep.subr.mxu0 0.0
    %7895 = vmatpush2.msra.mxu0 0.0
    %7896 = vmatprep.subr.mxu0 0.0
    %7897 = vmatpush2.msra.mxu0 0.0
    %7898 = vmatprep.subr.mxu0 0.0
    %7899 = vmatpush2.msra.mxu0 0.0
    %7900 = vmatprep.subr.mxu0 0.0
    %7901 = vmatpush2.msra.mxu0 0.0
    %7902 = vmatprep.subr.mxu0 0.0
    %7903 = vmatpush2.msra.mxu0 0.0
    %7904 = vmatprep.subr.mxu0 0.0
    %7905 = vmatpush2.msra.mxu0 0.0
    %7906 = vmatprep.subr.mxu0 0.0
    %7907 = vmatpush2.msra.mxu0 0.0
    %7908 = vmatprep.mubr.f32.mxu0 0.0
    %7909 = vmatmul.mubr.f32.gmra.mxu0 %v7839
    %v7910 = vpop.f32.mrf.mxu0
    %v7911 = vadd.f32 %v7836, %v7910
    %v7912 = vpop.f32.mrf.mxu0
    %7913 = vmatprep.mubr.f32.mxu0 0.0
    %7914 = vmatmul.mubr.f32.gmra.mxu0 %v7842
    %v7915 = vpop.f32.mrf.mxu0
    %v7916 = vadd.f32 %v7836, %v7915
    %v7917 = vpop.f32.mrf.mxu0
    %7918 = vdwg.mxu0
    %7921 = vrot.lane.b32.xlu0 %v7792, 112
    %v7922 = vpop.permute.xlu0 %7921
    %7923 = vrot.lane.b32.xlu0 %v7793, 112
    %v7924 = vpop.permute.xlu0 %7923
    %v7927 = vadd.f32 %v7774, %v7922
    %v7928 = vadd.f32 %v7775, %v7924
    %7931 = vrot.lane.b32.xlu0 %v7808, 96
    %v7932 = vpop.permute.xlu0 %7931
    %7933 = vrot.lane.b32.xlu0 %v7809, 96
    %v7934 = vpop.permute.xlu0 %7933
    %v7937 = vadd.f32 %v7927, %v7932
    %v7938 = vadd.f32 %v7928, %v7934
    %7941 = vrot.lane.b32.xlu0 %v7824, 80
    %v7942 = vpop.permute.xlu0 %7941
    %7943 = vrot.lane.b32.xlu0 %v7825, 80
    %v7944 = vpop.permute.xlu0 %7943
    %v7947 = vadd.f32 %v7937, %v7942
    %v7948 = vadd.f32 %v7938, %v7944
    %v7949 = vld [vmem:[#allocation5] sm:$0xff]
    %v7950 = vld [vmem:[#allocation5 + $0x8] sm:$0xff]
    %v7951 = vld [vmem:[#allocation20] sm:$0x1]
    %7952 = vrot.lane.b32.xlu0 %v7660, 96
    %v7953 = vpop.permute.xlu0 %7952
    %7954 = vrot.lane.b32.xlu0 %v7665, 96
    %v7955 = vpop.permute.xlu0 %7954
    %v7956 = vsel %vm500, %v7953, 0
    %v7958 = vsel %vm500, %v7955, 0
    %7960 = vmatprep.subr.mxu0 0.0
    %7961 = vmatpush1.msra.mxu0 0.0
    %7962 = vmatprep.subr.mxu0 0.0
    %7963 = vmatpush1.msra.mxu0 0.0
    %7964 = vmatprep.subr.mxu0 0.0
    %7965 = vmatpush1.msra.mxu0 0.0
    %7966 = vmatprep.subr.mxu0 0.0
    %7967 = vmatpush1.msra.mxu0 0.0
    %7968 = vmatprep.subr.mxu0 0.0
    %7969 = vmatpush1.msra.mxu0 0.0
    %7970 = vmatprep.subr.mxu0 0.0
    %7971 = vmatpush1.msra.mxu0 0.0
    %7972 = vmatprep.subr.mxu0 0.0
    %7973 = vmatpush1.msra.mxu0 0.0
    %7974 = vmatprep.subr.mxu0 0.0
    %7975 = vmatpush1.msra.mxu0 0.0
    %7976 = vmatprep.subr.mxu0 0.0
    %7977 = vmatpush1.msra.mxu0 0.0
    %7978 = vmatprep.subr.mxu0 0.0
    %7979 = vmatpush1.msra.mxu0 0.0
    %7980 = vmatprep.subr.mxu0 0.0
    %7981 = vmatpush1.msra.mxu0 0.0
    %7982 = vmatprep.subr.mxu0 0.0
    %7983 = vmatpush1.msra.mxu0 0.0
    %7984 = vmatprep.subr.mxu0 0.0
    %7985 = vmatpush1.msra.mxu0 %v762
    %7986 = vmatprep.subr.mxu0 0.0
    %7987 = vmatpush1.msra.mxu0 %v761
    %7988 = vmatprep.subr.mxu0 0.0
    %7989 = vmatpush1.msra.mxu0 %v760
    %7990 = vmatprep.subr.mxu0 0.0
    %7991 = vmatpush1.msra.mxu0 %v759
    %7992 = vmatprep.subr.mxu0 0.0
    %7993 = vmatpush2.msra.mxu0 0.0
    %7994 = vmatprep.subr.mxu0 0.0
    %7995 = vmatpush2.msra.mxu0 0.0
    %7996 = vmatprep.subr.mxu0 0.0
    %7997 = vmatpush2.msra.mxu0 0.0
    %7998 = vmatprep.subr.mxu0 0.0
    %7999 = vmatpush2.msra.mxu0 0.0
    %8000 = vmatprep.subr.mxu0 0.0
    %8001 = vmatpush2.msra.mxu0 0.0
    %8002 = vmatprep.subr.mxu0 0.0
    %8003 = vmatpush2.msra.mxu0 0.0
    %8004 = vmatprep.subr.mxu0 0.0
    %8005 = vmatpush2.msra.mxu0 0.0
    %8006 = vmatprep.subr.mxu0 0.0
    %8007 = vmatpush2.msra.mxu0 0.0
    %8008 = vmatprep.subr.mxu0 0.0
    %8009 = vmatpush2.msra.mxu0 0.0
    %8010 = vmatprep.subr.mxu0 0.0
    %8011 = vmatpush2.msra.mxu0 0.0
    %8012 = vmatprep.subr.mxu0 0.0
    %8013 = vmatpush2.msra.mxu0 0.0
    %8014 = vmatprep.subr.mxu0 0.0
    %8015 = vmatpush2.msra.mxu0 0.0
    %8016 = vmatprep.subr.mxu0 0.0
    %8017 = vmatpush2.msra.mxu0 0.0
    %8018 = vmatprep.subr.mxu0 0.0
    %8019 = vmatpush2.msra.mxu0 0.0
    %8020 = vmatprep.subr.mxu0 0.0
    %8021 = vmatpush2.msra.mxu0 0.0
    %8022 = vmatprep.subr.mxu0 0.0
    %8023 = vmatpush2.msra.mxu0 0.0
    %8024 = vmatprep.mubr.f32.mxu0 0.0
    %8025 = vmatmul.mubr.f32.gmra.mxu0 %v7956
    %v8026 = vpop.f32.mrf.mxu0
    %v8027 = vadd.f32 0.0, %v8026
    %v8028 = vpop.f32.mrf.mxu0
    %8029 = vmatprep.mubr.f32.mxu0 0.0
    %8030 = vmatmul.mubr.f32.gmra.mxu0 %v7958
    %v8031 = vpop.f32.mrf.mxu0
    %v8032 = vadd.f32 0.0, %v8031
    %v8033 = vpop.f32.mrf.mxu0
    %8034 = vdwg.mxu0
    %v8035 = vsel %vm1669, %v8027, -inf
    %8036 = vmax.xlane.f32.xlu0 %v8035
    %v8037 = vpop.xlane.xlu0 %8036
    %v8038 = vsel %vm1669, %v8032, -inf
    %8039 = vmax.xlane.f32.xlu0 %v8038
    %v8040 = vpop.xlane.xlu0 %8039
    %v8041 = vsub.f32 %v8027, %v8037
    %v8042 = vsub.f32 %v8032, %v8040
    %v8043 = vmul.f32 %v8041, 1.442695
    %v8044 = vpow.pop %v8043
    %v8045 = vmul.f32 %v8042, 1.442695
    %v8046 = vpow.pop %v8045
    %v8047 = vmul.f32 %v8044, %v7949
    %v8048 = vmul.f32 %v8046, %v7950
    %v8049 = vsel %vm745, %v8047, 0.0
    %8050 = vadd.xlane.f32.xlu0 %v8049
    %v8051 = vpop.xlane.xlu0 %8050
    %v8052 = vsel %vm745, %v8048, 0.0
    %8053 = vadd.xlane.f32.xlu0 %v8052
    %v8054 = vpop.xlane.xlu0 %8053
    %v8055 = vrcp.pop %v8051
    %v8056 = vrcp.pop %v8054
    %v8057 = vmul.f32 %v8047, %v8055
    %v8058 = vmul.f32 %v8048, %v8056
    %8061 = vrot.lane.b32.xlu0 %v8047, 108
    %v8062 = vpop.permute.xlu0 %8061
    %8063 = vrot.lane.b32.xlu0 %v8048, 108
    %v8064 = vpop.permute.xlu0 %8063
    %v8067 = vsel %vm745, %v8062, 0.0
    %8068 = vadd.xlane.f32.xlu0 %v8067
    %v8069 = vpop.xlane.xlu0 %8068
    %v8070 = vsel %vm745, %v8064, 0.0
    %8071 = vadd.xlane.f32.xlu0 %v8070
    %v8072 = vpop.xlane.xlu0 %8071
    %v8073 = vrcp.pop %v8069
    %v8074 = vrcp.pop %v8072
    %v8075 = vmul.f32 %v8047, %v8073
    %v8076 = vmul.f32 %v8048, %v8074
    %8077 = vrot.lane.b32.xlu0 %v8047, 88
    %v8078 = vpop.permute.xlu0 %8077
    %8079 = vrot.lane.b32.xlu0 %v8048, 88
    %v8080 = vpop.permute.xlu0 %8079
    %v8083 = vsel %vm745, %v8078, 0.0
    %8084 = vadd.xlane.f32.xlu0 %v8083
    %v8085 = vpop.xlane.xlu0 %8084
    %v8086 = vsel %vm745, %v8080, 0.0
    %8087 = vadd.xlane.f32.xlu0 %v8086
    %v8088 = vpop.xlane.xlu0 %8087
    %v8089 = vrcp.pop %v8085
    %v8090 = vrcp.pop %v8088
    %v8091 = vmul.f32 %v8047, %v8089
    %v8092 = vmul.f32 %v8048, %v8090
    %8093 = vrot.lane.b32.xlu0 %v8047, 68
    %v8094 = vpop.permute.xlu0 %8093
    %8095 = vrot.lane.b32.xlu0 %v8048, 68
    %v8096 = vpop.permute.xlu0 %8095
    %v8099 = vsel %vm745, %v8094, 0.0
    %8100 = vadd.xlane.f32.xlu0 %v8099
    %v8101 = vpop.xlane.xlu0 %8100
    %v8102 = vsel %vm745, %v8096, 0.0
    %8103 = vadd.xlane.f32.xlu0 %v8102
    %v8104 = vpop.xlane.xlu0 %8103
    %v8105 = vrcp.pop %v8101
    %v8106 = vrcp.pop %v8104
    %v8107 = vmul.f32 %v8047, %v8105
    %v8108 = vmul.f32 %v8048, %v8106
    %v8109 = vsel %vm745, %v8057, %v8075
    %v8110 = vsel %vm745, %v8058, %v8076
    %v8111 = vsel %vm538, %v8109, %v8091
    %v8112 = vsel %vm538, %v8110, %v8092
    %v8113 = vsel %vm754, %v8111, %v8107
    %v8114 = vsel %vm754, %v8112, %v8108
    %v8116 = vlaneseq
    %v8117 = vshrl.u32 %v8116, 7
    %v8118 = vsub.s32 0, %v8117
    %v8119 = vrot.slane %v7951, %v8118
    %v8122 = vsel %vm1669, %v8113, 0
    %v8125 = vsel %vm1669, %v8114, 0
    %8127 = vmatprep.subr.mxu0 0.0
    %8128 = vmatpush1.msra.mxu0 0.0
    %8129 = vmatprep.subr.mxu0 0.0
    %8130 = vmatpush1.msra.mxu0 0.0
    %8131 = vmatprep.subr.mxu0 0.0
    %8132 = vmatpush1.msra.mxu0 0.0
    %8133 = vmatprep.subr.mxu0 0.0
    %8134 = vmatpush1.msra.mxu0 0.0
    %8135 = vmatprep.subr.mxu0 0.0
    %8136 = vmatpush1.msra.mxu0 0.0
    %8137 = vmatprep.subr.mxu0 0.0
    %8138 = vmatpush1.msra.mxu0 0.0
    %8139 = vmatprep.subr.mxu0 0.0
    %8140 = vmatpush1.msra.mxu0 %v663
    %8141 = vmatprep.subr.mxu0 0.0
    %8142 = vmatpush1.msra.mxu0 %v661
    %8143 = vmatprep.subr.mxu0 0.0
    %8144 = vmatpush1.msra.mxu0 %v668
    %8145 = vmatprep.subr.mxu0 0.0
    %8146 = vmatpush1.msra.mxu0 %v652
    %8147 = vmatprep.subr.mxu0 0.0
    %8148 = vmatpush1.msra.mxu0 %v650
    %8149 = vmatprep.subr.mxu0 0.0
    %8150 = vmatpush1.msra.mxu0 %v645
    %8151 = vmatprep.subr.mxu0 0.0
    %8152 = vmatpush1.msra.mxu0 %v643
    %8153 = vmatprep.subr.mxu0 0.0
    %8154 = vmatpush1.msra.mxu0 %v667
    %8155 = vmatprep.subr.mxu0 0.0
    %8156 = vmatpush1.msra.mxu0 %v621
    %8157 = vmatprep.subr.mxu0 0.0
    %8158 = vmatpush1.msra.mxu0 %v615
    %8159 = vmatprep.subr.mxu0 0.0
    %8160 = vmatpush2.msra.mxu0 0.0
    %8161 = vmatprep.subr.mxu0 0.0
    %8162 = vmatpush2.msra.mxu0 0.0
    %8163 = vmatprep.subr.mxu0 0.0
    %8164 = vmatpush2.msra.mxu0 0.0
    %8165 = vmatprep.subr.mxu0 0.0
    %8166 = vmatpush2.msra.mxu0 0.0
    %8167 = vmatprep.subr.mxu0 0.0
    %8168 = vmatpush2.msra.mxu0 0.0
    %8169 = vmatprep.subr.mxu0 0.0
    %8170 = vmatpush2.msra.mxu0 0.0
    %8171 = vmatprep.subr.mxu0 0.0
    %8172 = vmatpush2.msra.mxu0 0.0
    %8173 = vmatprep.subr.mxu0 0.0
    %8174 = vmatpush2.msra.mxu0 0.0
    %8175 = vmatprep.subr.mxu0 0.0
    %8176 = vmatpush2.msra.mxu0 0.0
    %8177 = vmatprep.subr.mxu0 0.0
    %8178 = vmatpush2.msra.mxu0 0.0
    %8179 = vmatprep.subr.mxu0 0.0
    %8180 = vmatpush2.msra.mxu0 0.0
    %8181 = vmatprep.subr.mxu0 0.0
    %8182 = vmatpush2.msra.mxu0 0.0
    %8183 = vmatprep.subr.mxu0 0.0
    %8184 = vmatpush2.msra.mxu0 0.0
    %8185 = vmatprep.subr.mxu0 0.0
    %8186 = vmatpush2.msra.mxu0 0.0
    %8187 = vmatprep.subr.mxu0 0.0
    %8188 = vmatpush2.msra.mxu0 0.0
    %8189 = vmatprep.subr.mxu0 0.0
    %8190 = vmatpush2.msra.mxu0 0.0
    %8191 = vmatprep.mubr.f32.mxu0 0.0
    %8192 = vmatmul.mubr.f32.gmra.mxu0 %v8122
    %v8193 = vpop.f32.mrf.mxu0
    %v8194 = vadd.f32 %v8119, %v8193
    %v8195 = vpop.f32.mrf.mxu0
    %8196 = vmatprep.mubr.f32.mxu0 0.0
    %8197 = vmatmul.mubr.f32.gmra.mxu0 %v8125
    %v8198 = vpop.f32.mrf.mxu0
    %v8199 = vadd.f32 %v8119, %v8198
    %v8200 = vpop.f32.mrf.mxu0
    %8201 = vdwg.mxu0
    %v8202 = vadd.f32 %v7574, %v7911
    %v8203 = vadd.f32 %v7575, %v7916
    %v8204 = vadd.f32 %v8202, %v8194
    %v8205 = vadd.f32 %v8203, %v8199
    %v8206 = vld [vmem:[#allocation22] sm:$0xff]
    %v8207 = vld [vmem:[#allocation22 + $0x8] sm:$0xff]
    %v8208 = vld [vmem:[#allocation22 + $0x10] sm:$0xff]
    %v8209 = vld [vmem:[#allocation22 + $0x18] sm:$0xff]
    %v8210 = vld [vmem:[#allocation23] sm:$0x1]
    %v8212 = vlaneseq
    %v8213 = vshrl.u32 %v8212, 7
    %v8214 = vsub.s32 0, %v8213
    %v8215 = vrot.slane %v8210, %v8214
    %v8218 = vsel %vm500, %v8204, 0
    %v8221 = vsel %vm500, %v8205, 0
    %8223 = vmatprep.subr.mxu0 0.0
    %8224 = vmatpush1.msra.mxu0 0.0
    %8225 = vmatprep.subr.mxu0 0.0
    %8226 = vmatpush1.msra.mxu0 0.0
    %8227 = vmatprep.subr.mxu0 0.0
    %8228 = vmatpush1.msra.mxu0 0.0
    %8229 = vmatprep.subr.mxu0 0.0
    %8230 = vmatpush1.msra.mxu0 0.0
    %8231 = vmatprep.subr.mxu0 0.0
    %8232 = vmatpush1.msra.mxu0 0.0
    %8233 = vmatprep.subr.mxu0 0.0
    %8234 = vmatpush1.msra.mxu0 0.0
    %8235 = vmatprep.subr.mxu0 0.0
    %8236 = vmatpush1.msra.mxu0 0.0
    %8237 = vmatprep.subr.mxu0 0.0
    %8238 = vmatpush1.msra.mxu0 0.0
    %8239 = vmatprep.subr.mxu0 0.0
    %8240 = vmatpush1.msra.mxu0 0.0
    %8241 = vmatprep.subr.mxu0 0.0
    %8242 = vmatpush1.msra.mxu0 0.0
    %8243 = vmatprep.subr.mxu0 0.0
    %8244 = vmatpush1.msra.mxu0 0.0
    %8245 = vmatprep.subr.mxu0 0.0
    %8246 = vmatpush1.msra.mxu0 0.0
    %8247 = vmatprep.subr.mxu0 0.0
    %8248 = vmatpush1.msra.mxu0 %v8209
    %8249 = vmatprep.subr.mxu0 0.0
    %8250 = vmatpush1.msra.mxu0 %v8208
    %8251 = vmatprep.subr.mxu0 0.0
    %8252 = vmatpush1.msra.mxu0 %v8207
    %8253 = vmatprep.subr.mxu0 0.0
    %8254 = vmatpush1.msra.mxu0 %v8206
    %8255 = vmatprep.subr.mxu0 0.0
    %8256 = vmatpush2.msra.mxu0 0.0
    %8257 = vmatprep.subr.mxu0 0.0
    %8258 = vmatpush2.msra.mxu0 0.0
    %8259 = vmatprep.subr.mxu0 0.0
    %8260 = vmatpush2.msra.mxu0 0.0
    %8261 = vmatprep.subr.mxu0 0.0
    %8262 = vmatpush2.msra.mxu0 0.0
    %8263 = vmatprep.subr.mxu0 0.0
    %8264 = vmatpush2.msra.mxu0 0.0
    %8265 = vmatprep.subr.mxu0 0.0
    %8266 = vmatpush2.msra.mxu0 0.0
    %8267 = vmatprep.subr.mxu0 0.0
    %8268 = vmatpush2.msra.mxu0 0.0
    %8269 = vmatprep.subr.mxu0 0.0
    %8270 = vmatpush2.msra.mxu0 0.0
    %8271 = vmatprep.subr.mxu0 0.0
    %8272 = vmatpush2.msra.mxu0 0.0
    %8273 = vmatprep.subr.mxu0 0.0
    %8274 = vmatpush2.msra.mxu0 0.0
    %8275 = vmatprep.subr.mxu0 0.0
    %8276 = vmatpush2.msra.mxu0 0.0
    %8277 = vmatprep.subr.mxu0 0.0
    %8278 = vmatpush2.msra.mxu0 0.0
    %8279 = vmatprep.subr.mxu0 0.0
    %8280 = vmatpush2.msra.mxu0 0.0
    %8281 = vmatprep.subr.mxu0 0.0
    %8282 = vmatpush2.msra.mxu0 0.0
    %8283 = vmatprep.subr.mxu0 0.0
    %8284 = vmatpush2.msra.mxu0 0.0
    %8285 = vmatprep.subr.mxu0 0.0
    %8286 = vmatpush2.msra.mxu0 0.0
    %8287 = vmatprep.mubr.f32.mxu0 0.0
    %8288 = vmatmul.mubr.f32.gmra.mxu0 %v8218
    %v8289 = vpop.f32.mrf.mxu0
    %v8290 = vadd.f32 %v8215, %v8289
    %v8291 = vpop.f32.mrf.mxu0
    %8292 = vmatprep.mubr.f32.mxu0 0.0
    %8293 = vmatmul.mubr.f32.gmra.mxu0 %v8221
    %v8294 = vpop.f32.mrf.mxu0
    %v8295 = vadd.f32 %v8215, %v8294
    %v8296 = vpop.f32.mrf.mxu0
    %8297 = vdwg.mxu0
    %v8298 = vmax.f32 %v8290, 0.0
    %v8299 = vmax.f32 %v8295, 0.0
    %v8300 = vld [vmem:[#allocation25] sm:$0xff]
    %v8301 = vld [vmem:[#allocation25 + $0x8] sm:$0xff]
    %v8302 = vld [vmem:[#allocation25 + $0x10] sm:$0xff]
    %v8303 = vld [vmem:[#allocation25 + $0x18] sm:$0xff]
    %v8305 = vsel %vm500, %v8298, 0
    %v8308 = vsel %vm500, %v8299, 0
    %8310 = vmatprep.subr.mxu0 0.0
    %8311 = vmatpush1.msra.mxu0 0.0
    %8312 = vmatprep.subr.mxu0 0.0
    %8313 = vmatpush1.msra.mxu0 0.0
    %8314 = vmatprep.subr.mxu0 0.0
    %8315 = vmatpush1.msra.mxu0 0.0
    %8316 = vmatprep.subr.mxu0 0.0
    %8317 = vmatpush1.msra.mxu0 0.0
    %8318 = vmatprep.subr.mxu0 0.0
    %8319 = vmatpush1.msra.mxu0 0.0
    %8320 = vmatprep.subr.mxu0 0.0
    %8321 = vmatpush1.msra.mxu0 0.0
    %8322 = vmatprep.subr.mxu0 0.0
    %8323 = vmatpush1.msra.mxu0 0.0
    %8324 = vmatprep.subr.mxu0 0.0
    %8325 = vmatpush1.msra.mxu0 0.0
    %8326 = vmatprep.subr.mxu0 0.0
    %8327 = vmatpush1.msra.mxu0 0.0
    %8328 = vmatprep.subr.mxu0 0.0
    %8329 = vmatpush1.msra.mxu0 0.0
    %8330 = vmatprep.subr.mxu0 0.0
    %8331 = vmatpush1.msra.mxu0 0.0
    %8332 = vmatprep.subr.mxu0 0.0
    %8333 = vmatpush1.msra.mxu0 0.0
    %8334 = vmatprep.subr.mxu0 0.0
    %8335 = vmatpush1.msra.mxu0 %v8303
    %8336 = vmatprep.subr.mxu0 0.0
    %8337 = vmatpush1.msra.mxu0 %v8302
    %8338 = vmatprep.subr.mxu0 0.0
    %8339 = vmatpush1.msra.mxu0 %v8301
    %8340 = vmatprep.subr.mxu0 0.0
    %8341 = vmatpush1.msra.mxu0 %v8300
    %8342 = vmatprep.subr.mxu0 0.0
    %8343 = vmatpush2.msra.mxu0 0.0
    %8344 = vmatprep.subr.mxu0 0.0
    %8345 = vmatpush2.msra.mxu0 0.0
    %8346 = vmatprep.subr.mxu0 0.0
    %8347 = vmatpush2.msra.mxu0 0.0
    %8348 = vmatprep.subr.mxu0 0.0
    %8349 = vmatpush2.msra.mxu0 0.0
    %8350 = vmatprep.subr.mxu0 0.0
    %8351 = vmatpush2.msra.mxu0 0.0
    %8352 = vmatprep.subr.mxu0 0.0
    %8353 = vmatpush2.msra.mxu0 0.0
    %8354 = vmatprep.subr.mxu0 0.0
    %8355 = vmatpush2.msra.mxu0 0.0
    %8356 = vmatprep.subr.mxu0 0.0
    %8357 = vmatpush2.msra.mxu0 0.0
    %8358 = vmatprep.subr.mxu0 0.0
    %8359 = vmatpush2.msra.mxu0 0.0
    %8360 = vmatprep.subr.mxu0 0.0
    %8361 = vmatpush2.msra.mxu0 0.0
    %8362 = vmatprep.subr.mxu0 0.0
    %8363 = vmatpush2.msra.mxu0 0.0
    %8364 = vmatprep.subr.mxu0 0.0
    %8365 = vmatpush2.msra.mxu0 0.0
    %8366 = vmatprep.subr.mxu0 0.0
    %8367 = vmatpush2.msra.mxu0 0.0
    %8368 = vmatprep.subr.mxu0 0.0
    %8369 = vmatpush2.msra.mxu0 0.0
    %8370 = vmatprep.subr.mxu0 0.0
    %8371 = vmatpush2.msra.mxu0 0.0
    %8372 = vmatprep.subr.mxu0 0.0
    %8373 = vmatpush2.msra.mxu0 0.0
    %8374 = vmatprep.mubr.f32.mxu0 0.0
    %8375 = vmatmul.mubr.f32.gmra.mxu0 %v8305
    %v8376 = vpop.f32.mrf.mxu0
    %v8377 = vadd.f32 0.0, %v8376
    %v8378 = vpop.f32.mrf.mxu0
    %8379 = vmatprep.mubr.f32.mxu0 0.0
    %8380 = vmatmul.mubr.f32.gmra.mxu0 %v8308
    %v8381 = vpop.f32.mrf.mxu0
    %v8382 = vadd.f32 0.0, %v8381
    %v8383 = vpop.f32.mrf.mxu0
    %8384 = vdwg.mxu0
    %v8385 = vadd.f32 %v8204, %v8377
    %v8386 = vadd.f32 %v8205, %v8382
    %v8387 = vld [vmem:[#allocation26] sm:$0x1]
    %v8389 = vlaneseq
    %v8390 = vshrl.u32 %v8389, 7
    %v8391 = vsub.s32 0, %v8390
    %v8392 = vrot.slane %v8387, %v8391
    %v8394 = vadd.f32 %v8385, %v8392
    %v8395 = vadd.f32 %v8386, %v8392
    %s8396 = scalar_lea.vmem %s28, 96
    %8397 = vst.msk [vmem:[%s8396] sm:$0xff] %vm500, %v8394
    %8398 = vst.msk [vmem:[%s8396 + $0x8] sm:$0xff] %vm500, %v8395
    %v8399 = vsel %vm500, %v8394, 0.0
    %8400 = vadd.xlane.f32.xlu0 %v8399
    %v8401 = vpop.xlane.xlu0 %8400
    %v8402 = vsel %vm500, %v8395, 0.0
    %8403 = vadd.xlane.f32.xlu0 %v8402
    %v8404 = vpop.xlane.xlu0 %8403
    %v8405 = vrcp.pop 32.0
    %v8406 = vmul.f32 %v8401, %v8405
    %v8407 = vmul.f32 %v8404, %v8405
    %v8408 = vsub.f32 %v8394, %v8406
    %v8409 = vsub.f32 %v8395, %v8407
    %v8410 = vmul.f32 %v8408, %v8408
    %v8411 = vmul.f32 %v8409, %v8409
    %v8412 = vsel %vm500, %v8410, 0.0
    %8413 = vadd.xlane.f32.xlu0 %v8412
    %v8414 = vpop.xlane.xlu0 %8413
    %v8415 = vsel %vm500, %v8411, 0.0
    %8416 = vadd.xlane.f32.xlu0 %v8415
    %v8417 = vpop.xlane.xlu0 %8416
    %v8418 = vmul.f32 %v8414, %v8405
    %v8419 = vmul.f32 %v8417, %v8405
    %v8420 = vadd.f32 %v8418, 1e-05
    %v8421 = vadd.f32 %v8419, 1e-05
    %v8422 = vrsqrt.pop %v8420
    %v8423 = vrsqrt.pop %v8421
    %v8424 = vmul.f32 %v8408, %v8422
    %v8425 = vmul.f32 %v8409, %v8423
    %v8426 = vld [vmem:[%s24] sm:$0x1]
    %v8428 = vlaneseq
    %v8429 = vshrl.u32 %v8428, 7
    %v8430 = vsub.s32 0, %v8429
    %v8431 = vrot.slane %v8426, %v8430
    %v8433 = vmul.f32 %v8424, %v8431
    %v8434 = vmul.f32 %v8425, %v8431
    %v8435 = vld [vmem:[%s25] sm:$0x1]
    %v8437 = vlaneseq
    %v8438 = vshrl.u32 %v8437, 7
    %v8439 = vsub.s32 0, %v8438
    %v8440 = vrot.slane %v8435, %v8439
    %v8442 = vadd.f32 %v8433, %v8440
    %v8443 = vadd.f32 %v8434, %v8440
    %8444 = vst.msk [vmem:[#allocation28] sm:$0xff] %vm500, %v8442
    %8445 = vst.msk [vmem:[#allocation28 + $0x8] sm:$0xff] %vm500, %v8443
    %8447 = vrot.lane.b32.xlu0 %v7948, 120
    %v8448 = vpop.permute.xlu0 %8447
    %v8450 = vadd.f32 %v7947, %v8448
    %v8451 = vmul.f32 %v8450, 0.125
    %vm8452 = vcmask 64512
    %8453 = vst.msk [vmem:[#allocation29] sm:$0xff] %vm8452, %v8451
    // Predicated region
    $region170: #{decoder_forward.1} parent=1 // pred_check
      _
    $region171: #{decoder_forward.1} parent=1 // pred_check_branch
      %8455 = sbr.rel (0) target = $region173
    $region172: #{decoder_forward.1} parent=1 // pred_region
      %s8457 = ssub.s32 256, 256
      %8458 = vsyncadd [#allocation4], %s8457
      %s8459 = sshll.u32 [#allocation28], 4
      %s8460 = int_to_ptr.vmem [resolvable:$true] %s8459
      %8465 = dma.vmem_to_hbm [thread:$0]  %s8460, 256, %s26, [#allocation4], 128, 128, 8
    $region173: #{decoder_forward.1} parent=1 // pred_fallthru
      _
    // Predicated region
    $region174: #{decoder_forward.1} parent=1 // pred_check
      _
    $region175: #{decoder_forward.1} parent=1 // pred_check_branch
      %8467 = sbr.rel (0) target = $region177
    $region176: #{decoder_forward.1} parent=1 // pred_region
      %s8469 = ssub.s32 128, 128
      %8470 = vsyncadd [#allocation30], %s8469
      %s8472 = sshll.u32 [#allocation29], 4
      %s8473 = int_to_ptr.vmem [resolvable:$true] %s8472
      %8475 = dma.vmem_to_hbm [thread:$0]  %s8473, 128, %s27, [#allocation30]
    $region177: #{decoder_forward.1} parent=1 // pred_fallthru
      _
    // Predicated region
    $region178: #{decoder_forward.1} parent=1 // pred_check
      _
    $region179: #{decoder_forward.1} parent=1 // pred_check_branch
      %8477 = sbr.rel (0) target = $region181
    $region180: #{decoder_forward.1} parent=1 // pred_region
      _
    $region181: #{decoder_forward.1} parent=1 // pred_fallthru
      _
    // Predicated region
    $region182: #{decoder_forward.1} parent=1 // pred_check
      _
    $region183: #{decoder_forward.1} parent=1 // pred_check_branch
      %8479 = sbr.rel (0) target = $region185
    $region184: #{decoder_forward.1} parent=1 // pred_region
      %8480 = dma.done [#allocation4], 256
    $region185: #{decoder_forward.1} parent=1 // pred_fallthru
      _
    // Predicated region
    $region186: #{decoder_forward.1} parent=1 // pred_check
      _
    $region187: #{decoder_forward.1} parent=1 // pred_check_branch
      %8482 = sbr.rel (0) target = $region189
    $region188: #{decoder_forward.1} parent=1 // pred_region
      %8483 = dma.done [#allocation30], 128
    $region189: #{decoder_forward.1} parent=1 // pred_fallthru
      _
    // Predicated region
    $region190: #{decoder_forward.1} parent=1 // pred_check
      _
    $region191: #{decoder_forward.1} parent=1 // pred_check_branch
      %8485 = sbr.rel (0) target = $region193
    $region192: #{decoder_forward.1} parent=1 // pred_region
      _
    $region193: #{decoder_forward.1} parent=1 // pred_fallthru
      _
    %8486 = vsyncpa [#allocation3], 1
    %8487 = vsyncpa [#allocation6], 1
    %8488 = vsyncpa [#allocation9], 1
    %8489 = vsyncpa [#allocation12], 1
    %8490 = vsyncpa [#allocation15], 1
    %8491 = vsyncpa [#allocation18], 1
    %8492 = vsyncpa [#allocation21], 1
    %8493 = vsyncpa [#allocation24], 1
    %8494 = vsyncpa [#allocation27], 1
    %8495 = vsyncpa [#allocation4], 1
    %8496 = vsyncpa [#allocation30], 1

</llo_original>
